<compile_context>
chip_gen: v5e
topology: v5e:2x2
jax: 0.10.0
libtpu: 0.0.40
codegen_flags: <defaults>
</compile_context>

<pallas_src>
import functools

import numpy as np
import jax
import jax.numpy as jnp
from jax.experimental import pallas as pl
from jax.experimental.pallas import tpu as pltpu


# ----------------------------- Pallas kernel ------------------------------- #

def _fused_aspp_kernel(x_ref, w_ref, mask_ref, bias_ref, o_ref, xflat_ref, *,
                       groups, hw, padr, tk):
    """Whole-ASPP step for one (Cout-tile, batch, Cin-tile) grid point.

    x_ref    : (1, H*W, tk)        bf16  flattened NHWC input, current Cin slice
    w_ref    : (T, Cin, tco)       bf16  composed per-tap weights, resident;
                                         Cin slice taken in-kernel with pl.ds
    mask_ref : (NDX, H*W, 1)       f32   column-validity mask per distinct dx
    bias_ref : (1, 1, tco)         f32   per-batch fused bias (BNs + GAP branch)
    o_ref    : (1, H*W, tco)       f32   output block; also the Cin accumulator
    xflat_ref: (H*W + 2*padr, tk)  bf16  scratch: zero-padded flattened image
    groups   : static ((mask_idx, ((row_offset, tap_idx), ...)), ...) grouped by
               horizontal shift dx (mask_idx == -1 for dx == 0)
    """
    k = pl.program_id(2)
    nk = pl.num_programs(2)

    @pl.when(k == 0)
    def _init():
        o_ref[...] = jnp.zeros_like(o_ref)            # output doubles as acc
        xflat_ref[...] = jnp.zeros_like(xflat_ref)    # zero halo stays zero

    # Stage the current channel slice in the middle of the zero-padded buffer.
    # padr is a multiple of 16, so this bf16 store is sublane-tile aligned.
    xflat_ref[padr:padr + hw, :] = x_ref[0]

    koff = pl.multiple_of(k * tk, tk)                 # Cin offset into weights

    # 25 shifted matmuls, grouped by horizontal shift dx.  The row-wrap mask is
    # applied once per dx group on the f32 dot output (diag(m)@(x@w) == (m*x)@w)
    # -> 6 VPU multiplies instead of 18, and 7 independent add chains.
    acc = None
    for mi, tap_list in groups:                       # static unroll
        g = None
        for off, t in tap_list:
            patch = xflat_ref[off:off + hw, :]
            w_t = w_ref[t, pl.ds(koff, tk), :]
            d = jnp.dot(patch, w_t, preferred_element_type=jnp.float32)
            g = d if g is None else g + d
        if mi >= 0:                                   # horizontal shift: mask
            g = g * mask_ref[mi]
        acc = g if acc is None else acc + g
    o_ref[0] += acc

    @pl.when(k == nk - 1)
    def _finalize():
        o_ref[0] = jnp.maximum(o_ref[0] + bias_ref[0], 0.0)


# ------------------------------ kernel wrapper ------------------------------ #

def fused_aspp_conv(x_nhwc, w_taps, bias, tap_dydx, pad, *, tk=None, tco=None):
    """x_nhwc (N,H,W,Cin) bf16; w_taps (T,Cin,Cout) bf16; bias (N,1,Cout) f32."""
    N, H, W, Cin = x_nhwc.shape
    T, _, Cout = w_taps.shape
    assert T == len(tap_dydx)
    if tk is None:                           # cap at 256: safe on v7x's 64 MiB
        tk = 256 if Cin % 256 == 0 else (128 if Cin % 128 == 0 else Cin)
    assert Cin % tk == 0, (Cin, tk)
    Kt = Cin // tk
    if tco is None:                          # 128-wide Cout tiles: lane-dense
        tco = 128 if Cout % 128 == 0 else Cout
    assert Cout % tco == 0, (Cout, tco)
    J = Cout // tco
    HW = H * W

    # Flattened-row padding: enough zero rows so every shifted window is in
    # bounds; rounded to the bf16 sublane tile (16) so the interior store of
    # the staging buffer is tile-aligned.
    padr = -(-(pad * W + pad) // 16) * 16
    rows = HW + 2 * padr

    # Static per-tap metadata grouped by horizontal shift dx.
    dxs = sorted({dx for (_, dx) in tap_dydx if dx != 0})
    dx_idx = {dx: i for i, dx in enumerate(dxs)}
    by_dx = {}
    for t, (dy, dx) in enumerate(tap_dydx):
        by_dx.setdefault(dx, []).append((padr + dy * W + dx, t))
    groups = tuple((dx_idx.get(dx, -1), tuple(tap_list))
                   for dx, tap_list in sorted(by_dx.items()))

    # Column-validity masks, one per distinct nonzero dx (applied post-dot, f32).
    # NOTE: last-dim=1 pads to 128 lanes in VMEM; acceptable here (small HW) --
    # for very large HW compute the mask in-kernel from a broadcasted iota.
    ndx = max(len(dxs), 1)
    col = np.tile(np.arange(W), H).reshape(HW, 1)
    mask_np = np.stack([((col + dx >= 0) & (col + dx < W)).astype(np.float32)
                        for dx in (dxs or [0])], axis=0)         # (NDX, HW, 1)
    masks = jnp.asarray(mask_np, dtype=jnp.float32)

    x2d = x_nhwc.reshape(N, HW, Cin)
    kern = functools.partial(_fused_aspp_kernel, groups=groups, hw=HW,
                             padr=padr, tk=tk)

    # Explicit VMEM budget: x (db) + resident weights (db) + masks (db, lane-
    # padded) + bias + out (db) + xflat scratch, with 2x headroom.
    vmem_bytes = (2 * HW * tk * 2
                  + 2 * T * Cin * tco * 2
                  + 2 * ndx * HW * 128 * 4
                  + 2 * 8 * max(tco, 128) * 4
                  + 2 * HW * tco * 4
                  + rows * tk * 2)
    vmem_limit = int(min(max(2 * vmem_bytes, 32 << 20), 100 << 20))

    # Grid order (Cout-tile, batch, Cin-tile): weight block index depends only
    # on the OUTERMOST axis, so the composed weights are DMA'd once per Cout
    # tile (not once per batch).  j/n are "parallel" (megacore), k "arbitrary"
    # because the output block accumulates across it.
    out = pl.pallas_call(
        kern,
        out_shape=jax.ShapeDtypeStruct((N, HW, Cout), jnp.float32),
        grid=(J, N, Kt),
        in_specs=[
            pl.BlockSpec((1, HW, tk), lambda j, n, k: (n, 0, k)),
            pl.BlockSpec((T, Cin, tco), lambda j, n, k: (0, 0, j)),
            pl.BlockSpec((ndx, HW, 1), lambda j, n, k: (0, 0, 0)),
            pl.BlockSpec((1, 1, tco), lambda j, n, k: (n, 0, j)),
        ],
        out_specs=pl.BlockSpec((1, HW, tco), lambda j, n, k: (n, 0, j)),
        scratch_shapes=[pltpu.VMEM((rows, tk), x_nhwc.dtype)],
        compiler_params=pltpu.CompilerParams(
            dimension_semantics=("parallel", "parallel", "arbitrary"),
            vmem_limit_bytes=vmem_limit),
    )(x2d, w_taps, masks, bias)
    return out.reshape(N, H, W, Cout)


# ----------------------------- params / fusion ------------------------------ #

def init_aspp_params(key, inplanes, planes, output_stride):
    if output_stride == 16:
        dilations = (1, 6, 12, 18)
    elif output_stride == 8:
        dilations = (1, 12, 24, 36)
    else:
        raise NotImplementedError
    eps = 1e-5
    keys = jax.random.split(key, 6)

    def kaiming(k, shape, fan_in):            # kaiming_normal_: std sqrt(2/fan_in)
        return jax.random.normal(k, shape, jnp.float32) * np.sqrt(2.0 / fan_in)

    p = {"dilations": dilations}
    p["w_aspp1"] = kaiming(keys[0], (inplanes, planes), inplanes)            # 1x1
    p["w_aspp2"] = kaiming(keys[1], (3, 3, inplanes, planes), 9 * inplanes)  # HWIO
    p["w_aspp3"] = kaiming(keys[2], (3, 3, inplanes, planes), 9 * inplanes)
    p["w_aspp4"] = kaiming(keys[3], (3, 3, inplanes, planes), 9 * inplanes)
    p["w_gap"] = kaiming(keys[4], (inplanes, planes), inplanes)              # 1x1
    p["w_proj"] = kaiming(keys[5], (5 * planes, planes), 5 * planes)         # conv1

    # BatchNorm folded to inference-mode affine with as-initialized parameters.
    bn_scale = jnp.full((1, planes), 1.0 / np.sqrt(1.0 + eps), jnp.float32)
    bn_bias = jnp.zeros((1, planes), jnp.float32)
    for name in ("aspp1", "aspp2", "aspp3", "aspp4", "gap", "proj"):
        p[f"bn_{name}_scale"] = bn_scale
        p[f"bn_{name}_bias"] = bn_bias
    return p


def prepare_fused_params(p):
    """Fold branch BNs + 1x1 projection (+ its BN) into per-tap weights/bias."""
    hi = jax.lax.Precision.HIGHEST
    mm = lambda a, b: jnp.matmul(a, b, precision=hi)

    d = p["dilations"]
    pad = max(d)
    Cp = p["w_proj"].shape[1]
    w_proj_s = p["w_proj"] * p["bn_proj_scale"]            # fold proj-BN scale
    wp = [w_proj_s[i * Cp:(i + 1) * Cp, :] for i in range(5)]

    taps = {}                                              # (dy,dx) -> (Cin,Cout)

    def add_tap(dy, dx, w):
        taps[(dy, dx)] = taps.get((dy, dx), 0.0) + w

    add_tap(0, 0, mm(p["w_aspp1"] * p["bn_aspp1_scale"], wp[0]))      # aspp1 1x1
    for bi, name in enumerate(("aspp2", "aspp3", "aspp4"), start=1):  # dilated 3x3
        w = p[f"w_{name}"] * p[f"bn_{name}_scale"]
        dil = d[bi]
        for ky in range(3):
            for kx in range(3):
                add_tap((ky - 1) * dil, (kx - 1) * dil, mm(w[ky, kx], wp[bi]))

    offsets = tuple(sorted(taps.keys()))
    w_taps = jnp.stack([taps[o] for o in offsets], axis=0).astype(jnp.bfloat16)

    b_const = p["bn_proj_bias"]
    for bi, name in enumerate(("aspp1", "aspp2", "aspp3", "aspp4")):
        b_const = b_const + mm(p[f"bn_{name}_bias"], wp[bi])

    return {
        "pad": pad,
        "tap_offsets": offsets,                            # static (dy,dx) list
        "w_taps": w_taps,                                  # (T, Cin, Cout) bf16
        "b_const": b_const.astype(jnp.float32),            # (1, Cout)
        "w_gap": p["w_gap"],                               # (Cin, Cp) f32
        "s_gap": p["bn_gap_scale"],
        "b_gap": p["bn_gap_bias"],
        "wp_gap": wp[4],                                   # (Cp, Cout) f32
    }


# --------------------------------- forward ---------------------------------- #

def gap_bias_xla(pooled, fused):
    """Per-batch fused bias (plain XLA: two tiny matvecs)."""
    hi = jax.lax.Precision.HIGHEST
    h = jnp.matmul(pooled, fused["w_gap"], precision=hi)
    h = jnp.maximum(h * fused["s_gap"] + fused["b_gap"], 0.0)       # (N, Cp)
    b5 = jnp.matmul(h, fused["wp_gap"], precision=hi)               # (N, Cout)
    return b5 + fused["b_const"]


def aspp_forward(x_nchw, fused, *, tk=None, tco=None):
    N, Cin, H, W = x_nchw.shape
    Cout = fused["w_taps"].shape[-1]
    x = jnp.transpose(x_nchw, (0, 2, 3, 1)).astype(jnp.bfloat16)      # NHWC bf16
    # GAP branch is spatially constant -> it only shifts the projection bias.
    pooled = jnp.mean(x.astype(jnp.float32), axis=(1, 2))             # (N, Cin)
    bias = gap_bias_xla(pooled, fused).reshape(N, 1, Cout).astype(jnp.float32)
    y = fused_aspp_conv(x, fused["w_taps"], bias, fused["tap_offsets"],
                        fused["pad"], tk=tk, tco=tco)                 # (N,H,W,Co)
    # TODO(synk): F.dropout (functional default training=True -> stochastic) has
    # no deterministic equivalent; applied as identity (eval semantics).
    return jnp.transpose(y, (0, 3, 1, 2))                             # NCHW


# --------------------------- pure-JAX reference ----------------------------- #

def aspp_reference(x_nchw, p):
    x = jnp.transpose(x_nchw, (0, 2, 3, 1)).astype(jnp.bfloat16).astype(jnp.float32)
    N, H, W, Cin = x.shape
    hi = jax.lax.Precision.HIGHEST

    def conv(xx, w, dil):
        if w.ndim == 2:
            w = w.reshape(1, 1, *w.shape)
        k = w.shape[0]
        padc = ((dil, dil), (dil, dil)) if k == 3 else ((0, 0), (0, 0))
        return jax.lax.conv_general_dilated(
            xx, w, (1, 1), padc, rhs_dilation=(dil, dil),
            dimension_numbers=("NHWC", "HWIO", "NHWC"), precision=hi)

    def bn(yy, s, b):
        return yy * s.reshape(1, 1, 1, -1) + b.reshape(1, 1, 1, -1)

    d = p["dilations"]
    y1 = bn(conv(x, p["w_aspp1"], 1), p["bn_aspp1_scale"], p["bn_aspp1_bias"])
    y2 = bn(conv(x, p["w_aspp2"], d[1]), p["bn_aspp2_scale"], p["bn_aspp2_bias"])
    y3 = bn(conv(x, p["w_aspp3"], d[2]), p["bn_aspp3_scale"], p["bn_aspp3_bias"])
    y4 = bn(conv(x, p["w_aspp4"], d[3]), p["bn_aspp4_scale"], p["bn_aspp4_bias"])
    pooled = jnp.mean(x, axis=(1, 2), keepdims=True)
    y5 = jnp.maximum(bn(conv(pooled, p["w_gap"], 1),
                        p["bn_gap_scale"], p["bn_gap_bias"]), 0.0)
    y5 = jnp.broadcast_to(y5, (N, H, W, y5.shape[-1]))
    ycat = jnp.concatenate([y1, y2, y3, y4, y5], axis=-1)
    y = jnp.maximum(bn(conv(ycat, p["w_proj"], 1),
                       p["bn_proj_scale"], p["bn_proj_bias"]), 0.0)
    return jnp.transpose(y, (0, 3, 1, 2))


# ---------------------------------- main ------------------------------------ #

if __name__ == "__main__":
    # Small, structure-preserving config (real module: inplanes=2048, planes=256).
    # planes kept a multiple of 128 so output stores stay lane-dense; Cin chosen
    # so the Cin-tile grid has more than one reduction step.
    N, Cin, H, W = 2, 256, 16, 16
    planes = 128

    key = jax.random.PRNGKey(0)
    kx, kp = jax.random.split(key)
    x = jax.random.normal(kx, (N, Cin, H, W), jnp.float32)   # NCHW, PyTorch-style
    params = init_aspp_params(kp, Cin, planes, output_stride=16)
    fused = prepare_fused_params(params)

    fwd = jax.jit(lambda inp: aspp_forward(inp, fused, tk=128))
    out = jax.block_until_ready(fwd(x))
    ref = jax.block_until_ready(aspp_reference(x, params))

    assert out.shape == (N, planes, H, W), out.shape
    # bf16 operands (f32 accumulation) + offline weight composition -> ~1e-2 tol.
    np.testing.assert_allclose(np.asarray(out), np.asarray(ref),
                               rtol=3e-2, atol=3e-2)
    print("KERNEL_OK")
</pallas_src>

<mosaic_0001>
module attributes {stable_mosaic.version = 11 : i64} {
  func.func @_fused_aspp_kernel(%arg0: i32, %arg1: i32, %arg2: i32, %arg3: memref<1x256x128xbf16, #tpu.memory_space<vmem>>, %arg4: memref<25x256x128xbf16, #tpu.memory_space<vmem>>, %arg5: memref<6x256x1xf32, #tpu.memory_space<vmem>>, %arg6: memref<1x1x128xf32, #tpu.memory_space<vmem>>, %arg7: memref<1x256x128xf32, #tpu.memory_space<vmem>>, %arg8: memref<896x128xbf16, #tpu.memory_space<vmem>>) attributes {dimension_semantics = [#tpu.dimension_semantics<parallel>, #tpu.dimension_semantics<parallel>, #tpu.dimension_semantics<arbitrary>], iteration_bounds = array<i64: 1, 2, 2>, scalar_prefetch = 0 : i64, scratch_operands = 1 : i64, tpu.core_type = #tpu.core_type<tc>, window_params = [{transform_indices = @transform_0, window_bounds = array<i64: 1, 256, 128>}, {transform_indices = @transform_1, window_bounds = array<i64: 25, 256, 128>}, {pipeline_mode = #tpu.pipeline_mode<synchronous>, transform_indices = @transform_2, window_bounds = array<i64: 6, 256, 1>}, {transform_indices = @transform_3, window_bounds = array<i64: 1, 1, 128>}, {transform_indices = @transform_4, window_bounds = array<i64: 1, 256, 128>}]} {
    %c0_i32 = arith.constant 0 : i32
    %0 = arith.cmpi eq, %arg2, %c0_i32 : i32
    %1 = arith.extui %0 : i1 to i32
    %c0_i32_0 = arith.constant 0 : i32
    %2 = arith.cmpi ne, %1, %c0_i32_0 : i32
    scf.if %2 {
      %cst_106 = arith.constant 0.000000e+00 : f32
      %190 = vector.broadcast %cst_106 : f32 to vector<1x256x128xf32>
      %c0_107 = arith.constant 0 : index
      %c0_108 = arith.constant 0 : index
      %c0_109 = arith.constant 0 : index
      %191 = vector.load %arg7[%c0_107, %c0_108, %c0_109] : memref<1x256x128xf32, #tpu.memory_space<vmem>>, vector<1x256x128xf32>
      tpu.vector_store %arg7[%c0_107, %c0_108, %c0_109], %190 {strides = array<i32>} : memref<1x256x128xf32, #tpu.memory_space<vmem>>, vector<1x256x128xf32>,
      %cst_110 = arith.constant 0.000000e+00 : bf16
      %192 = vector.broadcast %cst_110 : bf16 to vector<896x128xbf16>
      %c0_111 = arith.constant 0 : index
      %c0_112 = arith.constant 0 : index
      %193 = vector.load %arg8[%c0_111, %c0_112] : memref<896x128xbf16, #tpu.memory_space<vmem>>, vector<896x128xbf16>
      tpu.vector_store %arg8[%c0_111, %c0_112], %192 {strides = array<i32>} : memref<896x128xbf16, #tpu.memory_space<vmem>>, vector<896x128xbf16>,
    } else {
    }
    %c0 = arith.constant 0 : index
    %c0_1 = arith.constant 0 : index
    %c0_2 = arith.constant 0 : index
    %3 = vector.load %arg3[%c0, %c0_1, %c0_2] : memref<1x256x128xbf16, #tpu.memory_space<vmem>>, vector<1x256x128xbf16>
    %4 = vector.shape_cast %3 : vector<1x256x128xbf16> to vector<256x128xbf16>
    %c320 = arith.constant 320 : index
    %c0_3 = arith.constant 0 : index
    %5 = vector.load %arg8[%c320, %c0_3] : memref<896x128xbf16, #tpu.memory_space<vmem>>, vector<256x128xbf16>
    tpu.vector_store %arg8[%c320, %c0_3], %4 {strides = array<i32>} : memref<896x128xbf16, #tpu.memory_space<vmem>>, vector<256x128xbf16>,
    %c128_i32 = arith.constant 128 : i32
    %6 = arith.muli %arg2, %c128_i32 : i32
    %7 = tpu.assume_multiple %6, 128 : i32
    %c14 = arith.constant 14 : index
    %c0_4 = arith.constant 0 : index
    %8 = vector.load %arg8[%c14, %c0_4] : memref<896x128xbf16, #tpu.memory_space<vmem>>, vector<256x128xbf16>
    %c0_5 = arith.constant 0 : index
    %9 = arith.index_cast %7 : i32 to index
    %c0_6 = arith.constant 0 : index
    %10 = vector.load %arg4[%c0_5, %9, %c0_6] : memref<25x256x128xbf16, #tpu.memory_space<vmem>>, vector<1x128x128xbf16>
    %11 = vector.shape_cast %10 : vector<1x128x128xbf16> to vector<128x128xbf16>
    %cst = arith.constant dense<0.000000e+00> : vector<256x128xf32>
    %12 = tpu.matmul %8, %11, %cst {dimension_numbers = #tpu.dot_dimension_numbers<[1], [0], [0], [1], [0, 0, 1, 1], [], []>} : vector<256x128xbf16>, vector<128x128xbf16>, vector<256x128xf32> -> vector<256x128xf32>
    %c302 = arith.constant 302 : index
    %c0_7 = arith.constant 0 : index
    %13 = vector.load %arg8[%c302, %c0_7] : memref<896x128xbf16, #tpu.memory_space<vmem>>, vector<256x128xbf16>
    %c9 = arith.constant 9 : index
    %14 = arith.index_cast %7 : i32 to index
    %c0_8 = arith.constant 0 : index
    %15 = vector.load %arg4[%c9, %14, %c0_8] : memref<25x256x128xbf16, #tpu.memory_space<vmem>>, vector<1x128x128xbf16>
    %16 = vector.shape_cast %15 : vector<1x128x128xbf16> to vector<128x128xbf16>
    %cst_9 = arith.constant dense<0.000000e+00> : vector<256x128xf32>
    %17 = tpu.matmul %13, %16, %cst_9 {dimension_numbers = #tpu.dot_dimension_numbers<[1], [0], [0], [1], [0, 0, 1, 1], [], []>} : vector<256x128xbf16>, vector<128x128xbf16>, vector<256x128xf32> -> vector<256x128xf32>
    %18 = arith.addf %12, %17 : vector<256x128xf32>
    %c590 = arith.constant 590 : index
    %c0_10 = arith.constant 0 : index
    %19 = vector.load %arg8[%c590, %c0_10] : memref<896x128xbf16, #tpu.memory_space<vmem>>, vector<256x128xbf16>
    %c22 = arith.constant 22 : index
    %20 = arith.index_cast %7 : i32 to index
    %c0_11 = arith.constant 0 : index
    %21 = vector.load %arg4[%c22, %20, %c0_11] : memref<25x256x128xbf16, #tpu.memory_space<vmem>>, vector<1x128x128xbf16>
    %22 = vector.shape_cast %21 : vector<1x128x128xbf16> to vector<128x128xbf16>
    %cst_12 = arith.constant dense<0.000000e+00> : vector<256x128xf32>
    %23 = tpu.matmul %19, %22, %cst_12 {dimension_numbers = #tpu.dot_dimension_numbers<[1], [0], [0], [1], [0, 0, 1, 1], [], []>} : vector<256x128xbf16>, vector<128x128xbf16>, vector<256x128xf32> -> vector<256x128xf32>
    %24 = arith.addf %18, %23 : vector<256x128xf32>
    %c0_13 = arith.constant 0 : index
    %c0_14 = arith.constant 0 : index
    %c0_15 = arith.constant 0 : index
    %25 = vector.load %arg5[%c0_13, %c0_14, %c0_15] : memref<6x256x1xf32, #tpu.memory_space<vmem>>, vector<1x256x1xf32>
    %26 = vector.shape_cast %25 : vector<1x256x1xf32> to vector<256x1xf32>
    %27 = vector.broadcast %26 : vector<256x1xf32> to vector<256x128xf32>
    %28 = arith.mulf %24, %27 : vector<256x128xf32>
    %c116 = arith.constant 116 : index
    %c0_16 = arith.constant 0 : index
    %29 = vector.load %arg8[%c116, %c0_16] : memref<896x128xbf16, #tpu.memory_space<vmem>>, vector<256x128xbf16>
    %c3 = arith.constant 3 : index
    %30 = arith.index_cast %7 : i32 to index
    %c0_17 = arith.constant 0 : index
    %31 = vector.load %arg4[%c3, %30, %c0_17] : memref<25x256x128xbf16, #tpu.memory_space<vmem>>, vector<1x128x128xbf16>
    %32 = vector.shape_cast %31 : vector<1x128x128xbf16> to vector<128x128xbf16>
    %cst_18 = arith.constant dense<0.000000e+00> : vector<256x128xf32>
    %33 = tpu.matmul %29, %32, %cst_18 {dimension_numbers = #tpu.dot_dimension_numbers<[1], [0], [0], [1], [0, 0, 1, 1], [], []>} : vector<256x128xbf16>, vector<128x128xbf16>, vector<256x128xf32> -> vector<256x128xf32>
    %c308 = arith.constant 308 : index
    %c0_19 = arith.constant 0 : index
    %34 = vector.load %arg8[%c308, %c0_19] : memref<896x128xbf16, #tpu.memory_space<vmem>>, vector<256x128xbf16>
    %c10 = arith.constant 10 : index
    %35 = arith.index_cast %7 : i32 to index
    %c0_20 = arith.constant 0 : index
    %36 = vector.load %arg4[%c10, %35, %c0_20] : memref<25x256x128xbf16, #tpu.memory_space<vmem>>, vector<1x128x128xbf16>
    %37 = vector.shape_cast %36 : vector<1x128x128xbf16> to vector<128x128xbf16>
    %cst_21 = arith.constant dense<0.000000e+00> : vector<256x128xf32>
    %38 = tpu.matmul %34, %37, %cst_21 {dimension_numbers = #tpu.dot_dimension_numbers<[1], [0], [0], [1], [0, 0, 1, 1], [], []>} : vector<256x128xbf16>, vector<128x128xbf16>, vector<256x128xf32> -> vector<256x128xf32>
    %39 = arith.addf %33, %38 : vector<256x128xf32>
    %c500 = arith.constant 500 : index
    %c0_22 = arith.constant 0 : index
    %40 = vector.load %arg8[%c500, %c0_22] : memref<896x128xbf16, #tpu.memory_space<vmem>>, vector<256x128xbf16>
    %c19 = arith.constant 19 : index
    %41 = arith.index_cast %7 : i32 to index
    %c0_23 = arith.constant 0 : index
    %42 = vector.load %arg4[%c19, %41, %c0_23] : memref<25x256x128xbf16, #tpu.memory_space<vmem>>, vector<1x128x128xbf16>
    %43 = vector.shape_cast %42 : vector<1x128x128xbf16> to vector<128x128xbf16>
    %cst_24 = arith.constant dense<0.000000e+00> : vector<256x128xf32>
    %44 = tpu.matmul %40, %43, %cst_24 {dimension_numbers = #tpu.dot_dimension_numbers<[1], [0], [0], [1], [0, 0, 1, 1], [], []>} : vector<256x128xbf16>, vector<128x128xbf16>, vector<256x128xf32> -> vector<256x128xf32>
    %45 = arith.addf %39, %44 : vector<256x128xf32>
    %c1 = arith.constant 1 : index
    %c0_25 = arith.constant 0 : index
    %c0_26 = arith.constant 0 : index
    %46 = vector.load %arg5[%c1, %c0_25, %c0_26] : memref<6x256x1xf32, #tpu.memory_space<vmem>>, vector<1x256x1xf32>
    %47 = vector.shape_cast %46 : vector<1x256x1xf32> to vector<256x1xf32>
    %48 = vector.broadcast %47 : vector<256x1xf32> to vector<256x128xf32>
    %49 = arith.mulf %45, %48 : vector<256x128xf32>
    %50 = arith.addf %28, %49 : vector<256x128xf32>
    %c218 = arith.constant 218 : index
    %c0_27 = arith.constant 0 : index
    %51 = vector.load %arg8[%c218, %c0_27] : memref<896x128xbf16, #tpu.memory_space<vmem>>, vector<256x128xbf16>
    %c6 = arith.constant 6 : index
    %52 = arith.index_cast %7 : i32 to index
    %c0_28 = arith.constant 0 : index
    %53 = vector.load %arg4[%c6, %52, %c0_28] : memref<25x256x128xbf16, #tpu.memory_space<vmem>>, vector<1x128x128xbf16>
    %54 = vector.shape_cast %53 : vector<1x128x128xbf16> to vector<128x128xbf16>
    %cst_29 = arith.constant dense<0.000000e+00> : vector<256x128xf32>
    %55 = tpu.matmul %51, %54, %cst_29 {dimension_numbers = #tpu.dot_dimension_numbers<[1], [0], [0], [1], [0, 0, 1, 1], [], []>} : vector<256x128xbf16>, vector<128x128xbf16>, vector<256x128xf32> -> vector<256x128xf32>
    %c314 = arith.constant 314 : index
    %c0_30 = arith.constant 0 : index
    %56 = vector.load %arg8[%c314, %c0_30] : memref<896x128xbf16, #tpu.memory_space<vmem>>, vector<256x128xbf16>
    %c11 = arith.constant 11 : index
    %57 = arith.index_cast %7 : i32 to index
    %c0_31 = arith.constant 0 : index
    %58 = vector.load %arg4[%c11, %57, %c0_31] : memref<25x256x128xbf16, #tpu.memory_space<vmem>>, vector<1x128x128xbf16>
    %59 = vector.shape_cast %58 : vector<1x128x128xbf16> to vector<128x128xbf16>
    %cst_32 = arith.constant dense<0.000000e+00> : vector<256x128xf32>
    %60 = tpu.matmul %56, %59, %cst_32 {dimension_numbers = #tpu.dot_dimension_numbers<[1], [0], [0], [1], [0, 0, 1, 1], [], []>} : vector<256x128xbf16>, vector<128x128xbf16>, vector<256x128xf32> -> vector<256x128xf32>
    %61 = arith.addf %55, %60 : vector<256x128xf32>
    %c410 = arith.constant 410 : index
    %c0_33 = arith.constant 0 : index
    %62 = vector.load %arg8[%c410, %c0_33] : memref<896x128xbf16, #tpu.memory_space<vmem>>, vector<256x128xbf16>
    %c16 = arith.constant 16 : index
    %63 = arith.index_cast %7 : i32 to index
    %c0_34 = arith.constant 0 : index
    %64 = vector.load %arg4[%c16, %63, %c0_34] : memref<25x256x128xbf16, #tpu.memory_space<vmem>>, vector<1x128x128xbf16>
    %65 = vector.shape_cast %64 : vector<1x128x128xbf16> to vector<128x128xbf16>
    %cst_35 = arith.constant dense<0.000000e+00> : vector<256x128xf32>
    %66 = tpu.matmul %62, %65, %cst_35 {dimension_numbers = #tpu.dot_dimension_numbers<[1], [0], [0], [1], [0, 0, 1, 1], [], []>} : vector<256x128xbf16>, vector<128x128xbf16>, vector<256x128xf32> -> vector<256x128xf32>
    %67 = arith.addf %61, %66 : vector<256x128xf32>
    %c2 = arith.constant 2 : index
    %c0_36 = arith.constant 0 : index
    %c0_37 = arith.constant 0 : index
    %68 = vector.load %arg5[%c2, %c0_36, %c0_37] : memref<6x256x1xf32, #tpu.memory_space<vmem>>, vector<1x256x1xf32>
    %69 = vector.shape_cast %68 : vector<1x256x1xf32> to vector<256x1xf32>
    %70 = vector.broadcast %69 : vector<256x1xf32> to vector<256x128xf32>
    %71 = arith.mulf %67, %70 : vector<256x128xf32>
    %72 = arith.addf %50, %71 : vector<256x128xf32>
    %c32 = arith.constant 32 : index
    %c0_38 = arith.constant 0 : index
    %73 = vector.load %arg8[%c32, %c0_38] : memref<896x128xbf16, #tpu.memory_space<vmem>>, vector<256x128xbf16>
    %c1_39 = arith.constant 1 : index
    %74 = arith.index_cast %7 : i32 to index
    %c0_40 = arith.constant 0 : index
    %75 = vector.load %arg4[%c1_39, %74, %c0_40] : memref<25x256x128xbf16, #tpu.memory_space<vmem>>, vector<1x128x128xbf16>
    %76 = vector.shape_cast %75 : vector<1x128x128xbf16> to vector<128x128xbf16>
    %cst_41 = arith.constant dense<0.000000e+00> : vector<256x128xf32>
    %77 = tpu.matmul %73, %76, %cst_41 {dimension_numbers = #tpu.dot_dimension_numbers<[1], [0], [0], [1], [0, 0, 1, 1], [], []>} : vector<256x128xbf16>, vector<128x128xbf16>, vector<256x128xf32> -> vector<256x128xf32>
    %c128 = arith.constant 128 : index
    %c0_42 = arith.constant 0 : index
    %78 = vector.load %arg8[%c128, %c0_42] : memref<896x128xbf16, #tpu.memory_space<vmem>>, vector<256x128xbf16>
    %c4 = arith.constant 4 : index
    %79 = arith.index_cast %7 : i32 to index
    %c0_43 = arith.constant 0 : index
    %80 = vector.load %arg4[%c4, %79, %c0_43] : memref<25x256x128xbf16, #tpu.memory_space<vmem>>, vector<1x128x128xbf16>
    %81 = vector.shape_cast %80 : vector<1x128x128xbf16> to vector<128x128xbf16>
    %cst_44 = arith.constant dense<0.000000e+00> : vector<256x128xf32>
    %82 = tpu.matmul %78, %81, %cst_44 {dimension_numbers = #tpu.dot_dimension_numbers<[1], [0], [0], [1], [0, 0, 1, 1], [], []>} : vector<256x128xbf16>, vector<128x128xbf16>, vector<256x128xf32> -> vector<256x128xf32>
    %83 = arith.addf %77, %82 : vector<256x128xf32>
    %c224 = arith.constant 224 : index
    %c0_45 = arith.constant 0 : index
    %84 = vector.load %arg8[%c224, %c0_45] : memref<896x128xbf16, #tpu.memory_space<vmem>>, vector<256x128xbf16>
    %c7 = arith.constant 7 : index
    %85 = arith.index_cast %7 : i32 to index
    %c0_46 = arith.constant 0 : index
    %86 = vector.load %arg4[%c7, %85, %c0_46] : memref<25x256x128xbf16, #tpu.memory_space<vmem>>, vector<1x128x128xbf16>
    %87 = vector.shape_cast %86 : vector<1x128x128xbf16> to vector<128x128xbf16>
    %cst_47 = arith.constant dense<0.000000e+00> : vector<256x128xf32>
    %88 = tpu.matmul %84, %87, %cst_47 {dimension_numbers = #tpu.dot_dimension_numbers<[1], [0], [0], [1], [0, 0, 1, 1], [], []>} : vector<256x128xbf16>, vector<128x128xbf16>, vector<256x128xf32> -> vector<256x128xf32>
    %89 = arith.addf %83, %88 : vector<256x128xf32>
    %c320_48 = arith.constant 320 : index
    %c0_49 = arith.constant 0 : index
    %90 = vector.load %arg8[%c320_48, %c0_49] : memref<896x128xbf16, #tpu.memory_space<vmem>>, vector<256x128xbf16>
    %c12 = arith.constant 12 : index
    %91 = arith.index_cast %7 : i32 to index
    %c0_50 = arith.constant 0 : index
    %92 = vector.load %arg4[%c12, %91, %c0_50] : memref<25x256x128xbf16, #tpu.memory_space<vmem>>, vector<1x128x128xbf16>
    %93 = vector.shape_cast %92 : vector<1x128x128xbf16> to vector<128x128xbf16>
    %cst_51 = arith.constant dense<0.000000e+00> : vector<256x128xf32>
    %94 = tpu.matmul %90, %93, %cst_51 {dimension_numbers = #tpu.dot_dimension_numbers<[1], [0], [0], [1], [0, 0, 1, 1], [], []>} : vector<256x128xbf16>, vector<128x128xbf16>, vector<256x128xf32> -> vector<256x128xf32>
    %95 = arith.addf %89, %94 : vector<256x128xf32>
    %c416 = arith.constant 416 : index
    %c0_52 = arith.constant 0 : index
    %96 = vector.load %arg8[%c416, %c0_52] : memref<896x128xbf16, #tpu.memory_space<vmem>>, vector<256x128xbf16>
    %c17 = arith.constant 17 : index
    %97 = arith.index_cast %7 : i32 to index
    %c0_53 = arith.constant 0 : index
    %98 = vector.load %arg4[%c17, %97, %c0_53] : memref<25x256x128xbf16, #tpu.memory_space<vmem>>, vector<1x128x128xbf16>
    %99 = vector.shape_cast %98 : vector<1x128x128xbf16> to vector<128x128xbf16>
    %cst_54 = arith.constant dense<0.000000e+00> : vector<256x128xf32>
    %100 = tpu.matmul %96, %99, %cst_54 {dimension_numbers = #tpu.dot_dimension_numbers<[1], [0], [0], [1], [0, 0, 1, 1], [], []>} : vector<256x128xbf16>, vector<128x128xbf16>, vector<256x128xf32> -> vector<256x128xf32>
    %101 = arith.addf %95, %100 : vector<256x128xf32>
    %c512 = arith.constant 512 : index
    %c0_55 = arith.constant 0 : index
    %102 = vector.load %arg8[%c512, %c0_55] : memref<896x128xbf16, #tpu.memory_space<vmem>>, vector<256x128xbf16>
    %c20 = arith.constant 20 : index
    %103 = arith.index_cast %7 : i32 to index
    %c0_56 = arith.constant 0 : index
    %104 = vector.load %arg4[%c20, %103, %c0_56] : memref<25x256x128xbf16, #tpu.memory_space<vmem>>, vector<1x128x128xbf16>
    %105 = vector.shape_cast %104 : vector<1x128x128xbf16> to vector<128x128xbf16>
    %cst_57 = arith.constant dense<0.000000e+00> : vector<256x128xf32>
    %106 = tpu.matmul %102, %105, %cst_57 {dimension_numbers = #tpu.dot_dimension_numbers<[1], [0], [0], [1], [0, 0, 1, 1], [], []>} : vector<256x128xbf16>, vector<128x128xbf16>, vector<256x128xf32> -> vector<256x128xf32>
    %107 = arith.addf %101, %106 : vector<256x128xf32>
    %c608 = arith.constant 608 : index
    %c0_58 = arith.constant 0 : index
    %108 = vector.load %arg8[%c608, %c0_58] : memref<896x128xbf16, #tpu.memory_space<vmem>>, vector<256x128xbf16>
    %c23 = arith.constant 23 : index
    %109 = arith.index_cast %7 : i32 to index
    %c0_59 = arith.constant 0 : index
    %110 = vector.load %arg4[%c23, %109, %c0_59] : memref<25x256x128xbf16, #tpu.memory_space<vmem>>, vector<1x128x128xbf16>
    %111 = vector.shape_cast %110 : vector<1x128x128xbf16> to vector<128x128xbf16>
    %cst_60 = arith.constant dense<0.000000e+00> : vector<256x128xf32>
    %112 = tpu.matmul %108, %111, %cst_60 {dimension_numbers = #tpu.dot_dimension_numbers<[1], [0], [0], [1], [0, 0, 1, 1], [], []>} : vector<256x128xbf16>, vector<128x128xbf16>, vector<256x128xf32> -> vector<256x128xf32>
    %113 = arith.addf %107, %112 : vector<256x128xf32>
    %114 = arith.addf %72, %113 : vector<256x128xf32>
    %c230 = arith.constant 230 : index
    %c0_61 = arith.constant 0 : index
    %115 = vector.load %arg8[%c230, %c0_61] : memref<896x128xbf16, #tpu.memory_space<vmem>>, vector<256x128xbf16>
    %c8 = arith.constant 8 : index
    %116 = arith.index_cast %7 : i32 to index
    %c0_62 = arith.constant 0 : index
    %117 = vector.load %arg4[%c8, %116, %c0_62] : memref<25x256x128xbf16, #tpu.memory_space<vmem>>, vector<1x128x128xbf16>
    %118 = vector.shape_cast %117 : vector<1x128x128xbf16> to vector<128x128xbf16>
    %cst_63 = arith.constant dense<0.000000e+00> : vector<256x128xf32>
    %119 = tpu.matmul %115, %118, %cst_63 {dimension_numbers = #tpu.dot_dimension_numbers<[1], [0], [0], [1], [0, 0, 1, 1], [], []>} : vector<256x128xbf16>, vector<128x128xbf16>, vector<256x128xf32> -> vector<256x128xf32>
    %c326 = arith.constant 326 : index
    %c0_64 = arith.constant 0 : index
    %120 = vector.load %arg8[%c326, %c0_64] : memref<896x128xbf16, #tpu.memory_space<vmem>>, vector<256x128xbf16>
    %c13 = arith.constant 13 : index
    %121 = arith.index_cast %7 : i32 to index
    %c0_65 = arith.constant 0 : index
    %122 = vector.load %arg4[%c13, %121, %c0_65] : memref<25x256x128xbf16, #tpu.memory_space<vmem>>, vector<1x128x128xbf16>
    %123 = vector.shape_cast %122 : vector<1x128x128xbf16> to vector<128x128xbf16>
    %cst_66 = arith.constant dense<0.000000e+00> : vector<256x128xf32>
    %124 = tpu.matmul %120, %123, %cst_66 {dimension_numbers = #tpu.dot_dimension_numbers<[1], [0], [0], [1], [0, 0, 1, 1], [], []>} : vector<256x128xbf16>, vector<128x128xbf16>, vector<256x128xf32> -> vector<256x128xf32>
    %125 = arith.addf %119, %124 : vector<256x128xf32>
    %c422 = arith.constant 422 : index
    %c0_67 = arith.constant 0 : index
    %126 = vector.load %arg8[%c422, %c0_67] : memref<896x128xbf16, #tpu.memory_space<vmem>>, vector<256x128xbf16>
    %c18 = arith.constant 18 : index
    %127 = arith.index_cast %7 : i32 to index
    %c0_68 = arith.constant 0 : index
    %128 = vector.load %arg4[%c18, %127, %c0_68] : memref<25x256x128xbf16, #tpu.memory_space<vmem>>, vector<1x128x128xbf16>
    %129 = vector.shape_cast %128 : vector<1x128x128xbf16> to vector<128x128xbf16>
    %cst_69 = arith.constant dense<0.000000e+00> : vector<256x128xf32>
    %130 = tpu.matmul %126, %129, %cst_69 {dimension_numbers = #tpu.dot_dimension_numbers<[1], [0], [0], [1], [0, 0, 1, 1], [], []>} : vector<256x128xbf16>, vector<128x128xbf16>, vector<256x128xf32> -> vector<256x128xf32>
    %131 = arith.addf %125, %130 : vector<256x128xf32>
    %c3_70 = arith.constant 3 : index
    %c0_71 = arith.constant 0 : index
    %c0_72 = arith.constant 0 : index
    %132 = vector.load %arg5[%c3_70, %c0_71, %c0_72] : memref<6x256x1xf32, #tpu.memory_space<vmem>>, vector<1x256x1xf32>
    %133 = vector.shape_cast %132 : vector<1x256x1xf32> to vector<256x1xf32>
    %134 = vector.broadcast %133 : vector<256x1xf32> to vector<256x128xf32>
    %135 = arith.mulf %131, %134 : vector<256x128xf32>
    %136 = arith.addf %114, %135 : vector<256x128xf32>
    %c140 = arith.constant 140 : index
    %c0_73 = arith.constant 0 : index
    %137 = vector.load %arg8[%c140, %c0_73] : memref<896x128xbf16, #tpu.memory_space<vmem>>, vector<256x128xbf16>
    %c5 = arith.constant 5 : index
    %138 = arith.index_cast %7 : i32 to index
    %c0_74 = arith.constant 0 : index
    %139 = vector.load %arg4[%c5, %138, %c0_74] : memref<25x256x128xbf16, #tpu.memory_space<vmem>>, vector<1x128x128xbf16>
    %140 = vector.shape_cast %139 : vector<1x128x128xbf16> to vector<128x128xbf16>
    %cst_75 = arith.constant dense<0.000000e+00> : vector<256x128xf32>
    %141 = tpu.matmul %137, %140, %cst_75 {dimension_numbers = #tpu.dot_dimension_numbers<[1], [0], [0], [1], [0, 0, 1, 1], [], []>} : vector<256x128xbf16>, vector<128x128xbf16>, vector<256x128xf32> -> vector<256x128xf32>
    %c332 = arith.constant 332 : index
    %c0_76 = arith.constant 0 : index
    %142 = vector.load %arg8[%c332, %c0_76] : memref<896x128xbf16, #tpu.memory_space<vmem>>, vector<256x128xbf16>
    %c14_77 = arith.constant 14 : index
    %143 = arith.index_cast %7 : i32 to index
    %c0_78 = arith.constant 0 : index
    %144 = vector.load %arg4[%c14_77, %143, %c0_78] : memref<25x256x128xbf16, #tpu.memory_space<vmem>>, vector<1x128x128xbf16>
    %145 = vector.shape_cast %144 : vector<1x128x128xbf16> to vector<128x128xbf16>
    %cst_79 = arith.constant dense<0.000000e+00> : vector<256x128xf32>
    %146 = tpu.matmul %142, %145, %cst_79 {dimension_numbers = #tpu.dot_dimension_numbers<[1], [0], [0], [1], [0, 0, 1, 1], [], []>} : vector<256x128xbf16>, vector<128x128xbf16>, vector<256x128xf32> -> vector<256x128xf32>
    %147 = arith.addf %141, %146 : vector<256x128xf32>
    %c524 = arith.constant 524 : index
    %c0_80 = arith.constant 0 : index
    %148 = vector.load %arg8[%c524, %c0_80] : memref<896x128xbf16, #tpu.memory_space<vmem>>, vector<256x128xbf16>
    %c21 = arith.constant 21 : index
    %149 = arith.index_cast %7 : i32 to index
    %c0_81 = arith.constant 0 : index
    %150 = vector.load %arg4[%c21, %149, %c0_81] : memref<25x256x128xbf16, #tpu.memory_space<vmem>>, vector<1x128x128xbf16>
    %151 = vector.shape_cast %150 : vector<1x128x128xbf16> to vector<128x128xbf16>
    %cst_82 = arith.constant dense<0.000000e+00> : vector<256x128xf32>
    %152 = tpu.matmul %148, %151, %cst_82 {dimension_numbers = #tpu.dot_dimension_numbers<[1], [0], [0], [1], [0, 0, 1, 1], [], []>} : vector<256x128xbf16>, vector<128x128xbf16>, vector<256x128xf32> -> vector<256x128xf32>
    %153 = arith.addf %147, %152 : vector<256x128xf32>
    %c4_83 = arith.constant 4 : index
    %c0_84 = arith.constant 0 : index
    %c0_85 = arith.constant 0 : index
    %154 = vector.load %arg5[%c4_83, %c0_84, %c0_85] : memref<6x256x1xf32, #tpu.memory_space<vmem>>, vector<1x256x1xf32>
    %155 = vector.shape_cast %154 : vector<1x256x1xf32> to vector<256x1xf32>
    %156 = vector.broadcast %155 : vector<256x1xf32> to vector<256x128xf32>
    %157 = arith.mulf %153, %156 : vector<256x128xf32>
    %158 = arith.addf %136, %157 : vector<256x128xf32>
    %c50 = arith.constant 50 : index
    %c0_86 = arith.constant 0 : index
    %159 = vector.load %arg8[%c50, %c0_86] : memref<896x128xbf16, #tpu.memory_space<vmem>>, vector<256x128xbf16>
    %c2_87 = arith.constant 2 : index
    %160 = arith.index_cast %7 : i32 to index
    %c0_88 = arith.constant 0 : index
    %161 = vector.load %arg4[%c2_87, %160, %c0_88] : memref<25x256x128xbf16, #tpu.memory_space<vmem>>, vector<1x128x128xbf16>
    %162 = vector.shape_cast %161 : vector<1x128x128xbf16> to vector<128x128xbf16>
    %cst_89 = arith.constant dense<0.000000e+00> : vector<256x128xf32>
    %163 = tpu.matmul %159, %162, %cst_89 {dimension_numbers = #tpu.dot_dimension_numbers<[1], [0], [0], [1], [0, 0, 1, 1], [], []>} : vector<256x128xbf16>, vector<128x128xbf16>, vector<256x128xf32> -> vector<256x128xf32>
    %c338 = arith.constant 338 : index
    %c0_90 = arith.constant 0 : index
    %164 = vector.load %arg8[%c338, %c0_90] : memref<896x128xbf16, #tpu.memory_space<vmem>>, vector<256x128xbf16>
    %c15 = arith.constant 15 : index
    %165 = arith.index_cast %7 : i32 to index
    %c0_91 = arith.constant 0 : index
    %166 = vector.load %arg4[%c15, %165, %c0_91] : memref<25x256x128xbf16, #tpu.memory_space<vmem>>, vector<1x128x128xbf16>
    %167 = vector.shape_cast %166 : vector<1x128x128xbf16> to vector<128x128xbf16>
    %cst_92 = arith.constant dense<0.000000e+00> : vector<256x128xf32>
    %168 = tpu.matmul %164, %167, %cst_92 {dimension_numbers = #tpu.dot_dimension_numbers<[1], [0], [0], [1], [0, 0, 1, 1], [], []>} : vector<256x128xbf16>, vector<128x128xbf16>, vector<256x128xf32> -> vector<256x128xf32>
    %169 = arith.addf %163, %168 : vector<256x128xf32>
    %c626 = arith.constant 626 : index
    %c0_93 = arith.constant 0 : index
    %170 = vector.load %arg8[%c626, %c0_93] : memref<896x128xbf16, #tpu.memory_space<vmem>>, vector<256x128xbf16>
    %c24 = arith.constant 24 : index
    %171 = arith.index_cast %7 : i32 to index
    %c0_94 = arith.constant 0 : index
    %172 = vector.load %arg4[%c24, %171, %c0_94] : memref<25x256x128xbf16, #tpu.memory_space<vmem>>, vector<1x128x128xbf16>
    %173 = vector.shape_cast %172 : vector<1x128x128xbf16> to vector<128x128xbf16>
    %cst_95 = arith.constant dense<0.000000e+00> : vector<256x128xf32>
    %174 = tpu.matmul %170, %173, %cst_95 {dimension_numbers = #tpu.dot_dimension_numbers<[1], [0], [0], [1], [0, 0, 1, 1], [], []>} : vector<256x128xbf16>, vector<128x128xbf16>, vector<256x128xf32> -> vector<256x128xf32>
    %175 = arith.addf %169, %174 : vector<256x128xf32>
    %c5_96 = arith.constant 5 : index
    %c0_97 = arith.constant 0 : index
    %c0_98 = arith.constant 0 : index
    %176 = vector.load %arg5[%c5_96, %c0_97, %c0_98] : memref<6x256x1xf32, #tpu.memory_space<vmem>>, vector<1x256x1xf32>
    %177 = vector.shape_cast %176 : vector<1x256x1xf32> to vector<256x1xf32>
    %178 = vector.broadcast %177 : vector<256x1xf32> to vector<256x128xf32>
    %179 = arith.mulf %175, %178 : vector<256x128xf32>
    %180 = arith.addf %158, %179 : vector<256x128xf32>
    %c0_99 = arith.constant 0 : index
    %c0_100 = arith.constant 0 : index
    %c0_101 = arith.constant 0 : index
    %181 = vector.load %arg7[%c0_99, %c0_100, %c0_101] : memref<1x256x128xf32, #tpu.memory_space<vmem>>, vector<1x256x128xf32>
    %182 = vector.shape_cast %181 : vector<1x256x128xf32> to vector<256x128xf32>
    %183 = arith.addf %182, %180 : vector<256x128xf32>
    %c0_102 = arith.constant 0 : index
    %c0_103 = arith.constant 0 : index
    %c0_104 = arith.constant 0 : index
    %184 = vector.load %arg7[%c0_102, %c0_103, %c0_104] : memref<1x256x128xf32, #tpu.memory_space<vmem>>, vector<1x256x128xf32>
    %185 = vector.shape_cast %184 : vector<1x256x128xf32> to vector<256x128xf32>
    %186 = vector.shape_cast %183 : vector<256x128xf32> to vector<1x256x128xf32>
    tpu.vector_store %arg7[%c0_102, %c0_103, %c0_104], %186 {strides = array<i32>} : memref<1x256x128xf32, #tpu.memory_space<vmem>>, vector<1x256x128xf32>,
    %c1_i32 = arith.constant 1 : i32
    %187 = arith.cmpi eq, %arg2, %c1_i32 : i32
    %188 = arith.extui %187 : i1 to i32
    %c0_i32_105 = arith.constant 0 : i32
    %189 = arith.cmpi ne, %188, %c0_i32_105 : i32
    scf.if %189 {
      %c0_106 = arith.constant 0 : index
      %c0_107 = arith.constant 0 : index
      %c0_108 = arith.constant 0 : index
      %190 = vector.load %arg7[%c0_106, %c0_107, %c0_108] : memref<1x256x128xf32, #tpu.memory_space<vmem>>, vector<1x256x128xf32>
      %191 = vector.shape_cast %190 : vector<1x256x128xf32> to vector<256x128xf32>
      %c0_109 = arith.constant 0 : index
      %c0_110 = arith.constant 0 : index
      %c0_111 = arith.constant 0 : index
      %192 = vector.load %arg6[%c0_109, %c0_110, %c0_111] : memref<1x1x128xf32, #tpu.memory_space<vmem>>, vector<1x1x128xf32>
      %193 = vector.shape_cast %192 : vector<1x1x128xf32> to vector<1x128xf32>
      %194 = vector.broadcast %193 : vector<1x128xf32> to vector<256x128xf32>
      %195 = arith.addf %191, %194 : vector<256x128xf32>
      %cst_112 = arith.constant 0.000000e+00 : f32
      %196 = vector.broadcast %cst_112 : f32 to vector<256x128xf32>
      %197 = arith.maximumf %195, %196 : vector<256x128xf32>
      %c0_113 = arith.constant 0 : index
      %c0_114 = arith.constant 0 : index
      %c0_115 = arith.constant 0 : index
      %198 = vector.load %arg7[%c0_113, %c0_114, %c0_115] : memref<1x256x128xf32, #tpu.memory_space<vmem>>, vector<1x256x128xf32>
      %199 = vector.shape_cast %198 : vector<1x256x128xf32> to vector<256x128xf32>
      %200 = vector.shape_cast %197 : vector<256x128xf32> to vector<1x256x128xf32>
      tpu.vector_store %arg7[%c0_113, %c0_114, %c0_115], %200 {strides = array<i32>} : memref<1x256x128xf32, #tpu.memory_space<vmem>>, vector<1x256x128xf32>,
    } else {
    }
    return
  }
  func.func @transform_0(%arg0: i32, %arg1: i32, %arg2: i32) -> (i32, i32, i32) {
    %c0_i32 = arith.constant 0 : i32
    %c0_i32_0 = arith.constant 0 : i32
    return %arg1, %c0_i32, %arg2 : i32, i32, i32
  }
  func.func @transform_1(%arg0: i32, %arg1: i32, %arg2: i32) -> (i32, i32, i32) {
    %c0_i32 = arith.constant 0 : i32
    %c0_i32_0 = arith.constant 0 : i32
    %c0_i32_1 = arith.constant 0 : i32
    return %c0_i32, %c0_i32_0, %arg0 : i32, i32, i32
  }
  func.func @transform_2(%arg0: i32, %arg1: i32, %arg2: i32) -> (i32, i32, i32) {
    %c0_i32 = arith.constant 0 : i32
    %c0_i32_0 = arith.constant 0 : i32
    %c0_i32_1 = arith.constant 0 : i32
    %c0_i32_2 = arith.constant 0 : i32
    return %c0_i32, %c0_i32_0, %c0_i32_1 : i32, i32, i32
  }
  func.func @transform_3(%arg0: i32, %arg1: i32, %arg2: i32) -> (i32, i32, i32) {
    %c0_i32 = arith.constant 0 : i32
    %c0_i32_0 = arith.constant 0 : i32
    return %arg1, %c0_i32, %arg0 : i32, i32, i32
  }
  func.func @transform_4(%arg0: i32, %arg1: i32, %arg2: i32) -> (i32, i32, i32) {
    %c0_i32 = arith.constant 0 : i32
    %c0_i32_0 = arith.constant 0 : i32
    return %arg1, %c0_i32, %arg0 : i32, i32, i32
  }
}

</mosaic_0001>

<llo_original>
// kernel: _lambda_.1
$region0: #{_lambda_.1}
  #allocation0 [shape = 'u32[]', space=smem, size = 0x4, offset = 0x4, fixed_abs, tag = 'smem constant byte address 0x4 - core index']
  #allocation1 [shape = 'u32[72,128]{1,0:T(1,128)}', space=vmem, size = 0x9000, scoped, tag = 'internal scratch']
  #allocation2 [shape = 'bf16[896,128]{1,0:T(8,128)(2,1)}', space=vmem, size = 0x38000, scoped, tag = 'scratch operand']
  %s0 = inlined_call_operand.vmem [shape: bf16[2,256,256], index: 0, kind: input, shape index: {}]
  %s1 = inlined_call_operand.hbm [shape: bf16[25,256,128], index: 1, kind: input, shape index: {}]
  %s2 = inlined_call_operand.hbm [shape: f32[6,256,1], index: 2, kind: input, shape index: {}]
  %s3 = inlined_call_operand.vmem [shape: f32[2,1,128], index: 3, kind: input, shape index: {}]
  %s4 = inlined_call_operand.hbm [shape: f32[2,256,128], index: 4, kind: output, shape index: {}]
  %s5 = sld [smem:[#allocation0]]
  $region106: #{_lambda_.1} parent=0
    _
  %s7 = ssub.s32 1, %s5
  %s8 = scalar_select 0, %s7, %s5
  $region1: #{_lambda_.1} parent=0
    #allocation3 [shape = 'u8[131072]{0}', space=vmem, size = 0x20000, scoped, tag = 'input window, operand 0']
    #allocation4 [shape = 'u8[1638400]{0}', space=vmem, size = 0x190000, scoped, tag = 'input window, operand 1, single buffered']
    #allocation5 [shape = 's32[2]{0}', space=sflag, size = 0x8, scoped, tag = 'scoped memory for _lambda_.1']
    #allocation6 [shape = 's32[2]{0}', space=sflag, size = 0x8, scoped, tag = 'scoped memory for _lambda_.1']
    #allocation7 [shape = 'u8[786432]{0}', space=vmem, size = 0xc0000, scoped, tag = 'input window, operand 2, single buffered']
    #allocation8 [shape = 's32[1]{0}', space=sflag, size = 0x4, scoped, tag = 'scoped memory for _lambda_.1']
    #allocation9 [shape = 'u8[262144]{0}', space=vmem, size = 0x40000, scoped, tag = 'output window, operand 0']
    %9 = vsyncpa [#allocation5], 0
    %10 = vsyncpa [#allocation8], 0
    %11 = vsyncpa [#allocation6], 0
    %s12 = scalar_lea.sflag [#allocation6], 1
    %13 = vsyncpa %s12, 0
    loop: start=0, step=1, limit=6
    $region2: #{_lambda_.1} parent=1 // loop_pre_header
      _
    $region3: #{_lambda_.1} parent=1 // loop_header
      %s15 = sphi 0, %s19
      %p16 = scmp.ge.s32.totalorder %s15, 6
      %s22 = sphi 0, %s41
      %s23 = sphi 0, %s37
      %s24 = sphi 0, %s33
      %s25 = sphi 0, %s22
      %s26 = sphi 0, %s23
      %s27 = sphi 0, %s24
      %s28 = sphi 0, %s25
      %s29 = sphi 0, %s26
      %s30 = sphi 0, %s27
      %s46 = sphi 0, %s48
      %s49 = sphi 0, %s46
      %s50 = sphi 0, %s49
      %s66 = sphi 0, %s50
      %s72 = sphi 0, %s74
      %s75 = sphi 0, %s72
      %s76 = sphi 0, %s75
      %s92 = sphi 0, %s76
      %s96 = sphi 0, %s96
      %s98 = sphi 0, %s96
      %s99 = sphi 0, %s98
      %s113 = sphi 0, %s99
      %s121 = sphi 0, %s123
      %s124 = sphi 0, %s121
      %s125 = sphi 0, %s124
      %s141 = sphi 0, %s125
      %s149 = sphi 0, %s151
      %s152 = sphi 0, %s149
      %s153 = sphi 0, %s152
      %s169 = sphi 0, %s153
    $region4: #{_lambda_.1} parent=1 // loop_header_branch
      %18 = sbr.rel (%p16) target = $region8
    $region5: #{_lambda_.1} parent=1 // loop_body
      %s20 = ssub.s32 %s15, 1
      %s21 = ssub.s32 %s15, 2
      %s31 = sadd.s32 1, %s24
      %p32 = scmp.ge.s32.totalorder %s31, 2
      %s33 = scalar_select %p32, 0, %s31
      %s34 = sadd.s32 1, %s23
      %s35 = scalar_select %p32, %s34, %s23
      %p36 = scmp.ge.s32.totalorder %s35, 2
      %s37 = scalar_select %p36, 0, %s35
      %s38 = sadd.s32 1, %s22
      %s39 = scalar_select %p36, %s38, %s22
      %p40 = scmp.ge.s32.totalorder %s39, 1
      %s41 = scalar_select %p40, 0, %s39
      %s42 = ssub.s32 %s23, %s37
      %s43 = ssub.s32 %s24, %s33
      %s44 = sor.u32 %s42, %s43
      %p45 = scmp.eq.s32.totalorder %s44, 0
      %s47 = sadd.s32 %s46, 1
      %s48 = scalar_select %p45, %s46, %s47
      %p51 = pneg %p45
      %p52 = scmp.eq.s32.totalorder %s15, 3
      %p53 = por %p51, %p52
      %p54 = scmp.ne.s32.totalorder %s46, %s49
      %p55 = scmp.eq.s32.totalorder %s15, 0
      %p56 = por %p54, %p55
      %p57 = scmp.ne.s32.totalorder %s46, %s49
      %p58 = scmp.eq.s32.totalorder %s20, 3
      %p59 = por %p57, %p58
      %p60 = scmp.ne.s32.totalorder %s49, %s50
      %p61 = scmp.eq.s32.totalorder %s20, 0
      %p62 = por %p60, %p61
      %p63 = scmp.ne.s32.totalorder %s49, %s50
      %p64 = scmp.eq.s32.totalorder %s21, 3
      %p65 = por %p63, %p64
      %p67 = scmp.ne.s32.totalorder %s50, %s66
      %p68 = scmp.eq.s32.totalorder %s21, 0
      %p69 = por %p67, %p68
      %s70 = ssub.s32 %s22, %s41
      %p71 = scmp.eq.s32.totalorder %s70, 0
      %s73 = sadd.s32 %s72, 1
      %s74 = scalar_select %p71, %s72, %s73
      %p77 = pneg %p71
      %p78 = scmp.eq.s32.totalorder %s15, 3
      %p79 = por %p77, %p78
      %p80 = scmp.ne.s32.totalorder %s72, %s75
      %p81 = scmp.eq.s32.totalorder %s15, 0
      %p82 = por %p80, %p81
      %p83 = scmp.ne.s32.totalorder %s72, %s75
      %p84 = scmp.eq.s32.totalorder %s20, 3
      %p85 = por %p83, %p84
      %p86 = scmp.ne.s32.totalorder %s75, %s76
      %p87 = scmp.eq.s32.totalorder %s20, 0
      %p88 = por %p86, %p87
      %p89 = scmp.ne.s32.totalorder %s75, %s76
      %p90 = scmp.eq.s32.totalorder %s21, 3
      %p91 = por %p89, %p90
      %p93 = scmp.ne.s32.totalorder %s76, %s92
      %p94 = scmp.eq.s32.totalorder %s21, 0
      %p95 = por %p93, %p94
      %s97 = sadd.s32 %s96, 1
      %p100 = scmp.eq.s32.totalorder %s15, 3
      %p101 = scmp.ne.s32.totalorder %s96, %s98
      %p102 = scmp.eq.s32.totalorder %s15, 0
      %p103 = por %p101, %p102
      %p104 = scmp.ne.s32.totalorder %s96, %s98
      %p105 = scmp.eq.s32.totalorder %s20, 3
      %p106 = por %p104, %p105
      %p107 = scmp.ne.s32.totalorder %s98, %s99
      %p108 = scmp.eq.s32.totalorder %s20, 0
      %p109 = por %p107, %p108
      %p110 = scmp.ne.s32.totalorder %s98, %s99
      %p111 = scmp.eq.s32.totalorder %s21, 3
      %p112 = por %p110, %p111
      %p114 = scmp.ne.s32.totalorder %s99, %s113
      %p115 = scmp.eq.s32.totalorder %s21, 0
      %p116 = por %p114, %p115
      %s117 = ssub.s32 %s23, %s37
      %s118 = ssub.s32 %s22, %s41
      %s119 = sor.u32 %s117, %s118
      %p120 = scmp.eq.s32.totalorder %s119, 0
      %s122 = sadd.s32 %s121, 1
      %s123 = scalar_select %p120, %s121, %s122
      %p126 = pneg %p120
      %p127 = scmp.eq.s32.totalorder %s15, 3
      %p128 = por %p126, %p127
      %p129 = scmp.ne.s32.totalorder %s121, %s124
      %p130 = scmp.eq.s32.totalorder %s15, 0
      %p131 = por %p129, %p130
      %p132 = scmp.ne.s32.totalorder %s121, %s124
      %p133 = scmp.eq.s32.totalorder %s20, 3
      %p134 = por %p132, %p133
      %p135 = scmp.ne.s32.totalorder %s124, %s125
      %p136 = scmp.eq.s32.totalorder %s20, 0
      %p137 = por %p135, %p136
      %p138 = scmp.ne.s32.totalorder %s124, %s125
      %p139 = scmp.eq.s32.totalorder %s21, 3
      %p140 = por %p138, %p139
      %p142 = scmp.ne.s32.totalorder %s125, %s141
      %p143 = scmp.eq.s32.totalorder %s21, 0
      %p144 = por %p142, %p143
      %s145 = ssub.s32 %s23, %s37
      %s146 = ssub.s32 %s22, %s41
      %s147 = sor.u32 %s145, %s146
      %p148 = scmp.eq.s32.totalorder %s147, 0
      %s150 = sadd.s32 %s149, 1
      %s151 = scalar_select %p148, %s149, %s150
      %p154 = pneg %p148
      %p155 = scmp.eq.s32.totalorder %s15, 3
      %p156 = por %p154, %p155
      %p157 = scmp.ne.s32.totalorder %s149, %s152
      %p158 = scmp.eq.s32.totalorder %s15, 0
      %p159 = por %p157, %p158
      %p160 = scmp.ne.s32.totalorder %s149, %s152
      %p161 = scmp.eq.s32.totalorder %s20, 3
      %p162 = por %p160, %p161
      %p163 = scmp.ne.s32.totalorder %s152, %s153
      %p164 = scmp.eq.s32.totalorder %s20, 0
      %p165 = por %p163, %p164
      %p166 = scmp.ne.s32.totalorder %s152, %s153
      %p167 = scmp.eq.s32.totalorder %s21, 3
      %p168 = por %p166, %p167
      %p170 = scmp.ne.s32.totalorder %s153, %s169
      %p171 = scmp.eq.s32.totalorder %s21, 0
      %p172 = por %p170, %p171
      %p173 = scmp.le.s32.totalorder 1, %s15
      %p174 = scmp.lt.s32.totalorder %s15, 5
      %p175 = pnand %p173, %p174
      %p176 = pneg %p175
      // Predicated region
      $region9: #{_lambda_.1} parent=5 // pred_check
        _
      $region10: #{_lambda_.1} parent=5 // pred_check_branch
        %178 = sbr.rel (%p175) target = $region12
      $region11: #{_lambda_.1} parent=5 // pred_region
        %s179 = ssub.s32 %s15, 1
        // Predicated region
        $region13: #{_lambda_.1} parent=11 // pred_check
          %p180 = pneg %p88
        $region14: #{_lambda_.1} parent=11 // pred_check_branch
          %182 = sbr.rel (%p180) target = $region16
        $region15: #{_lambda_.1} parent=11 // pred_region
          %184 = vsyncadd [#allocation5], 0
          %s185 = smul.addr %s25, 4
          %s186 = scalar_lea.hbm %s1, %s185
          %s187 = sshll.u32 %s186, 4
          %s188 = int_to_ptr.hbm [resolvable:$true] %s187
          %s189 = sshll.u32 [#allocation4], 4
          %s190 = int_to_ptr.vmem [resolvable:$true] %s189
          %195 = dma.hbm_to_vmem [thread:$0]  %s188, 51200, %s190, [#allocation5], 64, 64, 4
        $region16: #{_lambda_.1} parent=11 // pred_fallthru
          _
        // Predicated region
        $region17: #{_lambda_.1} parent=11 // pred_check
          %p196 = pneg %p109
        $region18: #{_lambda_.1} parent=11 // pred_check_branch
          %198 = sbr.rel (%p196) target = $region20
        $region19: #{_lambda_.1} parent=11 // pred_region
          %200 = vsyncadd [#allocation8], 0
          %s201 = sshll.u32 %s2, 4
          %s202 = int_to_ptr.hbm [resolvable:$true] %s201
          %s203 = sshll.u32 [#allocation7], 4
          %s204 = int_to_ptr.vmem [resolvable:$true] %s203
          %209 = dma.hbm_to_vmem [thread:$0]  %s202, 24576, %s204, [#allocation8], 128, 128, 8
        $region20: #{_lambda_.1} parent=11 // pred_fallthru
          _
      $region12: #{_lambda_.1} parent=5 // pred_fallthru
        _
      %p210 = scmp.lt.s32.totalorder %s15, 4
      // Predicated region
      $region21: #{_lambda_.1} parent=5 // pred_check
        %p211 = pneg %p210
      $region22: #{_lambda_.1} parent=5 // pred_check_branch
        %213 = sbr.rel (%p211) target = $region24
      $region23: #{_lambda_.1} parent=5 // pred_region
        // Predicated region
        $region25: #{_lambda_.1} parent=23 // pred_check
          %p214 = pneg %p56
        $region26: #{_lambda_.1} parent=23 // pred_check_branch
          %216 = sbr.rel (%p214) target = $region28
        $region27: #{_lambda_.1} parent=23 // pred_region
          %s217 = sand.u32 %s46, 1
          %s218 = sand.u32 %s46, 1
          %s219 = smul.addr %s218, 128
          %s220 = scalar_lea.vmem [#allocation3], %s219
          %s221 = smul.addr %s23, 64
          %s222 = sadd.s32 %s24, %s221
          %s223 = smul.addr %s222, 4
          %s224 = scalar_lea.vmem %s0, %s223
          // Predicated region
          $region29: #{_lambda_.1} parent=27 // pred_check
            _
          $region30: #{_lambda_.1} parent=27 // pred_check_branch
            %226 = sbr.rel (0) target = $region32
          $region31: #{_lambda_.1} parent=27 // pred_region
            // Predicated region
            $region33: #{_lambda_.1} parent=31 // pred_check
              _
            $region34: #{_lambda_.1} parent=31 // pred_check_branch
              %228 = sbr.rel target = $region36
            $region35: #{_lambda_.1} parent=31 // pred_region
              // Predicated region
              $region48: #{_lambda_.1} parent=35 // pred_check
                _
              $region49: #{_lambda_.1} parent=35 // pred_check_branch
                %306 = sbr.rel (0) target = $region51
              $region50: #{_lambda_.1} parent=35 // pred_region
                loop: start=0, step=1, limit=1
                $region52: #{_lambda_.1} parent=50 // loop_pre_header
                  _
                $region53: #{_lambda_.1} parent=50 // loop_header
                  %s308 = sphi 0, %s312
                  %p309 = scmp.ge.s32.totalorder %s308, 1
                  %s313 = sphi %s224, %s224
                  %s314 = sphi %s220, %s220
                $region54: #{_lambda_.1} parent=50 // loop_header_branch
                  %311 = sbr.rel (%p309) target = $region58
                $region55: #{_lambda_.1} parent=50 // loop_body
                  _
                $region56: #{_lambda_.1} parent=50 // loop_footer
                  %s312 = sadd.s32 1, %s308
                $region57: #{_lambda_.1} parent=50 // loop_footer_branch
                  %307 = sbr.rel target = $region53
                $region58: #{_lambda_.1} parent=50 // loop_exit
                  _
                %s316 = ssub.s32 16, 1
                loop: start=0, step=1, limit=1
                $region59: #{_lambda_.1} parent=50 // loop_pre_header
                  _
                $region60: #{_lambda_.1} parent=50 // loop_header
                  %s318 = sphi 0, %s322
                  %p319 = scmp.ge.s32.totalorder %s318, 1
                  %s323 = sphi %s224, %s224
                  %s324 = sphi %s220, %s220
                $region61: #{_lambda_.1} parent=50 // loop_header_branch
                  %321 = sbr.rel (%p319) target = $region65
                $region62: #{_lambda_.1} parent=50 // loop_body
                  %v325 = vld [vmem:[%s323] sm:%s316]
                  %326 = vst [vmem:[%s324] sm:%s316] %v325
                  %v327 = vld [vmem:[%s323 + $0x8] sm:%s316]
                  %328 = vst [vmem:[%s324 + $0x4] sm:%s316] %v327
                  %v329 = vld [vmem:[%s323 + $0x10] sm:%s316]
                  %330 = vst [vmem:[%s324 + $0x8] sm:%s316] %v329
                  %v331 = vld [vmem:[%s323 + $0x18] sm:%s316]
                  %332 = vst [vmem:[%s324 + $0xc] sm:%s316] %v331
                  %v333 = vld [vmem:[%s323 + $0x20] sm:%s316]
                  %334 = vst [vmem:[%s324 + $0x10] sm:%s316] %v333
                  %v335 = vld [vmem:[%s323 + $0x28] sm:%s316]
                  %336 = vst [vmem:[%s324 + $0x14] sm:%s316] %v335
                  %v337 = vld [vmem:[%s323 + $0x30] sm:%s316]
                  %338 = vst [vmem:[%s324 + $0x18] sm:%s316] %v337
                  %v339 = vld [vmem:[%s323 + $0x38] sm:%s316]
                  %340 = vst [vmem:[%s324 + $0x1c] sm:%s316] %v339
                  %v341 = vld [vmem:[%s323 + $0x40] sm:%s316]
                  %342 = vst [vmem:[%s324 + $0x20] sm:%s316] %v341
                  %v343 = vld [vmem:[%s323 + $0x48] sm:%s316]
                  %344 = vst [vmem:[%s324 + $0x24] sm:%s316] %v343
                  %v345 = vld [vmem:[%s323 + $0x50] sm:%s316]
                  %346 = vst [vmem:[%s324 + $0x28] sm:%s316] %v345
                  %v347 = vld [vmem:[%s323 + $0x58] sm:%s316]
                  %348 = vst [vmem:[%s324 + $0x2c] sm:%s316] %v347
                  %v349 = vld [vmem:[%s323 + $0x60] sm:%s316]
                  %350 = vst [vmem:[%s324 + $0x30] sm:%s316] %v349
                  %v351 = vld [vmem:[%s323 + $0x68] sm:%s316]
                  %352 = vst [vmem:[%s324 + $0x34] sm:%s316] %v351
                  %v353 = vld [vmem:[%s323 + $0x70] sm:%s316]
                  %354 = vst [vmem:[%s324 + $0x38] sm:%s316] %v353
                  %v355 = vld [vmem:[%s323 + $0x78] sm:%s316]
                  %356 = vst [vmem:[%s324 + $0x3c] sm:%s316] %v355
                  %v357 = vld [vmem:[%s323 + $0x80] sm:%s316]
                  %358 = vst [vmem:[%s324 + $0x40] sm:%s316] %v357
                  %v359 = vld [vmem:[%s323 + $0x88] sm:%s316]
                  %360 = vst [vmem:[%s324 + $0x44] sm:%s316] %v359
                  %v361 = vld [vmem:[%s323 + $0x90] sm:%s316]
                  %362 = vst [vmem:[%s324 + $0x48] sm:%s316] %v361
                  %v363 = vld [vmem:[%s323 + $0x98] sm:%s316]
                  %364 = vst [vmem:[%s324 + $0x4c] sm:%s316] %v363
                  %v365 = vld [vmem:[%s323 + $0xa0] sm:%s316]
                  %366 = vst [vmem:[%s324 + $0x50] sm:%s316] %v365
                  %v367 = vld [vmem:[%s323 + $0xa8] sm:%s316]
                  %368 = vst [vmem:[%s324 + $0x54] sm:%s316] %v367
                  %v369 = vld [vmem:[%s323 + $0xb0] sm:%s316]
                  %370 = vst [vmem:[%s324 + $0x58] sm:%s316] %v369
                  %v371 = vld [vmem:[%s323 + $0xb8] sm:%s316]
                  %372 = vst [vmem:[%s324 + $0x5c] sm:%s316] %v371
                  %v373 = vld [vmem:[%s323 + $0xc0] sm:%s316]
                  %374 = vst [vmem:[%s324 + $0x60] sm:%s316] %v373
                  %v375 = vld [vmem:[%s323 + $0xc8] sm:%s316]
                  %376 = vst [vmem:[%s324 + $0x64] sm:%s316] %v375
                  %v377 = vld [vmem:[%s323 + $0xd0] sm:%s316]
                  %378 = vst [vmem:[%s324 + $0x68] sm:%s316] %v377
                  %v379 = vld [vmem:[%s323 + $0xd8] sm:%s316]
                  %380 = vst [vmem:[%s324 + $0x6c] sm:%s316] %v379
                  %v381 = vld [vmem:[%s323 + $0xe0] sm:%s316]
                  %382 = vst [vmem:[%s324 + $0x70] sm:%s316] %v381
                  %v383 = vld [vmem:[%s323 + $0xe8] sm:%s316]
                  %384 = vst [vmem:[%s324 + $0x74] sm:%s316] %v383
                  %v385 = vld [vmem:[%s323 + $0xf0] sm:%s316]
                  %386 = vst [vmem:[%s324 + $0x78] sm:%s316] %v385
                  %v387 = vld [vmem:[%s323 + $0xf8] sm:%s316]
                  %388 = vst [vmem:[%s324 + $0x7c] sm:%s316] %v387
                $region63: #{_lambda_.1} parent=50 // loop_footer
                  %s322 = sadd.s32 1, %s318
                $region64: #{_lambda_.1} parent=50 // loop_footer_branch
                  %317 = sbr.rel target = $region60
                $region65: #{_lambda_.1} parent=50 // loop_exit
                  _
              $region51: #{_lambda_.1} parent=35 // pred_fallthru
                _
            $region36: #{_lambda_.1} parent=31 // pred_fallthru
              _
            // Predicated region
            $region37: #{_lambda_.1} parent=31 // pred_check
              _
            $region38: #{_lambda_.1} parent=31 // pred_check_branch
              %230 = sbr.rel (0) target = $region40
            $region39: #{_lambda_.1} parent=31 // pred_region
              %s232 = ssub.s32 16, 1
              loop: start=0, step=1, limit=1
              $region41: #{_lambda_.1} parent=39 // loop_pre_header
                _
              $region42: #{_lambda_.1} parent=39 // loop_header
                %s234 = sphi 0, %s238
                %p235 = scmp.ge.s32.totalorder %s234, 1
                %s239 = sphi %s224, %s224
                %s240 = sphi %s220, %s220
              $region43: #{_lambda_.1} parent=39 // loop_header_branch
                %237 = sbr.rel (%p235) target = $region47
              $region44: #{_lambda_.1} parent=39 // loop_body
                %v241 = vld [vmem:[%s239] sm:%s232]
                %242 = vst [vmem:[%s240] sm:%s232] %v241
                %v243 = vld [vmem:[%s239 + $0x8] sm:%s232]
                %244 = vst [vmem:[%s240 + $0x4] sm:%s232] %v243
                %v245 = vld [vmem:[%s239 + $0x10] sm:%s232]
                %246 = vst [vmem:[%s240 + $0x8] sm:%s232] %v245
                %v247 = vld [vmem:[%s239 + $0x18] sm:%s232]
                %248 = vst [vmem:[%s240 + $0xc] sm:%s232] %v247
                %v249 = vld [vmem:[%s239 + $0x20] sm:%s232]
                %250 = vst [vmem:[%s240 + $0x10] sm:%s232] %v249
                %v251 = vld [vmem:[%s239 + $0x28] sm:%s232]
                %252 = vst [vmem:[%s240 + $0x14] sm:%s232] %v251
                %v253 = vld [vmem:[%s239 + $0x30] sm:%s232]
                %254 = vst [vmem:[%s240 + $0x18] sm:%s232] %v253
                %v255 = vld [vmem:[%s239 + $0x38] sm:%s232]
                %256 = vst [vmem:[%s240 + $0x1c] sm:%s232] %v255
                %v257 = vld [vmem:[%s239 + $0x40] sm:%s232]
                %258 = vst [vmem:[%s240 + $0x20] sm:%s232] %v257
                %v259 = vld [vmem:[%s239 + $0x48] sm:%s232]
                %260 = vst [vmem:[%s240 + $0x24] sm:%s232] %v259
                %v261 = vld [vmem:[%s239 + $0x50] sm:%s232]
                %262 = vst [vmem:[%s240 + $0x28] sm:%s232] %v261
                %v263 = vld [vmem:[%s239 + $0x58] sm:%s232]
                %264 = vst [vmem:[%s240 + $0x2c] sm:%s232] %v263
                %v265 = vld [vmem:[%s239 + $0x60] sm:%s232]
                %266 = vst [vmem:[%s240 + $0x30] sm:%s232] %v265
                %v267 = vld [vmem:[%s239 + $0x68] sm:%s232]
                %268 = vst [vmem:[%s240 + $0x34] sm:%s232] %v267
                %v269 = vld [vmem:[%s239 + $0x70] sm:%s232]
                %270 = vst [vmem:[%s240 + $0x38] sm:%s232] %v269
                %v271 = vld [vmem:[%s239 + $0x78] sm:%s232]
                %272 = vst [vmem:[%s240 + $0x3c] sm:%s232] %v271
                %v273 = vld [vmem:[%s239 + $0x80] sm:%s232]
                %274 = vst [vmem:[%s240 + $0x40] sm:%s232] %v273
                %v275 = vld [vmem:[%s239 + $0x88] sm:%s232]
                %276 = vst [vmem:[%s240 + $0x44] sm:%s232] %v275
                %v277 = vld [vmem:[%s239 + $0x90] sm:%s232]
                %278 = vst [vmem:[%s240 + $0x48] sm:%s232] %v277
                %v279 = vld [vmem:[%s239 + $0x98] sm:%s232]
                %280 = vst [vmem:[%s240 + $0x4c] sm:%s232] %v279
                %v281 = vld [vmem:[%s239 + $0xa0] sm:%s232]
                %282 = vst [vmem:[%s240 + $0x50] sm:%s232] %v281
                %v283 = vld [vmem:[%s239 + $0xa8] sm:%s232]
                %284 = vst [vmem:[%s240 + $0x54] sm:%s232] %v283
                %v285 = vld [vmem:[%s239 + $0xb0] sm:%s232]
                %286 = vst [vmem:[%s240 + $0x58] sm:%s232] %v285
                %v287 = vld [vmem:[%s239 + $0xb8] sm:%s232]
                %288 = vst [vmem:[%s240 + $0x5c] sm:%s232] %v287
                %v289 = vld [vmem:[%s239 + $0xc0] sm:%s232]
                %290 = vst [vmem:[%s240 + $0x60] sm:%s232] %v289
                %v291 = vld [vmem:[%s239 + $0xc8] sm:%s232]
                %292 = vst [vmem:[%s240 + $0x64] sm:%s232] %v291
                %v293 = vld [vmem:[%s239 + $0xd0] sm:%s232]
                %294 = vst [vmem:[%s240 + $0x68] sm:%s232] %v293
                %v295 = vld [vmem:[%s239 + $0xd8] sm:%s232]
                %296 = vst [vmem:[%s240 + $0x6c] sm:%s232] %v295
                %v297 = vld [vmem:[%s239 + $0xe0] sm:%s232]
                %298 = vst [vmem:[%s240 + $0x70] sm:%s232] %v297
                %v299 = vld [vmem:[%s239 + $0xe8] sm:%s232]
                %300 = vst [vmem:[%s240 + $0x74] sm:%s232] %v299
                %v301 = vld [vmem:[%s239 + $0xf0] sm:%s232]
                %302 = vst [vmem:[%s240 + $0x78] sm:%s232] %v301
                %v303 = vld [vmem:[%s239 + $0xf8] sm:%s232]
                %304 = vst [vmem:[%s240 + $0x7c] sm:%s232] %v303
              $region45: #{_lambda_.1} parent=39 // loop_footer
                %s238 = sadd.s32 1, %s234
              $region46: #{_lambda_.1} parent=39 // loop_footer_branch
                %233 = sbr.rel target = $region42
              $region47: #{_lambda_.1} parent=39 // loop_exit
                _
            $region40: #{_lambda_.1} parent=31 // pred_fallthru
              _
          $region32: #{_lambda_.1} parent=27 // pred_fallthru
            _
          %389 = vnop
        $region28: #{_lambda_.1} parent=23 // pred_fallthru
          _
        // Predicated region
        $region66: #{_lambda_.1} parent=23 // pred_check
          %p390 = pneg %p131
        $region67: #{_lambda_.1} parent=23 // pred_check_branch
          %392 = sbr.rel (%p390) target = $region69
        $region68: #{_lambda_.1} parent=23 // pred_region
          %p393 = scmp.lt.s32.totalorder %s23, 1
          %s394 = scalar_select %p393, %s23, 1
          %p395 = scmp.lt.s32.totalorder %s22, 0
          %s396 = scalar_select %p395, %s22, 0
          %s397 = sadd.s32 %s396, %s394
          %s398 = scalar_lea.vmem %s3, %s397
        $region69: #{_lambda_.1} parent=23 // pred_fallthru
          _
      $region24: #{_lambda_.1} parent=5 // pred_fallthru
        _
      %p399 = scmp.le.s32.totalorder 1, %s15
      %p400 = scmp.lt.s32.totalorder %s15, 5
      %p401 = pnand %p399, %p400
      %p402 = pneg %p401
      // Predicated region
      $region70: #{_lambda_.1} parent=5 // pred_check
        _
      $region71: #{_lambda_.1} parent=5 // pred_check_branch
        %404 = sbr.rel (%p401) target = $region73
      $region72: #{_lambda_.1} parent=5 // pred_region
        %s405 = ssub.s32 %s15, 1
        %s406 = sand.u32 %s49, 1
        %s407 = sand.u32 %s49, 1
        %s408 = smul.addr %s407, 128
        %s409 = scalar_lea.vmem [#allocation3], %s408
        // Predicated region
        $region74: #{_lambda_.1} parent=72 // pred_check
          %p410 = pneg %p62
        $region75: #{_lambda_.1} parent=72 // pred_check_branch
          %412 = sbr.rel (%p410) target = $region77
        $region76: #{_lambda_.1} parent=72 // pred_region
          _
        $region77: #{_lambda_.1} parent=72 // pred_fallthru
          _
        // Predicated region
        $region78: #{_lambda_.1} parent=72 // pred_check
          %p413 = pneg %p88
        $region79: #{_lambda_.1} parent=72 // pred_check_branch
          %415 = sbr.rel (%p413) target = $region81
        $region80: #{_lambda_.1} parent=72 // pred_region
          %417 = dma.done [#allocation5], 51200
        $region81: #{_lambda_.1} parent=72 // pred_fallthru
          _
        // Predicated region
        $region82: #{_lambda_.1} parent=72 // pred_check
          %p418 = pneg %p109
        $region83: #{_lambda_.1} parent=72 // pred_check_branch
          %420 = sbr.rel (%p418) target = $region85
        $region84: #{_lambda_.1} parent=72 // pred_region
          %422 = dma.done [#allocation8], 24576
        $region85: #{_lambda_.1} parent=72 // pred_fallthru
          _
        %s423 = sand.u32 %s49, 1
        %s424 = sand.u32 %s49, 1
        %s425 = smul.addr %s424, 128
        %s426 = scalar_lea.vmem [#allocation3], %s425
        %p427 = pneg %p62
        %p428 = pneg %p59
        %p429 = pneg %p88
        %p430 = pneg %p85
        %p431 = pneg %p109
        %p432 = pneg %p106
        %p433 = scmp.lt.s32.totalorder %s26, 1
        %s434 = scalar_select %p433, %s26, 1
        %p435 = scmp.lt.s32.totalorder %s25, 0
        %s436 = scalar_select %p435, %s25, 0
        %s437 = sadd.s32 %s436, %s434
        %s438 = scalar_lea.vmem %s3, %s437
        %p439 = pneg %p137
        %p440 = pneg %p134
        %p441 = pneg %p165
        %p442 = pneg %p162
        %s443 = sand.u32 %s152, 1
        %s444 = scalar_lea.sflag [#allocation6], %s443
        %s445 = sand.u32 %s152, 1
        %s446 = smul.addr %s445, 256
        %s447 = scalar_lea.vmem [#allocation9], %s446
        %p448 = scmp.lt.s32.totalorder %s26, 1
        %s449 = scalar_select %p448, %s26, 1
        %p450 = scmp.lt.s32.totalorder %s25, 0
        %s451 = scalar_select %p450, %s25, 0
        %s452 = sadd.s32 %s451, %s449
        %s453 = scalar_lea.vmem %s3, %s452
        %p455 = scmp.eq.s32.totalorder %s27, 0
        // Predicated region
        $region86: #{_lambda_.1} parent=72 // pred_check
          %p456 = pneg %p455
        $region87: #{_lambda_.1} parent=72 // pred_check_branch
          %458 = sbr.rel (%p456) target = $region89
        $region88: #{_lambda_.1} parent=72 // pred_region
          %459 = vst [vmem:[%s447] sm:$0xff] 0.0
          %460 = vst [vmem:[%s447 + $0x8] sm:$0xff] 0.0
          %461 = vst [vmem:[%s447 + $0x10] sm:$0xff] 0.0
          %462 = vst [vmem:[%s447 + $0x18] sm:$0xff] 0.0
          %463 = vst [vmem:[%s447 + $0x20] sm:$0xff] 0.0
          %464 = vst [vmem:[%s447 + $0x28] sm:$0xff] 0.0
          %465 = vst [vmem:[%s447 + $0x30] sm:$0xff] 0.0
          %466 = vst [vmem:[%s447 + $0x38] sm:$0xff] 0.0
          %467 = vst [vmem:[%s447 + $0x40] sm:$0xff] 0.0
          %468 = vst [vmem:[%s447 + $0x48] sm:$0xff] 0.0
          %469 = vst [vmem:[%s447 + $0x50] sm:$0xff] 0.0
          %470 = vst [vmem:[%s447 + $0x58] sm:$0xff] 0.0
          %471 = vst [vmem:[%s447 + $0x60] sm:$0xff] 0.0
          %472 = vst [vmem:[%s447 + $0x68] sm:$0xff] 0.0
          %473 = vst [vmem:[%s447 + $0x70] sm:$0xff] 0.0
          %474 = vst [vmem:[%s447 + $0x78] sm:$0xff] 0.0
          %475 = vst [vmem:[%s447 + $0x80] sm:$0xff] 0.0
          %476 = vst [vmem:[%s447 + $0x88] sm:$0xff] 0.0
          %477 = vst [vmem:[%s447 + $0x90] sm:$0xff] 0.0
          %478 = vst [vmem:[%s447 + $0x98] sm:$0xff] 0.0
          %479 = vst [vmem:[%s447 + $0xa0] sm:$0xff] 0.0
          %480 = vst [vmem:[%s447 + $0xa8] sm:$0xff] 0.0
          %481 = vst [vmem:[%s447 + $0xb0] sm:$0xff] 0.0
          %482 = vst [vmem:[%s447 + $0xb8] sm:$0xff] 0.0
          %483 = vst [vmem:[%s447 + $0xc0] sm:$0xff] 0.0
          %484 = vst [vmem:[%s447 + $0xc8] sm:$0xff] 0.0
          %485 = vst [vmem:[%s447 + $0xd0] sm:$0xff] 0.0
          %486 = vst [vmem:[%s447 + $0xd8] sm:$0xff] 0.0
          %487 = vst [vmem:[%s447 + $0xe0] sm:$0xff] 0.0
          %488 = vst [vmem:[%s447 + $0xe8] sm:$0xff] 0.0
          %489 = vst [vmem:[%s447 + $0xf0] sm:$0xff] 0.0
          %490 = vst [vmem:[%s447 + $0xf8] sm:$0xff] 0.0
          %491 = vst [vmem:[#allocation2] sm:$0xf] 0
          %492 = vst [vmem:[#allocation2 + $0x4] sm:$0xf] 0
          %493 = vst [vmem:[#allocation2 + $0x8] sm:$0xf] 0
          %494 = vst [vmem:[#allocation2 + $0xc] sm:$0xf] 0
          %495 = vst [vmem:[#allocation2 + $0x10] sm:$0xf] 0
          %496 = vst [vmem:[#allocation2 + $0x14] sm:$0xf] 0
          %497 = vst [vmem:[#allocation2 + $0x18] sm:$0xf] 0
          %498 = vst [vmem:[#allocation2 + $0x1c] sm:$0xf] 0
          %499 = vst [vmem:[#allocation2 + $0x20] sm:$0xf] 0
          %500 = vst [vmem:[#allocation2 + $0x24] sm:$0xf] 0
          %501 = vst [vmem:[#allocation2 + $0x28] sm:$0xf] 0
          %502 = vst [vmem:[#allocation2 + $0x2c] sm:$0xf] 0
          %503 = vst [vmem:[#allocation2 + $0x30] sm:$0xf] 0
          %504 = vst [vmem:[#allocation2 + $0x34] sm:$0xf] 0
          %505 = vst [vmem:[#allocation2 + $0x38] sm:$0xf] 0
          %506 = vst [vmem:[#allocation2 + $0x3c] sm:$0xf] 0
          %507 = vst [vmem:[#allocation2 + $0x40] sm:$0xf] 0
          %508 = vst [vmem:[#allocation2 + $0x44] sm:$0xf] 0
          %509 = vst [vmem:[#allocation2 + $0x48] sm:$0xf] 0
          %510 = vst [vmem:[#allocation2 + $0x4c] sm:$0xf] 0
          %511 = vst [vmem:[#allocation2 + $0x50] sm:$0xf] 0
          %512 = vst [vmem:[#allocation2 + $0x54] sm:$0xf] 0
          %513 = vst [vmem:[#allocation2 + $0x58] sm:$0xf] 0
          %514 = vst [vmem:[#allocation2 + $0x5c] sm:$0xf] 0
          %515 = vst [vmem:[#allocation2 + $0x60] sm:$0xf] 0
          %516 = vst [vmem:[#allocation2 + $0x64] sm:$0xf] 0
          %517 = vst [vmem:[#allocation2 + $0x68] sm:$0xf] 0
          %518 = vst [vmem:[#allocation2 + $0x6c] sm:$0xf] 0
          %519 = vst [vmem:[#allocation2 + $0x70] sm:$0xf] 0
          %520 = vst [vmem:[#allocation2 + $0x74] sm:$0xf] 0
          %521 = vst [vmem:[#allocation2 + $0x78] sm:$0xf] 0
          %522 = vst [vmem:[#allocation2 + $0x7c] sm:$0xf] 0
          %523 = vst [vmem:[#allocation2 + $0x80] sm:$0xf] 0
          %524 = vst [vmem:[#allocation2 + $0x84] sm:$0xf] 0
          %525 = vst [vmem:[#allocation2 + $0x88] sm:$0xf] 0
          %526 = vst [vmem:[#allocation2 + $0x8c] sm:$0xf] 0
          %527 = vst [vmem:[#allocation2 + $0x90] sm:$0xf] 0
          %528 = vst [vmem:[#allocation2 + $0x94] sm:$0xf] 0
          %529 = vst [vmem:[#allocation2 + $0x98] sm:$0xf] 0
          %530 = vst [vmem:[#allocation2 + $0x9c] sm:$0xf] 0
          %531 = vst [vmem:[#allocation2 + $0xa0] sm:$0xf] 0
          %532 = vst [vmem:[#allocation2 + $0xa4] sm:$0xf] 0
          %533 = vst [vmem:[#allocation2 + $0xa8] sm:$0xf] 0
          %534 = vst [vmem:[#allocation2 + $0xac] sm:$0xf] 0
          %535 = vst [vmem:[#allocation2 + $0xb0] sm:$0xf] 0
          %536 = vst [vmem:[#allocation2 + $0xb4] sm:$0xf] 0
          %537 = vst [vmem:[#allocation2 + $0xb8] sm:$0xf] 0
          %538 = vst [vmem:[#allocation2 + $0xbc] sm:$0xf] 0
          %539 = vst [vmem:[#allocation2 + $0xc0] sm:$0xf] 0
          %540 = vst [vmem:[#allocation2 + $0xc4] sm:$0xf] 0
          %541 = vst [vmem:[#allocation2 + $0xc8] sm:$0xf] 0
          %542 = vst [vmem:[#allocation2 + $0xcc] sm:$0xf] 0
          %543 = vst [vmem:[#allocation2 + $0xd0] sm:$0xf] 0
          %544 = vst [vmem:[#allocation2 + $0xd4] sm:$0xf] 0
          %545 = vst [vmem:[#allocation2 + $0xd8] sm:$0xf] 0
          %546 = vst [vmem:[#allocation2 + $0xdc] sm:$0xf] 0
          %547 = vst [vmem:[#allocation2 + $0xe0] sm:$0xf] 0
          %548 = vst [vmem:[#allocation2 + $0xe4] sm:$0xf] 0
          %549 = vst [vmem:[#allocation2 + $0xe8] sm:$0xf] 0
          %550 = vst [vmem:[#allocation2 + $0xec] sm:$0xf] 0
          %551 = vst [vmem:[#allocation2 + $0xf0] sm:$0xf] 0
          %552 = vst [vmem:[#allocation2 + $0xf4] sm:$0xf] 0
          %553 = vst [vmem:[#allocation2 + $0xf8] sm:$0xf] 0
          %554 = vst [vmem:[#allocation2 + $0xfc] sm:$0xf] 0
          %555 = vst [vmem:[#allocation2 + $0x100] sm:$0xf] 0
          %556 = vst [vmem:[#allocation2 + $0x104] sm:$0xf] 0
          %557 = vst [vmem:[#allocation2 + $0x108] sm:$0xf] 0
          %558 = vst [vmem:[#allocation2 + $0x10c] sm:$0xf] 0
          %559 = vst [vmem:[#allocation2 + $0x110] sm:$0xf] 0
          %560 = vst [vmem:[#allocation2 + $0x114] sm:$0xf] 0
          %561 = vst [vmem:[#allocation2 + $0x118] sm:$0xf] 0
          %562 = vst [vmem:[#allocation2 + $0x11c] sm:$0xf] 0
          %563 = vst [vmem:[#allocation2 + $0x120] sm:$0xf] 0
          %564 = vst [vmem:[#allocation2 + $0x124] sm:$0xf] 0
          %565 = vst [vmem:[#allocation2 + $0x128] sm:$0xf] 0
          %566 = vst [vmem:[#allocation2 + $0x12c] sm:$0xf] 0
          %567 = vst [vmem:[#allocation2 + $0x130] sm:$0xf] 0
          %568 = vst [vmem:[#allocation2 + $0x134] sm:$0xf] 0
          %569 = vst [vmem:[#allocation2 + $0x138] sm:$0xf] 0
          %570 = vst [vmem:[#allocation2 + $0x13c] sm:$0xf] 0
          %571 = vst [vmem:[#allocation2 + $0x140] sm:$0xf] 0
          %572 = vst [vmem:[#allocation2 + $0x144] sm:$0xf] 0
          %573 = vst [vmem:[#allocation2 + $0x148] sm:$0xf] 0
          %574 = vst [vmem:[#allocation2 + $0x14c] sm:$0xf] 0
          %575 = vst [vmem:[#allocation2 + $0x150] sm:$0xf] 0
          %576 = vst [vmem:[#allocation2 + $0x154] sm:$0xf] 0
          %577 = vst [vmem:[#allocation2 + $0x158] sm:$0xf] 0
          %578 = vst [vmem:[#allocation2 + $0x15c] sm:$0xf] 0
          %579 = vst [vmem:[#allocation2 + $0x160] sm:$0xf] 0
          %580 = vst [vmem:[#allocation2 + $0x164] sm:$0xf] 0
          %581 = vst [vmem:[#allocation2 + $0x168] sm:$0xf] 0
          %582 = vst [vmem:[#allocation2 + $0x16c] sm:$0xf] 0
          %583 = vst [vmem:[#allocation2 + $0x170] sm:$0xf] 0
          %584 = vst [vmem:[#allocation2 + $0x174] sm:$0xf] 0
          %585 = vst [vmem:[#allocation2 + $0x178] sm:$0xf] 0
          %586 = vst [vmem:[#allocation2 + $0x17c] sm:$0xf] 0
          %587 = vst [vmem:[#allocation2 + $0x180] sm:$0xf] 0
          %588 = vst [vmem:[#allocation2 + $0x184] sm:$0xf] 0
          %589 = vst [vmem:[#allocation2 + $0x188] sm:$0xf] 0
          %590 = vst [vmem:[#allocation2 + $0x18c] sm:$0xf] 0
          %591 = vst [vmem:[#allocation2 + $0x190] sm:$0xf] 0
          %592 = vst [vmem:[#allocation2 + $0x194] sm:$0xf] 0
          %593 = vst [vmem:[#allocation2 + $0x198] sm:$0xf] 0
          %594 = vst [vmem:[#allocation2 + $0x19c] sm:$0xf] 0
          %595 = vst [vmem:[#allocation2 + $0x1a0] sm:$0xf] 0
          %596 = vst [vmem:[#allocation2 + $0x1a4] sm:$0xf] 0
          %597 = vst [vmem:[#allocation2 + $0x1a8] sm:$0xf] 0
          %598 = vst [vmem:[#allocation2 + $0x1ac] sm:$0xf] 0
          %599 = vst [vmem:[#allocation2 + $0x1b0] sm:$0xf] 0
          %600 = vst [vmem:[#allocation2 + $0x1b4] sm:$0xf] 0
          %601 = vst [vmem:[#allocation2 + $0x1b8] sm:$0xf] 0
          %602 = vst [vmem:[#allocation2 + $0x1bc] sm:$0xf] 0
        $region89: #{_lambda_.1} parent=72 // pred_fallthru
          _
        %v603 = vld [vmem:[%s409] sm:$0xf]
        %v604 = vld [vmem:[%s409 + $0x4] sm:$0xf]
        %v605 = vld [vmem:[%s409 + $0x8] sm:$0xf]
        %v606 = vld [vmem:[%s409 + $0xc] sm:$0xf]
        %v607 = vld [vmem:[%s409 + $0x10] sm:$0xf]
        %v608 = vld [vmem:[%s409 + $0x14] sm:$0xf]
        %v609 = vld [vmem:[%s409 + $0x18] sm:$0xf]
        %v610 = vld [vmem:[%s409 + $0x1c] sm:$0xf]
        %v611 = vld [vmem:[%s409 + $0x20] sm:$0xf]
        %v612 = vld [vmem:[%s409 + $0x24] sm:$0xf]
        %v613 = vld [vmem:[%s409 + $0x28] sm:$0xf]
        %v614 = vld [vmem:[%s409 + $0x2c] sm:$0xf]
        %v615 = vld [vmem:[%s409 + $0x30] sm:$0xf]
        %v616 = vld [vmem:[%s409 + $0x34] sm:$0xf]
        %v617 = vld [vmem:[%s409 + $0x38] sm:$0xf]
        %v618 = vld [vmem:[%s409 + $0x3c] sm:$0xf]
        %v619 = vld [vmem:[%s409 + $0x40] sm:$0xf]
        %v620 = vld [vmem:[%s409 + $0x44] sm:$0xf]
        %v621 = vld [vmem:[%s409 + $0x48] sm:$0xf]
        %v622 = vld [vmem:[%s409 + $0x4c] sm:$0xf]
        %v623 = vld [vmem:[%s409 + $0x50] sm:$0xf]
        %v624 = vld [vmem:[%s409 + $0x54] sm:$0xf]
        %v625 = vld [vmem:[%s409 + $0x58] sm:$0xf]
        %v626 = vld [vmem:[%s409 + $0x5c] sm:$0xf]
        %v627 = vld [vmem:[%s409 + $0x60] sm:$0xf]
        %v628 = vld [vmem:[%s409 + $0x64] sm:$0xf]
        %v629 = vld [vmem:[%s409 + $0x68] sm:$0xf]
        %v630 = vld [vmem:[%s409 + $0x6c] sm:$0xf]
        %v631 = vld [vmem:[%s409 + $0x70] sm:$0xf]
        %v632 = vld [vmem:[%s409 + $0x74] sm:$0xf]
        %v633 = vld [vmem:[%s409 + $0x78] sm:$0xf]
        %v634 = vld [vmem:[%s409 + $0x7c] sm:$0xf]
        %635 = vst [vmem:[#allocation2 + $0xa0] sm:$0xf] %v603
        %636 = vst [vmem:[#allocation2 + $0xa4] sm:$0xf] %v604
        %637 = vst [vmem:[#allocation2 + $0xa8] sm:$0xf] %v605
        %638 = vst [vmem:[#allocation2 + $0xac] sm:$0xf] %v606
        %639 = vst [vmem:[#allocation2 + $0xb0] sm:$0xf] %v607
        %640 = vst [vmem:[#allocation2 + $0xb4] sm:$0xf] %v608
        %641 = vst [vmem:[#allocation2 + $0xb8] sm:$0xf] %v609
        %642 = vst [vmem:[#allocation2 + $0xbc] sm:$0xf] %v610
        %643 = vst [vmem:[#allocation2 + $0xc0] sm:$0xf] %v611
        %644 = vst [vmem:[#allocation2 + $0xc4] sm:$0xf] %v612
        %645 = vst [vmem:[#allocation2 + $0xc8] sm:$0xf] %v613
        %646 = vst [vmem:[#allocation2 + $0xcc] sm:$0xf] %v614
        %647 = vst [vmem:[#allocation2 + $0xd0] sm:$0xf] %v615
        %648 = vst [vmem:[#allocation2 + $0xd4] sm:$0xf] %v616
        %649 = vst [vmem:[#allocation2 + $0xd8] sm:$0xf] %v617
        %650 = vst [vmem:[#allocation2 + $0xdc] sm:$0xf] %v618
        %651 = vst [vmem:[#allocation2 + $0xe0] sm:$0xf] %v619
        %652 = vst [vmem:[#allocation2 + $0xe4] sm:$0xf] %v620
        %653 = vst [vmem:[#allocation2 + $0xe8] sm:$0xf] %v621
        %654 = vst [vmem:[#allocation2 + $0xec] sm:$0xf] %v622
        %655 = vst [vmem:[#allocation2 + $0xf0] sm:$0xf] %v623
        %656 = vst [vmem:[#allocation2 + $0xf4] sm:$0xf] %v624
        %657 = vst [vmem:[#allocation2 + $0xf8] sm:$0xf] %v625
        %658 = vst [vmem:[#allocation2 + $0xfc] sm:$0xf] %v626
        %659 = vst [vmem:[#allocation2 + $0x100] sm:$0xf] %v627
        %660 = vst [vmem:[#allocation2 + $0x104] sm:$0xf] %v628
        %661 = vst [vmem:[#allocation2 + $0x108] sm:$0xf] %v629
        %662 = vst [vmem:[#allocation2 + $0x10c] sm:$0xf] %v630
        %663 = vst [vmem:[#allocation2 + $0x110] sm:$0xf] %v631
        %664 = vst [vmem:[#allocation2 + $0x114] sm:$0xf] %v632
        %665 = vst [vmem:[#allocation2 + $0x118] sm:$0xf] %v633
        %666 = vst [vmem:[#allocation2 + $0x11c] sm:$0xf] %v634
        %s667 = smul.u32 %s27, 128
        %v668 = vld [vmem:[#allocation2 + $0x4] sm:$0x8]
        %v669 = vld [vmem:[#allocation2 + $0x8] sm:$0xf]
        %v670 = vld [vmem:[#allocation2 + $0xc] sm:$0xf]
        %v671 = vld [vmem:[#allocation2 + $0x10] sm:$0xf]
        %v672 = vld [vmem:[#allocation2 + $0x14] sm:$0xf]
        %v673 = vld [vmem:[#allocation2 + $0x18] sm:$0xf]
        %v674 = vld [vmem:[#allocation2 + $0x1c] sm:$0xf]
        %v675 = vld [vmem:[#allocation2 + $0x20] sm:$0xf]
        %v676 = vld [vmem:[#allocation2 + $0x24] sm:$0xf]
        %v677 = vld [vmem:[#allocation2 + $0x28] sm:$0xf]
        %v678 = vld [vmem:[#allocation2 + $0x2c] sm:$0xf]
        %v679 = vld [vmem:[#allocation2 + $0x30] sm:$0xf]
        %v680 = vld [vmem:[#allocation2 + $0x34] sm:$0xf]
        %v681 = vld [vmem:[#allocation2 + $0x38] sm:$0xf]
        %v682 = vld [vmem:[#allocation2 + $0x3c] sm:$0xf]
        %v683 = vld [vmem:[#allocation2 + $0x40] sm:$0xf]
        %v684 = vld [vmem:[#allocation2 + $0x44] sm:$0xf]
        %v685 = vld [vmem:[#allocation2 + $0x48] sm:$0xf]
        %v686 = vld [vmem:[#allocation2 + $0x4c] sm:$0xf]
        %v687 = vld [vmem:[#allocation2 + $0x50] sm:$0xf]
        %v688 = vld [vmem:[#allocation2 + $0x54] sm:$0xf]
        %v689 = vld [vmem:[#allocation2 + $0x58] sm:$0xf]
        %v690 = vld [vmem:[#allocation2 + $0x5c] sm:$0xf]
        %v691 = vld [vmem:[#allocation2 + $0x60] sm:$0xf]
        %v692 = vld [vmem:[#allocation2 + $0x64] sm:$0xf]
        %v693 = vld [vmem:[#allocation2 + $0x68] sm:$0xf]
        %v694 = vld [vmem:[#allocation2 + $0x6c] sm:$0xf]
        %v695 = vld [vmem:[#allocation2 + $0x70] sm:$0xf]
        %v696 = vld [vmem:[#allocation2 + $0x74] sm:$0xf]
        %v697 = vld [vmem:[#allocation2 + $0x78] sm:$0xf]
        %v698 = vld [vmem:[#allocation2 + $0x7c] sm:$0xf]
        %v699 = vld [vmem:[#allocation2 + $0x80] sm:$0xf]
        %v700 = vld [vmem:[#allocation2 + $0x84] sm:$0x7]
        %s701 = sshra.s32 %s667, 3
        %s702 = sand.u32 %s667, 7
        %s703 = smul.addr %s701, 4
        %s704 = scalar_lea.vmem [#allocation4], %s703
        %v705 = vld [vmem:[%s704] sm:$0xf]
        %v706 = vld [vmem:[%s704 + $0x4] sm:$0xf]
        %v707 = vld [vmem:[%s704 + $0x8] sm:$0xf]
        %v708 = vld [vmem:[%s704 + $0xc] sm:$0xf]
        %v709 = vld [vmem:[%s704 + $0x10] sm:$0xf]
        %v710 = vld [vmem:[%s704 + $0x14] sm:$0xf]
        %v711 = vld [vmem:[%s704 + $0x18] sm:$0xf]
        %v712 = vld [vmem:[%s704 + $0x1c] sm:$0xf]
        %v713 = vld [vmem:[%s704 + $0x20] sm:$0xf]
        %v714 = vld [vmem:[%s704 + $0x24] sm:$0xf]
        %v715 = vld [vmem:[%s704 + $0x28] sm:$0xf]
        %v716 = vld [vmem:[%s704 + $0x2c] sm:$0xf]
        %v717 = vld [vmem:[%s704 + $0x30] sm:$0xf]
        %v718 = vld [vmem:[%s704 + $0x34] sm:$0xf]
        %v719 = vld [vmem:[%s704 + $0x38] sm:$0xf]
        %v720 = vld [vmem:[%s704 + $0x3c] sm:$0xf]
        %v721 = vld [vmem:[#allocation2 + $0x94] sm:$0x8]
        %v722 = vld [vmem:[#allocation2 + $0x98] sm:$0xf]
        %v723 = vld [vmem:[#allocation2 + $0x9c] sm:$0xf]
        %v724 = vld [vmem:[#allocation2 + $0xa0] sm:$0xf]
        %v725 = vld [vmem:[#allocation2 + $0xa4] sm:$0xf]
        %v726 = vld [vmem:[#allocation2 + $0xa8] sm:$0xf]
        %v727 = vld [vmem:[#allocation2 + $0xac] sm:$0xf]
        %v728 = vld [vmem:[#allocation2 + $0xb0] sm:$0xf]
        %v729 = vld [vmem:[#allocation2 + $0xb4] sm:$0xf]
        %v730 = vld [vmem:[#allocation2 + $0xb8] sm:$0xf]
        %v731 = vld [vmem:[#allocation2 + $0xbc] sm:$0xf]
        %v732 = vld [vmem:[#allocation2 + $0xc0] sm:$0xf]
        %v733 = vld [vmem:[#allocation2 + $0xc4] sm:$0xf]
        %v734 = vld [vmem:[#allocation2 + $0xc8] sm:$0xf]
        %v735 = vld [vmem:[#allocation2 + $0xcc] sm:$0xf]
        %v736 = vld [vmem:[#allocation2 + $0xd0] sm:$0xf]
        %v737 = vld [vmem:[#allocation2 + $0xd4] sm:$0xf]
        %v738 = vld [vmem:[#allocation2 + $0xd8] sm:$0xf]
        %v739 = vld [vmem:[#allocation2 + $0xdc] sm:$0xf]
        %v740 = vld [vmem:[#allocation2 + $0xe0] sm:$0xf]
        %v741 = vld [vmem:[#allocation2 + $0xe4] sm:$0xf]
        %v742 = vld [vmem:[#allocation2 + $0xe8] sm:$0xf]
        %v743 = vld [vmem:[#allocation2 + $0xec] sm:$0xf]
        %v744 = vld [vmem:[#allocation2 + $0xf0] sm:$0xf]
        %v745 = vld [vmem:[#allocation2 + $0xf4] sm:$0xf]
        %v746 = vld [vmem:[#allocation2 + $0xf8] sm:$0xf]
        %v747 = vld [vmem:[#allocation2 + $0xfc] sm:$0xf]
        %v748 = vld [vmem:[#allocation2 + $0x100] sm:$0xf]
        %v749 = vld [vmem:[#allocation2 + $0x104] sm:$0xf]
        %v750 = vld [vmem:[#allocation2 + $0x108] sm:$0xf]
        %v751 = vld [vmem:[#allocation2 + $0x10c] sm:$0xf]
        %v752 = vld [vmem:[#allocation2 + $0x110] sm:$0xf]
        %v753 = vld [vmem:[#allocation2 + $0x114] sm:$0x7]
        %s754 = sadd.s32 %s701, 288
        %s755 = smul.addr %s754, 4
        %s756 = scalar_lea.vmem [#allocation4], %s755
        %v757 = vld [vmem:[%s756] sm:$0xf]
        %v758 = vld [vmem:[%s756 + $0x4] sm:$0xf]
        %v759 = vld [vmem:[%s756 + $0x8] sm:$0xf]
        %v760 = vld [vmem:[%s756 + $0xc] sm:$0xf]
        %v761 = vld [vmem:[%s756 + $0x10] sm:$0xf]
        %v762 = vld [vmem:[%s756 + $0x14] sm:$0xf]
        %v763 = vld [vmem:[%s756 + $0x18] sm:$0xf]
        %v764 = vld [vmem:[%s756 + $0x1c] sm:$0xf]
        %v765 = vld [vmem:[%s756 + $0x20] sm:$0xf]
        %v766 = vld [vmem:[%s756 + $0x24] sm:$0xf]
        %v767 = vld [vmem:[%s756 + $0x28] sm:$0xf]
        %v768 = vld [vmem:[%s756 + $0x2c] sm:$0xf]
        %v769 = vld [vmem:[%s756 + $0x30] sm:$0xf]
        %v770 = vld [vmem:[%s756 + $0x34] sm:$0xf]
        %v771 = vld [vmem:[%s756 + $0x38] sm:$0xf]
        %v772 = vld [vmem:[%s756 + $0x3c] sm:$0xf]
        %v806 = vunpack.c.l.b16 %v721
        %v807 = vunpack.c.l.b16 %v722
        %v808 = vunpack.c.l.b16 %v723
        %v809 = vunpack.c.l.b16 %v724
        %v810 = vunpack.c.l.b16 %v725
        %v811 = vunpack.c.l.b16 %v726
        %v812 = vunpack.c.l.b16 %v727
        %v813 = vunpack.c.l.b16 %v728
        %v814 = vunpack.c.l.b16 %v729
        %v815 = vunpack.c.l.b16 %v730
        %v816 = vunpack.c.l.b16 %v731
        %v817 = vunpack.c.l.b16 %v732
        %v818 = vunpack.c.l.b16 %v733
        %v819 = vunpack.c.l.b16 %v734
        %v820 = vunpack.c.l.b16 %v735
        %v821 = vunpack.c.l.b16 %v736
        %v822 = vunpack.c.l.b16 %v737
        %v823 = vunpack.c.l.b16 %v738
        %v824 = vunpack.c.l.b16 %v739
        %v825 = vunpack.c.l.b16 %v740
        %v826 = vunpack.c.l.b16 %v741
        %v827 = vunpack.c.l.b16 %v742
        %v828 = vunpack.c.l.b16 %v743
        %v829 = vunpack.c.l.b16 %v744
        %v830 = vunpack.c.l.b16 %v745
        %v831 = vunpack.c.l.b16 %v746
        %v832 = vunpack.c.l.b16 %v747
        %v833 = vunpack.c.l.b16 %v748
        %v834 = vunpack.c.l.b16 %v749
        %v835 = vunpack.c.l.b16 %v750
        %v836 = vunpack.c.l.b16 %v751
        %v837 = vunpack.c.l.b16 %v752
        %v838 = vunpack.c.l.b16 %v753
        %v839 = vpack.c.b16 %v807, %v806
        %v840 = vpack.c.b16 %v809, %v808
        %v841 = vpack.c.b16 %v811, %v810
        %v842 = vpack.c.b16 %v813, %v812
        %v843 = vpack.c.b16 %v815, %v814
        %v844 = vpack.c.b16 %v817, %v816
        %v845 = vpack.c.b16 %v819, %v818
        %v846 = vpack.c.b16 %v821, %v820
        %v847 = vpack.c.b16 %v823, %v822
        %v848 = vpack.c.b16 %v825, %v824
        %v849 = vpack.c.b16 %v827, %v826
        %v850 = vpack.c.b16 %v829, %v828
        %v851 = vpack.c.b16 %v831, %v830
        %v852 = vpack.c.b16 %v833, %v832
        %v853 = vpack.c.b16 %v835, %v834
        %v854 = vpack.c.b16 %v837, %v836
        %v855 = vpack.c.b16 %v838, %v838
        %vm856 = vcmask 1044480
        %v857 = vrot.slane %v839, 3
        %v858 = vrot.slane %v840, 3
        %v859 = vsel %vm856, %v857, %v858
        %v860 = vrot.slane %v841, 3
        %v861 = vsel %vm856, %v858, %v860
        %v862 = vrot.slane %v842, 3
        %v863 = vsel %vm856, %v860, %v862
        %v864 = vrot.slane %v843, 3
        %v865 = vsel %vm856, %v862, %v864
        %v866 = vrot.slane %v844, 3
        %v867 = vsel %vm856, %v864, %v866
        %v868 = vrot.slane %v845, 3
        %v869 = vsel %vm856, %v866, %v868
        %v870 = vrot.slane %v846, 3
        %v871 = vsel %vm856, %v868, %v870
        %v872 = vrot.slane %v847, 3
        %v873 = vsel %vm856, %v870, %v872
        %v874 = vrot.slane %v848, 3
        %v875 = vsel %vm856, %v872, %v874
        %v876 = vrot.slane %v849, 3
        %v877 = vsel %vm856, %v874, %v876
        %v878 = vrot.slane %v850, 3
        %v879 = vsel %vm856, %v876, %v878
        %v880 = vrot.slane %v851, 3
        %v881 = vsel %vm856, %v878, %v880
        %v882 = vrot.slane %v852, 3
        %v883 = vsel %vm856, %v880, %v882
        %v884 = vrot.slane %v853, 3
        %v885 = vsel %vm856, %v882, %v884
        %v886 = vrot.slane %v854, 3
        %v887 = vsel %vm856, %v884, %v886
        %v888 = vrot.slane %v855, 3
        %v889 = vsel %vm856, %v886, %v888
        %v922 = vunpack.c.l.b16 %v757
        %v923 = vunpack.c.l.b16 %v758
        %v924 = vunpack.c.l.b16 %v759
        %v925 = vunpack.c.l.b16 %v760
        %v926 = vunpack.c.l.b16 %v761
        %v927 = vunpack.c.l.b16 %v762
        %v928 = vunpack.c.l.b16 %v763
        %v929 = vunpack.c.l.b16 %v764
        %v930 = vunpack.c.l.b16 %v765
        %v931 = vunpack.c.l.b16 %v766
        %v932 = vunpack.c.l.b16 %v767
        %v933 = vunpack.c.l.b16 %v768
        %v934 = vunpack.c.l.b16 %v769
        %v935 = vunpack.c.l.b16 %v770
        %v936 = vunpack.c.l.b16 %v771
        %v937 = vunpack.c.l.b16 %v772
        %v938 = vpack.c.b16 %v923, %v922
        %v939 = vpack.c.b16 %v925, %v924
        %v940 = vpack.c.b16 %v927, %v926
        %v941 = vpack.c.b16 %v929, %v928
        %v942 = vpack.c.b16 %v931, %v930
        %v943 = vpack.c.b16 %v933, %v932
        %v944 = vpack.c.b16 %v935, %v934
        %v945 = vpack.c.b16 %v937, %v936
        %954 = vmatpush.bf16.msra.mxu0 %v945
        %955 = vmatpush.bf16.msra.mxu0 %v944
        %956 = vmatpush.bf16.msra.mxu0 %v943
        %957 = vmatpush.bf16.msra.mxu0 %v942
        %958 = vmatpush.bf16.msra.mxu0 %v941
        %959 = vmatpush.bf16.msra.mxu0 %v940
        %960 = vmatpush.bf16.msra.mxu0 %v939
        %961 = vmatpush.bf16.msra.mxu0 %v938
        %962 = vmatmul.bf16.gmra.mxu0 %v859
        %v963 = vpop.f32.mrf.mxu0
        %v964 = vadd.f32 0.0, %v963
        %v965 = vpop.f32.mrf.mxu0
        %v966 = vadd.f32 0.0, %v965
        %967 = vmatmul.bf16.gmra.mxu0 %v861
        %v968 = vpop.f32.mrf.mxu0
        %v969 = vadd.f32 0.0, %v968
        %v970 = vpop.f32.mrf.mxu0
        %v971 = vadd.f32 0.0, %v970
        %972 = vmatmul.bf16.gmra.mxu0 %v863
        %v973 = vpop.f32.mrf.mxu0
        %v974 = vadd.f32 0.0, %v973
        %v975 = vpop.f32.mrf.mxu0
        %v976 = vadd.f32 0.0, %v975
        %977 = vmatmul.bf16.gmra.mxu0 %v865
        %v978 = vpop.f32.mrf.mxu0
        %v979 = vadd.f32 0.0, %v978
        %v980 = vpop.f32.mrf.mxu0
        %v981 = vadd.f32 0.0, %v980
        %982 = vmatmul.bf16.gmra.mxu0 %v867
        %v983 = vpop.f32.mrf.mxu0
        %v984 = vadd.f32 0.0, %v983
        %v985 = vpop.f32.mrf.mxu0
        %v986 = vadd.f32 0.0, %v985
        %987 = vmatmul.bf16.gmra.mxu0 %v869
        %v988 = vpop.f32.mrf.mxu0
        %v989 = vadd.f32 0.0, %v988
        %v990 = vpop.f32.mrf.mxu0
        %v991 = vadd.f32 0.0, %v990
        %992 = vmatmul.bf16.gmra.mxu0 %v871
        %v993 = vpop.f32.mrf.mxu0
        %v994 = vadd.f32 0.0, %v993
        %v995 = vpop.f32.mrf.mxu0
        %v996 = vadd.f32 0.0, %v995
        %997 = vmatmul.bf16.gmra.mxu0 %v873
        %v998 = vpop.f32.mrf.mxu0
        %v999 = vadd.f32 0.0, %v998
        %v1000 = vpop.f32.mrf.mxu0
        %v1001 = vadd.f32 0.0, %v1000
        %1002 = vmatmul.bf16.gmra.mxu0 %v875
        %v1003 = vpop.f32.mrf.mxu0
        %v1004 = vadd.f32 0.0, %v1003
        %v1005 = vpop.f32.mrf.mxu0
        %v1006 = vadd.f32 0.0, %v1005
        %1007 = vmatmul.bf16.gmra.mxu0 %v877
        %v1008 = vpop.f32.mrf.mxu0
        %v1009 = vadd.f32 0.0, %v1008
        %v1010 = vpop.f32.mrf.mxu0
        %v1011 = vadd.f32 0.0, %v1010
        %1012 = vmatmul.bf16.gmra.mxu0 %v879
        %v1013 = vpop.f32.mrf.mxu0
        %v1014 = vadd.f32 0.0, %v1013
        %v1015 = vpop.f32.mrf.mxu0
        %v1016 = vadd.f32 0.0, %v1015
        %1017 = vmatmul.bf16.gmra.mxu0 %v881
        %v1018 = vpop.f32.mrf.mxu0
        %v1019 = vadd.f32 0.0, %v1018
        %v1020 = vpop.f32.mrf.mxu0
        %v1021 = vadd.f32 0.0, %v1020
        %1022 = vmatmul.bf16.gmra.mxu0 %v883
        %v1023 = vpop.f32.mrf.mxu0
        %v1024 = vadd.f32 0.0, %v1023
        %v1025 = vpop.f32.mrf.mxu0
        %v1026 = vadd.f32 0.0, %v1025
        %1027 = vmatmul.bf16.gmra.mxu0 %v885
        %v1028 = vpop.f32.mrf.mxu0
        %v1029 = vadd.f32 0.0, %v1028
        %v1030 = vpop.f32.mrf.mxu0
        %v1031 = vadd.f32 0.0, %v1030
        %1032 = vmatmul.bf16.gmra.mxu0 %v887
        %v1033 = vpop.f32.mrf.mxu0
        %v1034 = vadd.f32 0.0, %v1033
        %v1035 = vpop.f32.mrf.mxu0
        %v1036 = vadd.f32 0.0, %v1035
        %1037 = vmatmul.bf16.gmra.mxu0 %v889
        %v1038 = vpop.f32.mrf.mxu0
        %v1039 = vadd.f32 0.0, %v1038
        %v1040 = vpop.f32.mrf.mxu0
        %v1041 = vadd.f32 0.0, %v1040
        %1042 = vdwg.mxu0
        %v1076 = vunpack.c.l.b16 %v668
        %v1077 = vunpack.c.l.b16 %v669
        %v1078 = vunpack.c.l.b16 %v670
        %v1079 = vunpack.c.l.b16 %v671
        %v1080 = vunpack.c.l.b16 %v672
        %v1081 = vunpack.c.l.b16 %v673
        %v1082 = vunpack.c.l.b16 %v674
        %v1083 = vunpack.c.l.b16 %v675
        %v1084 = vunpack.c.l.b16 %v676
        %v1085 = vunpack.c.l.b16 %v677
        %v1086 = vunpack.c.l.b16 %v678
        %v1087 = vunpack.c.l.b16 %v679
        %v1088 = vunpack.c.l.b16 %v680
        %v1089 = vunpack.c.l.b16 %v681
        %v1090 = vunpack.c.l.b16 %v682
        %v1091 = vunpack.c.l.b16 %v683
        %v1092 = vunpack.c.l.b16 %v684
        %v1093 = vunpack.c.l.b16 %v685
        %v1094 = vunpack.c.l.b16 %v686
        %v1095 = vunpack.c.l.b16 %v687
        %v1096 = vunpack.c.l.b16 %v688
        %v1097 = vunpack.c.l.b16 %v689
        %v1098 = vunpack.c.l.b16 %v690
        %v1099 = vunpack.c.l.b16 %v691
        %v1100 = vunpack.c.l.b16 %v692
        %v1101 = vunpack.c.l.b16 %v693
        %v1102 = vunpack.c.l.b16 %v694
        %v1103 = vunpack.c.l.b16 %v695
        %v1104 = vunpack.c.l.b16 %v696
        %v1105 = vunpack.c.l.b16 %v697
        %v1106 = vunpack.c.l.b16 %v698
        %v1107 = vunpack.c.l.b16 %v699
        %v1108 = vunpack.c.l.b16 %v700
        %v1109 = vpack.c.b16 %v1077, %v1076
        %v1110 = vpack.c.b16 %v1079, %v1078
        %v1111 = vpack.c.b16 %v1081, %v1080
        %v1112 = vpack.c.b16 %v1083, %v1082
        %v1113 = vpack.c.b16 %v1085, %v1084
        %v1114 = vpack.c.b16 %v1087, %v1086
        %v1115 = vpack.c.b16 %v1089, %v1088
        %v1116 = vpack.c.b16 %v1091, %v1090
        %v1117 = vpack.c.b16 %v1093, %v1092
        %v1118 = vpack.c.b16 %v1095, %v1094
        %v1119 = vpack.c.b16 %v1097, %v1096
        %v1120 = vpack.c.b16 %v1099, %v1098
        %v1121 = vpack.c.b16 %v1101, %v1100
        %v1122 = vpack.c.b16 %v1103, %v1102
        %v1123 = vpack.c.b16 %v1105, %v1104
        %v1124 = vpack.c.b16 %v1107, %v1106
        %v1125 = vpack.c.b16 %v1108, %v1108
        %v1126 = vrot.slane %v1109, 3
        %v1127 = vrot.slane %v1110, 3
        %v1128 = vsel %vm856, %v1126, %v1127
        %v1129 = vrot.slane %v1111, 3
        %v1130 = vsel %vm856, %v1127, %v1129
        %v1131 = vrot.slane %v1112, 3
        %v1132 = vsel %vm856, %v1129, %v1131
        %v1133 = vrot.slane %v1113, 3
        %v1134 = vsel %vm856, %v1131, %v1133
        %v1135 = vrot.slane %v1114, 3
        %v1136 = vsel %vm856, %v1133, %v1135
        %v1137 = vrot.slane %v1115, 3
        %v1138 = vsel %vm856, %v1135, %v1137
        %v1139 = vrot.slane %v1116, 3
        %v1140 = vsel %vm856, %v1137, %v1139
        %v1141 = vrot.slane %v1117, 3
        %v1142 = vsel %vm856, %v1139, %v1141
        %v1143 = vrot.slane %v1118, 3
        %v1144 = vsel %vm856, %v1141, %v1143
        %v1145 = vrot.slane %v1119, 3
        %v1146 = vsel %vm856, %v1143, %v1145
        %v1147 = vrot.slane %v1120, 3
        %v1148 = vsel %vm856, %v1145, %v1147
        %v1149 = vrot.slane %v1121, 3
        %v1150 = vsel %vm856, %v1147, %v1149
        %v1151 = vrot.slane %v1122, 3
        %v1152 = vsel %vm856, %v1149, %v1151
        %v1153 = vrot.slane %v1123, 3
        %v1154 = vsel %vm856, %v1151, %v1153
        %v1155 = vrot.slane %v1124, 3
        %v1156 = vsel %vm856, %v1153, %v1155
        %v1157 = vrot.slane %v1125, 3
        %v1158 = vsel %vm856, %v1155, %v1157
        %v1191 = vunpack.c.l.b16 %v705
        %v1192 = vunpack.c.l.b16 %v706
        %v1193 = vunpack.c.l.b16 %v707
        %v1194 = vunpack.c.l.b16 %v708
        %v1195 = vunpack.c.l.b16 %v709
        %v1196 = vunpack.c.l.b16 %v710
        %v1197 = vunpack.c.l.b16 %v711
        %v1198 = vunpack.c.l.b16 %v712
        %v1199 = vunpack.c.l.b16 %v713
        %v1200 = vunpack.c.l.b16 %v714
        %v1201 = vunpack.c.l.b16 %v715
        %v1202 = vunpack.c.l.b16 %v716
        %v1203 = vunpack.c.l.b16 %v717
        %v1204 = vunpack.c.l.b16 %v718
        %v1205 = vunpack.c.l.b16 %v719
        %v1206 = vunpack.c.l.b16 %v720
        %v1207 = vpack.c.b16 %v1192, %v1191
        %v1208 = vpack.c.b16 %v1194, %v1193
        %v1209 = vpack.c.b16 %v1196, %v1195
        %v1210 = vpack.c.b16 %v1198, %v1197
        %v1211 = vpack.c.b16 %v1200, %v1199
        %v1212 = vpack.c.b16 %v1202, %v1201
        %v1213 = vpack.c.b16 %v1204, %v1203
        %v1214 = vpack.c.b16 %v1206, %v1205
        %1223 = vmatpush.bf16.msra.mxu0 %v1214
        %1224 = vmatpush.bf16.msra.mxu0 %v1213
        %1225 = vmatpush.bf16.msra.mxu0 %v1212
        %1226 = vmatpush.bf16.msra.mxu0 %v1211
        %1227 = vmatpush.bf16.msra.mxu0 %v1210
        %1228 = vmatpush.bf16.msra.mxu0 %v1209
        %1229 = vmatpush.bf16.msra.mxu0 %v1208
        %1230 = vmatpush.bf16.msra.mxu0 %v1207
        %1231 = vmatmul.bf16.gmra.mxu0 %v1128
        %v1232 = vpop.f32.mrf.mxu0
        %v1233 = vadd.f32 %v964, %v1232
        %v1234 = vpop.f32.mrf.mxu0
        %v1235 = vadd.f32 %v966, %v1234
        %1236 = vmatmul.bf16.gmra.mxu0 %v1130
        %v1237 = vpop.f32.mrf.mxu0
        %v1238 = vadd.f32 %v969, %v1237
        %v1239 = vpop.f32.mrf.mxu0
        %v1240 = vadd.f32 %v971, %v1239
        %1241 = vmatmul.bf16.gmra.mxu0 %v1132
        %v1242 = vpop.f32.mrf.mxu0
        %v1243 = vadd.f32 %v974, %v1242
        %v1244 = vpop.f32.mrf.mxu0
        %v1245 = vadd.f32 %v976, %v1244
        %1246 = vmatmul.bf16.gmra.mxu0 %v1134
        %v1247 = vpop.f32.mrf.mxu0
        %v1248 = vadd.f32 %v979, %v1247
        %v1249 = vpop.f32.mrf.mxu0
        %v1250 = vadd.f32 %v981, %v1249
        %1251 = vmatmul.bf16.gmra.mxu0 %v1136
        %v1252 = vpop.f32.mrf.mxu0
        %v1253 = vadd.f32 %v984, %v1252
        %v1254 = vpop.f32.mrf.mxu0
        %v1255 = vadd.f32 %v986, %v1254
        %1256 = vmatmul.bf16.gmra.mxu0 %v1138
        %v1257 = vpop.f32.mrf.mxu0
        %v1258 = vadd.f32 %v989, %v1257
        %v1259 = vpop.f32.mrf.mxu0
        %v1260 = vadd.f32 %v991, %v1259
        %1261 = vmatmul.bf16.gmra.mxu0 %v1140
        %v1262 = vpop.f32.mrf.mxu0
        %v1263 = vadd.f32 %v994, %v1262
        %v1264 = vpop.f32.mrf.mxu0
        %v1265 = vadd.f32 %v996, %v1264
        %1266 = vmatmul.bf16.gmra.mxu0 %v1142
        %v1267 = vpop.f32.mrf.mxu0
        %v1268 = vadd.f32 %v999, %v1267
        %v1269 = vpop.f32.mrf.mxu0
        %v1270 = vadd.f32 %v1001, %v1269
        %1271 = vmatmul.bf16.gmra.mxu0 %v1144
        %v1272 = vpop.f32.mrf.mxu0
        %v1273 = vadd.f32 %v1004, %v1272
        %v1274 = vpop.f32.mrf.mxu0
        %v1275 = vadd.f32 %v1006, %v1274
        %1276 = vmatmul.bf16.gmra.mxu0 %v1146
        %v1277 = vpop.f32.mrf.mxu0
        %v1278 = vadd.f32 %v1009, %v1277
        %v1279 = vpop.f32.mrf.mxu0
        %v1280 = vadd.f32 %v1011, %v1279
        %1281 = vmatmul.bf16.gmra.mxu0 %v1148
        %v1282 = vpop.f32.mrf.mxu0
        %v1283 = vadd.f32 %v1014, %v1282
        %v1284 = vpop.f32.mrf.mxu0
        %v1285 = vadd.f32 %v1016, %v1284
        %1286 = vmatmul.bf16.gmra.mxu0 %v1150
        %v1287 = vpop.f32.mrf.mxu0
        %v1288 = vadd.f32 %v1019, %v1287
        %v1289 = vpop.f32.mrf.mxu0
        %v1290 = vadd.f32 %v1021, %v1289
        %1291 = vmatmul.bf16.gmra.mxu0 %v1152
        %v1292 = vpop.f32.mrf.mxu0
        %v1293 = vadd.f32 %v1024, %v1292
        %v1294 = vpop.f32.mrf.mxu0
        %v1295 = vadd.f32 %v1026, %v1294
        %1296 = vmatmul.bf16.gmra.mxu0 %v1154
        %v1297 = vpop.f32.mrf.mxu0
        %v1298 = vadd.f32 %v1029, %v1297
        %v1299 = vpop.f32.mrf.mxu0
        %v1300 = vadd.f32 %v1031, %v1299
        %1301 = vmatmul.bf16.gmra.mxu0 %v1156
        %v1302 = vpop.f32.mrf.mxu0
        %v1303 = vadd.f32 %v1034, %v1302
        %v1304 = vpop.f32.mrf.mxu0
        %v1305 = vadd.f32 %v1036, %v1304
        %1306 = vmatmul.bf16.gmra.mxu0 %v1158
        %v1307 = vpop.f32.mrf.mxu0
        %v1308 = vadd.f32 %v1039, %v1307
        %v1309 = vpop.f32.mrf.mxu0
        %v1310 = vadd.f32 %v1041, %v1309
        %1311 = vdwg.mxu0
        %v1312 = vld [vmem:[#allocation2 + $0x124] sm:$0x8]
        %v1313 = vld [vmem:[#allocation2 + $0x128] sm:$0xf]
        %v1314 = vld [vmem:[#allocation2 + $0x12c] sm:$0xf]
        %v1315 = vld [vmem:[#allocation2 + $0x130] sm:$0xf]
        %v1316 = vld [vmem:[#allocation2 + $0x134] sm:$0xf]
        %v1317 = vld [vmem:[#allocation2 + $0x138] sm:$0xf]
        %v1318 = vld [vmem:[#allocation2 + $0x13c] sm:$0xf]
        %v1319 = vld [vmem:[#allocation2 + $0x140] sm:$0xf]
        %v1320 = vld [vmem:[#allocation2 + $0x144] sm:$0xf]
        %v1321 = vld [vmem:[#allocation2 + $0x148] sm:$0xf]
        %v1322 = vld [vmem:[#allocation2 + $0x14c] sm:$0xf]
        %v1323 = vld [vmem:[#allocation2 + $0x150] sm:$0xf]
        %v1324 = vld [vmem:[#allocation2 + $0x154] sm:$0xf]
        %v1325 = vld [vmem:[#allocation2 + $0x158] sm:$0xf]
        %v1326 = vld [vmem:[#allocation2 + $0x15c] sm:$0xf]
        %v1327 = vld [vmem:[#allocation2 + $0x160] sm:$0xf]
        %v1328 = vld [vmem:[#allocation2 + $0x164] sm:$0xf]
        %v1329 = vld [vmem:[#allocation2 + $0x168] sm:$0xf]
        %v1330 = vld [vmem:[#allocation2 + $0x16c] sm:$0xf]
        %v1331 = vld [vmem:[#allocation2 + $0x170] sm:$0xf]
        %v1332 = vld [vmem:[#allocation2 + $0x174] sm:$0xf]
        %v1333 = vld [vmem:[#allocation2 + $0x178] sm:$0xf]
        %v1334 = vld [vmem:[#allocation2 + $0x17c] sm:$0xf]
        %v1335 = vld [vmem:[#allocation2 + $0x180] sm:$0xf]
        %v1336 = vld [vmem:[#allocation2 + $0x184] sm:$0xf]
        %v1337 = vld [vmem:[#allocation2 + $0x188] sm:$0xf]
        %v1338 = vld [vmem:[#allocation2 + $0x18c] sm:$0xf]
        %v1339 = vld [vmem:[#allocation2 + $0x190] sm:$0xf]
        %v1340 = vld [vmem:[#allocation2 + $0x194] sm:$0xf]
        %v1341 = vld [vmem:[#allocation2 + $0x198] sm:$0xf]
        %v1342 = vld [vmem:[#allocation2 + $0x19c] sm:$0xf]
        %v1343 = vld [vmem:[#allocation2 + $0x1a0] sm:$0xf]
        %v1344 = vld [vmem:[#allocation2 + $0x1a4] sm:$0x7]
        %s1345 = sadd.s32 %s701, 704
        %s1346 = smul.addr %s1345, 4
        %s1347 = scalar_lea.vmem [#allocation4], %s1346
        %v1348 = vld [vmem:[%s1347] sm:$0xf]
        %v1349 = vld [vmem:[%s1347 + $0x4] sm:$0xf]
        %v1350 = vld [vmem:[%s1347 + $0x8] sm:$0xf]
        %v1351 = vld [vmem:[%s1347 + $0xc] sm:$0xf]
        %v1352 = vld [vmem:[%s1347 + $0x10] sm:$0xf]
        %v1353 = vld [vmem:[%s1347 + $0x14] sm:$0xf]
        %v1354 = vld [vmem:[%s1347 + $0x18] sm:$0xf]
        %v1355 = vld [vmem:[%s1347 + $0x1c] sm:$0xf]
        %v1356 = vld [vmem:[%s1347 + $0x20] sm:$0xf]
        %v1357 = vld [vmem:[%s1347 + $0x24] sm:$0xf]
        %v1358 = vld [vmem:[%s1347 + $0x28] sm:$0xf]
        %v1359 = vld [vmem:[%s1347 + $0x2c] sm:$0xf]
        %v1360 = vld [vmem:[%s1347 + $0x30] sm:$0xf]
        %v1361 = vld [vmem:[%s1347 + $0x34] sm:$0xf]
        %v1362 = vld [vmem:[%s1347 + $0x38] sm:$0xf]
        %v1363 = vld [vmem:[%s1347 + $0x3c] sm:$0xf]
        %v1397 = vunpack.c.l.b16 %v1312
        %v1398 = vunpack.c.l.b16 %v1313
        %v1399 = vunpack.c.l.b16 %v1314
        %v1400 = vunpack.c.l.b16 %v1315
        %v1401 = vunpack.c.l.b16 %v1316
        %v1402 = vunpack.c.l.b16 %v1317
        %v1403 = vunpack.c.l.b16 %v1318
        %v1404 = vunpack.c.l.b16 %v1319
        %v1405 = vunpack.c.l.b16 %v1320
        %v1406 = vunpack.c.l.b16 %v1321
        %v1407 = vunpack.c.l.b16 %v1322
        %v1408 = vunpack.c.l.b16 %v1323
        %v1409 = vunpack.c.l.b16 %v1324
        %v1410 = vunpack.c.l.b16 %v1325
        %v1411 = vunpack.c.l.b16 %v1326
        %v1412 = vunpack.c.l.b16 %v1327
        %v1413 = vunpack.c.l.b16 %v1328
        %v1414 = vunpack.c.l.b16 %v1329
        %v1415 = vunpack.c.l.b16 %v1330
        %v1416 = vunpack.c.l.b16 %v1331
        %v1417 = vunpack.c.l.b16 %v1332
        %v1418 = vunpack.c.l.b16 %v1333
        %v1419 = vunpack.c.l.b16 %v1334
        %v1420 = vunpack.c.l.b16 %v1335
        %v1421 = vunpack.c.l.b16 %v1336
        %v1422 = vunpack.c.l.b16 %v1337
        %v1423 = vunpack.c.l.b16 %v1338
        %v1424 = vunpack.c.l.b16 %v1339
        %v1425 = vunpack.c.l.b16 %v1340
        %v1426 = vunpack.c.l.b16 %v1341
        %v1427 = vunpack.c.l.b16 %v1342
        %v1428 = vunpack.c.l.b16 %v1343
        %v1429 = vunpack.c.l.b16 %v1344
        %v1430 = vpack.c.b16 %v1398, %v1397
        %v1431 = vpack.c.b16 %v1400, %v1399
        %v1432 = vpack.c.b16 %v1402, %v1401
        %v1433 = vpack.c.b16 %v1404, %v1403
        %v1434 = vpack.c.b16 %v1406, %v1405
        %v1435 = vpack.c.b16 %v1408, %v1407
        %v1436 = vpack.c.b16 %v1410, %v1409
        %v1437 = vpack.c.b16 %v1412, %v1411
        %v1438 = vpack.c.b16 %v1414, %v1413
        %v1439 = vpack.c.b16 %v1416, %v1415
        %v1440 = vpack.c.b16 %v1418, %v1417
        %v1441 = vpack.c.b16 %v1420, %v1419
        %v1442 = vpack.c.b16 %v1422, %v1421
        %v1443 = vpack.c.b16 %v1424, %v1423
        %v1444 = vpack.c.b16 %v1426, %v1425
        %v1445 = vpack.c.b16 %v1428, %v1427
        %v1446 = vpack.c.b16 %v1429, %v1429
        %v1447 = vrot.slane %v1430, 3
        %v1448 = vrot.slane %v1431, 3
        %v1449 = vsel %vm856, %v1447, %v1448
        %v1450 = vrot.slane %v1432, 3
        %v1451 = vsel %vm856, %v1448, %v1450
        %v1452 = vrot.slane %v1433, 3
        %v1453 = vsel %vm856, %v1450, %v1452
        %v1454 = vrot.slane %v1434, 3
        %v1455 = vsel %vm856, %v1452, %v1454
        %v1456 = vrot.slane %v1435, 3
        %v1457 = vsel %vm856, %v1454, %v1456
        %v1458 = vrot.slane %v1436, 3
        %v1459 = vsel %vm856, %v1456, %v1458
        %v1460 = vrot.slane %v1437, 3
        %v1461 = vsel %vm856, %v1458, %v1460
        %v1462 = vrot.slane %v1438, 3
        %v1463 = vsel %vm856, %v1460, %v1462
        %v1464 = vrot.slane %v1439, 3
        %v1465 = vsel %vm856, %v1462, %v1464
        %v1466 = vrot.slane %v1440, 3
        %v1467 = vsel %vm856, %v1464, %v1466
        %v1468 = vrot.slane %v1441, 3
        %v1469 = vsel %vm856, %v1466, %v1468
        %v1470 = vrot.slane %v1442, 3
        %v1471 = vsel %vm856, %v1468, %v1470
        %v1472 = vrot.slane %v1443, 3
        %v1473 = vsel %vm856, %v1470, %v1472
        %v1474 = vrot.slane %v1444, 3
        %v1475 = vsel %vm856, %v1472, %v1474
        %v1476 = vrot.slane %v1445, 3
        %v1477 = vsel %vm856, %v1474, %v1476
        %v1478 = vrot.slane %v1446, 3
        %v1479 = vsel %vm856, %v1476, %v1478
        %v1512 = vunpack.c.l.b16 %v1348
        %v1513 = vunpack.c.l.b16 %v1349
        %v1514 = vunpack.c.l.b16 %v1350
        %v1515 = vunpack.c.l.b16 %v1351
        %v1516 = vunpack.c.l.b16 %v1352
        %v1517 = vunpack.c.l.b16 %v1353
        %v1518 = vunpack.c.l.b16 %v1354
        %v1519 = vunpack.c.l.b16 %v1355
        %v1520 = vunpack.c.l.b16 %v1356
        %v1521 = vunpack.c.l.b16 %v1357
        %v1522 = vunpack.c.l.b16 %v1358
        %v1523 = vunpack.c.l.b16 %v1359
        %v1524 = vunpack.c.l.b16 %v1360
        %v1525 = vunpack.c.l.b16 %v1361
        %v1526 = vunpack.c.l.b16 %v1362
        %v1527 = vunpack.c.l.b16 %v1363
        %v1528 = vpack.c.b16 %v1513, %v1512
        %v1529 = vpack.c.b16 %v1515, %v1514
        %v1530 = vpack.c.b16 %v1517, %v1516
        %v1531 = vpack.c.b16 %v1519, %v1518
        %v1532 = vpack.c.b16 %v1521, %v1520
        %v1533 = vpack.c.b16 %v1523, %v1522
        %v1534 = vpack.c.b16 %v1525, %v1524
        %v1535 = vpack.c.b16 %v1527, %v1526
        %1544 = vmatpush.bf16.msra.mxu0 %v1535
        %1545 = vmatpush.bf16.msra.mxu0 %v1534
        %1546 = vmatpush.bf16.msra.mxu0 %v1533
        %1547 = vmatpush.bf16.msra.mxu0 %v1532
        %1548 = vmatpush.bf16.msra.mxu0 %v1531
        %1549 = vmatpush.bf16.msra.mxu0 %v1530
        %1550 = vmatpush.bf16.msra.mxu0 %v1529
        %1551 = vmatpush.bf16.msra.mxu0 %v1528
        %1552 = vmatmul.bf16.gmra.mxu0 %v1449
        %v1553 = vpop.f32.mrf.mxu0
        %v1554 = vadd.f32 0.0, %v1553
        %v1555 = vpop.f32.mrf.mxu0
        %v1556 = vadd.f32 0.0, %v1555
        %1557 = vmatmul.bf16.gmra.mxu0 %v1451
        %v1558 = vpop.f32.mrf.mxu0
        %v1559 = vadd.f32 0.0, %v1558
        %v1560 = vpop.f32.mrf.mxu0
        %v1561 = vadd.f32 0.0, %v1560
        %1562 = vmatmul.bf16.gmra.mxu0 %v1453
        %v1563 = vpop.f32.mrf.mxu0
        %v1564 = vadd.f32 0.0, %v1563
        %v1565 = vpop.f32.mrf.mxu0
        %v1566 = vadd.f32 0.0, %v1565
        %1567 = vmatmul.bf16.gmra.mxu0 %v1455
        %v1568 = vpop.f32.mrf.mxu0
        %v1569 = vadd.f32 0.0, %v1568
        %v1570 = vpop.f32.mrf.mxu0
        %v1571 = vadd.f32 0.0, %v1570
        %1572 = vmatmul.bf16.gmra.mxu0 %v1457
        %v1573 = vpop.f32.mrf.mxu0
        %v1574 = vadd.f32 0.0, %v1573
        %v1575 = vpop.f32.mrf.mxu0
        %v1576 = vadd.f32 0.0, %v1575
        %1577 = vmatmul.bf16.gmra.mxu0 %v1459
        %v1578 = vpop.f32.mrf.mxu0
        %v1579 = vadd.f32 0.0, %v1578
        %v1580 = vpop.f32.mrf.mxu0
        %v1581 = vadd.f32 0.0, %v1580
        %1582 = vmatmul.bf16.gmra.mxu0 %v1461
        %v1583 = vpop.f32.mrf.mxu0
        %v1584 = vadd.f32 0.0, %v1583
        %v1585 = vpop.f32.mrf.mxu0
        %v1586 = vadd.f32 0.0, %v1585
        %1587 = vmatmul.bf16.gmra.mxu0 %v1463
        %v1588 = vpop.f32.mrf.mxu0
        %v1589 = vadd.f32 0.0, %v1588
        %v1590 = vpop.f32.mrf.mxu0
        %v1591 = vadd.f32 0.0, %v1590
        %1592 = vmatmul.bf16.gmra.mxu0 %v1465
        %v1593 = vpop.f32.mrf.mxu0
        %v1594 = vadd.f32 0.0, %v1593
        %v1595 = vpop.f32.mrf.mxu0
        %v1596 = vadd.f32 0.0, %v1595
        %1597 = vmatmul.bf16.gmra.mxu0 %v1467
        %v1598 = vpop.f32.mrf.mxu0
        %v1599 = vadd.f32 0.0, %v1598
        %v1600 = vpop.f32.mrf.mxu0
        %v1601 = vadd.f32 0.0, %v1600
        %1602 = vmatmul.bf16.gmra.mxu0 %v1469
        %v1603 = vpop.f32.mrf.mxu0
        %v1604 = vadd.f32 0.0, %v1603
        %v1605 = vpop.f32.mrf.mxu0
        %v1606 = vadd.f32 0.0, %v1605
        %1607 = vmatmul.bf16.gmra.mxu0 %v1471
        %v1608 = vpop.f32.mrf.mxu0
        %v1609 = vadd.f32 0.0, %v1608
        %v1610 = vpop.f32.mrf.mxu0
        %v1611 = vadd.f32 0.0, %v1610
        %1612 = vmatmul.bf16.gmra.mxu0 %v1473
        %v1613 = vpop.f32.mrf.mxu0
        %v1614 = vadd.f32 0.0, %v1613
        %v1615 = vpop.f32.mrf.mxu0
        %v1616 = vadd.f32 0.0, %v1615
        %1617 = vmatmul.bf16.gmra.mxu0 %v1475
        %v1618 = vpop.f32.mrf.mxu0
        %v1619 = vadd.f32 0.0, %v1618
        %v1620 = vpop.f32.mrf.mxu0
        %v1621 = vadd.f32 0.0, %v1620
        %1622 = vmatmul.bf16.gmra.mxu0 %v1477
        %v1623 = vpop.f32.mrf.mxu0
        %v1624 = vadd.f32 0.0, %v1623
        %v1625 = vpop.f32.mrf.mxu0
        %v1626 = vadd.f32 0.0, %v1625
        %1627 = vmatmul.bf16.gmra.mxu0 %v1479
        %v1628 = vpop.f32.mrf.mxu0
        %v1629 = vadd.f32 0.0, %v1628
        %v1630 = vpop.f32.mrf.mxu0
        %v1631 = vadd.f32 0.0, %v1630
        %1632 = vdwg.mxu0
        %v1633 = vadd.f32 %v1233, %v1554
        %v1634 = vadd.f32 %v1235, %v1556
        %v1635 = vadd.f32 %v1238, %v1559
        %v1636 = vadd.f32 %v1240, %v1561
        %v1637 = vadd.f32 %v1243, %v1564
        %v1638 = vadd.f32 %v1245, %v1566
        %v1639 = vadd.f32 %v1248, %v1569
        %v1640 = vadd.f32 %v1250, %v1571
        %v1641 = vadd.f32 %v1253, %v1574
        %v1642 = vadd.f32 %v1255, %v1576
        %v1643 = vadd.f32 %v1258, %v1579
        %v1644 = vadd.f32 %v1260, %v1581
        %v1645 = vadd.f32 %v1263, %v1584
        %v1646 = vadd.f32 %v1265, %v1586
        %v1647 = vadd.f32 %v1268, %v1589
        %v1648 = vadd.f32 %v1270, %v1591
        %v1649 = vadd.f32 %v1273, %v1594
        %v1650 = vadd.f32 %v1275, %v1596
        %v1651 = vadd.f32 %v1278, %v1599
        %v1652 = vadd.f32 %v1280, %v1601
        %v1653 = vadd.f32 %v1283, %v1604
        %v1654 = vadd.f32 %v1285, %v1606
        %v1655 = vadd.f32 %v1288, %v1609
        %v1656 = vadd.f32 %v1290, %v1611
        %v1657 = vadd.f32 %v1293, %v1614
        %v1658 = vadd.f32 %v1295, %v1616
        %v1659 = vadd.f32 %v1298, %v1619
        %v1660 = vadd.f32 %v1300, %v1621
        %v1661 = vadd.f32 %v1303, %v1624
        %v1662 = vadd.f32 %v1305, %v1626
        %v1663 = vadd.f32 %v1308, %v1629
        %v1664 = vadd.f32 %v1310, %v1631
        %v1665 = vld [vmem:[#allocation7] sm:$0xff]
        %v1666 = vld [vmem:[#allocation7 + $0x8] sm:$0xff]
        %v1667 = vld [vmem:[#allocation7 + $0x10] sm:$0xff]
        %v1668 = vld [vmem:[#allocation7 + $0x18] sm:$0xff]
        %v1669 = vld [vmem:[#allocation7 + $0x20] sm:$0xff]
        %v1670 = vld [vmem:[#allocation7 + $0x28] sm:$0xff]
        %v1671 = vld [vmem:[#allocation7 + $0x30] sm:$0xff]
        %v1672 = vld [vmem:[#allocation7 + $0x38] sm:$0xff]
        %v1673 = vld [vmem:[#allocation7 + $0x40] sm:$0xff]
        %v1674 = vld [vmem:[#allocation7 + $0x48] sm:$0xff]
        %v1675 = vld [vmem:[#allocation7 + $0x50] sm:$0xff]
        %v1676 = vld [vmem:[#allocation7 + $0x58] sm:$0xff]
        %v1677 = vld [vmem:[#allocation7 + $0x60] sm:$0xff]
        %v1678 = vld [vmem:[#allocation7 + $0x68] sm:$0xff]
        %v1679 = vld [vmem:[#allocation7 + $0x70] sm:$0xff]
        %v1680 = vld [vmem:[#allocation7 + $0x78] sm:$0xff]
        %v1681 = vld [vmem:[#allocation7 + $0x80] sm:$0xff]
        %v1682 = vld [vmem:[#allocation7 + $0x88] sm:$0xff]
        %v1683 = vld [vmem:[#allocation7 + $0x90] sm:$0xff]
        %v1684 = vld [vmem:[#allocation7 + $0x98] sm:$0xff]
        %v1685 = vld [vmem:[#allocation7 + $0xa0] sm:$0xff]
        %v1686 = vld [vmem:[#allocation7 + $0xa8] sm:$0xff]
        %v1687 = vld [vmem:[#allocation7 + $0xb0] sm:$0xff]
        %v1688 = vld [vmem:[#allocation7 + $0xb8] sm:$0xff]
        %v1689 = vld [vmem:[#allocation7 + $0xc0] sm:$0xff]
        %v1690 = vld [vmem:[#allocation7 + $0xc8] sm:$0xff]
        %v1691 = vld [vmem:[#allocation7 + $0xd0] sm:$0xff]
        %v1692 = vld [vmem:[#allocation7 + $0xd8] sm:$0xff]
        %v1693 = vld [vmem:[#allocation7 + $0xe0] sm:$0xff]
        %v1694 = vld [vmem:[#allocation7 + $0xe8] sm:$0xff]
        %v1695 = vld [vmem:[#allocation7 + $0xf0] sm:$0xff]
        %v1696 = vld [vmem:[#allocation7 + $0xf8] sm:$0xff]
        %1698 = vset.pattern.permute.xlu0 0
        %1699 = vperm.xlu0 %1698, %v1665
        %v1700 = vpop.permute.xlu0 %1699
        %1703 = vset.pattern.permute.xlu0 0
        %1704 = vperm.xlu0 %1703, %v1666
        %v1705 = vpop.permute.xlu0 %1704
        %1708 = vset.pattern.permute.xlu0 0
        %1709 = vperm.xlu0 %1708, %v1667
        %v1710 = vpop.permute.xlu0 %1709
        %1713 = vset.pattern.permute.xlu0 0
        %1714 = vperm.xlu0 %1713, %v1668
        %v1715 = vpop.permute.xlu0 %1714
        %1718 = vset.pattern.permute.xlu0 0
        %1719 = vperm.xlu0 %1718, %v1669
        %v1720 = vpop.permute.xlu0 %1719
        %1723 = vset.pattern.permute.xlu0 0
        %1724 = vperm.xlu0 %1723, %v1670
        %v1725 = vpop.permute.xlu0 %1724
        %1728 = vset.pattern.permute.xlu0 0
        %1729 = vperm.xlu0 %1728, %v1671
        %v1730 = vpop.permute.xlu0 %1729
        %1733 = vset.pattern.permute.xlu0 0
        %1734 = vperm.xlu0 %1733, %v1672
        %v1735 = vpop.permute.xlu0 %1734
        %1738 = vset.pattern.permute.xlu0 0
        %1739 = vperm.xlu0 %1738, %v1673
        %v1740 = vpop.permute.xlu0 %1739
        %1743 = vset.pattern.permute.xlu0 0
        %1744 = vperm.xlu0 %1743, %v1674
        %v1745 = vpop.permute.xlu0 %1744
        %1748 = vset.pattern.permute.xlu0 0
        %1749 = vperm.xlu0 %1748, %v1675
        %v1750 = vpop.permute.xlu0 %1749
        %1753 = vset.pattern.permute.xlu0 0
        %1754 = vperm.xlu0 %1753, %v1676
        %v1755 = vpop.permute.xlu0 %1754
        %1758 = vset.pattern.permute.xlu0 0
        %1759 = vperm.xlu0 %1758, %v1677
        %v1760 = vpop.permute.xlu0 %1759
        %1763 = vset.pattern.permute.xlu0 0
        %1764 = vperm.xlu0 %1763, %v1678
        %v1765 = vpop.permute.xlu0 %1764
        %1768 = vset.pattern.permute.xlu0 0
        %1769 = vperm.xlu0 %1768, %v1679
        %v1770 = vpop.permute.xlu0 %1769
        %1773 = vset.pattern.permute.xlu0 0
        %1774 = vperm.xlu0 %1773, %v1680
        %v1775 = vpop.permute.xlu0 %1774
        %1778 = vset.pattern.permute.xlu0 0
        %1779 = vperm.xlu0 %1778, %v1681
        %v1780 = vpop.permute.xlu0 %1779
        %1783 = vset.pattern.permute.xlu0 0
        %1784 = vperm.xlu0 %1783, %v1682
        %v1785 = vpop.permute.xlu0 %1784
        %1788 = vset.pattern.permute.xlu0 0
        %1789 = vperm.xlu0 %1788, %v1683
        %v1790 = vpop.permute.xlu0 %1789
        %1793 = vset.pattern.permute.xlu0 0
        %1794 = vperm.xlu0 %1793, %v1684
        %v1795 = vpop.permute.xlu0 %1794
        %1798 = vset.pattern.permute.xlu0 0
        %1799 = vperm.xlu0 %1798, %v1685
        %v1800 = vpop.permute.xlu0 %1799
        %1803 = vset.pattern.permute.xlu0 0
        %1804 = vperm.xlu0 %1803, %v1686
        %v1805 = vpop.permute.xlu0 %1804
        %1808 = vset.pattern.permute.xlu0 0
        %1809 = vperm.xlu0 %1808, %v1687
        %v1810 = vpop.permute.xlu0 %1809
        %1813 = vset.pattern.permute.xlu0 0
        %1814 = vperm.xlu0 %1813, %v1688
        %v1815 = vpop.permute.xlu0 %1814
        %1818 = vset.pattern.permute.xlu0 0
        %1819 = vperm.xlu0 %1818, %v1689
        %v1820 = vpop.permute.xlu0 %1819
        %1823 = vset.pattern.permute.xlu0 0
        %1824 = vperm.xlu0 %1823, %v1690
        %v1825 = vpop.permute.xlu0 %1824
        %1828 = vset.pattern.permute.xlu0 0
        %1829 = vperm.xlu0 %1828, %v1691
        %v1830 = vpop.permute.xlu0 %1829
        %1833 = vset.pattern.permute.xlu0 0
        %1834 = vperm.xlu0 %1833, %v1692
        %v1835 = vpop.permute.xlu0 %1834
        %1838 = vset.pattern.permute.xlu0 0
        %1839 = vperm.xlu0 %1838, %v1693
        %v1840 = vpop.permute.xlu0 %1839
        %1843 = vset.pattern.permute.xlu0 0
        %1844 = vperm.xlu0 %1843, %v1694
        %v1845 = vpop.permute.xlu0 %1844
        %1848 = vset.pattern.permute.xlu0 0
        %1849 = vperm.xlu0 %1848, %v1695
        %v1850 = vpop.permute.xlu0 %1849
        %1853 = vset.pattern.permute.xlu0 0
        %1854 = vperm.xlu0 %1853, %v1696
        %v1855 = vpop.permute.xlu0 %1854
        %v1857 = vmul.f32 %v1633, %v1700
        %v1858 = vmul.f32 %v1634, %v1705
        %v1859 = vmul.f32 %v1635, %v1710
        %v1860 = vmul.f32 %v1636, %v1715
        %v1861 = vmul.f32 %v1637, %v1720
        %v1862 = vmul.f32 %v1638, %v1725
        %v1863 = vmul.f32 %v1639, %v1730
        %v1864 = vmul.f32 %v1640, %v1735
        %v1865 = vmul.f32 %v1641, %v1740
        %v1866 = vmul.f32 %v1642, %v1745
        %v1867 = vmul.f32 %v1643, %v1750
        %v1868 = vmul.f32 %v1644, %v1755
        %v1869 = vmul.f32 %v1645, %v1760
        %v1870 = vmul.f32 %v1646, %v1765
        %v1871 = vmul.f32 %v1647, %v1770
        %v1872 = vmul.f32 %v1648, %v1775
        %v1873 = vmul.f32 %v1649, %v1780
        %v1874 = vmul.f32 %v1650, %v1785
        %v1875 = vmul.f32 %v1651, %v1790
        %v1876 = vmul.f32 %v1652, %v1795
        %v1877 = vmul.f32 %v1653, %v1800
        %v1878 = vmul.f32 %v1654, %v1805
        %v1879 = vmul.f32 %v1655, %v1810
        %v1880 = vmul.f32 %v1656, %v1815
        %v1881 = vmul.f32 %v1657, %v1820
        %v1882 = vmul.f32 %v1658, %v1825
        %v1883 = vmul.f32 %v1659, %v1830
        %v1884 = vmul.f32 %v1660, %v1835
        %v1885 = vmul.f32 %v1661, %v1840
        %v1886 = vmul.f32 %v1662, %v1845
        %v1887 = vmul.f32 %v1663, %v1850
        %v1888 = vmul.f32 %v1664, %v1855
        %v1889 = vld [vmem:[#allocation2 + $0x38] sm:$0xc]
        %v1890 = vld [vmem:[#allocation2 + $0x3c] sm:$0xf]
        %v1891 = vld [vmem:[#allocation2 + $0x40] sm:$0xf]
        %v1892 = vld [vmem:[#allocation2 + $0x44] sm:$0xf]
        %v1893 = vld [vmem:[#allocation2 + $0x48] sm:$0xf]
        %v1894 = vld [vmem:[#allocation2 + $0x4c] sm:$0xf]
        %v1895 = vld [vmem:[#allocation2 + $0x50] sm:$0xf]
        %v1896 = vld [vmem:[#allocation2 + $0x54] sm:$0xf]
        %v1897 = vld [vmem:[#allocation2 + $0x58] sm:$0xf]
        %v1898 = vld [vmem:[#allocation2 + $0x5c] sm:$0xf]
        %v1899 = vld [vmem:[#allocation2 + $0x60] sm:$0xf]
        %v1900 = vld [vmem:[#allocation2 + $0x64] sm:$0xf]
        %v1901 = vld [vmem:[#allocation2 + $0x68] sm:$0xf]
        %v1902 = vld [vmem:[#allocation2 + $0x6c] sm:$0xf]
        %v1903 = vld [vmem:[#allocation2 + $0x70] sm:$0xf]
        %v1904 = vld [vmem:[#allocation2 + $0x74] sm:$0xf]
        %v1905 = vld [vmem:[#allocation2 + $0x78] sm:$0xf]
        %v1906 = vld [vmem:[#allocation2 + $0x7c] sm:$0xf]
        %v1907 = vld [vmem:[#allocation2 + $0x80] sm:$0xf]
        %v1908 = vld [vmem:[#allocation2 + $0x84] sm:$0xf]
        %v1909 = vld [vmem:[#allocation2 + $0x88] sm:$0xf]
        %v1910 = vld [vmem:[#allocation2 + $0x8c] sm:$0xf]
        %v1911 = vld [vmem:[#allocation2 + $0x90] sm:$0xf]
        %v1912 = vld [vmem:[#allocation2 + $0x94] sm:$0xf]
        %v1913 = vld [vmem:[#allocation2 + $0x98] sm:$0xf]
        %v1914 = vld [vmem:[#allocation2 + $0x9c] sm:$0xf]
        %v1915 = vld [vmem:[#allocation2 + $0xa0] sm:$0xf]
        %v1916 = vld [vmem:[#allocation2 + $0xa4] sm:$0xf]
        %v1917 = vld [vmem:[#allocation2 + $0xa8] sm:$0xf]
        %v1918 = vld [vmem:[#allocation2 + $0xac] sm:$0xf]
        %v1919 = vld [vmem:[#allocation2 + $0xb0] sm:$0xf]
        %v1920 = vld [vmem:[#allocation2 + $0xb4] sm:$0xf]
        %v1921 = vld [vmem:[#allocation2 + $0xb8] sm:$0x3]
        %s1922 = sadd.s32 %s701, 96
        %s1923 = smul.addr %s1922, 4
        %s1924 = scalar_lea.vmem [#allocation4], %s1923
        %v1925 = vld [vmem:[%s1924] sm:$0xf]
        %v1926 = vld [vmem:[%s1924 + $0x4] sm:$0xf]
        %v1927 = vld [vmem:[%s1924 + $0x8] sm:$0xf]
        %v1928 = vld [vmem:[%s1924 + $0xc] sm:$0xf]
        %v1929 = vld [vmem:[%s1924 + $0x10] sm:$0xf]
        %v1930 = vld [vmem:[%s1924 + $0x14] sm:$0xf]
        %v1931 = vld [vmem:[%s1924 + $0x18] sm:$0xf]
        %v1932 = vld [vmem:[%s1924 + $0x1c] sm:$0xf]
        %v1933 = vld [vmem:[%s1924 + $0x20] sm:$0xf]
        %v1934 = vld [vmem:[%s1924 + $0x24] sm:$0xf]
        %v1935 = vld [vmem:[%s1924 + $0x28] sm:$0xf]
        %v1936 = vld [vmem:[%s1924 + $0x2c] sm:$0xf]
        %v1937 = vld [vmem:[%s1924 + $0x30] sm:$0xf]
        %v1938 = vld [vmem:[%s1924 + $0x34] sm:$0xf]
        %v1939 = vld [vmem:[%s1924 + $0x38] sm:$0xf]
        %v1940 = vld [vmem:[%s1924 + $0x3c] sm:$0xf]
        %v1941 = vld [vmem:[#allocation2 + $0x98] sm:$0xc]
        %v1942 = vld [vmem:[#allocation2 + $0xb8] sm:$0xf]
        %v1943 = vld [vmem:[#allocation2 + $0xbc] sm:$0xf]
        %v1944 = vld [vmem:[#allocation2 + $0xc0] sm:$0xf]
        %v1945 = vld [vmem:[#allocation2 + $0xc4] sm:$0xf]
        %v1946 = vld [vmem:[#allocation2 + $0xc8] sm:$0xf]
        %v1947 = vld [vmem:[#allocation2 + $0xcc] sm:$0xf]
        %v1948 = vld [vmem:[#allocation2 + $0xd0] sm:$0xf]
        %v1949 = vld [vmem:[#allocation2 + $0xd4] sm:$0xf]
        %v1950 = vld [vmem:[#allocation2 + $0xd8] sm:$0xf]
        %v1951 = vld [vmem:[#allocation2 + $0xdc] sm:$0xf]
        %v1952 = vld [vmem:[#allocation2 + $0xe0] sm:$0xf]
        %v1953 = vld [vmem:[#allocation2 + $0xe4] sm:$0xf]
        %v1954 = vld [vmem:[#allocation2 + $0xe8] sm:$0xf]
        %v1955 = vld [vmem:[#allocation2 + $0xec] sm:$0xf]
        %v1956 = vld [vmem:[#allocation2 + $0xf0] sm:$0xf]
        %v1957 = vld [vmem:[#allocation2 + $0xf4] sm:$0xf]
        %v1958 = vld [vmem:[#allocation2 + $0xf8] sm:$0xf]
        %v1959 = vld [vmem:[#allocation2 + $0xfc] sm:$0xf]
        %v1960 = vld [vmem:[#allocation2 + $0x100] sm:$0xf]
        %v1961 = vld [vmem:[#allocation2 + $0x104] sm:$0xf]
        %v1962 = vld [vmem:[#allocation2 + $0x108] sm:$0xf]
        %v1963 = vld [vmem:[#allocation2 + $0x10c] sm:$0xf]
        %v1964 = vld [vmem:[#allocation2 + $0x110] sm:$0xf]
        %v1965 = vld [vmem:[#allocation2 + $0x114] sm:$0xf]
        %v1966 = vld [vmem:[#allocation2 + $0x118] sm:$0x3]
        %s1967 = sadd.s32 %s701, 320
        %s1968 = smul.addr %s1967, 4
        %s1969 = scalar_lea.vmem [#allocation4], %s1968
        %v1970 = vld [vmem:[%s1969] sm:$0xf]
        %v1971 = vld [vmem:[%s1969 + $0x4] sm:$0xf]
        %v1972 = vld [vmem:[%s1969 + $0x8] sm:$0xf]
        %v1973 = vld [vmem:[%s1969 + $0xc] sm:$0xf]
        %v1974 = vld [vmem:[%s1969 + $0x10] sm:$0xf]
        %v1975 = vld [vmem:[%s1969 + $0x14] sm:$0xf]
        %v1976 = vld [vmem:[%s1969 + $0x18] sm:$0xf]
        %v1977 = vld [vmem:[%s1969 + $0x1c] sm:$0xf]
        %v1978 = vld [vmem:[%s1969 + $0x20] sm:$0xf]
        %v1979 = vld [vmem:[%s1969 + $0x24] sm:$0xf]
        %v1980 = vld [vmem:[%s1969 + $0x28] sm:$0xf]
        %v1981 = vld [vmem:[%s1969 + $0x2c] sm:$0xf]
        %v1982 = vld [vmem:[%s1969 + $0x30] sm:$0xf]
        %v1983 = vld [vmem:[%s1969 + $0x34] sm:$0xf]
        %v1984 = vld [vmem:[%s1969 + $0x38] sm:$0xf]
        %v1985 = vld [vmem:[%s1969 + $0x3c] sm:$0xf]
        %v2019 = vunpack.c.l.b16 %v1941
        %v2020 = vunpack.c.l.b16 %v1914
        %v2021 = vunpack.c.l.b16 %v1915
        %v2022 = vunpack.c.l.b16 %v1916
        %v2023 = vunpack.c.l.b16 %v1917
        %v2024 = vunpack.c.l.b16 %v1918
        %v2025 = vunpack.c.l.b16 %v1919
        %v2026 = vunpack.c.l.b16 %v1920
        %v2027 = vunpack.c.l.b16 %v1942
        %v2028 = vunpack.c.l.b16 %v1943
        %v2029 = vunpack.c.l.b16 %v1944
        %v2030 = vunpack.c.l.b16 %v1945
        %v2031 = vunpack.c.l.b16 %v1946
        %v2032 = vunpack.c.l.b16 %v1947
        %v2033 = vunpack.c.l.b16 %v1948
        %v2034 = vunpack.c.l.b16 %v1949
        %v2035 = vunpack.c.l.b16 %v1950
        %v2036 = vunpack.c.l.b16 %v1951
        %v2037 = vunpack.c.l.b16 %v1952
        %v2038 = vunpack.c.l.b16 %v1953
        %v2039 = vunpack.c.l.b16 %v1954
        %v2040 = vunpack.c.l.b16 %v1955
        %v2041 = vunpack.c.l.b16 %v1956
        %v2042 = vunpack.c.l.b16 %v1957
        %v2043 = vunpack.c.l.b16 %v1958
        %v2044 = vunpack.c.l.b16 %v1959
        %v2045 = vunpack.c.l.b16 %v1960
        %v2046 = vunpack.c.l.b16 %v1961
        %v2047 = vunpack.c.l.b16 %v1962
        %v2048 = vunpack.c.l.b16 %v1963
        %v2049 = vunpack.c.l.b16 %v1964
        %v2050 = vunpack.c.l.b16 %v1965
        %v2051 = vunpack.c.l.b16 %v1966
        %v2052 = vpack.c.b16 %v2020, %v2019
        %v2053 = vpack.c.b16 %v2022, %v2021
        %v2054 = vpack.c.b16 %v2024, %v2023
        %v2055 = vpack.c.b16 %v2026, %v2025
        %v2056 = vpack.c.b16 %v2028, %v2027
        %v2057 = vpack.c.b16 %v2030, %v2029
        %v2058 = vpack.c.b16 %v2032, %v2031
        %v2059 = vpack.c.b16 %v2034, %v2033
        %v2060 = vpack.c.b16 %v2036, %v2035
        %v2061 = vpack.c.b16 %v2038, %v2037
        %v2062 = vpack.c.b16 %v2040, %v2039
        %v2063 = vpack.c.b16 %v2042, %v2041
        %v2064 = vpack.c.b16 %v2044, %v2043
        %v2065 = vpack.c.b16 %v2046, %v2045
        %v2066 = vpack.c.b16 %v2048, %v2047
        %v2067 = vpack.c.b16 %v2050, %v2049
        %v2068 = vpack.c.b16 %v2051, %v2051
        %vm2069 = vcmask 1045504
        %v2070 = vrot.slane %v2052, 2
        %v2071 = vrot.slane %v2053, 2
        %v2072 = vsel %vm2069, %v2070, %v2071
        %v2073 = vrot.slane %v2054, 2
        %v2074 = vsel %vm2069, %v2071, %v2073
        %v2075 = vrot.slane %v2055, 2
        %v2076 = vsel %vm2069, %v2073, %v2075
        %v2077 = vrot.slane %v2056, 2
        %v2078 = vsel %vm2069, %v2075, %v2077
        %v2079 = vrot.slane %v2057, 2
        %v2080 = vsel %vm2069, %v2077, %v2079
        %v2081 = vrot.slane %v2058, 2
        %v2082 = vsel %vm2069, %v2079, %v2081
        %v2083 = vrot.slane %v2059, 2
        %v2084 = vsel %vm2069, %v2081, %v2083
        %v2085 = vrot.slane %v2060, 2
        %v2086 = vsel %vm2069, %v2083, %v2085
        %v2087 = vrot.slane %v2061, 2
        %v2088 = vsel %vm2069, %v2085, %v2087
        %v2089 = vrot.slane %v2062, 2
        %v2090 = vsel %vm2069, %v2087, %v2089
        %v2091 = vrot.slane %v2063, 2
        %v2092 = vsel %vm2069, %v2089, %v2091
        %v2093 = vrot.slane %v2064, 2
        %v2094 = vsel %vm2069, %v2091, %v2093
        %v2095 = vrot.slane %v2065, 2
        %v2096 = vsel %vm2069, %v2093, %v2095
        %v2097 = vrot.slane %v2066, 2
        %v2098 = vsel %vm2069, %v2095, %v2097
        %v2099 = vrot.slane %v2067, 2
        %v2100 = vsel %vm2069, %v2097, %v2099
        %v2101 = vrot.slane %v2068, 2
        %v2102 = vsel %vm2069, %v2099, %v2101
        %v2135 = vunpack.c.l.b16 %v1970
        %v2136 = vunpack.c.l.b16 %v1971
        %v2137 = vunpack.c.l.b16 %v1972
        %v2138 = vunpack.c.l.b16 %v1973
        %v2139 = vunpack.c.l.b16 %v1974
        %v2140 = vunpack.c.l.b16 %v1975
        %v2141 = vunpack.c.l.b16 %v1976
        %v2142 = vunpack.c.l.b16 %v1977
        %v2143 = vunpack.c.l.b16 %v1978
        %v2144 = vunpack.c.l.b16 %v1979
        %v2145 = vunpack.c.l.b16 %v1980
        %v2146 = vunpack.c.l.b16 %v1981
        %v2147 = vunpack.c.l.b16 %v1982
        %v2148 = vunpack.c.l.b16 %v1983
        %v2149 = vunpack.c.l.b16 %v1984
        %v2150 = vunpack.c.l.b16 %v1985
        %v2151 = vpack.c.b16 %v2136, %v2135
        %v2152 = vpack.c.b16 %v2138, %v2137
        %v2153 = vpack.c.b16 %v2140, %v2139
        %v2154 = vpack.c.b16 %v2142, %v2141
        %v2155 = vpack.c.b16 %v2144, %v2143
        %v2156 = vpack.c.b16 %v2146, %v2145
        %v2157 = vpack.c.b16 %v2148, %v2147
        %v2158 = vpack.c.b16 %v2150, %v2149
        %2167 = vmatpush.bf16.msra.mxu0 %v2158
        %2168 = vmatpush.bf16.msra.mxu0 %v2157
        %2169 = vmatpush.bf16.msra.mxu0 %v2156
        %2170 = vmatpush.bf16.msra.mxu0 %v2155
        %2171 = vmatpush.bf16.msra.mxu0 %v2154
        %2172 = vmatpush.bf16.msra.mxu0 %v2153
        %2173 = vmatpush.bf16.msra.mxu0 %v2152
        %2174 = vmatpush.bf16.msra.mxu0 %v2151
        %2175 = vmatmul.bf16.gmra.mxu0 %v2072
        %v2176 = vpop.f32.mrf.mxu0
        %v2177 = vadd.f32 0.0, %v2176
        %v2178 = vpop.f32.mrf.mxu0
        %v2179 = vadd.f32 0.0, %v2178
        %2180 = vmatmul.bf16.gmra.mxu0 %v2074
        %v2181 = vpop.f32.mrf.mxu0
        %v2182 = vadd.f32 0.0, %v2181
        %v2183 = vpop.f32.mrf.mxu0
        %v2184 = vadd.f32 0.0, %v2183
        %2185 = vmatmul.bf16.gmra.mxu0 %v2076
        %v2186 = vpop.f32.mrf.mxu0
        %v2187 = vadd.f32 0.0, %v2186
        %v2188 = vpop.f32.mrf.mxu0
        %v2189 = vadd.f32 0.0, %v2188
        %2190 = vmatmul.bf16.gmra.mxu0 %v2078
        %v2191 = vpop.f32.mrf.mxu0
        %v2192 = vadd.f32 0.0, %v2191
        %v2193 = vpop.f32.mrf.mxu0
        %v2194 = vadd.f32 0.0, %v2193
        %2195 = vmatmul.bf16.gmra.mxu0 %v2080
        %v2196 = vpop.f32.mrf.mxu0
        %v2197 = vadd.f32 0.0, %v2196
        %v2198 = vpop.f32.mrf.mxu0
        %v2199 = vadd.f32 0.0, %v2198
        %2200 = vmatmul.bf16.gmra.mxu0 %v2082
        %v2201 = vpop.f32.mrf.mxu0
        %v2202 = vadd.f32 0.0, %v2201
        %v2203 = vpop.f32.mrf.mxu0
        %v2204 = vadd.f32 0.0, %v2203
        %2205 = vmatmul.bf16.gmra.mxu0 %v2084
        %v2206 = vpop.f32.mrf.mxu0
        %v2207 = vadd.f32 0.0, %v2206
        %v2208 = vpop.f32.mrf.mxu0
        %v2209 = vadd.f32 0.0, %v2208
        %2210 = vmatmul.bf16.gmra.mxu0 %v2086
        %v2211 = vpop.f32.mrf.mxu0
        %v2212 = vadd.f32 0.0, %v2211
        %v2213 = vpop.f32.mrf.mxu0
        %v2214 = vadd.f32 0.0, %v2213
        %2215 = vmatmul.bf16.gmra.mxu0 %v2088
        %v2216 = vpop.f32.mrf.mxu0
        %v2217 = vadd.f32 0.0, %v2216
        %v2218 = vpop.f32.mrf.mxu0
        %v2219 = vadd.f32 0.0, %v2218
        %2220 = vmatmul.bf16.gmra.mxu0 %v2090
        %v2221 = vpop.f32.mrf.mxu0
        %v2222 = vadd.f32 0.0, %v2221
        %v2223 = vpop.f32.mrf.mxu0
        %v2224 = vadd.f32 0.0, %v2223
        %2225 = vmatmul.bf16.gmra.mxu0 %v2092
        %v2226 = vpop.f32.mrf.mxu0
        %v2227 = vadd.f32 0.0, %v2226
        %v2228 = vpop.f32.mrf.mxu0
        %v2229 = vadd.f32 0.0, %v2228
        %2230 = vmatmul.bf16.gmra.mxu0 %v2094
        %v2231 = vpop.f32.mrf.mxu0
        %v2232 = vadd.f32 0.0, %v2231
        %v2233 = vpop.f32.mrf.mxu0
        %v2234 = vadd.f32 0.0, %v2233
        %2235 = vmatmul.bf16.gmra.mxu0 %v2096
        %v2236 = vpop.f32.mrf.mxu0
        %v2237 = vadd.f32 0.0, %v2236
        %v2238 = vpop.f32.mrf.mxu0
        %v2239 = vadd.f32 0.0, %v2238
        %2240 = vmatmul.bf16.gmra.mxu0 %v2098
        %v2241 = vpop.f32.mrf.mxu0
        %v2242 = vadd.f32 0.0, %v2241
        %v2243 = vpop.f32.mrf.mxu0
        %v2244 = vadd.f32 0.0, %v2243
        %2245 = vmatmul.bf16.gmra.mxu0 %v2100
        %v2246 = vpop.f32.mrf.mxu0
        %v2247 = vadd.f32 0.0, %v2246
        %v2248 = vpop.f32.mrf.mxu0
        %v2249 = vadd.f32 0.0, %v2248
        %2250 = vmatmul.bf16.gmra.mxu0 %v2102
        %v2251 = vpop.f32.mrf.mxu0
        %v2252 = vadd.f32 0.0, %v2251
        %v2253 = vpop.f32.mrf.mxu0
        %v2254 = vadd.f32 0.0, %v2253
        %2255 = vdwg.mxu0
        %v2282 = vunpack.c.l.b16 %v1889
        %v2283 = vunpack.c.l.b16 %v1890
        %v2284 = vunpack.c.l.b16 %v1891
        %v2285 = vunpack.c.l.b16 %v1892
        %v2286 = vunpack.c.l.b16 %v1893
        %v2287 = vunpack.c.l.b16 %v1894
        %v2288 = vunpack.c.l.b16 %v1895
        %v2289 = vunpack.c.l.b16 %v1896
        %v2290 = vunpack.c.l.b16 %v1897
        %v2291 = vunpack.c.l.b16 %v1898
        %v2292 = vunpack.c.l.b16 %v1899
        %v2293 = vunpack.c.l.b16 %v1900
        %v2294 = vunpack.c.l.b16 %v1901
        %v2295 = vunpack.c.l.b16 %v1902
        %v2296 = vunpack.c.l.b16 %v1903
        %v2297 = vunpack.c.l.b16 %v1904
        %v2298 = vunpack.c.l.b16 %v1905
        %v2299 = vunpack.c.l.b16 %v1906
        %v2300 = vunpack.c.l.b16 %v1907
        %v2301 = vunpack.c.l.b16 %v1908
        %v2302 = vunpack.c.l.b16 %v1909
        %v2303 = vunpack.c.l.b16 %v1910
        %v2304 = vunpack.c.l.b16 %v1911
        %v2305 = vunpack.c.l.b16 %v1912
        %v2306 = vunpack.c.l.b16 %v1913
        %v2307 = vunpack.c.l.b16 %v1921
        %v2308 = vpack.c.b16 %v2283, %v2282
        %v2309 = vpack.c.b16 %v2285, %v2284
        %v2310 = vpack.c.b16 %v2287, %v2286
        %v2311 = vpack.c.b16 %v2289, %v2288
        %v2312 = vpack.c.b16 %v2291, %v2290
        %v2313 = vpack.c.b16 %v2293, %v2292
        %v2314 = vpack.c.b16 %v2295, %v2294
        %v2315 = vpack.c.b16 %v2297, %v2296
        %v2316 = vpack.c.b16 %v2299, %v2298
        %v2317 = vpack.c.b16 %v2301, %v2300
        %v2318 = vpack.c.b16 %v2303, %v2302
        %v2319 = vpack.c.b16 %v2305, %v2304
        %v2320 = vpack.c.b16 %v2020, %v2306
        %v2321 = vpack.c.b16 %v2307, %v2307
        %v2322 = vrot.slane %v2308, 2
        %v2323 = vrot.slane %v2309, 2
        %v2324 = vsel %vm2069, %v2322, %v2323
        %v2325 = vrot.slane %v2310, 2
        %v2326 = vsel %vm2069, %v2323, %v2325
        %v2327 = vrot.slane %v2311, 2
        %v2328 = vsel %vm2069, %v2325, %v2327
        %v2329 = vrot.slane %v2312, 2
        %v2330 = vsel %vm2069, %v2327, %v2329
        %v2331 = vrot.slane %v2313, 2
        %v2332 = vsel %vm2069, %v2329, %v2331
        %v2333 = vrot.slane %v2314, 2
        %v2334 = vsel %vm2069, %v2331, %v2333
        %v2335 = vrot.slane %v2315, 2
        %v2336 = vsel %vm2069, %v2333, %v2335
        %v2337 = vrot.slane %v2316, 2
        %v2338 = vsel %vm2069, %v2335, %v2337
        %v2339 = vrot.slane %v2317, 2
        %v2340 = vsel %vm2069, %v2337, %v2339
        %v2341 = vrot.slane %v2318, 2
        %v2342 = vsel %vm2069, %v2339, %v2341
        %v2343 = vrot.slane %v2319, 2
        %v2344 = vsel %vm2069, %v2341, %v2343
        %v2345 = vrot.slane %v2320, 2
        %v2346 = vsel %vm2069, %v2343, %v2345
        %v2347 = vsel %vm2069, %v2345, %v2071
        %v2348 = vrot.slane %v2321, 2
        %v2349 = vsel %vm2069, %v2075, %v2348
        %v2380 = vunpack.c.l.b16 %v1925
        %v2381 = vunpack.c.l.b16 %v1926
        %v2382 = vunpack.c.l.b16 %v1927
        %v2383 = vunpack.c.l.b16 %v1928
        %v2384 = vunpack.c.l.b16 %v1929
        %v2385 = vunpack.c.l.b16 %v1930
        %v2386 = vunpack.c.l.b16 %v1931
        %v2387 = vunpack.c.l.b16 %v1932
        %v2388 = vunpack.c.l.b16 %v1933
        %v2389 = vunpack.c.l.b16 %v1934
        %v2390 = vunpack.c.l.b16 %v1935
        %v2391 = vunpack.c.l.b16 %v1936
        %v2392 = vunpack.c.l.b16 %v1937
        %v2393 = vunpack.c.l.b16 %v1938
        %v2394 = vunpack.c.l.b16 %v1939
        %v2395 = vunpack.c.l.b16 %v1940
        %v2396 = vpack.c.b16 %v2381, %v2380
        %v2397 = vpack.c.b16 %v2383, %v2382
        %v2398 = vpack.c.b16 %v2385, %v2384
        %v2399 = vpack.c.b16 %v2387, %v2386
        %v2400 = vpack.c.b16 %v2389, %v2388
        %v2401 = vpack.c.b16 %v2391, %v2390
        %v2402 = vpack.c.b16 %v2393, %v2392
        %v2403 = vpack.c.b16 %v2395, %v2394
        %2412 = vmatpush.bf16.msra.mxu0 %v2403
        %2413 = vmatpush.bf16.msra.mxu0 %v2402
        %2414 = vmatpush.bf16.msra.mxu0 %v2401
        %2415 = vmatpush.bf16.msra.mxu0 %v2400
        %2416 = vmatpush.bf16.msra.mxu0 %v2399
        %2417 = vmatpush.bf16.msra.mxu0 %v2398
        %2418 = vmatpush.bf16.msra.mxu0 %v2397
        %2419 = vmatpush.bf16.msra.mxu0 %v2396
        %2420 = vmatmul.bf16.gmra.mxu0 %v2324
        %v2421 = vpop.f32.mrf.mxu0
        %v2422 = vadd.f32 %v2177, %v2421
        %v2423 = vpop.f32.mrf.mxu0
        %v2424 = vadd.f32 %v2179, %v2423
        %2425 = vmatmul.bf16.gmra.mxu0 %v2326
        %v2426 = vpop.f32.mrf.mxu0
        %v2427 = vadd.f32 %v2182, %v2426
        %v2428 = vpop.f32.mrf.mxu0
        %v2429 = vadd.f32 %v2184, %v2428
        %2430 = vmatmul.bf16.gmra.mxu0 %v2328
        %v2431 = vpop.f32.mrf.mxu0
        %v2432 = vadd.f32 %v2187, %v2431
        %v2433 = vpop.f32.mrf.mxu0
        %v2434 = vadd.f32 %v2189, %v2433
        %2435 = vmatmul.bf16.gmra.mxu0 %v2330
        %v2436 = vpop.f32.mrf.mxu0
        %v2437 = vadd.f32 %v2192, %v2436
        %v2438 = vpop.f32.mrf.mxu0
        %v2439 = vadd.f32 %v2194, %v2438
        %2440 = vmatmul.bf16.gmra.mxu0 %v2332
        %v2441 = vpop.f32.mrf.mxu0
        %v2442 = vadd.f32 %v2197, %v2441
        %v2443 = vpop.f32.mrf.mxu0
        %v2444 = vadd.f32 %v2199, %v2443
        %2445 = vmatmul.bf16.gmra.mxu0 %v2334
        %v2446 = vpop.f32.mrf.mxu0
        %v2447 = vadd.f32 %v2202, %v2446
        %v2448 = vpop.f32.mrf.mxu0
        %v2449 = vadd.f32 %v2204, %v2448
        %2450 = vmatmul.bf16.gmra.mxu0 %v2336
        %v2451 = vpop.f32.mrf.mxu0
        %v2452 = vadd.f32 %v2207, %v2451
        %v2453 = vpop.f32.mrf.mxu0
        %v2454 = vadd.f32 %v2209, %v2453
        %2455 = vmatmul.bf16.gmra.mxu0 %v2338
        %v2456 = vpop.f32.mrf.mxu0
        %v2457 = vadd.f32 %v2212, %v2456
        %v2458 = vpop.f32.mrf.mxu0
        %v2459 = vadd.f32 %v2214, %v2458
        %2460 = vmatmul.bf16.gmra.mxu0 %v2340
        %v2461 = vpop.f32.mrf.mxu0
        %v2462 = vadd.f32 %v2217, %v2461
        %v2463 = vpop.f32.mrf.mxu0
        %v2464 = vadd.f32 %v2219, %v2463
        %2465 = vmatmul.bf16.gmra.mxu0 %v2342
        %v2466 = vpop.f32.mrf.mxu0
        %v2467 = vadd.f32 %v2222, %v2466
        %v2468 = vpop.f32.mrf.mxu0
        %v2469 = vadd.f32 %v2224, %v2468
        %2470 = vmatmul.bf16.gmra.mxu0 %v2344
        %v2471 = vpop.f32.mrf.mxu0
        %v2472 = vadd.f32 %v2227, %v2471
        %v2473 = vpop.f32.mrf.mxu0
        %v2474 = vadd.f32 %v2229, %v2473
        %2475 = vmatmul.bf16.gmra.mxu0 %v2346
        %v2476 = vpop.f32.mrf.mxu0
        %v2477 = vadd.f32 %v2232, %v2476
        %v2478 = vpop.f32.mrf.mxu0
        %v2479 = vadd.f32 %v2234, %v2478
        %2480 = vmatmul.bf16.gmra.mxu0 %v2347
        %v2481 = vpop.f32.mrf.mxu0
        %v2482 = vadd.f32 %v2237, %v2481
        %v2483 = vpop.f32.mrf.mxu0
        %v2484 = vadd.f32 %v2239, %v2483
        %2485 = vmatmul.bf16.gmra.mxu0 %v2074
        %v2486 = vpop.f32.mrf.mxu0
        %v2487 = vadd.f32 %v2242, %v2486
        %v2488 = vpop.f32.mrf.mxu0
        %v2489 = vadd.f32 %v2244, %v2488
        %2490 = vmatmul.bf16.gmra.mxu0 %v2076
        %v2491 = vpop.f32.mrf.mxu0
        %v2492 = vadd.f32 %v2247, %v2491
        %v2493 = vpop.f32.mrf.mxu0
        %v2494 = vadd.f32 %v2249, %v2493
        %2495 = vmatmul.bf16.gmra.mxu0 %v2349
        %v2496 = vpop.f32.mrf.mxu0
        %v2497 = vadd.f32 %v2252, %v2496
        %v2498 = vpop.f32.mrf.mxu0
        %v2499 = vadd.f32 %v2254, %v2498
        %2500 = vdwg.mxu0
        %v2501 = vld [vmem:[#allocation2 + $0xf8] sm:$0xc]
        %v2502 = vld [vmem:[#allocation2 + $0xfc] sm:$0xf]
        %v2503 = vld [vmem:[#allocation2 + $0x100] sm:$0xf]
        %v2504 = vld [vmem:[#allocation2 + $0x104] sm:$0xf]
        %v2505 = vld [vmem:[#allocation2 + $0x108] sm:$0xf]
        %v2506 = vld [vmem:[#allocation2 + $0x10c] sm:$0xf]
        %v2507 = vld [vmem:[#allocation2 + $0x110] sm:$0xf]
        %v2508 = vld [vmem:[#allocation2 + $0x114] sm:$0xf]
        %v2509 = vld [vmem:[#allocation2 + $0x118] sm:$0xf]
        %v2510 = vld [vmem:[#allocation2 + $0x11c] sm:$0xf]
        %v2511 = vld [vmem:[#allocation2 + $0x120] sm:$0xf]
        %v2512 = vld [vmem:[#allocation2 + $0x124] sm:$0xf]
        %v2513 = vld [vmem:[#allocation2 + $0x128] sm:$0xf]
        %v2514 = vld [vmem:[#allocation2 + $0x12c] sm:$0xf]
        %v2515 = vld [vmem:[#allocation2 + $0x130] sm:$0xf]
        %v2516 = vld [vmem:[#allocation2 + $0x134] sm:$0xf]
        %v2517 = vld [vmem:[#allocation2 + $0x138] sm:$0xf]
        %v2518 = vld [vmem:[#allocation2 + $0x13c] sm:$0xf]
        %v2519 = vld [vmem:[#allocation2 + $0x140] sm:$0xf]
        %v2520 = vld [vmem:[#allocation2 + $0x144] sm:$0xf]
        %v2521 = vld [vmem:[#allocation2 + $0x148] sm:$0xf]
        %v2522 = vld [vmem:[#allocation2 + $0x14c] sm:$0xf]
        %v2523 = vld [vmem:[#allocation2 + $0x150] sm:$0xf]
        %v2524 = vld [vmem:[#allocation2 + $0x154] sm:$0xf]
        %v2525 = vld [vmem:[#allocation2 + $0x158] sm:$0xf]
        %v2526 = vld [vmem:[#allocation2 + $0x15c] sm:$0xf]
        %v2527 = vld [vmem:[#allocation2 + $0x160] sm:$0xf]
        %v2528 = vld [vmem:[#allocation2 + $0x164] sm:$0xf]
        %v2529 = vld [vmem:[#allocation2 + $0x168] sm:$0xf]
        %v2530 = vld [vmem:[#allocation2 + $0x16c] sm:$0xf]
        %v2531 = vld [vmem:[#allocation2 + $0x170] sm:$0xf]
        %v2532 = vld [vmem:[#allocation2 + $0x174] sm:$0xf]
        %v2533 = vld [vmem:[#allocation2 + $0x178] sm:$0x3]
        %s2534 = sadd.s32 %s701, 608
        %s2535 = smul.addr %s2534, 4
        %s2536 = scalar_lea.vmem [#allocation4], %s2535
        %v2537 = vld [vmem:[%s2536] sm:$0xf]
        %v2538 = vld [vmem:[%s2536 + $0x4] sm:$0xf]
        %v2539 = vld [vmem:[%s2536 + $0x8] sm:$0xf]
        %v2540 = vld [vmem:[%s2536 + $0xc] sm:$0xf]
        %v2541 = vld [vmem:[%s2536 + $0x10] sm:$0xf]
        %v2542 = vld [vmem:[%s2536 + $0x14] sm:$0xf]
        %v2543 = vld [vmem:[%s2536 + $0x18] sm:$0xf]
        %v2544 = vld [vmem:[%s2536 + $0x1c] sm:$0xf]
        %v2545 = vld [vmem:[%s2536 + $0x20] sm:$0xf]
        %v2546 = vld [vmem:[%s2536 + $0x24] sm:$0xf]
        %v2547 = vld [vmem:[%s2536 + $0x28] sm:$0xf]
        %v2548 = vld [vmem:[%s2536 + $0x2c] sm:$0xf]
        %v2549 = vld [vmem:[%s2536 + $0x30] sm:$0xf]
        %v2550 = vld [vmem:[%s2536 + $0x34] sm:$0xf]
        %v2551 = vld [vmem:[%s2536 + $0x38] sm:$0xf]
        %v2552 = vld [vmem:[%s2536 + $0x3c] sm:$0xf]
        %v2586 = vunpack.c.l.b16 %v2501
        %v2587 = vunpack.c.l.b16 %v2502
        %v2588 = vunpack.c.l.b16 %v2503
        %v2589 = vunpack.c.l.b16 %v2504
        %v2590 = vunpack.c.l.b16 %v2505
        %v2591 = vunpack.c.l.b16 %v2506
        %v2592 = vunpack.c.l.b16 %v2507
        %v2593 = vunpack.c.l.b16 %v2508
        %v2594 = vunpack.c.l.b16 %v2509
        %v2595 = vunpack.c.l.b16 %v2510
        %v2596 = vunpack.c.l.b16 %v2511
        %v2597 = vunpack.c.l.b16 %v2512
        %v2598 = vunpack.c.l.b16 %v2513
        %v2599 = vunpack.c.l.b16 %v2514
        %v2600 = vunpack.c.l.b16 %v2515
        %v2601 = vunpack.c.l.b16 %v2516
        %v2602 = vunpack.c.l.b16 %v2517
        %v2603 = vunpack.c.l.b16 %v2518
        %v2604 = vunpack.c.l.b16 %v2519
        %v2605 = vunpack.c.l.b16 %v2520
        %v2606 = vunpack.c.l.b16 %v2521
        %v2607 = vunpack.c.l.b16 %v2522
        %v2608 = vunpack.c.l.b16 %v2523
        %v2609 = vunpack.c.l.b16 %v2524
        %v2610 = vunpack.c.l.b16 %v2525
        %v2611 = vunpack.c.l.b16 %v2526
        %v2612 = vunpack.c.l.b16 %v2527
        %v2613 = vunpack.c.l.b16 %v2528
        %v2614 = vunpack.c.l.b16 %v2529
        %v2615 = vunpack.c.l.b16 %v2530
        %v2616 = vunpack.c.l.b16 %v2531
        %v2617 = vunpack.c.l.b16 %v2532
        %v2618 = vunpack.c.l.b16 %v2533
        %v2619 = vpack.c.b16 %v2587, %v2586
        %v2620 = vpack.c.b16 %v2589, %v2588
        %v2621 = vpack.c.b16 %v2591, %v2590
        %v2622 = vpack.c.b16 %v2593, %v2592
        %v2623 = vpack.c.b16 %v2595, %v2594
        %v2624 = vpack.c.b16 %v2597, %v2596
        %v2625 = vpack.c.b16 %v2599, %v2598
        %v2626 = vpack.c.b16 %v2601, %v2600
        %v2627 = vpack.c.b16 %v2603, %v2602
        %v2628 = vpack.c.b16 %v2605, %v2604
        %v2629 = vpack.c.b16 %v2607, %v2606
        %v2630 = vpack.c.b16 %v2609, %v2608
        %v2631 = vpack.c.b16 %v2611, %v2610
        %v2632 = vpack.c.b16 %v2613, %v2612
        %v2633 = vpack.c.b16 %v2615, %v2614
        %v2634 = vpack.c.b16 %v2617, %v2616
        %v2635 = vpack.c.b16 %v2618, %v2618
        %v2636 = vrot.slane %v2619, 2
        %v2637 = vrot.slane %v2620, 2
        %v2638 = vsel %vm2069, %v2636, %v2637
        %v2639 = vrot.slane %v2621, 2
        %v2640 = vsel %vm2069, %v2637, %v2639
        %v2641 = vrot.slane %v2622, 2
        %v2642 = vsel %vm2069, %v2639, %v2641
        %v2643 = vrot.slane %v2623, 2
        %v2644 = vsel %vm2069, %v2641, %v2643
        %v2645 = vrot.slane %v2624, 2
        %v2646 = vsel %vm2069, %v2643, %v2645
        %v2647 = vrot.slane %v2625, 2
        %v2648 = vsel %vm2069, %v2645, %v2647
        %v2649 = vrot.slane %v2626, 2
        %v2650 = vsel %vm2069, %v2647, %v2649
        %v2651 = vrot.slane %v2627, 2
        %v2652 = vsel %vm2069, %v2649, %v2651
        %v2653 = vrot.slane %v2628, 2
        %v2654 = vsel %vm2069, %v2651, %v2653
        %v2655 = vrot.slane %v2629, 2
        %v2656 = vsel %vm2069, %v2653, %v2655
        %v2657 = vrot.slane %v2630, 2
        %v2658 = vsel %vm2069, %v2655, %v2657
        %v2659 = vrot.slane %v2631, 2
        %v2660 = vsel %vm2069, %v2657, %v2659
        %v2661 = vrot.slane %v2632, 2
        %v2662 = vsel %vm2069, %v2659, %v2661
        %v2663 = vrot.slane %v2633, 2
        %v2664 = vsel %vm2069, %v2661, %v2663
        %v2665 = vrot.slane %v2634, 2
        %v2666 = vsel %vm2069, %v2663, %v2665
        %v2667 = vrot.slane %v2635, 2
        %v2668 = vsel %vm2069, %v2665, %v2667
        %v2701 = vunpack.c.l.b16 %v2537
        %v2702 = vunpack.c.l.b16 %v2538
        %v2703 = vunpack.c.l.b16 %v2539
        %v2704 = vunpack.c.l.b16 %v2540
        %v2705 = vunpack.c.l.b16 %v2541
        %v2706 = vunpack.c.l.b16 %v2542
        %v2707 = vunpack.c.l.b16 %v2543
        %v2708 = vunpack.c.l.b16 %v2544
        %v2709 = vunpack.c.l.b16 %v2545
        %v2710 = vunpack.c.l.b16 %v2546
        %v2711 = vunpack.c.l.b16 %v2547
        %v2712 = vunpack.c.l.b16 %v2548
        %v2713 = vunpack.c.l.b16 %v2549
        %v2714 = vunpack.c.l.b16 %v2550
        %v2715 = vunpack.c.l.b16 %v2551
        %v2716 = vunpack.c.l.b16 %v2552
        %v2717 = vpack.c.b16 %v2702, %v2701
        %v2718 = vpack.c.b16 %v2704, %v2703
        %v2719 = vpack.c.b16 %v2706, %v2705
        %v2720 = vpack.c.b16 %v2708, %v2707
        %v2721 = vpack.c.b16 %v2710, %v2709
        %v2722 = vpack.c.b16 %v2712, %v2711
        %v2723 = vpack.c.b16 %v2714, %v2713
        %v2724 = vpack.c.b16 %v2716, %v2715
        %2733 = vmatpush.bf16.msra.mxu0 %v2724
        %2734 = vmatpush.bf16.msra.mxu0 %v2723
        %2735 = vmatpush.bf16.msra.mxu0 %v2722
        %2736 = vmatpush.bf16.msra.mxu0 %v2721
        %2737 = vmatpush.bf16.msra.mxu0 %v2720
        %2738 = vmatpush.bf16.msra.mxu0 %v2719
        %2739 = vmatpush.bf16.msra.mxu0 %v2718
        %2740 = vmatpush.bf16.msra.mxu0 %v2717
        %2741 = vmatmul.bf16.gmra.mxu0 %v2638
        %v2742 = vpop.f32.mrf.mxu0
        %v2743 = vadd.f32 0.0, %v2742
        %v2744 = vpop.f32.mrf.mxu0
        %v2745 = vadd.f32 0.0, %v2744
        %2746 = vmatmul.bf16.gmra.mxu0 %v2640
        %v2747 = vpop.f32.mrf.mxu0
        %v2748 = vadd.f32 0.0, %v2747
        %v2749 = vpop.f32.mrf.mxu0
        %v2750 = vadd.f32 0.0, %v2749
        %2751 = vmatmul.bf16.gmra.mxu0 %v2642
        %v2752 = vpop.f32.mrf.mxu0
        %v2753 = vadd.f32 0.0, %v2752
        %v2754 = vpop.f32.mrf.mxu0
        %v2755 = vadd.f32 0.0, %v2754
        %2756 = vmatmul.bf16.gmra.mxu0 %v2644
        %v2757 = vpop.f32.mrf.mxu0
        %v2758 = vadd.f32 0.0, %v2757
        %v2759 = vpop.f32.mrf.mxu0
        %v2760 = vadd.f32 0.0, %v2759
        %2761 = vmatmul.bf16.gmra.mxu0 %v2646
        %v2762 = vpop.f32.mrf.mxu0
        %v2763 = vadd.f32 0.0, %v2762
        %v2764 = vpop.f32.mrf.mxu0
        %v2765 = vadd.f32 0.0, %v2764
        %2766 = vmatmul.bf16.gmra.mxu0 %v2648
        %v2767 = vpop.f32.mrf.mxu0
        %v2768 = vadd.f32 0.0, %v2767
        %v2769 = vpop.f32.mrf.mxu0
        %v2770 = vadd.f32 0.0, %v2769
        %2771 = vmatmul.bf16.gmra.mxu0 %v2650
        %v2772 = vpop.f32.mrf.mxu0
        %v2773 = vadd.f32 0.0, %v2772
        %v2774 = vpop.f32.mrf.mxu0
        %v2775 = vadd.f32 0.0, %v2774
        %2776 = vmatmul.bf16.gmra.mxu0 %v2652
        %v2777 = vpop.f32.mrf.mxu0
        %v2778 = vadd.f32 0.0, %v2777
        %v2779 = vpop.f32.mrf.mxu0
        %v2780 = vadd.f32 0.0, %v2779
        %2781 = vmatmul.bf16.gmra.mxu0 %v2654
        %v2782 = vpop.f32.mrf.mxu0
        %v2783 = vadd.f32 0.0, %v2782
        %v2784 = vpop.f32.mrf.mxu0
        %v2785 = vadd.f32 0.0, %v2784
        %2786 = vmatmul.bf16.gmra.mxu0 %v2656
        %v2787 = vpop.f32.mrf.mxu0
        %v2788 = vadd.f32 0.0, %v2787
        %v2789 = vpop.f32.mrf.mxu0
        %v2790 = vadd.f32 0.0, %v2789
        %2791 = vmatmul.bf16.gmra.mxu0 %v2658
        %v2792 = vpop.f32.mrf.mxu0
        %v2793 = vadd.f32 0.0, %v2792
        %v2794 = vpop.f32.mrf.mxu0
        %v2795 = vadd.f32 0.0, %v2794
        %2796 = vmatmul.bf16.gmra.mxu0 %v2660
        %v2797 = vpop.f32.mrf.mxu0
        %v2798 = vadd.f32 0.0, %v2797
        %v2799 = vpop.f32.mrf.mxu0
        %v2800 = vadd.f32 0.0, %v2799
        %2801 = vmatmul.bf16.gmra.mxu0 %v2662
        %v2802 = vpop.f32.mrf.mxu0
        %v2803 = vadd.f32 0.0, %v2802
        %v2804 = vpop.f32.mrf.mxu0
        %v2805 = vadd.f32 0.0, %v2804
        %2806 = vmatmul.bf16.gmra.mxu0 %v2664
        %v2807 = vpop.f32.mrf.mxu0
        %v2808 = vadd.f32 0.0, %v2807
        %v2809 = vpop.f32.mrf.mxu0
        %v2810 = vadd.f32 0.0, %v2809
        %2811 = vmatmul.bf16.gmra.mxu0 %v2666
        %v2812 = vpop.f32.mrf.mxu0
        %v2813 = vadd.f32 0.0, %v2812
        %v2814 = vpop.f32.mrf.mxu0
        %v2815 = vadd.f32 0.0, %v2814
        %2816 = vmatmul.bf16.gmra.mxu0 %v2668
        %v2817 = vpop.f32.mrf.mxu0
        %v2818 = vadd.f32 0.0, %v2817
        %v2819 = vpop.f32.mrf.mxu0
        %v2820 = vadd.f32 0.0, %v2819
        %2821 = vdwg.mxu0
        %v2822 = vadd.f32 %v2422, %v2743
        %v2823 = vadd.f32 %v2424, %v2745
        %v2824 = vadd.f32 %v2427, %v2748
        %v2825 = vadd.f32 %v2429, %v2750
        %v2826 = vadd.f32 %v2432, %v2753
        %v2827 = vadd.f32 %v2434, %v2755
        %v2828 = vadd.f32 %v2437, %v2758
        %v2829 = vadd.f32 %v2439, %v2760
        %v2830 = vadd.f32 %v2442, %v2763
        %v2831 = vadd.f32 %v2444, %v2765
        %v2832 = vadd.f32 %v2447, %v2768
        %v2833 = vadd.f32 %v2449, %v2770
        %v2834 = vadd.f32 %v2452, %v2773
        %v2835 = vadd.f32 %v2454, %v2775
        %v2836 = vadd.f32 %v2457, %v2778
        %v2837 = vadd.f32 %v2459, %v2780
        %v2838 = vadd.f32 %v2462, %v2783
        %v2839 = vadd.f32 %v2464, %v2785
        %v2840 = vadd.f32 %v2467, %v2788
        %v2841 = vadd.f32 %v2469, %v2790
        %v2842 = vadd.f32 %v2472, %v2793
        %v2843 = vadd.f32 %v2474, %v2795
        %v2844 = vadd.f32 %v2477, %v2798
        %v2845 = vadd.f32 %v2479, %v2800
        %v2846 = vadd.f32 %v2482, %v2803
        %v2847 = vadd.f32 %v2484, %v2805
        %v2848 = vadd.f32 %v2487, %v2808
        %v2849 = vadd.f32 %v2489, %v2810
        %v2850 = vadd.f32 %v2492, %v2813
        %v2851 = vadd.f32 %v2494, %v2815
        %v2852 = vadd.f32 %v2497, %v2818
        %v2853 = vadd.f32 %v2499, %v2820
        %s2854 = scalar_lea.vmem [#allocation7], 256
        %v2855 = vld [vmem:[%s2854] sm:$0xff]
        %v2856 = vld [vmem:[%s2854 + $0x8] sm:$0xff]
        %v2857 = vld [vmem:[%s2854 + $0x10] sm:$0xff]
        %v2858 = vld [vmem:[%s2854 + $0x18] sm:$0xff]
        %v2859 = vld [vmem:[%s2854 + $0x20] sm:$0xff]
        %v2860 = vld [vmem:[%s2854 + $0x28] sm:$0xff]
        %v2861 = vld [vmem:[%s2854 + $0x30] sm:$0xff]
        %v2862 = vld [vmem:[%s2854 + $0x38] sm:$0xff]
        %v2863 = vld [vmem:[%s2854 + $0x40] sm:$0xff]
        %v2864 = vld [vmem:[%s2854 + $0x48] sm:$0xff]
        %v2865 = vld [vmem:[%s2854 + $0x50] sm:$0xff]
        %v2866 = vld [vmem:[%s2854 + $0x58] sm:$0xff]
        %v2867 = vld [vmem:[%s2854 + $0x60] sm:$0xff]
        %v2868 = vld [vmem:[%s2854 + $0x68] sm:$0xff]
        %v2869 = vld [vmem:[%s2854 + $0x70] sm:$0xff]
        %v2870 = vld [vmem:[%s2854 + $0x78] sm:$0xff]
        %v2871 = vld [vmem:[%s2854 + $0x80] sm:$0xff]
        %v2872 = vld [vmem:[%s2854 + $0x88] sm:$0xff]
        %v2873 = vld [vmem:[%s2854 + $0x90] sm:$0xff]
        %v2874 = vld [vmem:[%s2854 + $0x98] sm:$0xff]
        %v2875 = vld [vmem:[%s2854 + $0xa0] sm:$0xff]
        %v2876 = vld [vmem:[%s2854 + $0xa8] sm:$0xff]
        %v2877 = vld [vmem:[%s2854 + $0xb0] sm:$0xff]
        %v2878 = vld [vmem:[%s2854 + $0xb8] sm:$0xff]
        %v2879 = vld [vmem:[%s2854 + $0xc0] sm:$0xff]
        %v2880 = vld [vmem:[%s2854 + $0xc8] sm:$0xff]
        %v2881 = vld [vmem:[%s2854 + $0xd0] sm:$0xff]
        %v2882 = vld [vmem:[%s2854 + $0xd8] sm:$0xff]
        %v2883 = vld [vmem:[%s2854 + $0xe0] sm:$0xff]
        %v2884 = vld [vmem:[%s2854 + $0xe8] sm:$0xff]
        %v2885 = vld [vmem:[%s2854 + $0xf0] sm:$0xff]
        %v2886 = vld [vmem:[%s2854 + $0xf8] sm:$0xff]
        %2888 = vset.pattern.permute.xlu0 0
        %2889 = vperm.xlu0 %2888, %v2855
        %v2890 = vpop.permute.xlu0 %2889
        %2893 = vset.pattern.permute.xlu0 0
        %2894 = vperm.xlu0 %2893, %v2856
        %v2895 = vpop.permute.xlu0 %2894
        %2898 = vset.pattern.permute.xlu0 0
        %2899 = vperm.xlu0 %2898, %v2857
        %v2900 = vpop.permute.xlu0 %2899
        %2903 = vset.pattern.permute.xlu0 0
        %2904 = vperm.xlu0 %2903, %v2858
        %v2905 = vpop.permute.xlu0 %2904
        %2908 = vset.pattern.permute.xlu0 0
        %2909 = vperm.xlu0 %2908, %v2859
        %v2910 = vpop.permute.xlu0 %2909
        %2913 = vset.pattern.permute.xlu0 0
        %2914 = vperm.xlu0 %2913, %v2860
        %v2915 = vpop.permute.xlu0 %2914
        %2918 = vset.pattern.permute.xlu0 0
        %2919 = vperm.xlu0 %2918, %v2861
        %v2920 = vpop.permute.xlu0 %2919
        %2923 = vset.pattern.permute.xlu0 0
        %2924 = vperm.xlu0 %2923, %v2862
        %v2925 = vpop.permute.xlu0 %2924
        %2928 = vset.pattern.permute.xlu0 0
        %2929 = vperm.xlu0 %2928, %v2863
        %v2930 = vpop.permute.xlu0 %2929
        %2933 = vset.pattern.permute.xlu0 0
        %2934 = vperm.xlu0 %2933, %v2864
        %v2935 = vpop.permute.xlu0 %2934
        %2938 = vset.pattern.permute.xlu0 0
        %2939 = vperm.xlu0 %2938, %v2865
        %v2940 = vpop.permute.xlu0 %2939
        %2943 = vset.pattern.permute.xlu0 0
        %2944 = vperm.xlu0 %2943, %v2866
        %v2945 = vpop.permute.xlu0 %2944
        %2948 = vset.pattern.permute.xlu0 0
        %2949 = vperm.xlu0 %2948, %v2867
        %v2950 = vpop.permute.xlu0 %2949
        %2953 = vset.pattern.permute.xlu0 0
        %2954 = vperm.xlu0 %2953, %v2868
        %v2955 = vpop.permute.xlu0 %2954
        %2958 = vset.pattern.permute.xlu0 0
        %2959 = vperm.xlu0 %2958, %v2869
        %v2960 = vpop.permute.xlu0 %2959
        %2963 = vset.pattern.permute.xlu0 0
        %2964 = vperm.xlu0 %2963, %v2870
        %v2965 = vpop.permute.xlu0 %2964
        %2968 = vset.pattern.permute.xlu0 0
        %2969 = vperm.xlu0 %2968, %v2871
        %v2970 = vpop.permute.xlu0 %2969
        %2973 = vset.pattern.permute.xlu0 0
        %2974 = vperm.xlu0 %2973, %v2872
        %v2975 = vpop.permute.xlu0 %2974
        %2978 = vset.pattern.permute.xlu0 0
        %2979 = vperm.xlu0 %2978, %v2873
        %v2980 = vpop.permute.xlu0 %2979
        %2983 = vset.pattern.permute.xlu0 0
        %2984 = vperm.xlu0 %2983, %v2874
        %v2985 = vpop.permute.xlu0 %2984
        %2988 = vset.pattern.permute.xlu0 0
        %2989 = vperm.xlu0 %2988, %v2875
        %v2990 = vpop.permute.xlu0 %2989
        %2993 = vset.pattern.permute.xlu0 0
        %2994 = vperm.xlu0 %2993, %v2876
        %v2995 = vpop.permute.xlu0 %2994
        %2998 = vset.pattern.permute.xlu0 0
        %2999 = vperm.xlu0 %2998, %v2877
        %v3000 = vpop.permute.xlu0 %2999
        %3003 = vset.pattern.permute.xlu0 0
        %3004 = vperm.xlu0 %3003, %v2878
        %v3005 = vpop.permute.xlu0 %3004
        %3008 = vset.pattern.permute.xlu0 0
        %3009 = vperm.xlu0 %3008, %v2879
        %v3010 = vpop.permute.xlu0 %3009
        %3013 = vset.pattern.permute.xlu0 0
        %3014 = vperm.xlu0 %3013, %v2880
        %v3015 = vpop.permute.xlu0 %3014
        %3018 = vset.pattern.permute.xlu0 0
        %3019 = vperm.xlu0 %3018, %v2881
        %v3020 = vpop.permute.xlu0 %3019
        %3023 = vset.pattern.permute.xlu0 0
        %3024 = vperm.xlu0 %3023, %v2882
        %v3025 = vpop.permute.xlu0 %3024
        %3028 = vset.pattern.permute.xlu0 0
        %3029 = vperm.xlu0 %3028, %v2883
        %v3030 = vpop.permute.xlu0 %3029
        %3033 = vset.pattern.permute.xlu0 0
        %3034 = vperm.xlu0 %3033, %v2884
        %v3035 = vpop.permute.xlu0 %3034
        %3038 = vset.pattern.permute.xlu0 0
        %3039 = vperm.xlu0 %3038, %v2885
        %v3040 = vpop.permute.xlu0 %3039
        %3043 = vset.pattern.permute.xlu0 0
        %3044 = vperm.xlu0 %3043, %v2886
        %v3045 = vpop.permute.xlu0 %3044
        %v3047 = vmul.f32 %v2822, %v2890
        %v3048 = vmul.f32 %v2823, %v2895
        %v3049 = vmul.f32 %v2824, %v2900
        %v3050 = vmul.f32 %v2825, %v2905
        %v3051 = vmul.f32 %v2826, %v2910
        %v3052 = vmul.f32 %v2827, %v2915
        %v3053 = vmul.f32 %v2828, %v2920
        %v3054 = vmul.f32 %v2829, %v2925
        %v3055 = vmul.f32 %v2830, %v2930
        %v3056 = vmul.f32 %v2831, %v2935
        %v3057 = vmul.f32 %v2832, %v2940
        %v3058 = vmul.f32 %v2833, %v2945
        %v3059 = vmul.f32 %v2834, %v2950
        %v3060 = vmul.f32 %v2835, %v2955
        %v3061 = vmul.f32 %v2836, %v2960
        %v3062 = vmul.f32 %v2837, %v2965
        %v3063 = vmul.f32 %v2838, %v2970
        %v3064 = vmul.f32 %v2839, %v2975
        %v3065 = vmul.f32 %v2840, %v2980
        %v3066 = vmul.f32 %v2841, %v2985
        %v3067 = vmul.f32 %v2842, %v2990
        %v3068 = vmul.f32 %v2843, %v2995
        %v3069 = vmul.f32 %v2844, %v3000
        %v3070 = vmul.f32 %v2845, %v3005
        %v3071 = vmul.f32 %v2846, %v3010
        %v3072 = vmul.f32 %v2847, %v3015
        %v3073 = vmul.f32 %v2848, %v3020
        %v3074 = vmul.f32 %v2849, %v3025
        %v3075 = vmul.f32 %v2850, %v3030
        %v3076 = vmul.f32 %v2851, %v3035
        %v3077 = vmul.f32 %v2852, %v3040
        %v3078 = vmul.f32 %v2853, %v3045
        %v3079 = vadd.f32 %v1857, %v3047
        %v3080 = vadd.f32 %v1858, %v3048
        %v3081 = vadd.f32 %v1859, %v3049
        %v3082 = vadd.f32 %v1860, %v3050
        %v3083 = vadd.f32 %v1861, %v3051
        %v3084 = vadd.f32 %v1862, %v3052
        %v3085 = vadd.f32 %v1863, %v3053
        %v3086 = vadd.f32 %v1864, %v3054
        %v3087 = vadd.f32 %v1865, %v3055
        %v3088 = vadd.f32 %v1866, %v3056
        %v3089 = vadd.f32 %v1867, %v3057
        %v3090 = vadd.f32 %v1868, %v3058
        %v3091 = vadd.f32 %v1869, %v3059
        %v3092 = vadd.f32 %v1870, %v3060
        %v3093 = vadd.f32 %v1871, %v3061
        %v3094 = vadd.f32 %v1872, %v3062
        %v3095 = vadd.f32 %v1873, %v3063
        %v3096 = vadd.f32 %v1874, %v3064
        %v3097 = vadd.f32 %v1875, %v3065
        %v3098 = vadd.f32 %v1876, %v3066
        %v3099 = vadd.f32 %v1877, %v3067
        %v3100 = vadd.f32 %v1878, %v3068
        %v3101 = vadd.f32 %v1879, %v3069
        %v3102 = vadd.f32 %v1880, %v3070
        %v3103 = vadd.f32 %v1881, %v3071
        %v3104 = vadd.f32 %v1882, %v3072
        %v3105 = vadd.f32 %v1883, %v3073
        %v3106 = vadd.f32 %v1884, %v3074
        %v3107 = vadd.f32 %v1885, %v3075
        %v3108 = vadd.f32 %v1886, %v3076
        %v3109 = vadd.f32 %v1887, %v3077
        %v3110 = vadd.f32 %v1888, %v3078
        %v3111 = vld [vmem:[#allocation2 + $0x6c] sm:$0xe]
        %v3112 = vld [vmem:[#allocation2 + $0x70] sm:$0xf]
        %v3113 = vld [vmem:[#allocation2 + $0x74] sm:$0xf]
        %v3114 = vld [vmem:[#allocation2 + $0x78] sm:$0xf]
        %v3115 = vld [vmem:[#allocation2 + $0x7c] sm:$0xf]
        %v3116 = vld [vmem:[#allocation2 + $0x80] sm:$0xf]
        %v3117 = vld [vmem:[#allocation2 + $0x84] sm:$0xf]
        %v3118 = vld [vmem:[#allocation2 + $0x88] sm:$0xf]
        %v3119 = vld [vmem:[#allocation2 + $0x8c] sm:$0xf]
        %v3120 = vld [vmem:[#allocation2 + $0x90] sm:$0xf]
        %v3121 = vld [vmem:[#allocation2 + $0x94] sm:$0xf]
        %v3122 = vld [vmem:[#allocation2 + $0x98] sm:$0xf]
        %v3123 = vld [vmem:[#allocation2 + $0x9c] sm:$0xf]
        %v3124 = vld [vmem:[#allocation2 + $0xa0] sm:$0xf]
        %v3125 = vld [vmem:[#allocation2 + $0xa4] sm:$0xf]
        %v3126 = vld [vmem:[#allocation2 + $0xa8] sm:$0xf]
        %v3127 = vld [vmem:[#allocation2 + $0xac] sm:$0xf]
        %v3128 = vld [vmem:[#allocation2 + $0xb0] sm:$0xf]
        %v3129 = vld [vmem:[#allocation2 + $0xb4] sm:$0xf]
        %v3130 = vld [vmem:[#allocation2 + $0xb8] sm:$0xf]
        %v3131 = vld [vmem:[#allocation2 + $0xbc] sm:$0xf]
        %v3132 = vld [vmem:[#allocation2 + $0xc0] sm:$0xf]
        %v3133 = vld [vmem:[#allocation2 + $0xc4] sm:$0xf]
        %v3134 = vld [vmem:[#allocation2 + $0xc8] sm:$0xf]
        %v3135 = vld [vmem:[#allocation2 + $0xcc] sm:$0xf]
        %v3136 = vld [vmem:[#allocation2 + $0xd0] sm:$0xf]
        %v3137 = vld [vmem:[#allocation2 + $0xd4] sm:$0xf]
        %v3138 = vld [vmem:[#allocation2 + $0xd8] sm:$0xf]
        %v3139 = vld [vmem:[#allocation2 + $0xdc] sm:$0xf]
        %v3140 = vld [vmem:[#allocation2 + $0xe0] sm:$0xf]
        %v3141 = vld [vmem:[#allocation2 + $0xe4] sm:$0xf]
        %v3142 = vld [vmem:[#allocation2 + $0xe8] sm:$0xf]
        %v3143 = vld [vmem:[#allocation2 + $0xec] sm:$0x1]
        %s3144 = sadd.s32 %s701, 192
        %s3145 = smul.addr %s3144, 4
        %s3146 = scalar_lea.vmem [#allocation4], %s3145
        %v3147 = vld [vmem:[%s3146] sm:$0xf]
        %v3148 = vld [vmem:[%s3146 + $0x4] sm:$0xf]
        %v3149 = vld [vmem:[%s3146 + $0x8] sm:$0xf]
        %v3150 = vld [vmem:[%s3146 + $0xc] sm:$0xf]
        %v3151 = vld [vmem:[%s3146 + $0x10] sm:$0xf]
        %v3152 = vld [vmem:[%s3146 + $0x14] sm:$0xf]
        %v3153 = vld [vmem:[%s3146 + $0x18] sm:$0xf]
        %v3154 = vld [vmem:[%s3146 + $0x1c] sm:$0xf]
        %v3155 = vld [vmem:[%s3146 + $0x20] sm:$0xf]
        %v3156 = vld [vmem:[%s3146 + $0x24] sm:$0xf]
        %v3157 = vld [vmem:[%s3146 + $0x28] sm:$0xf]
        %v3158 = vld [vmem:[%s3146 + $0x2c] sm:$0xf]
        %v3159 = vld [vmem:[%s3146 + $0x30] sm:$0xf]
        %v3160 = vld [vmem:[%s3146 + $0x34] sm:$0xf]
        %v3161 = vld [vmem:[%s3146 + $0x38] sm:$0xf]
        %v3162 = vld [vmem:[%s3146 + $0x3c] sm:$0xf]
        %v3163 = vld [vmem:[#allocation2 + $0x9c] sm:$0xe]
        %v3164 = vld [vmem:[#allocation2 + $0xec] sm:$0xf]
        %v3165 = vld [vmem:[#allocation2 + $0xf0] sm:$0xf]
        %v3166 = vld [vmem:[#allocation2 + $0xf4] sm:$0xf]
        %v3167 = vld [vmem:[#allocation2 + $0xf8] sm:$0xf]
        %v3168 = vld [vmem:[#allocation2 + $0xfc] sm:$0xf]
        %v3169 = vld [vmem:[#allocation2 + $0x100] sm:$0xf]
        %v3170 = vld [vmem:[#allocation2 + $0x104] sm:$0xf]
        %v3171 = vld [vmem:[#allocation2 + $0x108] sm:$0xf]
        %v3172 = vld [vmem:[#allocation2 + $0x10c] sm:$0xf]
        %v3173 = vld [vmem:[#allocation2 + $0x110] sm:$0xf]
        %v3174 = vld [vmem:[#allocation2 + $0x114] sm:$0xf]
        %v3175 = vld [vmem:[#allocation2 + $0x118] sm:$0xf]
        %v3176 = vld [vmem:[#allocation2 + $0x11c] sm:$0x1]
        %s3177 = sadd.s32 %s701, 352
        %s3178 = smul.addr %s3177, 4
        %s3179 = scalar_lea.vmem [#allocation4], %s3178
        %v3180 = vld [vmem:[%s3179] sm:$0xf]
        %v3181 = vld [vmem:[%s3179 + $0x4] sm:$0xf]
        %v3182 = vld [vmem:[%s3179 + $0x8] sm:$0xf]
        %v3183 = vld [vmem:[%s3179 + $0xc] sm:$0xf]
        %v3184 = vld [vmem:[%s3179 + $0x10] sm:$0xf]
        %v3185 = vld [vmem:[%s3179 + $0x14] sm:$0xf]
        %v3186 = vld [vmem:[%s3179 + $0x18] sm:$0xf]
        %v3187 = vld [vmem:[%s3179 + $0x1c] sm:$0xf]
        %v3188 = vld [vmem:[%s3179 + $0x20] sm:$0xf]
        %v3189 = vld [vmem:[%s3179 + $0x24] sm:$0xf]
        %v3190 = vld [vmem:[%s3179 + $0x28] sm:$0xf]
        %v3191 = vld [vmem:[%s3179 + $0x2c] sm:$0xf]
        %v3192 = vld [vmem:[%s3179 + $0x30] sm:$0xf]
        %v3193 = vld [vmem:[%s3179 + $0x34] sm:$0xf]
        %v3194 = vld [vmem:[%s3179 + $0x38] sm:$0xf]
        %v3195 = vld [vmem:[%s3179 + $0x3c] sm:$0xf]
        %v3229 = vunpack.c.l.b16 %v3163
        %v3230 = vunpack.c.l.b16 %v3124
        %v3231 = vunpack.c.l.b16 %v3125
        %v3232 = vunpack.c.l.b16 %v3126
        %v3233 = vunpack.c.l.b16 %v3127
        %v3234 = vunpack.c.l.b16 %v3128
        %v3235 = vunpack.c.l.b16 %v3129
        %v3236 = vunpack.c.l.b16 %v3130
        %v3237 = vunpack.c.l.b16 %v3131
        %v3238 = vunpack.c.l.b16 %v3132
        %v3239 = vunpack.c.l.b16 %v3133
        %v3240 = vunpack.c.l.b16 %v3134
        %v3241 = vunpack.c.l.b16 %v3135
        %v3242 = vunpack.c.l.b16 %v3136
        %v3243 = vunpack.c.l.b16 %v3137
        %v3244 = vunpack.c.l.b16 %v3138
        %v3245 = vunpack.c.l.b16 %v3139
        %v3246 = vunpack.c.l.b16 %v3140
        %v3247 = vunpack.c.l.b16 %v3141
        %v3248 = vunpack.c.l.b16 %v3142
        %v3249 = vunpack.c.l.b16 %v3164
        %v3250 = vunpack.c.l.b16 %v3165
        %v3251 = vunpack.c.l.b16 %v3166
        %v3252 = vunpack.c.l.b16 %v3167
        %v3253 = vunpack.c.l.b16 %v3168
        %v3254 = vunpack.c.l.b16 %v3169
        %v3255 = vunpack.c.l.b16 %v3170
        %v3256 = vunpack.c.l.b16 %v3171
        %v3257 = vunpack.c.l.b16 %v3172
        %v3258 = vunpack.c.l.b16 %v3173
        %v3259 = vunpack.c.l.b16 %v3174
        %v3260 = vunpack.c.l.b16 %v3175
        %v3261 = vunpack.c.l.b16 %v3176
        %v3262 = vpack.c.b16 %v3230, %v3229
        %v3263 = vpack.c.b16 %v3232, %v3231
        %v3264 = vpack.c.b16 %v3234, %v3233
        %v3265 = vpack.c.b16 %v3236, %v3235
        %v3266 = vpack.c.b16 %v3238, %v3237
        %v3267 = vpack.c.b16 %v3240, %v3239
        %v3268 = vpack.c.b16 %v3242, %v3241
        %v3269 = vpack.c.b16 %v3244, %v3243
        %v3270 = vpack.c.b16 %v3246, %v3245
        %v3271 = vpack.c.b16 %v3248, %v3247
        %v3272 = vpack.c.b16 %v3250, %v3249
        %v3273 = vpack.c.b16 %v3252, %v3251
        %v3274 = vpack.c.b16 %v3254, %v3253
        %v3275 = vpack.c.b16 %v3256, %v3255
        %v3276 = vpack.c.b16 %v3258, %v3257
        %v3277 = vpack.c.b16 %v3260, %v3259
        %v3278 = vpack.c.b16 %v3261, %v3261
        %vm3279 = vcmask 1046528
        %v3280 = vrot.slane %v3262, 1
        %v3281 = vrot.slane %v3263, 1
        %v3282 = vsel %vm3279, %v3280, %v3281
        %v3283 = vrot.slane %v3264, 1
        %v3284 = vsel %vm3279, %v3281, %v3283
        %v3285 = vrot.slane %v3265, 1
        %v3286 = vsel %vm3279, %v3283, %v3285
        %v3287 = vrot.slane %v3266, 1
        %v3288 = vsel %vm3279, %v3285, %v3287
        %v3289 = vrot.slane %v3267, 1
        %v3290 = vsel %vm3279, %v3287, %v3289
        %v3291 = vrot.slane %v3268, 1
        %v3292 = vsel %vm3279, %v3289, %v3291
        %v3293 = vrot.slane %v3269, 1
        %v3294 = vsel %vm3279, %v3291, %v3293
        %v3295 = vrot.slane %v3270, 1
        %v3296 = vsel %vm3279, %v3293, %v3295
        %v3297 = vrot.slane %v3271, 1
        %v3298 = vsel %vm3279, %v3295, %v3297
        %v3299 = vrot.slane %v3272, 1
        %v3300 = vsel %vm3279, %v3297, %v3299
        %v3301 = vrot.slane %v3273, 1
        %v3302 = vsel %vm3279, %v3299, %v3301
        %v3303 = vrot.slane %v3274, 1
        %v3304 = vsel %vm3279, %v3301, %v3303
        %v3305 = vrot.slane %v3275, 1
        %v3306 = vsel %vm3279, %v3303, %v3305
        %v3307 = vrot.slane %v3276, 1
        %v3308 = vsel %vm3279, %v3305, %v3307
        %v3309 = vrot.slane %v3277, 1
        %v3310 = vsel %vm3279, %v3307, %v3309
        %v3311 = vrot.slane %v3278, 1
        %v3312 = vsel %vm3279, %v3309, %v3311
        %v3345 = vunpack.c.l.b16 %v3180
        %v3346 = vunpack.c.l.b16 %v3181
        %v3347 = vunpack.c.l.b16 %v3182
        %v3348 = vunpack.c.l.b16 %v3183
        %v3349 = vunpack.c.l.b16 %v3184
        %v3350 = vunpack.c.l.b16 %v3185
        %v3351 = vunpack.c.l.b16 %v3186
        %v3352 = vunpack.c.l.b16 %v3187
        %v3353 = vunpack.c.l.b16 %v3188
        %v3354 = vunpack.c.l.b16 %v3189
        %v3355 = vunpack.c.l.b16 %v3190
        %v3356 = vunpack.c.l.b16 %v3191
        %v3357 = vunpack.c.l.b16 %v3192
        %v3358 = vunpack.c.l.b16 %v3193
        %v3359 = vunpack.c.l.b16 %v3194
        %v3360 = vunpack.c.l.b16 %v3195
        %v3361 = vpack.c.b16 %v3346, %v3345
        %v3362 = vpack.c.b16 %v3348, %v3347
        %v3363 = vpack.c.b16 %v3350, %v3349
        %v3364 = vpack.c.b16 %v3352, %v3351
        %v3365 = vpack.c.b16 %v3354, %v3353
        %v3366 = vpack.c.b16 %v3356, %v3355
        %v3367 = vpack.c.b16 %v3358, %v3357
        %v3368 = vpack.c.b16 %v3360, %v3359
        %3377 = vmatpush.bf16.msra.mxu0 %v3368
        %3378 = vmatpush.bf16.msra.mxu0 %v3367
        %3379 = vmatpush.bf16.msra.mxu0 %v3366
        %3380 = vmatpush.bf16.msra.mxu0 %v3365
        %3381 = vmatpush.bf16.msra.mxu0 %v3364
        %3382 = vmatpush.bf16.msra.mxu0 %v3363
        %3383 = vmatpush.bf16.msra.mxu0 %v3362
        %3384 = vmatpush.bf16.msra.mxu0 %v3361
        %3385 = vmatmul.bf16.gmra.mxu0 %v3282
        %v3386 = vpop.f32.mrf.mxu0
        %v3387 = vadd.f32 0.0, %v3386
        %v3388 = vpop.f32.mrf.mxu0
        %v3389 = vadd.f32 0.0, %v3388
        %3390 = vmatmul.bf16.gmra.mxu0 %v3284
        %v3391 = vpop.f32.mrf.mxu0
        %v3392 = vadd.f32 0.0, %v3391
        %v3393 = vpop.f32.mrf.mxu0
        %v3394 = vadd.f32 0.0, %v3393
        %3395 = vmatmul.bf16.gmra.mxu0 %v3286
        %v3396 = vpop.f32.mrf.mxu0
        %v3397 = vadd.f32 0.0, %v3396
        %v3398 = vpop.f32.mrf.mxu0
        %v3399 = vadd.f32 0.0, %v3398
        %3400 = vmatmul.bf16.gmra.mxu0 %v3288
        %v3401 = vpop.f32.mrf.mxu0
        %v3402 = vadd.f32 0.0, %v3401
        %v3403 = vpop.f32.mrf.mxu0
        %v3404 = vadd.f32 0.0, %v3403
        %3405 = vmatmul.bf16.gmra.mxu0 %v3290
        %v3406 = vpop.f32.mrf.mxu0
        %v3407 = vadd.f32 0.0, %v3406
        %v3408 = vpop.f32.mrf.mxu0
        %v3409 = vadd.f32 0.0, %v3408
        %3410 = vmatmul.bf16.gmra.mxu0 %v3292
        %v3411 = vpop.f32.mrf.mxu0
        %v3412 = vadd.f32 0.0, %v3411
        %v3413 = vpop.f32.mrf.mxu0
        %v3414 = vadd.f32 0.0, %v3413
        %3415 = vmatmul.bf16.gmra.mxu0 %v3294
        %v3416 = vpop.f32.mrf.mxu0
        %v3417 = vadd.f32 0.0, %v3416
        %v3418 = vpop.f32.mrf.mxu0
        %v3419 = vadd.f32 0.0, %v3418
        %3420 = vmatmul.bf16.gmra.mxu0 %v3296
        %v3421 = vpop.f32.mrf.mxu0
        %v3422 = vadd.f32 0.0, %v3421
        %v3423 = vpop.f32.mrf.mxu0
        %v3424 = vadd.f32 0.0, %v3423
        %3425 = vmatmul.bf16.gmra.mxu0 %v3298
        %v3426 = vpop.f32.mrf.mxu0
        %v3427 = vadd.f32 0.0, %v3426
        %v3428 = vpop.f32.mrf.mxu0
        %v3429 = vadd.f32 0.0, %v3428
        %3430 = vmatmul.bf16.gmra.mxu0 %v3300
        %v3431 = vpop.f32.mrf.mxu0
        %v3432 = vadd.f32 0.0, %v3431
        %v3433 = vpop.f32.mrf.mxu0
        %v3434 = vadd.f32 0.0, %v3433
        %3435 = vmatmul.bf16.gmra.mxu0 %v3302
        %v3436 = vpop.f32.mrf.mxu0
        %v3437 = vadd.f32 0.0, %v3436
        %v3438 = vpop.f32.mrf.mxu0
        %v3439 = vadd.f32 0.0, %v3438
        %3440 = vmatmul.bf16.gmra.mxu0 %v3304
        %v3441 = vpop.f32.mrf.mxu0
        %v3442 = vadd.f32 0.0, %v3441
        %v3443 = vpop.f32.mrf.mxu0
        %v3444 = vadd.f32 0.0, %v3443
        %3445 = vmatmul.bf16.gmra.mxu0 %v3306
        %v3446 = vpop.f32.mrf.mxu0
        %v3447 = vadd.f32 0.0, %v3446
        %v3448 = vpop.f32.mrf.mxu0
        %v3449 = vadd.f32 0.0, %v3448
        %3450 = vmatmul.bf16.gmra.mxu0 %v3308
        %v3451 = vpop.f32.mrf.mxu0
        %v3452 = vadd.f32 0.0, %v3451
        %v3453 = vpop.f32.mrf.mxu0
        %v3454 = vadd.f32 0.0, %v3453
        %3455 = vmatmul.bf16.gmra.mxu0 %v3310
        %v3456 = vpop.f32.mrf.mxu0
        %v3457 = vadd.f32 0.0, %v3456
        %v3458 = vpop.f32.mrf.mxu0
        %v3459 = vadd.f32 0.0, %v3458
        %3460 = vmatmul.bf16.gmra.mxu0 %v3312
        %v3461 = vpop.f32.mrf.mxu0
        %v3462 = vadd.f32 0.0, %v3461
        %v3463 = vpop.f32.mrf.mxu0
        %v3464 = vadd.f32 0.0, %v3463
        %3465 = vdwg.mxu0
        %v3480 = vunpack.c.l.b16 %v3111
        %v3481 = vunpack.c.l.b16 %v3112
        %v3482 = vunpack.c.l.b16 %v3113
        %v3483 = vunpack.c.l.b16 %v3114
        %v3484 = vunpack.c.l.b16 %v3115
        %v3485 = vunpack.c.l.b16 %v3116
        %v3486 = vunpack.c.l.b16 %v3117
        %v3487 = vunpack.c.l.b16 %v3118
        %v3488 = vunpack.c.l.b16 %v3119
        %v3489 = vunpack.c.l.b16 %v3120
        %v3490 = vunpack.c.l.b16 %v3121
        %v3491 = vunpack.c.l.b16 %v3122
        %v3492 = vunpack.c.l.b16 %v3123
        %v3493 = vunpack.c.l.b16 %v3143
        %v3494 = vpack.c.b16 %v3481, %v3480
        %v3495 = vpack.c.b16 %v3483, %v3482
        %v3496 = vpack.c.b16 %v3485, %v3484
        %v3497 = vpack.c.b16 %v3487, %v3486
        %v3498 = vpack.c.b16 %v3489, %v3488
        %v3499 = vpack.c.b16 %v3491, %v3490
        %v3500 = vpack.c.b16 %v3230, %v3492
        %v3501 = vpack.c.b16 %v3493, %v3493
        %v3502 = vrot.slane %v3494, 1
        %v3503 = vrot.slane %v3495, 1
        %v3504 = vsel %vm3279, %v3502, %v3503
        %v3505 = vrot.slane %v3496, 1
        %v3506 = vsel %vm3279, %v3503, %v3505
        %v3507 = vrot.slane %v3497, 1
        %v3508 = vsel %vm3279, %v3505, %v3507
        %v3509 = vrot.slane %v3498, 1
        %v3510 = vsel %vm3279, %v3507, %v3509
        %v3511 = vrot.slane %v3499, 1
        %v3512 = vsel %vm3279, %v3509, %v3511
        %v3513 = vrot.slane %v3500, 1
        %v3514 = vsel %vm3279, %v3511, %v3513
        %v3515 = vsel %vm3279, %v3513, %v3281
        %v3516 = vrot.slane %v3501, 1
        %v3517 = vsel %vm3279, %v3297, %v3516
        %v3542 = vunpack.c.l.b16 %v3147
        %v3543 = vunpack.c.l.b16 %v3148
        %v3544 = vunpack.c.l.b16 %v3149
        %v3545 = vunpack.c.l.b16 %v3150
        %v3546 = vunpack.c.l.b16 %v3151
        %v3547 = vunpack.c.l.b16 %v3152
        %v3548 = vunpack.c.l.b16 %v3153
        %v3549 = vunpack.c.l.b16 %v3154
        %v3550 = vunpack.c.l.b16 %v3155
        %v3551 = vunpack.c.l.b16 %v3156
        %v3552 = vunpack.c.l.b16 %v3157
        %v3553 = vunpack.c.l.b16 %v3158
        %v3554 = vunpack.c.l.b16 %v3159
        %v3555 = vunpack.c.l.b16 %v3160
        %v3556 = vunpack.c.l.b16 %v3161
        %v3557 = vunpack.c.l.b16 %v3162
        %v3558 = vpack.c.b16 %v3543, %v3542
        %v3559 = vpack.c.b16 %v3545, %v3544
        %v3560 = vpack.c.b16 %v3547, %v3546
        %v3561 = vpack.c.b16 %v3549, %v3548
        %v3562 = vpack.c.b16 %v3551, %v3550
        %v3563 = vpack.c.b16 %v3553, %v3552
        %v3564 = vpack.c.b16 %v3555, %v3554
        %v3565 = vpack.c.b16 %v3557, %v3556
        %3574 = vmatpush.bf16.msra.mxu0 %v3565
        %3575 = vmatpush.bf16.msra.mxu0 %v3564
        %3576 = vmatpush.bf16.msra.mxu0 %v3563
        %3577 = vmatpush.bf16.msra.mxu0 %v3562
        %3578 = vmatpush.bf16.msra.mxu0 %v3561
        %3579 = vmatpush.bf16.msra.mxu0 %v3560
        %3580 = vmatpush.bf16.msra.mxu0 %v3559
        %3581 = vmatpush.bf16.msra.mxu0 %v3558
        %3582 = vmatmul.bf16.gmra.mxu0 %v3504
        %v3583 = vpop.f32.mrf.mxu0
        %v3584 = vadd.f32 %v3387, %v3583
        %v3585 = vpop.f32.mrf.mxu0
        %v3586 = vadd.f32 %v3389, %v3585
        %3587 = vmatmul.bf16.gmra.mxu0 %v3506
        %v3588 = vpop.f32.mrf.mxu0
        %v3589 = vadd.f32 %v3392, %v3588
        %v3590 = vpop.f32.mrf.mxu0
        %v3591 = vadd.f32 %v3394, %v3590
        %3592 = vmatmul.bf16.gmra.mxu0 %v3508
        %v3593 = vpop.f32.mrf.mxu0
        %v3594 = vadd.f32 %v3397, %v3593
        %v3595 = vpop.f32.mrf.mxu0
        %v3596 = vadd.f32 %v3399, %v3595
        %3597 = vmatmul.bf16.gmra.mxu0 %v3510
        %v3598 = vpop.f32.mrf.mxu0
        %v3599 = vadd.f32 %v3402, %v3598
        %v3600 = vpop.f32.mrf.mxu0
        %v3601 = vadd.f32 %v3404, %v3600
        %3602 = vmatmul.bf16.gmra.mxu0 %v3512
        %v3603 = vpop.f32.mrf.mxu0
        %v3604 = vadd.f32 %v3407, %v3603
        %v3605 = vpop.f32.mrf.mxu0
        %v3606 = vadd.f32 %v3409, %v3605
        %3607 = vmatmul.bf16.gmra.mxu0 %v3514
        %v3608 = vpop.f32.mrf.mxu0
        %v3609 = vadd.f32 %v3412, %v3608
        %v3610 = vpop.f32.mrf.mxu0
        %v3611 = vadd.f32 %v3414, %v3610
        %3612 = vmatmul.bf16.gmra.mxu0 %v3515
        %v3613 = vpop.f32.mrf.mxu0
        %v3614 = vadd.f32 %v3417, %v3613
        %v3615 = vpop.f32.mrf.mxu0
        %v3616 = vadd.f32 %v3419, %v3615
        %3617 = vmatmul.bf16.gmra.mxu0 %v3284
        %v3618 = vpop.f32.mrf.mxu0
        %v3619 = vadd.f32 %v3422, %v3618
        %v3620 = vpop.f32.mrf.mxu0
        %v3621 = vadd.f32 %v3424, %v3620
        %3622 = vmatmul.bf16.gmra.mxu0 %v3286
        %v3623 = vpop.f32.mrf.mxu0
        %v3624 = vadd.f32 %v3427, %v3623
        %v3625 = vpop.f32.mrf.mxu0
        %v3626 = vadd.f32 %v3429, %v3625
        %3627 = vmatmul.bf16.gmra.mxu0 %v3288
        %v3628 = vpop.f32.mrf.mxu0
        %v3629 = vadd.f32 %v3432, %v3628
        %v3630 = vpop.f32.mrf.mxu0
        %v3631 = vadd.f32 %v3434, %v3630
        %3632 = vmatmul.bf16.gmra.mxu0 %v3290
        %v3633 = vpop.f32.mrf.mxu0
        %v3634 = vadd.f32 %v3437, %v3633
        %v3635 = vpop.f32.mrf.mxu0
        %v3636 = vadd.f32 %v3439, %v3635
        %3637 = vmatmul.bf16.gmra.mxu0 %v3292
        %v3638 = vpop.f32.mrf.mxu0
        %v3639 = vadd.f32 %v3442, %v3638
        %v3640 = vpop.f32.mrf.mxu0
        %v3641 = vadd.f32 %v3444, %v3640
        %3642 = vmatmul.bf16.gmra.mxu0 %v3294
        %v3643 = vpop.f32.mrf.mxu0
        %v3644 = vadd.f32 %v3447, %v3643
        %v3645 = vpop.f32.mrf.mxu0
        %v3646 = vadd.f32 %v3449, %v3645
        %3647 = vmatmul.bf16.gmra.mxu0 %v3296
        %v3648 = vpop.f32.mrf.mxu0
        %v3649 = vadd.f32 %v3452, %v3648
        %v3650 = vpop.f32.mrf.mxu0
        %v3651 = vadd.f32 %v3454, %v3650
        %3652 = vmatmul.bf16.gmra.mxu0 %v3298
        %v3653 = vpop.f32.mrf.mxu0
        %v3654 = vadd.f32 %v3457, %v3653
        %v3655 = vpop.f32.mrf.mxu0
        %v3656 = vadd.f32 %v3459, %v3655
        %3657 = vmatmul.bf16.gmra.mxu0 %v3517
        %v3658 = vpop.f32.mrf.mxu0
        %v3659 = vadd.f32 %v3462, %v3658
        %v3660 = vpop.f32.mrf.mxu0
        %v3661 = vadd.f32 %v3464, %v3660
        %3662 = vdwg.mxu0
        %v3663 = vld [vmem:[#allocation2 + $0xcc] sm:$0xe]
        %v3664 = vld [vmem:[#allocation2 + $0xd0] sm:$0xf]
        %v3665 = vld [vmem:[#allocation2 + $0xd4] sm:$0xf]
        %v3666 = vld [vmem:[#allocation2 + $0xd8] sm:$0xf]
        %v3667 = vld [vmem:[#allocation2 + $0xdc] sm:$0xf]
        %v3668 = vld [vmem:[#allocation2 + $0xe0] sm:$0xf]
        %v3669 = vld [vmem:[#allocation2 + $0xe4] sm:$0xf]
        %v3670 = vld [vmem:[#allocation2 + $0xe8] sm:$0xf]
        %v3671 = vld [vmem:[#allocation2 + $0xec] sm:$0xf]
        %v3672 = vld [vmem:[#allocation2 + $0xf0] sm:$0xf]
        %v3673 = vld [vmem:[#allocation2 + $0xf4] sm:$0xf]
        %v3674 = vld [vmem:[#allocation2 + $0xf8] sm:$0xf]
        %v3675 = vld [vmem:[#allocation2 + $0xfc] sm:$0xf]
        %v3676 = vld [vmem:[#allocation2 + $0x100] sm:$0xf]
        %v3677 = vld [vmem:[#allocation2 + $0x104] sm:$0xf]
        %v3678 = vld [vmem:[#allocation2 + $0x108] sm:$0xf]
        %v3679 = vld [vmem:[#allocation2 + $0x10c] sm:$0xf]
        %v3680 = vld [vmem:[#allocation2 + $0x110] sm:$0xf]
        %v3681 = vld [vmem:[#allocation2 + $0x114] sm:$0xf]
        %v3682 = vld [vmem:[#allocation2 + $0x118] sm:$0xf]
        %v3683 = vld [vmem:[#allocation2 + $0x11c] sm:$0xf]
        %v3684 = vld [vmem:[#allocation2 + $0x120] sm:$0xf]
        %v3685 = vld [vmem:[#allocation2 + $0x124] sm:$0xf]
        %v3686 = vld [vmem:[#allocation2 + $0x128] sm:$0xf]
        %v3687 = vld [vmem:[#allocation2 + $0x12c] sm:$0xf]
        %v3688 = vld [vmem:[#allocation2 + $0x130] sm:$0xf]
        %v3689 = vld [vmem:[#allocation2 + $0x134] sm:$0xf]
        %v3690 = vld [vmem:[#allocation2 + $0x138] sm:$0xf]
        %v3691 = vld [vmem:[#allocation2 + $0x13c] sm:$0xf]
        %v3692 = vld [vmem:[#allocation2 + $0x140] sm:$0xf]
        %v3693 = vld [vmem:[#allocation2 + $0x144] sm:$0xf]
        %v3694 = vld [vmem:[#allocation2 + $0x148] sm:$0xf]
        %v3695 = vld [vmem:[#allocation2 + $0x14c] sm:$0x1]
        %s3696 = sadd.s32 %s701, 512
        %s3697 = smul.addr %s3696, 4
        %s3698 = scalar_lea.vmem [#allocation4], %s3697
        %v3699 = vld [vmem:[%s3698] sm:$0xf]
        %v3700 = vld [vmem:[%s3698 + $0x4] sm:$0xf]
        %v3701 = vld [vmem:[%s3698 + $0x8] sm:$0xf]
        %v3702 = vld [vmem:[%s3698 + $0xc] sm:$0xf]
        %v3703 = vld [vmem:[%s3698 + $0x10] sm:$0xf]
        %v3704 = vld [vmem:[%s3698 + $0x14] sm:$0xf]
        %v3705 = vld [vmem:[%s3698 + $0x18] sm:$0xf]
        %v3706 = vld [vmem:[%s3698 + $0x1c] sm:$0xf]
        %v3707 = vld [vmem:[%s3698 + $0x20] sm:$0xf]
        %v3708 = vld [vmem:[%s3698 + $0x24] sm:$0xf]
        %v3709 = vld [vmem:[%s3698 + $0x28] sm:$0xf]
        %v3710 = vld [vmem:[%s3698 + $0x2c] sm:$0xf]
        %v3711 = vld [vmem:[%s3698 + $0x30] sm:$0xf]
        %v3712 = vld [vmem:[%s3698 + $0x34] sm:$0xf]
        %v3713 = vld [vmem:[%s3698 + $0x38] sm:$0xf]
        %v3714 = vld [vmem:[%s3698 + $0x3c] sm:$0xf]
        %v3748 = vunpack.c.l.b16 %v3663
        %v3749 = vunpack.c.l.b16 %v3664
        %v3750 = vunpack.c.l.b16 %v3665
        %v3751 = vunpack.c.l.b16 %v3666
        %v3752 = vunpack.c.l.b16 %v3667
        %v3753 = vunpack.c.l.b16 %v3668
        %v3754 = vunpack.c.l.b16 %v3669
        %v3755 = vunpack.c.l.b16 %v3670
        %v3756 = vunpack.c.l.b16 %v3671
        %v3757 = vunpack.c.l.b16 %v3672
        %v3758 = vunpack.c.l.b16 %v3673
        %v3759 = vunpack.c.l.b16 %v3674
        %v3760 = vunpack.c.l.b16 %v3675
        %v3761 = vunpack.c.l.b16 %v3676
        %v3762 = vunpack.c.l.b16 %v3677
        %v3763 = vunpack.c.l.b16 %v3678
        %v3764 = vunpack.c.l.b16 %v3679
        %v3765 = vunpack.c.l.b16 %v3680
        %v3766 = vunpack.c.l.b16 %v3681
        %v3767 = vunpack.c.l.b16 %v3682
        %v3768 = vunpack.c.l.b16 %v3683
        %v3769 = vunpack.c.l.b16 %v3684
        %v3770 = vunpack.c.l.b16 %v3685
        %v3771 = vunpack.c.l.b16 %v3686
        %v3772 = vunpack.c.l.b16 %v3687
        %v3773 = vunpack.c.l.b16 %v3688
        %v3774 = vunpack.c.l.b16 %v3689
        %v3775 = vunpack.c.l.b16 %v3690
        %v3776 = vunpack.c.l.b16 %v3691
        %v3777 = vunpack.c.l.b16 %v3692
        %v3778 = vunpack.c.l.b16 %v3693
        %v3779 = vunpack.c.l.b16 %v3694
        %v3780 = vunpack.c.l.b16 %v3695
        %v3781 = vpack.c.b16 %v3749, %v3748
        %v3782 = vpack.c.b16 %v3751, %v3750
        %v3783 = vpack.c.b16 %v3753, %v3752
        %v3784 = vpack.c.b16 %v3755, %v3754
        %v3785 = vpack.c.b16 %v3757, %v3756
        %v3786 = vpack.c.b16 %v3759, %v3758
        %v3787 = vpack.c.b16 %v3761, %v3760
        %v3788 = vpack.c.b16 %v3763, %v3762
        %v3789 = vpack.c.b16 %v3765, %v3764
        %v3790 = vpack.c.b16 %v3767, %v3766
        %v3791 = vpack.c.b16 %v3769, %v3768
        %v3792 = vpack.c.b16 %v3771, %v3770
        %v3793 = vpack.c.b16 %v3773, %v3772
        %v3794 = vpack.c.b16 %v3775, %v3774
        %v3795 = vpack.c.b16 %v3777, %v3776
        %v3796 = vpack.c.b16 %v3779, %v3778
        %v3797 = vpack.c.b16 %v3780, %v3780
        %v3798 = vrot.slane %v3781, 1
        %v3799 = vrot.slane %v3782, 1
        %v3800 = vsel %vm3279, %v3798, %v3799
        %v3801 = vrot.slane %v3783, 1
        %v3802 = vsel %vm3279, %v3799, %v3801
        %v3803 = vrot.slane %v3784, 1
        %v3804 = vsel %vm3279, %v3801, %v3803
        %v3805 = vrot.slane %v3785, 1
        %v3806 = vsel %vm3279, %v3803, %v3805
        %v3807 = vrot.slane %v3786, 1
        %v3808 = vsel %vm3279, %v3805, %v3807
        %v3809 = vrot.slane %v3787, 1
        %v3810 = vsel %vm3279, %v3807, %v3809
        %v3811 = vrot.slane %v3788, 1
        %v3812 = vsel %vm3279, %v3809, %v3811
        %v3813 = vrot.slane %v3789, 1
        %v3814 = vsel %vm3279, %v3811, %v3813
        %v3815 = vrot.slane %v3790, 1
        %v3816 = vsel %vm3279, %v3813, %v3815
        %v3817 = vrot.slane %v3791, 1
        %v3818 = vsel %vm3279, %v3815, %v3817
        %v3819 = vrot.slane %v3792, 1
        %v3820 = vsel %vm3279, %v3817, %v3819
        %v3821 = vrot.slane %v3793, 1
        %v3822 = vsel %vm3279, %v3819, %v3821
        %v3823 = vrot.slane %v3794, 1
        %v3824 = vsel %vm3279, %v3821, %v3823
        %v3825 = vrot.slane %v3795, 1
        %v3826 = vsel %vm3279, %v3823, %v3825
        %v3827 = vrot.slane %v3796, 1
        %v3828 = vsel %vm3279, %v3825, %v3827
        %v3829 = vrot.slane %v3797, 1
        %v3830 = vsel %vm3279, %v3827, %v3829
        %v3863 = vunpack.c.l.b16 %v3699
        %v3864 = vunpack.c.l.b16 %v3700
        %v3865 = vunpack.c.l.b16 %v3701
        %v3866 = vunpack.c.l.b16 %v3702
        %v3867 = vunpack.c.l.b16 %v3703
        %v3868 = vunpack.c.l.b16 %v3704
        %v3869 = vunpack.c.l.b16 %v3705
        %v3870 = vunpack.c.l.b16 %v3706
        %v3871 = vunpack.c.l.b16 %v3707
        %v3872 = vunpack.c.l.b16 %v3708
        %v3873 = vunpack.c.l.b16 %v3709
        %v3874 = vunpack.c.l.b16 %v3710
        %v3875 = vunpack.c.l.b16 %v3711
        %v3876 = vunpack.c.l.b16 %v3712
        %v3877 = vunpack.c.l.b16 %v3713
        %v3878 = vunpack.c.l.b16 %v3714
        %v3879 = vpack.c.b16 %v3864, %v3863
        %v3880 = vpack.c.b16 %v3866, %v3865
        %v3881 = vpack.c.b16 %v3868, %v3867
        %v3882 = vpack.c.b16 %v3870, %v3869
        %v3883 = vpack.c.b16 %v3872, %v3871
        %v3884 = vpack.c.b16 %v3874, %v3873
        %v3885 = vpack.c.b16 %v3876, %v3875
        %v3886 = vpack.c.b16 %v3878, %v3877
        %3895 = vmatpush.bf16.msra.mxu0 %v3886
        %3896 = vmatpush.bf16.msra.mxu0 %v3885
        %3897 = vmatpush.bf16.msra.mxu0 %v3884
        %3898 = vmatpush.bf16.msra.mxu0 %v3883
        %3899 = vmatpush.bf16.msra.mxu0 %v3882
        %3900 = vmatpush.bf16.msra.mxu0 %v3881
        %3901 = vmatpush.bf16.msra.mxu0 %v3880
        %3902 = vmatpush.bf16.msra.mxu0 %v3879
        %3903 = vmatmul.bf16.gmra.mxu0 %v3800
        %v3904 = vpop.f32.mrf.mxu0
        %v3905 = vadd.f32 0.0, %v3904
        %v3906 = vpop.f32.mrf.mxu0
        %v3907 = vadd.f32 0.0, %v3906
        %3908 = vmatmul.bf16.gmra.mxu0 %v3802
        %v3909 = vpop.f32.mrf.mxu0
        %v3910 = vadd.f32 0.0, %v3909
        %v3911 = vpop.f32.mrf.mxu0
        %v3912 = vadd.f32 0.0, %v3911
        %3913 = vmatmul.bf16.gmra.mxu0 %v3804
        %v3914 = vpop.f32.mrf.mxu0
        %v3915 = vadd.f32 0.0, %v3914
        %v3916 = vpop.f32.mrf.mxu0
        %v3917 = vadd.f32 0.0, %v3916
        %3918 = vmatmul.bf16.gmra.mxu0 %v3806
        %v3919 = vpop.f32.mrf.mxu0
        %v3920 = vadd.f32 0.0, %v3919
        %v3921 = vpop.f32.mrf.mxu0
        %v3922 = vadd.f32 0.0, %v3921
        %3923 = vmatmul.bf16.gmra.mxu0 %v3808
        %v3924 = vpop.f32.mrf.mxu0
        %v3925 = vadd.f32 0.0, %v3924
        %v3926 = vpop.f32.mrf.mxu0
        %v3927 = vadd.f32 0.0, %v3926
        %3928 = vmatmul.bf16.gmra.mxu0 %v3810
        %v3929 = vpop.f32.mrf.mxu0
        %v3930 = vadd.f32 0.0, %v3929
        %v3931 = vpop.f32.mrf.mxu0
        %v3932 = vadd.f32 0.0, %v3931
        %3933 = vmatmul.bf16.gmra.mxu0 %v3812
        %v3934 = vpop.f32.mrf.mxu0
        %v3935 = vadd.f32 0.0, %v3934
        %v3936 = vpop.f32.mrf.mxu0
        %v3937 = vadd.f32 0.0, %v3936
        %3938 = vmatmul.bf16.gmra.mxu0 %v3814
        %v3939 = vpop.f32.mrf.mxu0
        %v3940 = vadd.f32 0.0, %v3939
        %v3941 = vpop.f32.mrf.mxu0
        %v3942 = vadd.f32 0.0, %v3941
        %3943 = vmatmul.bf16.gmra.mxu0 %v3816
        %v3944 = vpop.f32.mrf.mxu0
        %v3945 = vadd.f32 0.0, %v3944
        %v3946 = vpop.f32.mrf.mxu0
        %v3947 = vadd.f32 0.0, %v3946
        %3948 = vmatmul.bf16.gmra.mxu0 %v3818
        %v3949 = vpop.f32.mrf.mxu0
        %v3950 = vadd.f32 0.0, %v3949
        %v3951 = vpop.f32.mrf.mxu0
        %v3952 = vadd.f32 0.0, %v3951
        %3953 = vmatmul.bf16.gmra.mxu0 %v3820
        %v3954 = vpop.f32.mrf.mxu0
        %v3955 = vadd.f32 0.0, %v3954
        %v3956 = vpop.f32.mrf.mxu0
        %v3957 = vadd.f32 0.0, %v3956
        %3958 = vmatmul.bf16.gmra.mxu0 %v3822
        %v3959 = vpop.f32.mrf.mxu0
        %v3960 = vadd.f32 0.0, %v3959
        %v3961 = vpop.f32.mrf.mxu0
        %v3962 = vadd.f32 0.0, %v3961
        %3963 = vmatmul.bf16.gmra.mxu0 %v3824
        %v3964 = vpop.f32.mrf.mxu0
        %v3965 = vadd.f32 0.0, %v3964
        %v3966 = vpop.f32.mrf.mxu0
        %v3967 = vadd.f32 0.0, %v3966
        %3968 = vmatmul.bf16.gmra.mxu0 %v3826
        %v3969 = vpop.f32.mrf.mxu0
        %v3970 = vadd.f32 0.0, %v3969
        %v3971 = vpop.f32.mrf.mxu0
        %v3972 = vadd.f32 0.0, %v3971
        %3973 = vmatmul.bf16.gmra.mxu0 %v3828
        %v3974 = vpop.f32.mrf.mxu0
        %v3975 = vadd.f32 0.0, %v3974
        %v3976 = vpop.f32.mrf.mxu0
        %v3977 = vadd.f32 0.0, %v3976
        %3978 = vmatmul.bf16.gmra.mxu0 %v3830
        %v3979 = vpop.f32.mrf.mxu0
        %v3980 = vadd.f32 0.0, %v3979
        %v3981 = vpop.f32.mrf.mxu0
        %v3982 = vadd.f32 0.0, %v3981
        %3983 = vdwg.mxu0
        %v3984 = vadd.f32 %v3584, %v3905
        %v3985 = vadd.f32 %v3586, %v3907
        %v3986 = vadd.f32 %v3589, %v3910
        %v3987 = vadd.f32 %v3591, %v3912
        %v3988 = vadd.f32 %v3594, %v3915
        %v3989 = vadd.f32 %v3596, %v3917
        %v3990 = vadd.f32 %v3599, %v3920
        %v3991 = vadd.f32 %v3601, %v3922
        %v3992 = vadd.f32 %v3604, %v3925
        %v3993 = vadd.f32 %v3606, %v3927
        %v3994 = vadd.f32 %v3609, %v3930
        %v3995 = vadd.f32 %v3611, %v3932
        %v3996 = vadd.f32 %v3614, %v3935
        %v3997 = vadd.f32 %v3616, %v3937
        %v3998 = vadd.f32 %v3619, %v3940
        %v3999 = vadd.f32 %v3621, %v3942
        %v4000 = vadd.f32 %v3624, %v3945
        %v4001 = vadd.f32 %v3626, %v3947
        %v4002 = vadd.f32 %v3629, %v3950
        %v4003 = vadd.f32 %v3631, %v3952
        %v4004 = vadd.f32 %v3634, %v3955
        %v4005 = vadd.f32 %v3636, %v3957
        %v4006 = vadd.f32 %v3639, %v3960
        %v4007 = vadd.f32 %v3641, %v3962
        %v4008 = vadd.f32 %v3644, %v3965
        %v4009 = vadd.f32 %v3646, %v3967
        %v4010 = vadd.f32 %v3649, %v3970
        %v4011 = vadd.f32 %v3651, %v3972
        %v4012 = vadd.f32 %v3654, %v3975
        %v4013 = vadd.f32 %v3656, %v3977
        %v4014 = vadd.f32 %v3659, %v3980
        %v4015 = vadd.f32 %v3661, %v3982
        %s4016 = scalar_lea.vmem [#allocation7], 512
        %v4017 = vld [vmem:[%s4016] sm:$0xff]
        %v4018 = vld [vmem:[%s4016 + $0x8] sm:$0xff]
        %v4019 = vld [vmem:[%s4016 + $0x10] sm:$0xff]
        %v4020 = vld [vmem:[%s4016 + $0x18] sm:$0xff]
        %v4021 = vld [vmem:[%s4016 + $0x20] sm:$0xff]
        %v4022 = vld [vmem:[%s4016 + $0x28] sm:$0xff]
        %v4023 = vld [vmem:[%s4016 + $0x30] sm:$0xff]
        %v4024 = vld [vmem:[%s4016 + $0x38] sm:$0xff]
        %v4025 = vld [vmem:[%s4016 + $0x40] sm:$0xff]
        %v4026 = vld [vmem:[%s4016 + $0x48] sm:$0xff]
        %v4027 = vld [vmem:[%s4016 + $0x50] sm:$0xff]
        %v4028 = vld [vmem:[%s4016 + $0x58] sm:$0xff]
        %v4029 = vld [vmem:[%s4016 + $0x60] sm:$0xff]
        %v4030 = vld [vmem:[%s4016 + $0x68] sm:$0xff]
        %v4031 = vld [vmem:[%s4016 + $0x70] sm:$0xff]
        %v4032 = vld [vmem:[%s4016 + $0x78] sm:$0xff]
        %v4033 = vld [vmem:[%s4016 + $0x80] sm:$0xff]
        %v4034 = vld [vmem:[%s4016 + $0x88] sm:$0xff]
        %v4035 = vld [vmem:[%s4016 + $0x90] sm:$0xff]
        %v4036 = vld [vmem:[%s4016 + $0x98] sm:$0xff]
        %v4037 = vld [vmem:[%s4016 + $0xa0] sm:$0xff]
        %v4038 = vld [vmem:[%s4016 + $0xa8] sm:$0xff]
        %v4039 = vld [vmem:[%s4016 + $0xb0] sm:$0xff]
        %v4040 = vld [vmem:[%s4016 + $0xb8] sm:$0xff]
        %v4041 = vld [vmem:[%s4016 + $0xc0] sm:$0xff]
        %v4042 = vld [vmem:[%s4016 + $0xc8] sm:$0xff]
        %v4043 = vld [vmem:[%s4016 + $0xd0] sm:$0xff]
        %v4044 = vld [vmem:[%s4016 + $0xd8] sm:$0xff]
        %v4045 = vld [vmem:[%s4016 + $0xe0] sm:$0xff]
        %v4046 = vld [vmem:[%s4016 + $0xe8] sm:$0xff]
        %v4047 = vld [vmem:[%s4016 + $0xf0] sm:$0xff]
        %v4048 = vld [vmem:[%s4016 + $0xf8] sm:$0xff]
        %4050 = vset.pattern.permute.xlu0 0
        %4051 = vperm.xlu0 %4050, %v4017
        %v4052 = vpop.permute.xlu0 %4051
        %4055 = vset.pattern.permute.xlu0 0
        %4056 = vperm.xlu0 %4055, %v4018
        %v4057 = vpop.permute.xlu0 %4056
        %4060 = vset.pattern.permute.xlu0 0
        %4061 = vperm.xlu0 %4060, %v4019
        %v4062 = vpop.permute.xlu0 %4061
        %4065 = vset.pattern.permute.xlu0 0
        %4066 = vperm.xlu0 %4065, %v4020
        %v4067 = vpop.permute.xlu0 %4066
        %4070 = vset.pattern.permute.xlu0 0
        %4071 = vperm.xlu0 %4070, %v4021
        %v4072 = vpop.permute.xlu0 %4071
        %4075 = vset.pattern.permute.xlu0 0
        %4076 = vperm.xlu0 %4075, %v4022
        %v4077 = vpop.permute.xlu0 %4076
        %4080 = vset.pattern.permute.xlu0 0
        %4081 = vperm.xlu0 %4080, %v4023
        %v4082 = vpop.permute.xlu0 %4081
        %4085 = vset.pattern.permute.xlu0 0
        %4086 = vperm.xlu0 %4085, %v4024
        %v4087 = vpop.permute.xlu0 %4086
        %4090 = vset.pattern.permute.xlu0 0
        %4091 = vperm.xlu0 %4090, %v4025
        %v4092 = vpop.permute.xlu0 %4091
        %4095 = vset.pattern.permute.xlu0 0
        %4096 = vperm.xlu0 %4095, %v4026
        %v4097 = vpop.permute.xlu0 %4096
        %4100 = vset.pattern.permute.xlu0 0
        %4101 = vperm.xlu0 %4100, %v4027
        %v4102 = vpop.permute.xlu0 %4101
        %4105 = vset.pattern.permute.xlu0 0
        %4106 = vperm.xlu0 %4105, %v4028
        %v4107 = vpop.permute.xlu0 %4106
        %4110 = vset.pattern.permute.xlu0 0
        %4111 = vperm.xlu0 %4110, %v4029
        %v4112 = vpop.permute.xlu0 %4111
        %4115 = vset.pattern.permute.xlu0 0
        %4116 = vperm.xlu0 %4115, %v4030
        %v4117 = vpop.permute.xlu0 %4116
        %4120 = vset.pattern.permute.xlu0 0
        %4121 = vperm.xlu0 %4120, %v4031
        %v4122 = vpop.permute.xlu0 %4121
        %4125 = vset.pattern.permute.xlu0 0
        %4126 = vperm.xlu0 %4125, %v4032
        %v4127 = vpop.permute.xlu0 %4126
        %4130 = vset.pattern.permute.xlu0 0
        %4131 = vperm.xlu0 %4130, %v4033
        %v4132 = vpop.permute.xlu0 %4131
        %4135 = vset.pattern.permute.xlu0 0
        %4136 = vperm.xlu0 %4135, %v4034
        %v4137 = vpop.permute.xlu0 %4136
        %4140 = vset.pattern.permute.xlu0 0
        %4141 = vperm.xlu0 %4140, %v4035
        %v4142 = vpop.permute.xlu0 %4141
        %4145 = vset.pattern.permute.xlu0 0
        %4146 = vperm.xlu0 %4145, %v4036
        %v4147 = vpop.permute.xlu0 %4146
        %4150 = vset.pattern.permute.xlu0 0
        %4151 = vperm.xlu0 %4150, %v4037
        %v4152 = vpop.permute.xlu0 %4151
        %4155 = vset.pattern.permute.xlu0 0
        %4156 = vperm.xlu0 %4155, %v4038
        %v4157 = vpop.permute.xlu0 %4156
        %4160 = vset.pattern.permute.xlu0 0
        %4161 = vperm.xlu0 %4160, %v4039
        %v4162 = vpop.permute.xlu0 %4161
        %4165 = vset.pattern.permute.xlu0 0
        %4166 = vperm.xlu0 %4165, %v4040
        %v4167 = vpop.permute.xlu0 %4166
        %4170 = vset.pattern.permute.xlu0 0
        %4171 = vperm.xlu0 %4170, %v4041
        %v4172 = vpop.permute.xlu0 %4171
        %4175 = vset.pattern.permute.xlu0 0
        %4176 = vperm.xlu0 %4175, %v4042
        %v4177 = vpop.permute.xlu0 %4176
        %4180 = vset.pattern.permute.xlu0 0
        %4181 = vperm.xlu0 %4180, %v4043
        %v4182 = vpop.permute.xlu0 %4181
        %4185 = vset.pattern.permute.xlu0 0
        %4186 = vperm.xlu0 %4185, %v4044
        %v4187 = vpop.permute.xlu0 %4186
        %4190 = vset.pattern.permute.xlu0 0
        %4191 = vperm.xlu0 %4190, %v4045
        %v4192 = vpop.permute.xlu0 %4191
        %4195 = vset.pattern.permute.xlu0 0
        %4196 = vperm.xlu0 %4195, %v4046
        %v4197 = vpop.permute.xlu0 %4196
        %4200 = vset.pattern.permute.xlu0 0
        %4201 = vperm.xlu0 %4200, %v4047
        %v4202 = vpop.permute.xlu0 %4201
        %4205 = vset.pattern.permute.xlu0 0
        %4206 = vperm.xlu0 %4205, %v4048
        %v4207 = vpop.permute.xlu0 %4206
        %v4209 = vmul.f32 %v3984, %v4052
        %v4210 = vmul.f32 %v3985, %v4057
        %v4211 = vmul.f32 %v3986, %v4062
        %v4212 = vmul.f32 %v3987, %v4067
        %v4213 = vmul.f32 %v3988, %v4072
        %v4214 = vmul.f32 %v3989, %v4077
        %v4215 = vmul.f32 %v3990, %v4082
        %v4216 = vmul.f32 %v3991, %v4087
        %v4217 = vmul.f32 %v3992, %v4092
        %v4218 = vmul.f32 %v3993, %v4097
        %v4219 = vmul.f32 %v3994, %v4102
        %v4220 = vmul.f32 %v3995, %v4107
        %v4221 = vmul.f32 %v3996, %v4112
        %v4222 = vmul.f32 %v3997, %v4117
        %v4223 = vmul.f32 %v3998, %v4122
        %v4224 = vmul.f32 %v3999, %v4127
        %v4225 = vmul.f32 %v4000, %v4132
        %v4226 = vmul.f32 %v4001, %v4137
        %v4227 = vmul.f32 %v4002, %v4142
        %v4228 = vmul.f32 %v4003, %v4147
        %v4229 = vmul.f32 %v4004, %v4152
        %v4230 = vmul.f32 %v4005, %v4157
        %v4231 = vmul.f32 %v4006, %v4162
        %v4232 = vmul.f32 %v4007, %v4167
        %v4233 = vmul.f32 %v4008, %v4172
        %v4234 = vmul.f32 %v4009, %v4177
        %v4235 = vmul.f32 %v4010, %v4182
        %v4236 = vmul.f32 %v4011, %v4187
        %v4237 = vmul.f32 %v4012, %v4192
        %v4238 = vmul.f32 %v4013, %v4197
        %v4239 = vmul.f32 %v4014, %v4202
        %v4240 = vmul.f32 %v4015, %v4207
        %v4241 = vadd.f32 %v3079, %v4209
        %v4242 = vadd.f32 %v3080, %v4210
        %v4243 = vadd.f32 %v3081, %v4211
        %v4244 = vadd.f32 %v3082, %v4212
        %v4245 = vadd.f32 %v3083, %v4213
        %v4246 = vadd.f32 %v3084, %v4214
        %v4247 = vadd.f32 %v3085, %v4215
        %v4248 = vadd.f32 %v3086, %v4216
        %v4249 = vadd.f32 %v3087, %v4217
        %v4250 = vadd.f32 %v3088, %v4218
        %v4251 = vadd.f32 %v3089, %v4219
        %v4252 = vadd.f32 %v3090, %v4220
        %v4253 = vadd.f32 %v3091, %v4221
        %v4254 = vadd.f32 %v3092, %v4222
        %v4255 = vadd.f32 %v3093, %v4223
        %v4256 = vadd.f32 %v3094, %v4224
        %v4257 = vadd.f32 %v3095, %v4225
        %v4258 = vadd.f32 %v3096, %v4226
        %v4259 = vadd.f32 %v3097, %v4227
        %v4260 = vadd.f32 %v3098, %v4228
        %v4261 = vadd.f32 %v3099, %v4229
        %v4262 = vadd.f32 %v3100, %v4230
        %v4263 = vadd.f32 %v3101, %v4231
        %v4264 = vadd.f32 %v3102, %v4232
        %v4265 = vadd.f32 %v3103, %v4233
        %v4266 = vadd.f32 %v3104, %v4234
        %v4267 = vadd.f32 %v3105, %v4235
        %v4268 = vadd.f32 %v3106, %v4236
        %v4269 = vadd.f32 %v3107, %v4237
        %v4270 = vadd.f32 %v3108, %v4238
        %v4271 = vadd.f32 %v3109, %v4239
        %v4272 = vadd.f32 %v3110, %v4240
        %v4273 = vld [vmem:[#allocation2 + $0x10] sm:$0xf]
        %v4274 = vld [vmem:[#allocation2 + $0x14] sm:$0xf]
        %v4275 = vld [vmem:[#allocation2 + $0x18] sm:$0xf]
        %v4276 = vld [vmem:[#allocation2 + $0x1c] sm:$0xf]
        %v4277 = vld [vmem:[#allocation2 + $0x20] sm:$0xf]
        %v4278 = vld [vmem:[#allocation2 + $0x24] sm:$0xf]
        %v4279 = vld [vmem:[#allocation2 + $0x28] sm:$0xf]
        %v4280 = vld [vmem:[#allocation2 + $0x2c] sm:$0xf]
        %v4281 = vld [vmem:[#allocation2 + $0x30] sm:$0xf]
        %v4282 = vld [vmem:[#allocation2 + $0x34] sm:$0xf]
        %v4283 = vld [vmem:[#allocation2 + $0x38] sm:$0xf]
        %v4284 = vld [vmem:[#allocation2 + $0x3c] sm:$0xf]
        %v4285 = vld [vmem:[#allocation2 + $0x40] sm:$0xf]
        %v4286 = vld [vmem:[#allocation2 + $0x44] sm:$0xf]
        %v4287 = vld [vmem:[#allocation2 + $0x48] sm:$0xf]
        %v4288 = vld [vmem:[#allocation2 + $0x4c] sm:$0xf]
        %v4289 = vld [vmem:[#allocation2 + $0x50] sm:$0xf]
        %v4290 = vld [vmem:[#allocation2 + $0x54] sm:$0xf]
        %v4291 = vld [vmem:[#allocation2 + $0x58] sm:$0xf]
        %v4292 = vld [vmem:[#allocation2 + $0x5c] sm:$0xf]
        %v4293 = vld [vmem:[#allocation2 + $0x60] sm:$0xf]
        %v4294 = vld [vmem:[#allocation2 + $0x64] sm:$0xf]
        %v4295 = vld [vmem:[#allocation2 + $0x68] sm:$0xf]
        %v4296 = vld [vmem:[#allocation2 + $0x6c] sm:$0xf]
        %v4297 = vld [vmem:[#allocation2 + $0x70] sm:$0xf]
        %v4298 = vld [vmem:[#allocation2 + $0x74] sm:$0xf]
        %v4299 = vld [vmem:[#allocation2 + $0x78] sm:$0xf]
        %v4300 = vld [vmem:[#allocation2 + $0x7c] sm:$0xf]
        %v4301 = vld [vmem:[#allocation2 + $0x80] sm:$0xf]
        %v4302 = vld [vmem:[#allocation2 + $0x84] sm:$0xf]
        %v4303 = vld [vmem:[#allocation2 + $0x88] sm:$0xf]
        %v4304 = vld [vmem:[#allocation2 + $0x8c] sm:$0xf]
        %s4305 = sadd.s32 %s701, 32
        %s4306 = smul.addr %s4305, 4
        %s4307 = scalar_lea.vmem [#allocation4], %s4306
        %v4308 = vld [vmem:[%s4307] sm:$0xf]
        %v4309 = vld [vmem:[%s4307 + $0x4] sm:$0xf]
        %v4310 = vld [vmem:[%s4307 + $0x8] sm:$0xf]
        %v4311 = vld [vmem:[%s4307 + $0xc] sm:$0xf]
        %v4312 = vld [vmem:[%s4307 + $0x10] sm:$0xf]
        %v4313 = vld [vmem:[%s4307 + $0x14] sm:$0xf]
        %v4314 = vld [vmem:[%s4307 + $0x18] sm:$0xf]
        %v4315 = vld [vmem:[%s4307 + $0x1c] sm:$0xf]
        %v4316 = vld [vmem:[%s4307 + $0x20] sm:$0xf]
        %v4317 = vld [vmem:[%s4307 + $0x24] sm:$0xf]
        %v4318 = vld [vmem:[%s4307 + $0x28] sm:$0xf]
        %v4319 = vld [vmem:[%s4307 + $0x2c] sm:$0xf]
        %v4320 = vld [vmem:[%s4307 + $0x30] sm:$0xf]
        %v4321 = vld [vmem:[%s4307 + $0x34] sm:$0xf]
        %v4322 = vld [vmem:[%s4307 + $0x38] sm:$0xf]
        %v4323 = vld [vmem:[%s4307 + $0x3c] sm:$0xf]
        %v4324 = vld [vmem:[#allocation2 + $0x90] sm:$0xf]
        %v4325 = vld [vmem:[#allocation2 + $0x94] sm:$0xf]
        %v4326 = vld [vmem:[#allocation2 + $0x98] sm:$0xf]
        %v4327 = vld [vmem:[#allocation2 + $0x9c] sm:$0xf]
        %v4328 = vld [vmem:[#allocation2 + $0xa0] sm:$0xf]
        %v4329 = vld [vmem:[#allocation2 + $0xa4] sm:$0xf]
        %v4330 = vld [vmem:[#allocation2 + $0xa8] sm:$0xf]
        %v4331 = vld [vmem:[#allocation2 + $0xac] sm:$0xf]
        %v4332 = vld [vmem:[#allocation2 + $0xb0] sm:$0xf]
        %v4333 = vld [vmem:[#allocation2 + $0xb4] sm:$0xf]
        %v4334 = vld [vmem:[#allocation2 + $0xb8] sm:$0xf]
        %v4335 = vld [vmem:[#allocation2 + $0xbc] sm:$0xf]
        %s4336 = sadd.s32 %s701, 128
        %s4337 = smul.addr %s4336, 4
        %s4338 = scalar_lea.vmem [#allocation4], %s4337
        %v4339 = vld [vmem:[%s4338] sm:$0xf]
        %v4340 = vld [vmem:[%s4338 + $0x4] sm:$0xf]
        %v4341 = vld [vmem:[%s4338 + $0x8] sm:$0xf]
        %v4342 = vld [vmem:[%s4338 + $0xc] sm:$0xf]
        %v4343 = vld [vmem:[%s4338 + $0x10] sm:$0xf]
        %v4344 = vld [vmem:[%s4338 + $0x14] sm:$0xf]
        %v4345 = vld [vmem:[%s4338 + $0x18] sm:$0xf]
        %v4346 = vld [vmem:[%s4338 + $0x1c] sm:$0xf]
        %v4347 = vld [vmem:[%s4338 + $0x20] sm:$0xf]
        %v4348 = vld [vmem:[%s4338 + $0x24] sm:$0xf]
        %v4349 = vld [vmem:[%s4338 + $0x28] sm:$0xf]
        %v4350 = vld [vmem:[%s4338 + $0x2c] sm:$0xf]
        %v4351 = vld [vmem:[%s4338 + $0x30] sm:$0xf]
        %v4352 = vld [vmem:[%s4338 + $0x34] sm:$0xf]
        %v4353 = vld [vmem:[%s4338 + $0x38] sm:$0xf]
        %v4354 = vld [vmem:[%s4338 + $0x3c] sm:$0xf]
        %v4387 = vunpack.c.l.b16 %v4285
        %v4388 = vunpack.c.l.b16 %v4286
        %v4389 = vunpack.c.l.b16 %v4287
        %v4390 = vunpack.c.l.b16 %v4288
        %v4391 = vunpack.c.l.b16 %v4289
        %v4392 = vunpack.c.l.b16 %v4290
        %v4393 = vunpack.c.l.b16 %v4291
        %v4394 = vunpack.c.l.b16 %v4292
        %v4395 = vunpack.c.l.b16 %v4293
        %v4396 = vunpack.c.l.b16 %v4294
        %v4397 = vunpack.c.l.b16 %v4295
        %v4398 = vunpack.c.l.b16 %v4296
        %v4399 = vunpack.c.l.b16 %v4297
        %v4400 = vunpack.c.l.b16 %v4298
        %v4401 = vunpack.c.l.b16 %v4299
        %v4402 = vunpack.c.l.b16 %v4300
        %v4403 = vunpack.c.l.b16 %v4301
        %v4404 = vunpack.c.l.b16 %v4302
        %v4405 = vunpack.c.l.b16 %v4303
        %v4406 = vunpack.c.l.b16 %v4304
        %v4407 = vunpack.c.l.b16 %v4324
        %v4408 = vunpack.c.l.b16 %v4325
        %v4409 = vunpack.c.l.b16 %v4326
        %v4410 = vunpack.c.l.b16 %v4327
        %v4411 = vunpack.c.l.b16 %v4328
        %v4412 = vunpack.c.l.b16 %v4329
        %v4413 = vunpack.c.l.b16 %v4330
        %v4414 = vunpack.c.l.b16 %v4331
        %v4415 = vunpack.c.l.b16 %v4332
        %v4416 = vunpack.c.l.b16 %v4333
        %v4417 = vunpack.c.l.b16 %v4334
        %v4418 = vunpack.c.l.b16 %v4335
        %v4419 = vpack.c.b16 %v4388, %v4387
        %v4420 = vpack.c.b16 %v4390, %v4389
        %v4421 = vpack.c.b16 %v4392, %v4391
        %v4422 = vpack.c.b16 %v4394, %v4393
        %v4423 = vpack.c.b16 %v4396, %v4395
        %v4424 = vpack.c.b16 %v4398, %v4397
        %v4425 = vpack.c.b16 %v4400, %v4399
        %v4426 = vpack.c.b16 %v4402, %v4401
        %v4427 = vpack.c.b16 %v4404, %v4403
        %v4428 = vpack.c.b16 %v4406, %v4405
        %v4429 = vpack.c.b16 %v4408, %v4407
        %v4430 = vpack.c.b16 %v4410, %v4409
        %v4431 = vpack.c.b16 %v4412, %v4411
        %v4432 = vpack.c.b16 %v4414, %v4413
        %v4433 = vpack.c.b16 %v4416, %v4415
        %v4434 = vpack.c.b16 %v4418, %v4417
        %v4467 = vunpack.c.l.b16 %v4339
        %v4468 = vunpack.c.l.b16 %v4340
        %v4469 = vunpack.c.l.b16 %v4341
        %v4470 = vunpack.c.l.b16 %v4342
        %v4471 = vunpack.c.l.b16 %v4343
        %v4472 = vunpack.c.l.b16 %v4344
        %v4473 = vunpack.c.l.b16 %v4345
        %v4474 = vunpack.c.l.b16 %v4346
        %v4475 = vunpack.c.l.b16 %v4347
        %v4476 = vunpack.c.l.b16 %v4348
        %v4477 = vunpack.c.l.b16 %v4349
        %v4478 = vunpack.c.l.b16 %v4350
        %v4479 = vunpack.c.l.b16 %v4351
        %v4480 = vunpack.c.l.b16 %v4352
        %v4481 = vunpack.c.l.b16 %v4353
        %v4482 = vunpack.c.l.b16 %v4354
        %v4483 = vpack.c.b16 %v4468, %v4467
        %v4484 = vpack.c.b16 %v4470, %v4469
        %v4485 = vpack.c.b16 %v4472, %v4471
        %v4486 = vpack.c.b16 %v4474, %v4473
        %v4487 = vpack.c.b16 %v4476, %v4475
        %v4488 = vpack.c.b16 %v4478, %v4477
        %v4489 = vpack.c.b16 %v4480, %v4479
        %v4490 = vpack.c.b16 %v4482, %v4481
        %4499 = vmatpush.bf16.msra.mxu0 %v4490
        %4500 = vmatpush.bf16.msra.mxu0 %v4489
        %4501 = vmatpush.bf16.msra.mxu0 %v4488
        %4502 = vmatpush.bf16.msra.mxu0 %v4487
        %4503 = vmatpush.bf16.msra.mxu0 %v4486
        %4504 = vmatpush.bf16.msra.mxu0 %v4485
        %4505 = vmatpush.bf16.msra.mxu0 %v4484
        %4506 = vmatpush.bf16.msra.mxu0 %v4483
        %4507 = vmatmul.bf16.gmra.mxu0 %v4419
        %v4508 = vpop.f32.mrf.mxu0
        %v4509 = vadd.f32 0.0, %v4508
        %v4510 = vpop.f32.mrf.mxu0
        %v4511 = vadd.f32 0.0, %v4510
        %4512 = vmatmul.bf16.gmra.mxu0 %v4420
        %v4513 = vpop.f32.mrf.mxu0
        %v4514 = vadd.f32 0.0, %v4513
        %v4515 = vpop.f32.mrf.mxu0
        %v4516 = vadd.f32 0.0, %v4515
        %4517 = vmatmul.bf16.gmra.mxu0 %v4421
        %v4518 = vpop.f32.mrf.mxu0
        %v4519 = vadd.f32 0.0, %v4518
        %v4520 = vpop.f32.mrf.mxu0
        %v4521 = vadd.f32 0.0, %v4520
        %4522 = vmatmul.bf16.gmra.mxu0 %v4422
        %v4523 = vpop.f32.mrf.mxu0
        %v4524 = vadd.f32 0.0, %v4523
        %v4525 = vpop.f32.mrf.mxu0
        %v4526 = vadd.f32 0.0, %v4525
        %4527 = vmatmul.bf16.gmra.mxu0 %v4423
        %v4528 = vpop.f32.mrf.mxu0
        %v4529 = vadd.f32 0.0, %v4528
        %v4530 = vpop.f32.mrf.mxu0
        %v4531 = vadd.f32 0.0, %v4530
        %4532 = vmatmul.bf16.gmra.mxu0 %v4424
        %v4533 = vpop.f32.mrf.mxu0
        %v4534 = vadd.f32 0.0, %v4533
        %v4535 = vpop.f32.mrf.mxu0
        %v4536 = vadd.f32 0.0, %v4535
        %4537 = vmatmul.bf16.gmra.mxu0 %v4425
        %v4538 = vpop.f32.mrf.mxu0
        %v4539 = vadd.f32 0.0, %v4538
        %v4540 = vpop.f32.mrf.mxu0
        %v4541 = vadd.f32 0.0, %v4540
        %4542 = vmatmul.bf16.gmra.mxu0 %v4426
        %v4543 = vpop.f32.mrf.mxu0
        %v4544 = vadd.f32 0.0, %v4543
        %v4545 = vpop.f32.mrf.mxu0
        %v4546 = vadd.f32 0.0, %v4545
        %4547 = vmatmul.bf16.gmra.mxu0 %v4427
        %v4548 = vpop.f32.mrf.mxu0
        %v4549 = vadd.f32 0.0, %v4548
        %v4550 = vpop.f32.mrf.mxu0
        %v4551 = vadd.f32 0.0, %v4550
        %4552 = vmatmul.bf16.gmra.mxu0 %v4428
        %v4553 = vpop.f32.mrf.mxu0
        %v4554 = vadd.f32 0.0, %v4553
        %v4555 = vpop.f32.mrf.mxu0
        %v4556 = vadd.f32 0.0, %v4555
        %4557 = vmatmul.bf16.gmra.mxu0 %v4429
        %v4558 = vpop.f32.mrf.mxu0
        %v4559 = vadd.f32 0.0, %v4558
        %v4560 = vpop.f32.mrf.mxu0
        %v4561 = vadd.f32 0.0, %v4560
        %4562 = vmatmul.bf16.gmra.mxu0 %v4430
        %v4563 = vpop.f32.mrf.mxu0
        %v4564 = vadd.f32 0.0, %v4563
        %v4565 = vpop.f32.mrf.mxu0
        %v4566 = vadd.f32 0.0, %v4565
        %4567 = vmatmul.bf16.gmra.mxu0 %v4431
        %v4568 = vpop.f32.mrf.mxu0
        %v4569 = vadd.f32 0.0, %v4568
        %v4570 = vpop.f32.mrf.mxu0
        %v4571 = vadd.f32 0.0, %v4570
        %4572 = vmatmul.bf16.gmra.mxu0 %v4432
        %v4573 = vpop.f32.mrf.mxu0
        %v4574 = vadd.f32 0.0, %v4573
        %v4575 = vpop.f32.mrf.mxu0
        %v4576 = vadd.f32 0.0, %v4575
        %4577 = vmatmul.bf16.gmra.mxu0 %v4433
        %v4578 = vpop.f32.mrf.mxu0
        %v4579 = vadd.f32 0.0, %v4578
        %v4580 = vpop.f32.mrf.mxu0
        %v4581 = vadd.f32 0.0, %v4580
        %4582 = vmatmul.bf16.gmra.mxu0 %v4434
        %v4583 = vpop.f32.mrf.mxu0
        %v4584 = vadd.f32 0.0, %v4583
        %v4585 = vpop.f32.mrf.mxu0
        %v4586 = vadd.f32 0.0, %v4585
        %4587 = vdwg.mxu0
        %v4600 = vunpack.c.l.b16 %v4273
        %v4601 = vunpack.c.l.b16 %v4274
        %v4602 = vunpack.c.l.b16 %v4275
        %v4603 = vunpack.c.l.b16 %v4276
        %v4604 = vunpack.c.l.b16 %v4277
        %v4605 = vunpack.c.l.b16 %v4278
        %v4606 = vunpack.c.l.b16 %v4279
        %v4607 = vunpack.c.l.b16 %v4280
        %v4608 = vunpack.c.l.b16 %v4281
        %v4609 = vunpack.c.l.b16 %v4282
        %v4610 = vunpack.c.l.b16 %v4283
        %v4611 = vunpack.c.l.b16 %v4284
        %v4612 = vpack.c.b16 %v4601, %v4600
        %v4613 = vpack.c.b16 %v4603, %v4602
        %v4614 = vpack.c.b16 %v4605, %v4604
        %v4615 = vpack.c.b16 %v4607, %v4606
        %v4616 = vpack.c.b16 %v4609, %v4608
        %v4617 = vpack.c.b16 %v4611, %v4610
        %v4640 = vunpack.c.l.b16 %v4308
        %v4641 = vunpack.c.l.b16 %v4309
        %v4642 = vunpack.c.l.b16 %v4310
        %v4643 = vunpack.c.l.b16 %v4311
        %v4644 = vunpack.c.l.b16 %v4312
        %v4645 = vunpack.c.l.b16 %v4313
        %v4646 = vunpack.c.l.b16 %v4314
        %v4647 = vunpack.c.l.b16 %v4315
        %v4648 = vunpack.c.l.b16 %v4316
        %v4649 = vunpack.c.l.b16 %v4317
        %v4650 = vunpack.c.l.b16 %v4318
        %v4651 = vunpack.c.l.b16 %v4319
        %v4652 = vunpack.c.l.b16 %v4320
        %v4653 = vunpack.c.l.b16 %v4321
        %v4654 = vunpack.c.l.b16 %v4322
        %v4655 = vunpack.c.l.b16 %v4323
        %v4656 = vpack.c.b16 %v4641, %v4640
        %v4657 = vpack.c.b16 %v4643, %v4642
        %v4658 = vpack.c.b16 %v4645, %v4644
        %v4659 = vpack.c.b16 %v4647, %v4646
        %v4660 = vpack.c.b16 %v4649, %v4648
        %v4661 = vpack.c.b16 %v4651, %v4650
        %v4662 = vpack.c.b16 %v4653, %v4652
        %v4663 = vpack.c.b16 %v4655, %v4654
        %4672 = vmatpush.bf16.msra.mxu0 %v4663
        %4673 = vmatpush.bf16.msra.mxu0 %v4662
        %4674 = vmatpush.bf16.msra.mxu0 %v4661
        %4675 = vmatpush.bf16.msra.mxu0 %v4660
        %4676 = vmatpush.bf16.msra.mxu0 %v4659
        %4677 = vmatpush.bf16.msra.mxu0 %v4658
        %4678 = vmatpush.bf16.msra.mxu0 %v4657
        %4679 = vmatpush.bf16.msra.mxu0 %v4656
        %4680 = vmatmul.bf16.gmra.mxu0 %v4612
        %v4681 = vpop.f32.mrf.mxu0
        %v4682 = vadd.f32 %v4509, %v4681
        %v4683 = vpop.f32.mrf.mxu0
        %v4684 = vadd.f32 %v4511, %v4683
        %4685 = vmatmul.bf16.gmra.mxu0 %v4613
        %v4686 = vpop.f32.mrf.mxu0
        %v4687 = vadd.f32 %v4514, %v4686
        %v4688 = vpop.f32.mrf.mxu0
        %v4689 = vadd.f32 %v4516, %v4688
        %4690 = vmatmul.bf16.gmra.mxu0 %v4614
        %v4691 = vpop.f32.mrf.mxu0
        %v4692 = vadd.f32 %v4519, %v4691
        %v4693 = vpop.f32.mrf.mxu0
        %v4694 = vadd.f32 %v4521, %v4693
        %4695 = vmatmul.bf16.gmra.mxu0 %v4615
        %v4696 = vpop.f32.mrf.mxu0
        %v4697 = vadd.f32 %v4524, %v4696
        %v4698 = vpop.f32.mrf.mxu0
        %v4699 = vadd.f32 %v4526, %v4698
        %4700 = vmatmul.bf16.gmra.mxu0 %v4616
        %v4701 = vpop.f32.mrf.mxu0
        %v4702 = vadd.f32 %v4529, %v4701
        %v4703 = vpop.f32.mrf.mxu0
        %v4704 = vadd.f32 %v4531, %v4703
        %4705 = vmatmul.bf16.gmra.mxu0 %v4617
        %v4706 = vpop.f32.mrf.mxu0
        %v4707 = vadd.f32 %v4534, %v4706
        %v4708 = vpop.f32.mrf.mxu0
        %v4709 = vadd.f32 %v4536, %v4708
        %4710 = vmatmul.bf16.gmra.mxu0 %v4419
        %v4711 = vpop.f32.mrf.mxu0
        %v4712 = vadd.f32 %v4539, %v4711
        %v4713 = vpop.f32.mrf.mxu0
        %v4714 = vadd.f32 %v4541, %v4713
        %4715 = vmatmul.bf16.gmra.mxu0 %v4420
        %v4716 = vpop.f32.mrf.mxu0
        %v4717 = vadd.f32 %v4544, %v4716
        %v4718 = vpop.f32.mrf.mxu0
        %v4719 = vadd.f32 %v4546, %v4718
        %4720 = vmatmul.bf16.gmra.mxu0 %v4421
        %v4721 = vpop.f32.mrf.mxu0
        %v4722 = vadd.f32 %v4549, %v4721
        %v4723 = vpop.f32.mrf.mxu0
        %v4724 = vadd.f32 %v4551, %v4723
        %4725 = vmatmul.bf16.gmra.mxu0 %v4422
        %v4726 = vpop.f32.mrf.mxu0
        %v4727 = vadd.f32 %v4554, %v4726
        %v4728 = vpop.f32.mrf.mxu0
        %v4729 = vadd.f32 %v4556, %v4728
        %4730 = vmatmul.bf16.gmra.mxu0 %v4423
        %v4731 = vpop.f32.mrf.mxu0
        %v4732 = vadd.f32 %v4559, %v4731
        %v4733 = vpop.f32.mrf.mxu0
        %v4734 = vadd.f32 %v4561, %v4733
        %4735 = vmatmul.bf16.gmra.mxu0 %v4424
        %v4736 = vpop.f32.mrf.mxu0
        %v4737 = vadd.f32 %v4564, %v4736
        %v4738 = vpop.f32.mrf.mxu0
        %v4739 = vadd.f32 %v4566, %v4738
        %4740 = vmatmul.bf16.gmra.mxu0 %v4425
        %v4741 = vpop.f32.mrf.mxu0
        %v4742 = vadd.f32 %v4569, %v4741
        %v4743 = vpop.f32.mrf.mxu0
        %v4744 = vadd.f32 %v4571, %v4743
        %4745 = vmatmul.bf16.gmra.mxu0 %v4426
        %v4746 = vpop.f32.mrf.mxu0
        %v4747 = vadd.f32 %v4574, %v4746
        %v4748 = vpop.f32.mrf.mxu0
        %v4749 = vadd.f32 %v4576, %v4748
        %4750 = vmatmul.bf16.gmra.mxu0 %v4427
        %v4751 = vpop.f32.mrf.mxu0
        %v4752 = vadd.f32 %v4579, %v4751
        %v4753 = vpop.f32.mrf.mxu0
        %v4754 = vadd.f32 %v4581, %v4753
        %4755 = vmatmul.bf16.gmra.mxu0 %v4428
        %v4756 = vpop.f32.mrf.mxu0
        %v4757 = vadd.f32 %v4584, %v4756
        %v4758 = vpop.f32.mrf.mxu0
        %v4759 = vadd.f32 %v4586, %v4758
        %4760 = vdwg.mxu0
        %v4761 = vld [vmem:[#allocation2 + $0xec] sm:$0xf]
        %s4762 = sadd.s32 %s701, 224
        %s4763 = smul.addr %s4762, 4
        %s4764 = scalar_lea.vmem [#allocation4], %s4763
        %v4765 = vld [vmem:[%s4764] sm:$0xf]
        %v4766 = vld [vmem:[%s4764 + $0x4] sm:$0xf]
        %v4767 = vld [vmem:[%s4764 + $0x8] sm:$0xf]
        %v4768 = vld [vmem:[%s4764 + $0xc] sm:$0xf]
        %v4769 = vld [vmem:[%s4764 + $0x10] sm:$0xf]
        %v4770 = vld [vmem:[%s4764 + $0x14] sm:$0xf]
        %v4771 = vld [vmem:[%s4764 + $0x18] sm:$0xf]
        %v4772 = vld [vmem:[%s4764 + $0x1c] sm:$0xf]
        %v4773 = vld [vmem:[%s4764 + $0x20] sm:$0xf]
        %v4774 = vld [vmem:[%s4764 + $0x24] sm:$0xf]
        %v4775 = vld [vmem:[%s4764 + $0x28] sm:$0xf]
        %v4776 = vld [vmem:[%s4764 + $0x2c] sm:$0xf]
        %v4777 = vld [vmem:[%s4764 + $0x30] sm:$0xf]
        %v4778 = vld [vmem:[%s4764 + $0x34] sm:$0xf]
        %v4779 = vld [vmem:[%s4764 + $0x38] sm:$0xf]
        %v4780 = vld [vmem:[%s4764 + $0x3c] sm:$0xf]
        %v4782 = vunpack.c.l.b16 %v4761
        %v4783 = vpack.c.b16 %v3482, %v3481
        %v4784 = vpack.c.b16 %v3484, %v3483
        %v4785 = vpack.c.b16 %v3486, %v3485
        %v4786 = vpack.c.b16 %v3488, %v3487
        %v4787 = vpack.c.b16 %v3490, %v3489
        %v4788 = vpack.c.b16 %v3492, %v3491
        %v4789 = vpack.c.b16 %v3231, %v3230
        %v4790 = vpack.c.b16 %v3233, %v3232
        %v4791 = vpack.c.b16 %v3235, %v3234
        %v4792 = vpack.c.b16 %v3237, %v3236
        %v4793 = vpack.c.b16 %v3239, %v3238
        %v4794 = vpack.c.b16 %v3241, %v3240
        %v4795 = vpack.c.b16 %v3243, %v3242
        %v4796 = vpack.c.b16 %v3245, %v3244
        %v4797 = vpack.c.b16 %v3247, %v3246
        %v4798 = vpack.c.b16 %v4782, %v3248
        %v4831 = vunpack.c.l.b16 %v4765
        %v4832 = vunpack.c.l.b16 %v4766
        %v4833 = vunpack.c.l.b16 %v4767
        %v4834 = vunpack.c.l.b16 %v4768
        %v4835 = vunpack.c.l.b16 %v4769
        %v4836 = vunpack.c.l.b16 %v4770
        %v4837 = vunpack.c.l.b16 %v4771
        %v4838 = vunpack.c.l.b16 %v4772
        %v4839 = vunpack.c.l.b16 %v4773
        %v4840 = vunpack.c.l.b16 %v4774
        %v4841 = vunpack.c.l.b16 %v4775
        %v4842 = vunpack.c.l.b16 %v4776
        %v4843 = vunpack.c.l.b16 %v4777
        %v4844 = vunpack.c.l.b16 %v4778
        %v4845 = vunpack.c.l.b16 %v4779
        %v4846 = vunpack.c.l.b16 %v4780
        %v4847 = vpack.c.b16 %v4832, %v4831
        %v4848 = vpack.c.b16 %v4834, %v4833
        %v4849 = vpack.c.b16 %v4836, %v4835
        %v4850 = vpack.c.b16 %v4838, %v4837
        %v4851 = vpack.c.b16 %v4840, %v4839
        %v4852 = vpack.c.b16 %v4842, %v4841
        %v4853 = vpack.c.b16 %v4844, %v4843
        %v4854 = vpack.c.b16 %v4846, %v4845
        %4863 = vmatpush.bf16.msra.mxu0 %v4854
        %4864 = vmatpush.bf16.msra.mxu0 %v4853
        %4865 = vmatpush.bf16.msra.mxu0 %v4852
        %4866 = vmatpush.bf16.msra.mxu0 %v4851
        %4867 = vmatpush.bf16.msra.mxu0 %v4850
        %4868 = vmatpush.bf16.msra.mxu0 %v4849
        %4869 = vmatpush.bf16.msra.mxu0 %v4848
        %4870 = vmatpush.bf16.msra.mxu0 %v4847
        %4871 = vmatmul.bf16.gmra.mxu0 %v4783
        %v4872 = vpop.f32.mrf.mxu0
        %v4873 = vadd.f32 0.0, %v4872
        %v4874 = vpop.f32.mrf.mxu0
        %v4875 = vadd.f32 0.0, %v4874
        %4876 = vmatmul.bf16.gmra.mxu0 %v4784
        %v4877 = vpop.f32.mrf.mxu0
        %v4878 = vadd.f32 0.0, %v4877
        %v4879 = vpop.f32.mrf.mxu0
        %v4880 = vadd.f32 0.0, %v4879
        %4881 = vmatmul.bf16.gmra.mxu0 %v4785
        %v4882 = vpop.f32.mrf.mxu0
        %v4883 = vadd.f32 0.0, %v4882
        %v4884 = vpop.f32.mrf.mxu0
        %v4885 = vadd.f32 0.0, %v4884
        %4886 = vmatmul.bf16.gmra.mxu0 %v4786
        %v4887 = vpop.f32.mrf.mxu0
        %v4888 = vadd.f32 0.0, %v4887
        %v4889 = vpop.f32.mrf.mxu0
        %v4890 = vadd.f32 0.0, %v4889
        %4891 = vmatmul.bf16.gmra.mxu0 %v4787
        %v4892 = vpop.f32.mrf.mxu0
        %v4893 = vadd.f32 0.0, %v4892
        %v4894 = vpop.f32.mrf.mxu0
        %v4895 = vadd.f32 0.0, %v4894
        %4896 = vmatmul.bf16.gmra.mxu0 %v4788
        %v4897 = vpop.f32.mrf.mxu0
        %v4898 = vadd.f32 0.0, %v4897
        %v4899 = vpop.f32.mrf.mxu0
        %v4900 = vadd.f32 0.0, %v4899
        %4901 = vmatmul.bf16.gmra.mxu0 %v4789
        %v4902 = vpop.f32.mrf.mxu0
        %v4903 = vadd.f32 0.0, %v4902
        %v4904 = vpop.f32.mrf.mxu0
        %v4905 = vadd.f32 0.0, %v4904
        %4906 = vmatmul.bf16.gmra.mxu0 %v4790
        %v4907 = vpop.f32.mrf.mxu0
        %v4908 = vadd.f32 0.0, %v4907
        %v4909 = vpop.f32.mrf.mxu0
        %v4910 = vadd.f32 0.0, %v4909
        %4911 = vmatmul.bf16.gmra.mxu0 %v4791
        %v4912 = vpop.f32.mrf.mxu0
        %v4913 = vadd.f32 0.0, %v4912
        %v4914 = vpop.f32.mrf.mxu0
        %v4915 = vadd.f32 0.0, %v4914
        %4916 = vmatmul.bf16.gmra.mxu0 %v4792
        %v4917 = vpop.f32.mrf.mxu0
        %v4918 = vadd.f32 0.0, %v4917
        %v4919 = vpop.f32.mrf.mxu0
        %v4920 = vadd.f32 0.0, %v4919
        %4921 = vmatmul.bf16.gmra.mxu0 %v4793
        %v4922 = vpop.f32.mrf.mxu0
        %v4923 = vadd.f32 0.0, %v4922
        %v4924 = vpop.f32.mrf.mxu0
        %v4925 = vadd.f32 0.0, %v4924
        %4926 = vmatmul.bf16.gmra.mxu0 %v4794
        %v4927 = vpop.f32.mrf.mxu0
        %v4928 = vadd.f32 0.0, %v4927
        %v4929 = vpop.f32.mrf.mxu0
        %v4930 = vadd.f32 0.0, %v4929
        %4931 = vmatmul.bf16.gmra.mxu0 %v4795
        %v4932 = vpop.f32.mrf.mxu0
        %v4933 = vadd.f32 0.0, %v4932
        %v4934 = vpop.f32.mrf.mxu0
        %v4935 = vadd.f32 0.0, %v4934
        %4936 = vmatmul.bf16.gmra.mxu0 %v4796
        %v4937 = vpop.f32.mrf.mxu0
        %v4938 = vadd.f32 0.0, %v4937
        %v4939 = vpop.f32.mrf.mxu0
        %v4940 = vadd.f32 0.0, %v4939
        %4941 = vmatmul.bf16.gmra.mxu0 %v4797
        %v4942 = vpop.f32.mrf.mxu0
        %v4943 = vadd.f32 0.0, %v4942
        %v4944 = vpop.f32.mrf.mxu0
        %v4945 = vadd.f32 0.0, %v4944
        %4946 = vmatmul.bf16.gmra.mxu0 %v4798
        %v4947 = vpop.f32.mrf.mxu0
        %v4948 = vadd.f32 0.0, %v4947
        %v4949 = vpop.f32.mrf.mxu0
        %v4950 = vadd.f32 0.0, %v4949
        %4951 = vdwg.mxu0
        %v4952 = vadd.f32 %v4682, %v4873
        %v4953 = vadd.f32 %v4684, %v4875
        %v4954 = vadd.f32 %v4687, %v4878
        %v4955 = vadd.f32 %v4689, %v4880
        %v4956 = vadd.f32 %v4692, %v4883
        %v4957 = vadd.f32 %v4694, %v4885
        %v4958 = vadd.f32 %v4697, %v4888
        %v4959 = vadd.f32 %v4699, %v4890
        %v4960 = vadd.f32 %v4702, %v4893
        %v4961 = vadd.f32 %v4704, %v4895
        %v4962 = vadd.f32 %v4707, %v4898
        %v4963 = vadd.f32 %v4709, %v4900
        %v4964 = vadd.f32 %v4712, %v4903
        %v4965 = vadd.f32 %v4714, %v4905
        %v4966 = vadd.f32 %v4717, %v4908
        %v4967 = vadd.f32 %v4719, %v4910
        %v4968 = vadd.f32 %v4722, %v4913
        %v4969 = vadd.f32 %v4724, %v4915
        %v4970 = vadd.f32 %v4727, %v4918
        %v4971 = vadd.f32 %v4729, %v4920
        %v4972 = vadd.f32 %v4732, %v4923
        %v4973 = vadd.f32 %v4734, %v4925
        %v4974 = vadd.f32 %v4737, %v4928
        %v4975 = vadd.f32 %v4739, %v4930
        %v4976 = vadd.f32 %v4742, %v4933
        %v4977 = vadd.f32 %v4744, %v4935
        %v4978 = vadd.f32 %v4747, %v4938
        %v4979 = vadd.f32 %v4749, %v4940
        %v4980 = vadd.f32 %v4752, %v4943
        %v4981 = vadd.f32 %v4754, %v4945
        %v4982 = vadd.f32 %v4757, %v4948
        %v4983 = vadd.f32 %v4759, %v4950
        %v4984 = vld [vmem:[#allocation2 + $0x11c] sm:$0xf]
        %s4985 = sadd.s32 %s701, 384
        %s4986 = smul.addr %s4985, 4
        %s4987 = scalar_lea.vmem [#allocation4], %s4986
        %v4988 = vld [vmem:[%s4987] sm:$0xf]
        %v4989 = vld [vmem:[%s4987 + $0x4] sm:$0xf]
        %v4990 = vld [vmem:[%s4987 + $0x8] sm:$0xf]
        %v4991 = vld [vmem:[%s4987 + $0xc] sm:$0xf]
        %v4992 = vld [vmem:[%s4987 + $0x10] sm:$0xf]
        %v4993 = vld [vmem:[%s4987 + $0x14] sm:$0xf]
        %v4994 = vld [vmem:[%s4987 + $0x18] sm:$0xf]
        %v4995 = vld [vmem:[%s4987 + $0x1c] sm:$0xf]
        %v4996 = vld [vmem:[%s4987 + $0x20] sm:$0xf]
        %v4997 = vld [vmem:[%s4987 + $0x24] sm:$0xf]
        %v4998 = vld [vmem:[%s4987 + $0x28] sm:$0xf]
        %v4999 = vld [vmem:[%s4987 + $0x2c] sm:$0xf]
        %v5000 = vld [vmem:[%s4987 + $0x30] sm:$0xf]
        %v5001 = vld [vmem:[%s4987 + $0x34] sm:$0xf]
        %v5002 = vld [vmem:[%s4987 + $0x38] sm:$0xf]
        %v5003 = vld [vmem:[%s4987 + $0x3c] sm:$0xf]
        %v5005 = vunpack.c.l.b16 %v4984
        %v5006 = vpack.c.b16 %v3249, %v3248
        %v5007 = vpack.c.b16 %v3251, %v3250
        %v5008 = vpack.c.b16 %v3253, %v3252
        %v5009 = vpack.c.b16 %v3255, %v3254
        %v5010 = vpack.c.b16 %v3257, %v3256
        %v5011 = vpack.c.b16 %v3259, %v3258
        %v5012 = vpack.c.b16 %v5005, %v3260
        %v5036 = vunpack.c.l.b16 %v4988
        %v5037 = vunpack.c.l.b16 %v4989
        %v5038 = vunpack.c.l.b16 %v4990
        %v5039 = vunpack.c.l.b16 %v4991
        %v5040 = vunpack.c.l.b16 %v4992
        %v5041 = vunpack.c.l.b16 %v4993
        %v5042 = vunpack.c.l.b16 %v4994
        %v5043 = vunpack.c.l.b16 %v4995
        %v5044 = vunpack.c.l.b16 %v4996
        %v5045 = vunpack.c.l.b16 %v4997
        %v5046 = vunpack.c.l.b16 %v4998
        %v5047 = vunpack.c.l.b16 %v4999
        %v5048 = vunpack.c.l.b16 %v5000
        %v5049 = vunpack.c.l.b16 %v5001
        %v5050 = vunpack.c.l.b16 %v5002
        %v5051 = vunpack.c.l.b16 %v5003
        %v5052 = vpack.c.b16 %v5037, %v5036
        %v5053 = vpack.c.b16 %v5039, %v5038
        %v5054 = vpack.c.b16 %v5041, %v5040
        %v5055 = vpack.c.b16 %v5043, %v5042
        %v5056 = vpack.c.b16 %v5045, %v5044
        %v5057 = vpack.c.b16 %v5047, %v5046
        %v5058 = vpack.c.b16 %v5049, %v5048
        %v5059 = vpack.c.b16 %v5051, %v5050
        %5068 = vmatpush.bf16.msra.mxu0 %v5059
        %5069 = vmatpush.bf16.msra.mxu0 %v5058
        %5070 = vmatpush.bf16.msra.mxu0 %v5057
        %5071 = vmatpush.bf16.msra.mxu0 %v5056
        %5072 = vmatpush.bf16.msra.mxu0 %v5055
        %5073 = vmatpush.bf16.msra.mxu0 %v5054
        %5074 = vmatpush.bf16.msra.mxu0 %v5053
        %5075 = vmatpush.bf16.msra.mxu0 %v5052
        %5076 = vmatmul.bf16.gmra.mxu0 %v4789
        %v5077 = vpop.f32.mrf.mxu0
        %v5078 = vadd.f32 0.0, %v5077
        %v5079 = vpop.f32.mrf.mxu0
        %v5080 = vadd.f32 0.0, %v5079
        %5081 = vmatmul.bf16.gmra.mxu0 %v4790
        %v5082 = vpop.f32.mrf.mxu0
        %v5083 = vadd.f32 0.0, %v5082
        %v5084 = vpop.f32.mrf.mxu0
        %v5085 = vadd.f32 0.0, %v5084
        %5086 = vmatmul.bf16.gmra.mxu0 %v4791
        %v5087 = vpop.f32.mrf.mxu0
        %v5088 = vadd.f32 0.0, %v5087
        %v5089 = vpop.f32.mrf.mxu0
        %v5090 = vadd.f32 0.0, %v5089
        %5091 = vmatmul.bf16.gmra.mxu0 %v4792
        %v5092 = vpop.f32.mrf.mxu0
        %v5093 = vadd.f32 0.0, %v5092
        %v5094 = vpop.f32.mrf.mxu0
        %v5095 = vadd.f32 0.0, %v5094
        %5096 = vmatmul.bf16.gmra.mxu0 %v4793
        %v5097 = vpop.f32.mrf.mxu0
        %v5098 = vadd.f32 0.0, %v5097
        %v5099 = vpop.f32.mrf.mxu0
        %v5100 = vadd.f32 0.0, %v5099
        %5101 = vmatmul.bf16.gmra.mxu0 %v4794
        %v5102 = vpop.f32.mrf.mxu0
        %v5103 = vadd.f32 0.0, %v5102
        %v5104 = vpop.f32.mrf.mxu0
        %v5105 = vadd.f32 0.0, %v5104
        %5106 = vmatmul.bf16.gmra.mxu0 %v4795
        %v5107 = vpop.f32.mrf.mxu0
        %v5108 = vadd.f32 0.0, %v5107
        %v5109 = vpop.f32.mrf.mxu0
        %v5110 = vadd.f32 0.0, %v5109
        %5111 = vmatmul.bf16.gmra.mxu0 %v4796
        %v5112 = vpop.f32.mrf.mxu0
        %v5113 = vadd.f32 0.0, %v5112
        %v5114 = vpop.f32.mrf.mxu0
        %v5115 = vadd.f32 0.0, %v5114
        %5116 = vmatmul.bf16.gmra.mxu0 %v4797
        %v5117 = vpop.f32.mrf.mxu0
        %v5118 = vadd.f32 0.0, %v5117
        %v5119 = vpop.f32.mrf.mxu0
        %v5120 = vadd.f32 0.0, %v5119
        %5121 = vmatmul.bf16.gmra.mxu0 %v5006
        %v5122 = vpop.f32.mrf.mxu0
        %v5123 = vadd.f32 0.0, %v5122
        %v5124 = vpop.f32.mrf.mxu0
        %v5125 = vadd.f32 0.0, %v5124
        %5126 = vmatmul.bf16.gmra.mxu0 %v5007
        %v5127 = vpop.f32.mrf.mxu0
        %v5128 = vadd.f32 0.0, %v5127
        %v5129 = vpop.f32.mrf.mxu0
        %v5130 = vadd.f32 0.0, %v5129
        %5131 = vmatmul.bf16.gmra.mxu0 %v5008
        %v5132 = vpop.f32.mrf.mxu0
        %v5133 = vadd.f32 0.0, %v5132
        %v5134 = vpop.f32.mrf.mxu0
        %v5135 = vadd.f32 0.0, %v5134
        %5136 = vmatmul.bf16.gmra.mxu0 %v5009
        %v5137 = vpop.f32.mrf.mxu0
        %v5138 = vadd.f32 0.0, %v5137
        %v5139 = vpop.f32.mrf.mxu0
        %v5140 = vadd.f32 0.0, %v5139
        %5141 = vmatmul.bf16.gmra.mxu0 %v5010
        %v5142 = vpop.f32.mrf.mxu0
        %v5143 = vadd.f32 0.0, %v5142
        %v5144 = vpop.f32.mrf.mxu0
        %v5145 = vadd.f32 0.0, %v5144
        %5146 = vmatmul.bf16.gmra.mxu0 %v5011
        %v5147 = vpop.f32.mrf.mxu0
        %v5148 = vadd.f32 0.0, %v5147
        %v5149 = vpop.f32.mrf.mxu0
        %v5150 = vadd.f32 0.0, %v5149
        %5151 = vmatmul.bf16.gmra.mxu0 %v5012
        %v5152 = vpop.f32.mrf.mxu0
        %v5153 = vadd.f32 0.0, %v5152
        %v5154 = vpop.f32.mrf.mxu0
        %v5155 = vadd.f32 0.0, %v5154
        %5156 = vdwg.mxu0
        %v5157 = vadd.f32 %v4952, %v5078
        %v5158 = vadd.f32 %v4953, %v5080
        %v5159 = vadd.f32 %v4954, %v5083
        %v5160 = vadd.f32 %v4955, %v5085
        %v5161 = vadd.f32 %v4956, %v5088
        %v5162 = vadd.f32 %v4957, %v5090
        %v5163 = vadd.f32 %v4958, %v5093
        %v5164 = vadd.f32 %v4959, %v5095
        %v5165 = vadd.f32 %v4960, %v5098
        %v5166 = vadd.f32 %v4961, %v5100
        %v5167 = vadd.f32 %v4962, %v5103
        %v5168 = vadd.f32 %v4963, %v5105
        %v5169 = vadd.f32 %v4964, %v5108
        %v5170 = vadd.f32 %v4965, %v5110
        %v5171 = vadd.f32 %v4966, %v5113
        %v5172 = vadd.f32 %v4967, %v5115
        %v5173 = vadd.f32 %v4968, %v5118
        %v5174 = vadd.f32 %v4969, %v5120
        %v5175 = vadd.f32 %v4970, %v5123
        %v5176 = vadd.f32 %v4971, %v5125
        %v5177 = vadd.f32 %v4972, %v5128
        %v5178 = vadd.f32 %v4973, %v5130
        %v5179 = vadd.f32 %v4974, %v5133
        %v5180 = vadd.f32 %v4975, %v5135
        %v5181 = vadd.f32 %v4976, %v5138
        %v5182 = vadd.f32 %v4977, %v5140
        %v5183 = vadd.f32 %v4978, %v5143
        %v5184 = vadd.f32 %v4979, %v5145
        %v5185 = vadd.f32 %v4980, %v5148
        %v5186 = vadd.f32 %v4981, %v5150
        %v5187 = vadd.f32 %v4982, %v5153
        %v5188 = vadd.f32 %v4983, %v5155
        %v5189 = vld [vmem:[#allocation2 + $0x14c] sm:$0xf]
        %s5190 = sadd.s32 %s701, 544
        %s5191 = smul.addr %s5190, 4
        %s5192 = scalar_lea.vmem [#allocation4], %s5191
        %v5193 = vld [vmem:[%s5192] sm:$0xf]
        %v5194 = vld [vmem:[%s5192 + $0x4] sm:$0xf]
        %v5195 = vld [vmem:[%s5192 + $0x8] sm:$0xf]
        %v5196 = vld [vmem:[%s5192 + $0xc] sm:$0xf]
        %v5197 = vld [vmem:[%s5192 + $0x10] sm:$0xf]
        %v5198 = vld [vmem:[%s5192 + $0x14] sm:$0xf]
        %v5199 = vld [vmem:[%s5192 + $0x18] sm:$0xf]
        %v5200 = vld [vmem:[%s5192 + $0x1c] sm:$0xf]
        %v5201 = vld [vmem:[%s5192 + $0x20] sm:$0xf]
        %v5202 = vld [vmem:[%s5192 + $0x24] sm:$0xf]
        %v5203 = vld [vmem:[%s5192 + $0x28] sm:$0xf]
        %v5204 = vld [vmem:[%s5192 + $0x2c] sm:$0xf]
        %v5205 = vld [vmem:[%s5192 + $0x30] sm:$0xf]
        %v5206 = vld [vmem:[%s5192 + $0x34] sm:$0xf]
        %v5207 = vld [vmem:[%s5192 + $0x38] sm:$0xf]
        %v5208 = vld [vmem:[%s5192 + $0x3c] sm:$0xf]
        %v5210 = vunpack.c.l.b16 %v5189
        %v5211 = vpack.c.b16 %v3750, %v3749
        %v5212 = vpack.c.b16 %v3752, %v3751
        %v5213 = vpack.c.b16 %v3754, %v3753
        %v5214 = vpack.c.b16 %v3756, %v3755
        %v5215 = vpack.c.b16 %v3758, %v3757
        %v5216 = vpack.c.b16 %v3760, %v3759
        %v5217 = vpack.c.b16 %v3762, %v3761
        %v5218 = vpack.c.b16 %v3764, %v3763
        %v5219 = vpack.c.b16 %v3766, %v3765
        %v5220 = vpack.c.b16 %v3768, %v3767
        %v5221 = vpack.c.b16 %v3770, %v3769
        %v5222 = vpack.c.b16 %v3772, %v3771
        %v5223 = vpack.c.b16 %v3774, %v3773
        %v5224 = vpack.c.b16 %v3776, %v3775
        %v5225 = vpack.c.b16 %v3778, %v3777
        %v5226 = vpack.c.b16 %v5210, %v3779
        %v5259 = vunpack.c.l.b16 %v5193
        %v5260 = vunpack.c.l.b16 %v5194
        %v5261 = vunpack.c.l.b16 %v5195
        %v5262 = vunpack.c.l.b16 %v5196
        %v5263 = vunpack.c.l.b16 %v5197
        %v5264 = vunpack.c.l.b16 %v5198
        %v5265 = vunpack.c.l.b16 %v5199
        %v5266 = vunpack.c.l.b16 %v5200
        %v5267 = vunpack.c.l.b16 %v5201
        %v5268 = vunpack.c.l.b16 %v5202
        %v5269 = vunpack.c.l.b16 %v5203
        %v5270 = vunpack.c.l.b16 %v5204
        %v5271 = vunpack.c.l.b16 %v5205
        %v5272 = vunpack.c.l.b16 %v5206
        %v5273 = vunpack.c.l.b16 %v5207
        %v5274 = vunpack.c.l.b16 %v5208
        %v5275 = vpack.c.b16 %v5260, %v5259
        %v5276 = vpack.c.b16 %v5262, %v5261
        %v5277 = vpack.c.b16 %v5264, %v5263
        %v5278 = vpack.c.b16 %v5266, %v5265
        %v5279 = vpack.c.b16 %v5268, %v5267
        %v5280 = vpack.c.b16 %v5270, %v5269
        %v5281 = vpack.c.b16 %v5272, %v5271
        %v5282 = vpack.c.b16 %v5274, %v5273
        %5291 = vmatpush.bf16.msra.mxu0 %v5282
        %5292 = vmatpush.bf16.msra.mxu0 %v5281
        %5293 = vmatpush.bf16.msra.mxu0 %v5280
        %5294 = vmatpush.bf16.msra.mxu0 %v5279
        %5295 = vmatpush.bf16.msra.mxu0 %v5278
        %5296 = vmatpush.bf16.msra.mxu0 %v5277
        %5297 = vmatpush.bf16.msra.mxu0 %v5276
        %5298 = vmatpush.bf16.msra.mxu0 %v5275
        %5299 = vmatmul.bf16.gmra.mxu0 %v5211
        %v5300 = vpop.f32.mrf.mxu0
        %v5301 = vadd.f32 0.0, %v5300
        %v5302 = vpop.f32.mrf.mxu0
        %v5303 = vadd.f32 0.0, %v5302
        %5304 = vmatmul.bf16.gmra.mxu0 %v5212
        %v5305 = vpop.f32.mrf.mxu0
        %v5306 = vadd.f32 0.0, %v5305
        %v5307 = vpop.f32.mrf.mxu0
        %v5308 = vadd.f32 0.0, %v5307
        %5309 = vmatmul.bf16.gmra.mxu0 %v5213
        %v5310 = vpop.f32.mrf.mxu0
        %v5311 = vadd.f32 0.0, %v5310
        %v5312 = vpop.f32.mrf.mxu0
        %v5313 = vadd.f32 0.0, %v5312
        %5314 = vmatmul.bf16.gmra.mxu0 %v5214
        %v5315 = vpop.f32.mrf.mxu0
        %v5316 = vadd.f32 0.0, %v5315
        %v5317 = vpop.f32.mrf.mxu0
        %v5318 = vadd.f32 0.0, %v5317
        %5319 = vmatmul.bf16.gmra.mxu0 %v5215
        %v5320 = vpop.f32.mrf.mxu0
        %v5321 = vadd.f32 0.0, %v5320
        %v5322 = vpop.f32.mrf.mxu0
        %v5323 = vadd.f32 0.0, %v5322
        %5324 = vmatmul.bf16.gmra.mxu0 %v5216
        %v5325 = vpop.f32.mrf.mxu0
        %v5326 = vadd.f32 0.0, %v5325
        %v5327 = vpop.f32.mrf.mxu0
        %v5328 = vadd.f32 0.0, %v5327
        %5329 = vmatmul.bf16.gmra.mxu0 %v5217
        %v5330 = vpop.f32.mrf.mxu0
        %v5331 = vadd.f32 0.0, %v5330
        %v5332 = vpop.f32.mrf.mxu0
        %v5333 = vadd.f32 0.0, %v5332
        %5334 = vmatmul.bf16.gmra.mxu0 %v5218
        %v5335 = vpop.f32.mrf.mxu0
        %v5336 = vadd.f32 0.0, %v5335
        %v5337 = vpop.f32.mrf.mxu0
        %v5338 = vadd.f32 0.0, %v5337
        %5339 = vmatmul.bf16.gmra.mxu0 %v5219
        %v5340 = vpop.f32.mrf.mxu0
        %v5341 = vadd.f32 0.0, %v5340
        %v5342 = vpop.f32.mrf.mxu0
        %v5343 = vadd.f32 0.0, %v5342
        %5344 = vmatmul.bf16.gmra.mxu0 %v5220
        %v5345 = vpop.f32.mrf.mxu0
        %v5346 = vadd.f32 0.0, %v5345
        %v5347 = vpop.f32.mrf.mxu0
        %v5348 = vadd.f32 0.0, %v5347
        %5349 = vmatmul.bf16.gmra.mxu0 %v5221
        %v5350 = vpop.f32.mrf.mxu0
        %v5351 = vadd.f32 0.0, %v5350
        %v5352 = vpop.f32.mrf.mxu0
        %v5353 = vadd.f32 0.0, %v5352
        %5354 = vmatmul.bf16.gmra.mxu0 %v5222
        %v5355 = vpop.f32.mrf.mxu0
        %v5356 = vadd.f32 0.0, %v5355
        %v5357 = vpop.f32.mrf.mxu0
        %v5358 = vadd.f32 0.0, %v5357
        %5359 = vmatmul.bf16.gmra.mxu0 %v5223
        %v5360 = vpop.f32.mrf.mxu0
        %v5361 = vadd.f32 0.0, %v5360
        %v5362 = vpop.f32.mrf.mxu0
        %v5363 = vadd.f32 0.0, %v5362
        %5364 = vmatmul.bf16.gmra.mxu0 %v5224
        %v5365 = vpop.f32.mrf.mxu0
        %v5366 = vadd.f32 0.0, %v5365
        %v5367 = vpop.f32.mrf.mxu0
        %v5368 = vadd.f32 0.0, %v5367
        %5369 = vmatmul.bf16.gmra.mxu0 %v5225
        %v5370 = vpop.f32.mrf.mxu0
        %v5371 = vadd.f32 0.0, %v5370
        %v5372 = vpop.f32.mrf.mxu0
        %v5373 = vadd.f32 0.0, %v5372
        %5374 = vmatmul.bf16.gmra.mxu0 %v5226
        %v5375 = vpop.f32.mrf.mxu0
        %v5376 = vadd.f32 0.0, %v5375
        %v5377 = vpop.f32.mrf.mxu0
        %v5378 = vadd.f32 0.0, %v5377
        %5379 = vdwg.mxu0
        %v5380 = vadd.f32 %v5157, %v5301
        %v5381 = vadd.f32 %v5158, %v5303
        %v5382 = vadd.f32 %v5159, %v5306
        %v5383 = vadd.f32 %v5160, %v5308
        %v5384 = vadd.f32 %v5161, %v5311
        %v5385 = vadd.f32 %v5162, %v5313
        %v5386 = vadd.f32 %v5163, %v5316
        %v5387 = vadd.f32 %v5164, %v5318
        %v5388 = vadd.f32 %v5165, %v5321
        %v5389 = vadd.f32 %v5166, %v5323
        %v5390 = vadd.f32 %v5167, %v5326
        %v5391 = vadd.f32 %v5168, %v5328
        %v5392 = vadd.f32 %v5169, %v5331
        %v5393 = vadd.f32 %v5170, %v5333
        %v5394 = vadd.f32 %v5171, %v5336
        %v5395 = vadd.f32 %v5172, %v5338
        %v5396 = vadd.f32 %v5173, %v5341
        %v5397 = vadd.f32 %v5174, %v5343
        %v5398 = vadd.f32 %v5175, %v5346
        %v5399 = vadd.f32 %v5176, %v5348
        %v5400 = vadd.f32 %v5177, %v5351
        %v5401 = vadd.f32 %v5178, %v5353
        %v5402 = vadd.f32 %v5179, %v5356
        %v5403 = vadd.f32 %v5180, %v5358
        %v5404 = vadd.f32 %v5181, %v5361
        %v5405 = vadd.f32 %v5182, %v5363
        %v5406 = vadd.f32 %v5183, %v5366
        %v5407 = vadd.f32 %v5184, %v5368
        %v5408 = vadd.f32 %v5185, %v5371
        %v5409 = vadd.f32 %v5186, %v5373
        %v5410 = vadd.f32 %v5187, %v5376
        %v5411 = vadd.f32 %v5188, %v5378
        %v5412 = vld [vmem:[#allocation2 + $0x100] sm:$0xf]
        %v5413 = vld [vmem:[#allocation2 + $0x104] sm:$0xf]
        %v5414 = vld [vmem:[#allocation2 + $0x108] sm:$0xf]
        %v5415 = vld [vmem:[#allocation2 + $0x10c] sm:$0xf]
        %v5416 = vld [vmem:[#allocation2 + $0x110] sm:$0xf]
        %v5417 = vld [vmem:[#allocation2 + $0x114] sm:$0xf]
        %v5418 = vld [vmem:[#allocation2 + $0x118] sm:$0xf]
        %v5419 = vld [vmem:[#allocation2 + $0x11c] sm:$0xf]
        %v5420 = vld [vmem:[#allocation2 + $0x120] sm:$0xf]
        %v5421 = vld [vmem:[#allocation2 + $0x124] sm:$0xf]
        %v5422 = vld [vmem:[#allocation2 + $0x128] sm:$0xf]
        %v5423 = vld [vmem:[#allocation2 + $0x12c] sm:$0xf]
        %v5424 = vld [vmem:[#allocation2 + $0x130] sm:$0xf]
        %v5425 = vld [vmem:[#allocation2 + $0x134] sm:$0xf]
        %v5426 = vld [vmem:[#allocation2 + $0x138] sm:$0xf]
        %v5427 = vld [vmem:[#allocation2 + $0x13c] sm:$0xf]
        %v5428 = vld [vmem:[#allocation2 + $0x140] sm:$0xf]
        %v5429 = vld [vmem:[#allocation2 + $0x144] sm:$0xf]
        %v5430 = vld [vmem:[#allocation2 + $0x148] sm:$0xf]
        %v5431 = vld [vmem:[#allocation2 + $0x14c] sm:$0xf]
        %v5432 = vld [vmem:[#allocation2 + $0x150] sm:$0xf]
        %v5433 = vld [vmem:[#allocation2 + $0x154] sm:$0xf]
        %v5434 = vld [vmem:[#allocation2 + $0x158] sm:$0xf]
        %v5435 = vld [vmem:[#allocation2 + $0x15c] sm:$0xf]
        %v5436 = vld [vmem:[#allocation2 + $0x160] sm:$0xf]
        %v5437 = vld [vmem:[#allocation2 + $0x164] sm:$0xf]
        %v5438 = vld [vmem:[#allocation2 + $0x168] sm:$0xf]
        %v5439 = vld [vmem:[#allocation2 + $0x16c] sm:$0xf]
        %v5440 = vld [vmem:[#allocation2 + $0x170] sm:$0xf]
        %v5441 = vld [vmem:[#allocation2 + $0x174] sm:$0xf]
        %v5442 = vld [vmem:[#allocation2 + $0x178] sm:$0xf]
        %v5443 = vld [vmem:[#allocation2 + $0x17c] sm:$0xf]
        %s5444 = sadd.s32 %s701, 640
        %s5445 = smul.addr %s5444, 4
        %s5446 = scalar_lea.vmem [#allocation4], %s5445
        %v5447 = vld [vmem:[%s5446] sm:$0xf]
        %v5448 = vld [vmem:[%s5446 + $0x4] sm:$0xf]
        %v5449 = vld [vmem:[%s5446 + $0x8] sm:$0xf]
        %v5450 = vld [vmem:[%s5446 + $0xc] sm:$0xf]
        %v5451 = vld [vmem:[%s5446 + $0x10] sm:$0xf]
        %v5452 = vld [vmem:[%s5446 + $0x14] sm:$0xf]
        %v5453 = vld [vmem:[%s5446 + $0x18] sm:$0xf]
        %v5454 = vld [vmem:[%s5446 + $0x1c] sm:$0xf]
        %v5455 = vld [vmem:[%s5446 + $0x20] sm:$0xf]
        %v5456 = vld [vmem:[%s5446 + $0x24] sm:$0xf]
        %v5457 = vld [vmem:[%s5446 + $0x28] sm:$0xf]
        %v5458 = vld [vmem:[%s5446 + $0x2c] sm:$0xf]
        %v5459 = vld [vmem:[%s5446 + $0x30] sm:$0xf]
        %v5460 = vld [vmem:[%s5446 + $0x34] sm:$0xf]
        %v5461 = vld [vmem:[%s5446 + $0x38] sm:$0xf]
        %v5462 = vld [vmem:[%s5446 + $0x3c] sm:$0xf]
        %v5495 = vunpack.c.l.b16 %v5412
        %v5496 = vunpack.c.l.b16 %v5413
        %v5497 = vunpack.c.l.b16 %v5414
        %v5498 = vunpack.c.l.b16 %v5415
        %v5499 = vunpack.c.l.b16 %v5416
        %v5500 = vunpack.c.l.b16 %v5417
        %v5501 = vunpack.c.l.b16 %v5418
        %v5502 = vunpack.c.l.b16 %v5419
        %v5503 = vunpack.c.l.b16 %v5420
        %v5504 = vunpack.c.l.b16 %v5421
        %v5505 = vunpack.c.l.b16 %v5422
        %v5506 = vunpack.c.l.b16 %v5423
        %v5507 = vunpack.c.l.b16 %v5424
        %v5508 = vunpack.c.l.b16 %v5425
        %v5509 = vunpack.c.l.b16 %v5426
        %v5510 = vunpack.c.l.b16 %v5427
        %v5511 = vunpack.c.l.b16 %v5428
        %v5512 = vunpack.c.l.b16 %v5429
        %v5513 = vunpack.c.l.b16 %v5430
        %v5514 = vunpack.c.l.b16 %v5431
        %v5515 = vunpack.c.l.b16 %v5432
        %v5516 = vunpack.c.l.b16 %v5433
        %v5517 = vunpack.c.l.b16 %v5434
        %v5518 = vunpack.c.l.b16 %v5435
        %v5519 = vunpack.c.l.b16 %v5436
        %v5520 = vunpack.c.l.b16 %v5437
        %v5521 = vunpack.c.l.b16 %v5438
        %v5522 = vunpack.c.l.b16 %v5439
        %v5523 = vunpack.c.l.b16 %v5440
        %v5524 = vunpack.c.l.b16 %v5441
        %v5525 = vunpack.c.l.b16 %v5442
        %v5526 = vunpack.c.l.b16 %v5443
        %v5527 = vpack.c.b16 %v5496, %v5495
        %v5528 = vpack.c.b16 %v5498, %v5497
        %v5529 = vpack.c.b16 %v5500, %v5499
        %v5530 = vpack.c.b16 %v5502, %v5501
        %v5531 = vpack.c.b16 %v5504, %v5503
        %v5532 = vpack.c.b16 %v5506, %v5505
        %v5533 = vpack.c.b16 %v5508, %v5507
        %v5534 = vpack.c.b16 %v5510, %v5509
        %v5535 = vpack.c.b16 %v5512, %v5511
        %v5536 = vpack.c.b16 %v5514, %v5513
        %v5537 = vpack.c.b16 %v5516, %v5515
        %v5538 = vpack.c.b16 %v5518, %v5517
        %v5539 = vpack.c.b16 %v5520, %v5519
        %v5540 = vpack.c.b16 %v5522, %v5521
        %v5541 = vpack.c.b16 %v5524, %v5523
        %v5542 = vpack.c.b16 %v5526, %v5525
        %v5575 = vunpack.c.l.b16 %v5447
        %v5576 = vunpack.c.l.b16 %v5448
        %v5577 = vunpack.c.l.b16 %v5449
        %v5578 = vunpack.c.l.b16 %v5450
        %v5579 = vunpack.c.l.b16 %v5451
        %v5580 = vunpack.c.l.b16 %v5452
        %v5581 = vunpack.c.l.b16 %v5453
        %v5582 = vunpack.c.l.b16 %v5454
        %v5583 = vunpack.c.l.b16 %v5455
        %v5584 = vunpack.c.l.b16 %v5456
        %v5585 = vunpack.c.l.b16 %v5457
        %v5586 = vunpack.c.l.b16 %v5458
        %v5587 = vunpack.c.l.b16 %v5459
        %v5588 = vunpack.c.l.b16 %v5460
        %v5589 = vunpack.c.l.b16 %v5461
        %v5590 = vunpack.c.l.b16 %v5462
        %v5591 = vpack.c.b16 %v5576, %v5575
        %v5592 = vpack.c.b16 %v5578, %v5577
        %v5593 = vpack.c.b16 %v5580, %v5579
        %v5594 = vpack.c.b16 %v5582, %v5581
        %v5595 = vpack.c.b16 %v5584, %v5583
        %v5596 = vpack.c.b16 %v5586, %v5585
        %v5597 = vpack.c.b16 %v5588, %v5587
        %v5598 = vpack.c.b16 %v5590, %v5589
        %5607 = vmatpush.bf16.msra.mxu0 %v5598
        %5608 = vmatpush.bf16.msra.mxu0 %v5597
        %5609 = vmatpush.bf16.msra.mxu0 %v5596
        %5610 = vmatpush.bf16.msra.mxu0 %v5595
        %5611 = vmatpush.bf16.msra.mxu0 %v5594
        %5612 = vmatpush.bf16.msra.mxu0 %v5593
        %5613 = vmatpush.bf16.msra.mxu0 %v5592
        %5614 = vmatpush.bf16.msra.mxu0 %v5591
        %5615 = vmatmul.bf16.gmra.mxu0 %v5527
        %v5616 = vpop.f32.mrf.mxu0
        %v5617 = vadd.f32 0.0, %v5616
        %v5618 = vpop.f32.mrf.mxu0
        %v5619 = vadd.f32 0.0, %v5618
        %5620 = vmatmul.bf16.gmra.mxu0 %v5528
        %v5621 = vpop.f32.mrf.mxu0
        %v5622 = vadd.f32 0.0, %v5621
        %v5623 = vpop.f32.mrf.mxu0
        %v5624 = vadd.f32 0.0, %v5623
        %5625 = vmatmul.bf16.gmra.mxu0 %v5529
        %v5626 = vpop.f32.mrf.mxu0
        %v5627 = vadd.f32 0.0, %v5626
        %v5628 = vpop.f32.mrf.mxu0
        %v5629 = vadd.f32 0.0, %v5628
        %5630 = vmatmul.bf16.gmra.mxu0 %v5530
        %v5631 = vpop.f32.mrf.mxu0
        %v5632 = vadd.f32 0.0, %v5631
        %v5633 = vpop.f32.mrf.mxu0
        %v5634 = vadd.f32 0.0, %v5633
        %5635 = vmatmul.bf16.gmra.mxu0 %v5531
        %v5636 = vpop.f32.mrf.mxu0
        %v5637 = vadd.f32 0.0, %v5636
        %v5638 = vpop.f32.mrf.mxu0
        %v5639 = vadd.f32 0.0, %v5638
        %5640 = vmatmul.bf16.gmra.mxu0 %v5532
        %v5641 = vpop.f32.mrf.mxu0
        %v5642 = vadd.f32 0.0, %v5641
        %v5643 = vpop.f32.mrf.mxu0
        %v5644 = vadd.f32 0.0, %v5643
        %5645 = vmatmul.bf16.gmra.mxu0 %v5533
        %v5646 = vpop.f32.mrf.mxu0
        %v5647 = vadd.f32 0.0, %v5646
        %v5648 = vpop.f32.mrf.mxu0
        %v5649 = vadd.f32 0.0, %v5648
        %5650 = vmatmul.bf16.gmra.mxu0 %v5534
        %v5651 = vpop.f32.mrf.mxu0
        %v5652 = vadd.f32 0.0, %v5651
        %v5653 = vpop.f32.mrf.mxu0
        %v5654 = vadd.f32 0.0, %v5653
        %5655 = vmatmul.bf16.gmra.mxu0 %v5535
        %v5656 = vpop.f32.mrf.mxu0
        %v5657 = vadd.f32 0.0, %v5656
        %v5658 = vpop.f32.mrf.mxu0
        %v5659 = vadd.f32 0.0, %v5658
        %5660 = vmatmul.bf16.gmra.mxu0 %v5536
        %v5661 = vpop.f32.mrf.mxu0
        %v5662 = vadd.f32 0.0, %v5661
        %v5663 = vpop.f32.mrf.mxu0
        %v5664 = vadd.f32 0.0, %v5663
        %5665 = vmatmul.bf16.gmra.mxu0 %v5537
        %v5666 = vpop.f32.mrf.mxu0
        %v5667 = vadd.f32 0.0, %v5666
        %v5668 = vpop.f32.mrf.mxu0
        %v5669 = vadd.f32 0.0, %v5668
        %5670 = vmatmul.bf16.gmra.mxu0 %v5538
        %v5671 = vpop.f32.mrf.mxu0
        %v5672 = vadd.f32 0.0, %v5671
        %v5673 = vpop.f32.mrf.mxu0
        %v5674 = vadd.f32 0.0, %v5673
        %5675 = vmatmul.bf16.gmra.mxu0 %v5539
        %v5676 = vpop.f32.mrf.mxu0
        %v5677 = vadd.f32 0.0, %v5676
        %v5678 = vpop.f32.mrf.mxu0
        %v5679 = vadd.f32 0.0, %v5678
        %5680 = vmatmul.bf16.gmra.mxu0 %v5540
        %v5681 = vpop.f32.mrf.mxu0
        %v5682 = vadd.f32 0.0, %v5681
        %v5683 = vpop.f32.mrf.mxu0
        %v5684 = vadd.f32 0.0, %v5683
        %5685 = vmatmul.bf16.gmra.mxu0 %v5541
        %v5686 = vpop.f32.mrf.mxu0
        %v5687 = vadd.f32 0.0, %v5686
        %v5688 = vpop.f32.mrf.mxu0
        %v5689 = vadd.f32 0.0, %v5688
        %5690 = vmatmul.bf16.gmra.mxu0 %v5542
        %v5691 = vpop.f32.mrf.mxu0
        %v5692 = vadd.f32 0.0, %v5691
        %v5693 = vpop.f32.mrf.mxu0
        %v5694 = vadd.f32 0.0, %v5693
        %5695 = vdwg.mxu0
        %v5696 = vadd.f32 %v5380, %v5617
        %v5697 = vadd.f32 %v5381, %v5619
        %v5698 = vadd.f32 %v5382, %v5622
        %v5699 = vadd.f32 %v5383, %v5624
        %v5700 = vadd.f32 %v5384, %v5627
        %v5701 = vadd.f32 %v5385, %v5629
        %v5702 = vadd.f32 %v5386, %v5632
        %v5703 = vadd.f32 %v5387, %v5634
        %v5704 = vadd.f32 %v5388, %v5637
        %v5705 = vadd.f32 %v5389, %v5639
        %v5706 = vadd.f32 %v5390, %v5642
        %v5707 = vadd.f32 %v5391, %v5644
        %v5708 = vadd.f32 %v5392, %v5647
        %v5709 = vadd.f32 %v5393, %v5649
        %v5710 = vadd.f32 %v5394, %v5652
        %v5711 = vadd.f32 %v5395, %v5654
        %v5712 = vadd.f32 %v5396, %v5657
        %v5713 = vadd.f32 %v5397, %v5659
        %v5714 = vadd.f32 %v5398, %v5662
        %v5715 = vadd.f32 %v5399, %v5664
        %v5716 = vadd.f32 %v5400, %v5667
        %v5717 = vadd.f32 %v5401, %v5669
        %v5718 = vadd.f32 %v5402, %v5672
        %v5719 = vadd.f32 %v5403, %v5674
        %v5720 = vadd.f32 %v5404, %v5677
        %v5721 = vadd.f32 %v5405, %v5679
        %v5722 = vadd.f32 %v5406, %v5682
        %v5723 = vadd.f32 %v5407, %v5684
        %v5724 = vadd.f32 %v5408, %v5687
        %v5725 = vadd.f32 %v5409, %v5689
        %v5726 = vadd.f32 %v5410, %v5692
        %v5727 = vadd.f32 %v5411, %v5694
        %v5728 = vld [vmem:[#allocation2 + $0x130] sm:$0xf]
        %v5729 = vld [vmem:[#allocation2 + $0x134] sm:$0xf]
        %v5730 = vld [vmem:[#allocation2 + $0x138] sm:$0xf]
        %v5731 = vld [vmem:[#allocation2 + $0x13c] sm:$0xf]
        %v5732 = vld [vmem:[#allocation2 + $0x140] sm:$0xf]
        %v5733 = vld [vmem:[#allocation2 + $0x144] sm:$0xf]
        %v5734 = vld [vmem:[#allocation2 + $0x148] sm:$0xf]
        %v5735 = vld [vmem:[#allocation2 + $0x14c] sm:$0xf]
        %v5736 = vld [vmem:[#allocation2 + $0x150] sm:$0xf]
        %v5737 = vld [vmem:[#allocation2 + $0x154] sm:$0xf]
        %v5738 = vld [vmem:[#allocation2 + $0x158] sm:$0xf]
        %v5739 = vld [vmem:[#allocation2 + $0x15c] sm:$0xf]
        %v5740 = vld [vmem:[#allocation2 + $0x160] sm:$0xf]
        %v5741 = vld [vmem:[#allocation2 + $0x164] sm:$0xf]
        %v5742 = vld [vmem:[#allocation2 + $0x168] sm:$0xf]
        %v5743 = vld [vmem:[#allocation2 + $0x16c] sm:$0xf]
        %v5744 = vld [vmem:[#allocation2 + $0x170] sm:$0xf]
        %v5745 = vld [vmem:[#allocation2 + $0x174] sm:$0xf]
        %v5746 = vld [vmem:[#allocation2 + $0x178] sm:$0xf]
        %v5747 = vld [vmem:[#allocation2 + $0x17c] sm:$0xf]
        %v5748 = vld [vmem:[#allocation2 + $0x180] sm:$0xf]
        %v5749 = vld [vmem:[#allocation2 + $0x184] sm:$0xf]
        %v5750 = vld [vmem:[#allocation2 + $0x188] sm:$0xf]
        %v5751 = vld [vmem:[#allocation2 + $0x18c] sm:$0xf]
        %v5752 = vld [vmem:[#allocation2 + $0x190] sm:$0xf]
        %v5753 = vld [vmem:[#allocation2 + $0x194] sm:$0xf]
        %v5754 = vld [vmem:[#allocation2 + $0x198] sm:$0xf]
        %v5755 = vld [vmem:[#allocation2 + $0x19c] sm:$0xf]
        %v5756 = vld [vmem:[#allocation2 + $0x1a0] sm:$0xf]
        %v5757 = vld [vmem:[#allocation2 + $0x1a4] sm:$0xf]
        %v5758 = vld [vmem:[#allocation2 + $0x1a8] sm:$0xf]
        %v5759 = vld [vmem:[#allocation2 + $0x1ac] sm:$0xf]
        %s5760 = sadd.s32 %s701, 736
        %s5761 = smul.addr %s5760, 4
        %s5762 = scalar_lea.vmem [#allocation4], %s5761
        %v5763 = vld [vmem:[%s5762] sm:$0xf]
        %v5764 = vld [vmem:[%s5762 + $0x4] sm:$0xf]
        %v5765 = vld [vmem:[%s5762 + $0x8] sm:$0xf]
        %v5766 = vld [vmem:[%s5762 + $0xc] sm:$0xf]
        %v5767 = vld [vmem:[%s5762 + $0x10] sm:$0xf]
        %v5768 = vld [vmem:[%s5762 + $0x14] sm:$0xf]
        %v5769 = vld [vmem:[%s5762 + $0x18] sm:$0xf]
        %v5770 = vld [vmem:[%s5762 + $0x1c] sm:$0xf]
        %v5771 = vld [vmem:[%s5762 + $0x20] sm:$0xf]
        %v5772 = vld [vmem:[%s5762 + $0x24] sm:$0xf]
        %v5773 = vld [vmem:[%s5762 + $0x28] sm:$0xf]
        %v5774 = vld [vmem:[%s5762 + $0x2c] sm:$0xf]
        %v5775 = vld [vmem:[%s5762 + $0x30] sm:$0xf]
        %v5776 = vld [vmem:[%s5762 + $0x34] sm:$0xf]
        %v5777 = vld [vmem:[%s5762 + $0x38] sm:$0xf]
        %v5778 = vld [vmem:[%s5762 + $0x3c] sm:$0xf]
        %v5811 = vunpack.c.l.b16 %v5728
        %v5812 = vunpack.c.l.b16 %v5729
        %v5813 = vunpack.c.l.b16 %v5730
        %v5814 = vunpack.c.l.b16 %v5731
        %v5815 = vunpack.c.l.b16 %v5732
        %v5816 = vunpack.c.l.b16 %v5733
        %v5817 = vunpack.c.l.b16 %v5734
        %v5818 = vunpack.c.l.b16 %v5735
        %v5819 = vunpack.c.l.b16 %v5736
        %v5820 = vunpack.c.l.b16 %v5737
        %v5821 = vunpack.c.l.b16 %v5738
        %v5822 = vunpack.c.l.b16 %v5739
        %v5823 = vunpack.c.l.b16 %v5740
        %v5824 = vunpack.c.l.b16 %v5741
        %v5825 = vunpack.c.l.b16 %v5742
        %v5826 = vunpack.c.l.b16 %v5743
        %v5827 = vunpack.c.l.b16 %v5744
        %v5828 = vunpack.c.l.b16 %v5745
        %v5829 = vunpack.c.l.b16 %v5746
        %v5830 = vunpack.c.l.b16 %v5747
        %v5831 = vunpack.c.l.b16 %v5748
        %v5832 = vunpack.c.l.b16 %v5749
        %v5833 = vunpack.c.l.b16 %v5750
        %v5834 = vunpack.c.l.b16 %v5751
        %v5835 = vunpack.c.l.b16 %v5752
        %v5836 = vunpack.c.l.b16 %v5753
        %v5837 = vunpack.c.l.b16 %v5754
        %v5838 = vunpack.c.l.b16 %v5755
        %v5839 = vunpack.c.l.b16 %v5756
        %v5840 = vunpack.c.l.b16 %v5757
        %v5841 = vunpack.c.l.b16 %v5758
        %v5842 = vunpack.c.l.b16 %v5759
        %v5843 = vpack.c.b16 %v5812, %v5811
        %v5844 = vpack.c.b16 %v5814, %v5813
        %v5845 = vpack.c.b16 %v5816, %v5815
        %v5846 = vpack.c.b16 %v5818, %v5817
        %v5847 = vpack.c.b16 %v5820, %v5819
        %v5848 = vpack.c.b16 %v5822, %v5821
        %v5849 = vpack.c.b16 %v5824, %v5823
        %v5850 = vpack.c.b16 %v5826, %v5825
        %v5851 = vpack.c.b16 %v5828, %v5827
        %v5852 = vpack.c.b16 %v5830, %v5829
        %v5853 = vpack.c.b16 %v5832, %v5831
        %v5854 = vpack.c.b16 %v5834, %v5833
        %v5855 = vpack.c.b16 %v5836, %v5835
        %v5856 = vpack.c.b16 %v5838, %v5837
        %v5857 = vpack.c.b16 %v5840, %v5839
        %v5858 = vpack.c.b16 %v5842, %v5841
        %v5891 = vunpack.c.l.b16 %v5763
        %v5892 = vunpack.c.l.b16 %v5764
        %v5893 = vunpack.c.l.b16 %v5765
        %v5894 = vunpack.c.l.b16 %v5766
        %v5895 = vunpack.c.l.b16 %v5767
        %v5896 = vunpack.c.l.b16 %v5768
        %v5897 = vunpack.c.l.b16 %v5769
        %v5898 = vunpack.c.l.b16 %v5770
        %v5899 = vunpack.c.l.b16 %v5771
        %v5900 = vunpack.c.l.b16 %v5772
        %v5901 = vunpack.c.l.b16 %v5773
        %v5902 = vunpack.c.l.b16 %v5774
        %v5903 = vunpack.c.l.b16 %v5775
        %v5904 = vunpack.c.l.b16 %v5776
        %v5905 = vunpack.c.l.b16 %v5777
        %v5906 = vunpack.c.l.b16 %v5778
        %v5907 = vpack.c.b16 %v5892, %v5891
        %v5908 = vpack.c.b16 %v5894, %v5893
        %v5909 = vpack.c.b16 %v5896, %v5895
        %v5910 = vpack.c.b16 %v5898, %v5897
        %v5911 = vpack.c.b16 %v5900, %v5899
        %v5912 = vpack.c.b16 %v5902, %v5901
        %v5913 = vpack.c.b16 %v5904, %v5903
        %v5914 = vpack.c.b16 %v5906, %v5905
        %5923 = vmatpush.bf16.msra.mxu0 %v5914
        %5924 = vmatpush.bf16.msra.mxu0 %v5913
        %5925 = vmatpush.bf16.msra.mxu0 %v5912
        %5926 = vmatpush.bf16.msra.mxu0 %v5911
        %5927 = vmatpush.bf16.msra.mxu0 %v5910
        %5928 = vmatpush.bf16.msra.mxu0 %v5909
        %5929 = vmatpush.bf16.msra.mxu0 %v5908
        %5930 = vmatpush.bf16.msra.mxu0 %v5907
        %5931 = vmatmul.bf16.gmra.mxu0 %v5843
        %v5932 = vpop.f32.mrf.mxu0
        %v5933 = vadd.f32 0.0, %v5932
        %v5934 = vpop.f32.mrf.mxu0
        %v5935 = vadd.f32 0.0, %v5934
        %5936 = vmatmul.bf16.gmra.mxu0 %v5844
        %v5937 = vpop.f32.mrf.mxu0
        %v5938 = vadd.f32 0.0, %v5937
        %v5939 = vpop.f32.mrf.mxu0
        %v5940 = vadd.f32 0.0, %v5939
        %5941 = vmatmul.bf16.gmra.mxu0 %v5845
        %v5942 = vpop.f32.mrf.mxu0
        %v5943 = vadd.f32 0.0, %v5942
        %v5944 = vpop.f32.mrf.mxu0
        %v5945 = vadd.f32 0.0, %v5944
        %5946 = vmatmul.bf16.gmra.mxu0 %v5846
        %v5947 = vpop.f32.mrf.mxu0
        %v5948 = vadd.f32 0.0, %v5947
        %v5949 = vpop.f32.mrf.mxu0
        %v5950 = vadd.f32 0.0, %v5949
        %5951 = vmatmul.bf16.gmra.mxu0 %v5847
        %v5952 = vpop.f32.mrf.mxu0
        %v5953 = vadd.f32 0.0, %v5952
        %v5954 = vpop.f32.mrf.mxu0
        %v5955 = vadd.f32 0.0, %v5954
        %5956 = vmatmul.bf16.gmra.mxu0 %v5848
        %v5957 = vpop.f32.mrf.mxu0
        %v5958 = vadd.f32 0.0, %v5957
        %v5959 = vpop.f32.mrf.mxu0
        %v5960 = vadd.f32 0.0, %v5959
        %5961 = vmatmul.bf16.gmra.mxu0 %v5849
        %v5962 = vpop.f32.mrf.mxu0
        %v5963 = vadd.f32 0.0, %v5962
        %v5964 = vpop.f32.mrf.mxu0
        %v5965 = vadd.f32 0.0, %v5964
        %5966 = vmatmul.bf16.gmra.mxu0 %v5850
        %v5967 = vpop.f32.mrf.mxu0
        %v5968 = vadd.f32 0.0, %v5967
        %v5969 = vpop.f32.mrf.mxu0
        %v5970 = vadd.f32 0.0, %v5969
        %5971 = vmatmul.bf16.gmra.mxu0 %v5851
        %v5972 = vpop.f32.mrf.mxu0
        %v5973 = vadd.f32 0.0, %v5972
        %v5974 = vpop.f32.mrf.mxu0
        %v5975 = vadd.f32 0.0, %v5974
        %5976 = vmatmul.bf16.gmra.mxu0 %v5852
        %v5977 = vpop.f32.mrf.mxu0
        %v5978 = vadd.f32 0.0, %v5977
        %v5979 = vpop.f32.mrf.mxu0
        %v5980 = vadd.f32 0.0, %v5979
        %5981 = vmatmul.bf16.gmra.mxu0 %v5853
        %v5982 = vpop.f32.mrf.mxu0
        %v5983 = vadd.f32 0.0, %v5982
        %v5984 = vpop.f32.mrf.mxu0
        %v5985 = vadd.f32 0.0, %v5984
        %5986 = vmatmul.bf16.gmra.mxu0 %v5854
        %v5987 = vpop.f32.mrf.mxu0
        %v5988 = vadd.f32 0.0, %v5987
        %v5989 = vpop.f32.mrf.mxu0
        %v5990 = vadd.f32 0.0, %v5989
        %5991 = vmatmul.bf16.gmra.mxu0 %v5855
        %v5992 = vpop.f32.mrf.mxu0
        %v5993 = vadd.f32 0.0, %v5992
        %v5994 = vpop.f32.mrf.mxu0
        %v5995 = vadd.f32 0.0, %v5994
        %5996 = vmatmul.bf16.gmra.mxu0 %v5856
        %v5997 = vpop.f32.mrf.mxu0
        %v5998 = vadd.f32 0.0, %v5997
        %v5999 = vpop.f32.mrf.mxu0
        %v6000 = vadd.f32 0.0, %v5999
        %6001 = vmatmul.bf16.gmra.mxu0 %v5857
        %v6002 = vpop.f32.mrf.mxu0
        %v6003 = vadd.f32 0.0, %v6002
        %v6004 = vpop.f32.mrf.mxu0
        %v6005 = vadd.f32 0.0, %v6004
        %6006 = vmatmul.bf16.gmra.mxu0 %v5858
        %v6007 = vpop.f32.mrf.mxu0
        %v6008 = vadd.f32 0.0, %v6007
        %v6009 = vpop.f32.mrf.mxu0
        %v6010 = vadd.f32 0.0, %v6009
        %6011 = vdwg.mxu0
        %v6012 = vadd.f32 %v5696, %v5933
        %v6013 = vadd.f32 %v5697, %v5935
        %v6014 = vadd.f32 %v5698, %v5938
        %v6015 = vadd.f32 %v5699, %v5940
        %v6016 = vadd.f32 %v5700, %v5943
        %v6017 = vadd.f32 %v5701, %v5945
        %v6018 = vadd.f32 %v5702, %v5948
        %v6019 = vadd.f32 %v5703, %v5950
        %v6020 = vadd.f32 %v5704, %v5953
        %v6021 = vadd.f32 %v5705, %v5955
        %v6022 = vadd.f32 %v5706, %v5958
        %v6023 = vadd.f32 %v5707, %v5960
        %v6024 = vadd.f32 %v5708, %v5963
        %v6025 = vadd.f32 %v5709, %v5965
        %v6026 = vadd.f32 %v5710, %v5968
        %v6027 = vadd.f32 %v5711, %v5970
        %v6028 = vadd.f32 %v5712, %v5973
        %v6029 = vadd.f32 %v5713, %v5975
        %v6030 = vadd.f32 %v5714, %v5978
        %v6031 = vadd.f32 %v5715, %v5980
        %v6032 = vadd.f32 %v5716, %v5983
        %v6033 = vadd.f32 %v5717, %v5985
        %v6034 = vadd.f32 %v5718, %v5988
        %v6035 = vadd.f32 %v5719, %v5990
        %v6036 = vadd.f32 %v5720, %v5993
        %v6037 = vadd.f32 %v5721, %v5995
        %v6038 = vadd.f32 %v5722, %v5998
        %v6039 = vadd.f32 %v5723, %v6000
        %v6040 = vadd.f32 %v5724, %v6003
        %v6041 = vadd.f32 %v5725, %v6005
        %v6042 = vadd.f32 %v5726, %v6008
        %v6043 = vadd.f32 %v5727, %v6010
        %v6044 = vadd.f32 %v4241, %v6012
        %v6045 = vadd.f32 %v4242, %v6013
        %v6046 = vadd.f32 %v4243, %v6014
        %v6047 = vadd.f32 %v4244, %v6015
        %v6048 = vadd.f32 %v4245, %v6016
        %v6049 = vadd.f32 %v4246, %v6017
        %v6050 = vadd.f32 %v4247, %v6018
        %v6051 = vadd.f32 %v4248, %v6019
        %v6052 = vadd.f32 %v4249, %v6020
        %v6053 = vadd.f32 %v4250, %v6021
        %v6054 = vadd.f32 %v4251, %v6022
        %v6055 = vadd.f32 %v4252, %v6023
        %v6056 = vadd.f32 %v4253, %v6024
        %v6057 = vadd.f32 %v4254, %v6025
        %v6058 = vadd.f32 %v4255, %v6026
        %v6059 = vadd.f32 %v4256, %v6027
        %v6060 = vadd.f32 %v4257, %v6028
        %v6061 = vadd.f32 %v4258, %v6029
        %v6062 = vadd.f32 %v4259, %v6030
        %v6063 = vadd.f32 %v4260, %v6031
        %v6064 = vadd.f32 %v4261, %v6032
        %v6065 = vadd.f32 %v4262, %v6033
        %v6066 = vadd.f32 %v4263, %v6034
        %v6067 = vadd.f32 %v4264, %v6035
        %v6068 = vadd.f32 %v4265, %v6036
        %v6069 = vadd.f32 %v4266, %v6037
        %v6070 = vadd.f32 %v4267, %v6038
        %v6071 = vadd.f32 %v4268, %v6039
        %v6072 = vadd.f32 %v4269, %v6040
        %v6073 = vadd.f32 %v4270, %v6041
        %v6074 = vadd.f32 %v4271, %v6042
        %v6075 = vadd.f32 %v4272, %v6043
        %v6076 = vld [vmem:[#allocation2 + $0x70] sm:$0x8]
        %v6077 = vld [vmem:[#allocation2 + $0x74] sm:$0xf]
        %v6078 = vld [vmem:[#allocation2 + $0x78] sm:$0xf]
        %v6079 = vld [vmem:[#allocation2 + $0x7c] sm:$0xf]
        %v6080 = vld [vmem:[#allocation2 + $0x80] sm:$0xf]
        %v6081 = vld [vmem:[#allocation2 + $0x84] sm:$0xf]
        %v6082 = vld [vmem:[#allocation2 + $0x88] sm:$0xf]
        %v6083 = vld [vmem:[#allocation2 + $0x8c] sm:$0xf]
        %v6084 = vld [vmem:[#allocation2 + $0x90] sm:$0xf]
        %v6085 = vld [vmem:[#allocation2 + $0x94] sm:$0xf]
        %v6086 = vld [vmem:[#allocation2 + $0x98] sm:$0xf]
        %v6087 = vld [vmem:[#allocation2 + $0x9c] sm:$0xf]
        %v6088 = vld [vmem:[#allocation2 + $0xa0] sm:$0xf]
        %v6089 = vld [vmem:[#allocation2 + $0xa4] sm:$0xf]
        %v6090 = vld [vmem:[#allocation2 + $0xa8] sm:$0xf]
        %v6091 = vld [vmem:[#allocation2 + $0xac] sm:$0xf]
        %v6092 = vld [vmem:[#allocation2 + $0xb0] sm:$0xf]
        %v6093 = vld [vmem:[#allocation2 + $0xb4] sm:$0xf]
        %v6094 = vld [vmem:[#allocation2 + $0xb8] sm:$0xf]
        %v6095 = vld [vmem:[#allocation2 + $0xbc] sm:$0xf]
        %v6096 = vld [vmem:[#allocation2 + $0xc0] sm:$0xf]
        %v6097 = vld [vmem:[#allocation2 + $0xc4] sm:$0xf]
        %v6098 = vld [vmem:[#allocation2 + $0xc8] sm:$0xf]
        %v6099 = vld [vmem:[#allocation2 + $0xcc] sm:$0xf]
        %v6100 = vld [vmem:[#allocation2 + $0xd0] sm:$0xf]
        %v6101 = vld [vmem:[#allocation2 + $0xd4] sm:$0xf]
        %v6102 = vld [vmem:[#allocation2 + $0xd8] sm:$0xf]
        %v6103 = vld [vmem:[#allocation2 + $0xdc] sm:$0xf]
        %v6104 = vld [vmem:[#allocation2 + $0xe0] sm:$0xf]
        %v6105 = vld [vmem:[#allocation2 + $0xe4] sm:$0xf]
        %v6106 = vld [vmem:[#allocation2 + $0xe8] sm:$0xf]
        %v6107 = vld [vmem:[#allocation2 + $0xec] sm:$0xf]
        %v6108 = vld [vmem:[#allocation2 + $0xf0] sm:$0x7]
        %s6109 = sadd.s32 %s701, 256
        %s6110 = smul.addr %s6109, 4
        %s6111 = scalar_lea.vmem [#allocation4], %s6110
        %v6112 = vld [vmem:[%s6111] sm:$0xf]
        %v6113 = vld [vmem:[%s6111 + $0x4] sm:$0xf]
        %v6114 = vld [vmem:[%s6111 + $0x8] sm:$0xf]
        %v6115 = vld [vmem:[%s6111 + $0xc] sm:$0xf]
        %v6116 = vld [vmem:[%s6111 + $0x10] sm:$0xf]
        %v6117 = vld [vmem:[%s6111 + $0x14] sm:$0xf]
        %v6118 = vld [vmem:[%s6111 + $0x18] sm:$0xf]
        %v6119 = vld [vmem:[%s6111 + $0x1c] sm:$0xf]
        %v6120 = vld [vmem:[%s6111 + $0x20] sm:$0xf]
        %v6121 = vld [vmem:[%s6111 + $0x24] sm:$0xf]
        %v6122 = vld [vmem:[%s6111 + $0x28] sm:$0xf]
        %v6123 = vld [vmem:[%s6111 + $0x2c] sm:$0xf]
        %v6124 = vld [vmem:[%s6111 + $0x30] sm:$0xf]
        %v6125 = vld [vmem:[%s6111 + $0x34] sm:$0xf]
        %v6126 = vld [vmem:[%s6111 + $0x38] sm:$0xf]
        %v6127 = vld [vmem:[%s6111 + $0x3c] sm:$0xf]
        %v6128 = vld [vmem:[#allocation2 + $0xa0] sm:$0x8]
        %v6129 = vld [vmem:[#allocation2 + $0xf0] sm:$0xf]
        %v6130 = vld [vmem:[#allocation2 + $0xf4] sm:$0xf]
        %v6131 = vld [vmem:[#allocation2 + $0xf8] sm:$0xf]
        %v6132 = vld [vmem:[#allocation2 + $0xfc] sm:$0xf]
        %v6133 = vld [vmem:[#allocation2 + $0x100] sm:$0xf]
        %v6134 = vld [vmem:[#allocation2 + $0x104] sm:$0xf]
        %v6135 = vld [vmem:[#allocation2 + $0x108] sm:$0xf]
        %v6136 = vld [vmem:[#allocation2 + $0x10c] sm:$0xf]
        %v6137 = vld [vmem:[#allocation2 + $0x110] sm:$0xf]
        %v6138 = vld [vmem:[#allocation2 + $0x114] sm:$0xf]
        %v6139 = vld [vmem:[#allocation2 + $0x118] sm:$0xf]
        %v6140 = vld [vmem:[#allocation2 + $0x11c] sm:$0xf]
        %v6141 = vld [vmem:[#allocation2 + $0x120] sm:$0x7]
        %s6142 = sadd.s32 %s701, 416
        %s6143 = smul.addr %s6142, 4
        %s6144 = scalar_lea.vmem [#allocation4], %s6143
        %v6145 = vld [vmem:[%s6144] sm:$0xf]
        %v6146 = vld [vmem:[%s6144 + $0x4] sm:$0xf]
        %v6147 = vld [vmem:[%s6144 + $0x8] sm:$0xf]
        %v6148 = vld [vmem:[%s6144 + $0xc] sm:$0xf]
        %v6149 = vld [vmem:[%s6144 + $0x10] sm:$0xf]
        %v6150 = vld [vmem:[%s6144 + $0x14] sm:$0xf]
        %v6151 = vld [vmem:[%s6144 + $0x18] sm:$0xf]
        %v6152 = vld [vmem:[%s6144 + $0x1c] sm:$0xf]
        %v6153 = vld [vmem:[%s6144 + $0x20] sm:$0xf]
        %v6154 = vld [vmem:[%s6144 + $0x24] sm:$0xf]
        %v6155 = vld [vmem:[%s6144 + $0x28] sm:$0xf]
        %v6156 = vld [vmem:[%s6144 + $0x2c] sm:$0xf]
        %v6157 = vld [vmem:[%s6144 + $0x30] sm:$0xf]
        %v6158 = vld [vmem:[%s6144 + $0x34] sm:$0xf]
        %v6159 = vld [vmem:[%s6144 + $0x38] sm:$0xf]
        %v6160 = vld [vmem:[%s6144 + $0x3c] sm:$0xf]
        %v6194 = vunpack.c.l.b16 %v6128
        %v6195 = vunpack.c.l.b16 %v6089
        %v6196 = vunpack.c.l.b16 %v6090
        %v6197 = vunpack.c.l.b16 %v6091
        %v6198 = vunpack.c.l.b16 %v6092
        %v6199 = vunpack.c.l.b16 %v6093
        %v6200 = vunpack.c.l.b16 %v6094
        %v6201 = vunpack.c.l.b16 %v6095
        %v6202 = vunpack.c.l.b16 %v6096
        %v6203 = vunpack.c.l.b16 %v6097
        %v6204 = vunpack.c.l.b16 %v6098
        %v6205 = vunpack.c.l.b16 %v6099
        %v6206 = vunpack.c.l.b16 %v6100
        %v6207 = vunpack.c.l.b16 %v6101
        %v6208 = vunpack.c.l.b16 %v6102
        %v6209 = vunpack.c.l.b16 %v6103
        %v6210 = vunpack.c.l.b16 %v6104
        %v6211 = vunpack.c.l.b16 %v6105
        %v6212 = vunpack.c.l.b16 %v6106
        %v6213 = vunpack.c.l.b16 %v6107
        %v6214 = vunpack.c.l.b16 %v6129
        %v6215 = vunpack.c.l.b16 %v6130
        %v6216 = vunpack.c.l.b16 %v6131
        %v6217 = vunpack.c.l.b16 %v6132
        %v6218 = vunpack.c.l.b16 %v6133
        %v6219 = vunpack.c.l.b16 %v6134
        %v6220 = vunpack.c.l.b16 %v6135
        %v6221 = vunpack.c.l.b16 %v6136
        %v6222 = vunpack.c.l.b16 %v6137
        %v6223 = vunpack.c.l.b16 %v6138
        %v6224 = vunpack.c.l.b16 %v6139
        %v6225 = vunpack.c.l.b16 %v6140
        %v6226 = vunpack.c.l.b16 %v6141
        %v6227 = vpack.c.b16 %v6195, %v6194
        %v6228 = vpack.c.b16 %v6197, %v6196
        %v6229 = vpack.c.b16 %v6199, %v6198
        %v6230 = vpack.c.b16 %v6201, %v6200
        %v6231 = vpack.c.b16 %v6203, %v6202
        %v6232 = vpack.c.b16 %v6205, %v6204
        %v6233 = vpack.c.b16 %v6207, %v6206
        %v6234 = vpack.c.b16 %v6209, %v6208
        %v6235 = vpack.c.b16 %v6211, %v6210
        %v6236 = vpack.c.b16 %v6213, %v6212
        %v6237 = vpack.c.b16 %v6215, %v6214
        %v6238 = vpack.c.b16 %v6217, %v6216
        %v6239 = vpack.c.b16 %v6219, %v6218
        %v6240 = vpack.c.b16 %v6221, %v6220
        %v6241 = vpack.c.b16 %v6223, %v6222
        %v6242 = vpack.c.b16 %v6225, %v6224
        %v6243 = vpack.c.b16 %v6226, %v6226
        %v6244 = vrot.slane %v6227, 3
        %v6245 = vrot.slane %v6228, 3
        %v6246 = vsel %vm856, %v6244, %v6245
        %v6247 = vrot.slane %v6229, 3
        %v6248 = vsel %vm856, %v6245, %v6247
        %v6249 = vrot.slane %v6230, 3
        %v6250 = vsel %vm856, %v6247, %v6249
        %v6251 = vrot.slane %v6231, 3
        %v6252 = vsel %vm856, %v6249, %v6251
        %v6253 = vrot.slane %v6232, 3
        %v6254 = vsel %vm856, %v6251, %v6253
        %v6255 = vrot.slane %v6233, 3
        %v6256 = vsel %vm856, %v6253, %v6255
        %v6257 = vrot.slane %v6234, 3
        %v6258 = vsel %vm856, %v6255, %v6257
        %v6259 = vrot.slane %v6235, 3
        %v6260 = vsel %vm856, %v6257, %v6259
        %v6261 = vrot.slane %v6236, 3
        %v6262 = vsel %vm856, %v6259, %v6261
        %v6263 = vrot.slane %v6237, 3
        %v6264 = vsel %vm856, %v6261, %v6263
        %v6265 = vrot.slane %v6238, 3
        %v6266 = vsel %vm856, %v6263, %v6265
        %v6267 = vrot.slane %v6239, 3
        %v6268 = vsel %vm856, %v6265, %v6267
        %v6269 = vrot.slane %v6240, 3
        %v6270 = vsel %vm856, %v6267, %v6269
        %v6271 = vrot.slane %v6241, 3
        %v6272 = vsel %vm856, %v6269, %v6271
        %v6273 = vrot.slane %v6242, 3
        %v6274 = vsel %vm856, %v6271, %v6273
        %v6275 = vrot.slane %v6243, 3
        %v6276 = vsel %vm856, %v6273, %v6275
        %v6309 = vunpack.c.l.b16 %v6145
        %v6310 = vunpack.c.l.b16 %v6146
        %v6311 = vunpack.c.l.b16 %v6147
        %v6312 = vunpack.c.l.b16 %v6148
        %v6313 = vunpack.c.l.b16 %v6149
        %v6314 = vunpack.c.l.b16 %v6150
        %v6315 = vunpack.c.l.b16 %v6151
        %v6316 = vunpack.c.l.b16 %v6152
        %v6317 = vunpack.c.l.b16 %v6153
        %v6318 = vunpack.c.l.b16 %v6154
        %v6319 = vunpack.c.l.b16 %v6155
        %v6320 = vunpack.c.l.b16 %v6156
        %v6321 = vunpack.c.l.b16 %v6157
        %v6322 = vunpack.c.l.b16 %v6158
        %v6323 = vunpack.c.l.b16 %v6159
        %v6324 = vunpack.c.l.b16 %v6160
        %v6325 = vpack.c.b16 %v6310, %v6309
        %v6326 = vpack.c.b16 %v6312, %v6311
        %v6327 = vpack.c.b16 %v6314, %v6313
        %v6328 = vpack.c.b16 %v6316, %v6315
        %v6329 = vpack.c.b16 %v6318, %v6317
        %v6330 = vpack.c.b16 %v6320, %v6319
        %v6331 = vpack.c.b16 %v6322, %v6321
        %v6332 = vpack.c.b16 %v6324, %v6323
        %6341 = vmatpush.bf16.msra.mxu0 %v6332
        %6342 = vmatpush.bf16.msra.mxu0 %v6331
        %6343 = vmatpush.bf16.msra.mxu0 %v6330
        %6344 = vmatpush.bf16.msra.mxu0 %v6329
        %6345 = vmatpush.bf16.msra.mxu0 %v6328
        %6346 = vmatpush.bf16.msra.mxu0 %v6327
        %6347 = vmatpush.bf16.msra.mxu0 %v6326
        %6348 = vmatpush.bf16.msra.mxu0 %v6325
        %6349 = vmatmul.bf16.gmra.mxu0 %v6246
        %v6350 = vpop.f32.mrf.mxu0
        %v6351 = vadd.f32 0.0, %v6350
        %v6352 = vpop.f32.mrf.mxu0
        %v6353 = vadd.f32 0.0, %v6352
        %6354 = vmatmul.bf16.gmra.mxu0 %v6248
        %v6355 = vpop.f32.mrf.mxu0
        %v6356 = vadd.f32 0.0, %v6355
        %v6357 = vpop.f32.mrf.mxu0
        %v6358 = vadd.f32 0.0, %v6357
        %6359 = vmatmul.bf16.gmra.mxu0 %v6250
        %v6360 = vpop.f32.mrf.mxu0
        %v6361 = vadd.f32 0.0, %v6360
        %v6362 = vpop.f32.mrf.mxu0
        %v6363 = vadd.f32 0.0, %v6362
        %6364 = vmatmul.bf16.gmra.mxu0 %v6252
        %v6365 = vpop.f32.mrf.mxu0
        %v6366 = vadd.f32 0.0, %v6365
        %v6367 = vpop.f32.mrf.mxu0
        %v6368 = vadd.f32 0.0, %v6367
        %6369 = vmatmul.bf16.gmra.mxu0 %v6254
        %v6370 = vpop.f32.mrf.mxu0
        %v6371 = vadd.f32 0.0, %v6370
        %v6372 = vpop.f32.mrf.mxu0
        %v6373 = vadd.f32 0.0, %v6372
        %6374 = vmatmul.bf16.gmra.mxu0 %v6256
        %v6375 = vpop.f32.mrf.mxu0
        %v6376 = vadd.f32 0.0, %v6375
        %v6377 = vpop.f32.mrf.mxu0
        %v6378 = vadd.f32 0.0, %v6377
        %6379 = vmatmul.bf16.gmra.mxu0 %v6258
        %v6380 = vpop.f32.mrf.mxu0
        %v6381 = vadd.f32 0.0, %v6380
        %v6382 = vpop.f32.mrf.mxu0
        %v6383 = vadd.f32 0.0, %v6382
        %6384 = vmatmul.bf16.gmra.mxu0 %v6260
        %v6385 = vpop.f32.mrf.mxu0
        %v6386 = vadd.f32 0.0, %v6385
        %v6387 = vpop.f32.mrf.mxu0
        %v6388 = vadd.f32 0.0, %v6387
        %6389 = vmatmul.bf16.gmra.mxu0 %v6262
        %v6390 = vpop.f32.mrf.mxu0
        %v6391 = vadd.f32 0.0, %v6390
        %v6392 = vpop.f32.mrf.mxu0
        %v6393 = vadd.f32 0.0, %v6392
        %6394 = vmatmul.bf16.gmra.mxu0 %v6264
        %v6395 = vpop.f32.mrf.mxu0
        %v6396 = vadd.f32 0.0, %v6395
        %v6397 = vpop.f32.mrf.mxu0
        %v6398 = vadd.f32 0.0, %v6397
        %6399 = vmatmul.bf16.gmra.mxu0 %v6266
        %v6400 = vpop.f32.mrf.mxu0
        %v6401 = vadd.f32 0.0, %v6400
        %v6402 = vpop.f32.mrf.mxu0
        %v6403 = vadd.f32 0.0, %v6402
        %6404 = vmatmul.bf16.gmra.mxu0 %v6268
        %v6405 = vpop.f32.mrf.mxu0
        %v6406 = vadd.f32 0.0, %v6405
        %v6407 = vpop.f32.mrf.mxu0
        %v6408 = vadd.f32 0.0, %v6407
        %6409 = vmatmul.bf16.gmra.mxu0 %v6270
        %v6410 = vpop.f32.mrf.mxu0
        %v6411 = vadd.f32 0.0, %v6410
        %v6412 = vpop.f32.mrf.mxu0
        %v6413 = vadd.f32 0.0, %v6412
        %6414 = vmatmul.bf16.gmra.mxu0 %v6272
        %v6415 = vpop.f32.mrf.mxu0
        %v6416 = vadd.f32 0.0, %v6415
        %v6417 = vpop.f32.mrf.mxu0
        %v6418 = vadd.f32 0.0, %v6417
        %6419 = vmatmul.bf16.gmra.mxu0 %v6274
        %v6420 = vpop.f32.mrf.mxu0
        %v6421 = vadd.f32 0.0, %v6420
        %v6422 = vpop.f32.mrf.mxu0
        %v6423 = vadd.f32 0.0, %v6422
        %6424 = vmatmul.bf16.gmra.mxu0 %v6276
        %v6425 = vpop.f32.mrf.mxu0
        %v6426 = vadd.f32 0.0, %v6425
        %v6427 = vpop.f32.mrf.mxu0
        %v6428 = vadd.f32 0.0, %v6427
        %6429 = vdwg.mxu0
        %v6444 = vunpack.c.l.b16 %v6076
        %v6445 = vunpack.c.l.b16 %v6077
        %v6446 = vunpack.c.l.b16 %v6078
        %v6447 = vunpack.c.l.b16 %v6079
        %v6448 = vunpack.c.l.b16 %v6080
        %v6449 = vunpack.c.l.b16 %v6081
        %v6450 = vunpack.c.l.b16 %v6082
        %v6451 = vunpack.c.l.b16 %v6083
        %v6452 = vunpack.c.l.b16 %v6084
        %v6453 = vunpack.c.l.b16 %v6085
        %v6454 = vunpack.c.l.b16 %v6086
        %v6455 = vunpack.c.l.b16 %v6087
        %v6456 = vunpack.c.l.b16 %v6088
        %v6457 = vunpack.c.l.b16 %v6108
        %v6458 = vpack.c.b16 %v6445, %v6444
        %v6459 = vpack.c.b16 %v6447, %v6446
        %v6460 = vpack.c.b16 %v6449, %v6448
        %v6461 = vpack.c.b16 %v6451, %v6450
        %v6462 = vpack.c.b16 %v6453, %v6452
        %v6463 = vpack.c.b16 %v6455, %v6454
        %v6464 = vpack.c.b16 %v6195, %v6456
        %v6465 = vpack.c.b16 %v6457, %v6457
        %v6466 = vrot.slane %v6458, 3
        %v6467 = vrot.slane %v6459, 3
        %v6468 = vsel %vm856, %v6466, %v6467
        %v6469 = vrot.slane %v6460, 3
        %v6470 = vsel %vm856, %v6467, %v6469
        %v6471 = vrot.slane %v6461, 3
        %v6472 = vsel %vm856, %v6469, %v6471
        %v6473 = vrot.slane %v6462, 3
        %v6474 = vsel %vm856, %v6471, %v6473
        %v6475 = vrot.slane %v6463, 3
        %v6476 = vsel %vm856, %v6473, %v6475
        %v6477 = vrot.slane %v6464, 3
        %v6478 = vsel %vm856, %v6475, %v6477
        %v6479 = vsel %vm856, %v6477, %v6245
        %v6480 = vrot.slane %v6465, 3
        %v6481 = vsel %vm856, %v6261, %v6480
        %v6506 = vunpack.c.l.b16 %v6112
        %v6507 = vunpack.c.l.b16 %v6113
        %v6508 = vunpack.c.l.b16 %v6114
        %v6509 = vunpack.c.l.b16 %v6115
        %v6510 = vunpack.c.l.b16 %v6116
        %v6511 = vunpack.c.l.b16 %v6117
        %v6512 = vunpack.c.l.b16 %v6118
        %v6513 = vunpack.c.l.b16 %v6119
        %v6514 = vunpack.c.l.b16 %v6120
        %v6515 = vunpack.c.l.b16 %v6121
        %v6516 = vunpack.c.l.b16 %v6122
        %v6517 = vunpack.c.l.b16 %v6123
        %v6518 = vunpack.c.l.b16 %v6124
        %v6519 = vunpack.c.l.b16 %v6125
        %v6520 = vunpack.c.l.b16 %v6126
        %v6521 = vunpack.c.l.b16 %v6127
        %v6522 = vpack.c.b16 %v6507, %v6506
        %v6523 = vpack.c.b16 %v6509, %v6508
        %v6524 = vpack.c.b16 %v6511, %v6510
        %v6525 = vpack.c.b16 %v6513, %v6512
        %v6526 = vpack.c.b16 %v6515, %v6514
        %v6527 = vpack.c.b16 %v6517, %v6516
        %v6528 = vpack.c.b16 %v6519, %v6518
        %v6529 = vpack.c.b16 %v6521, %v6520
        %6538 = vmatpush.bf16.msra.mxu0 %v6529
        %6539 = vmatpush.bf16.msra.mxu0 %v6528
        %6540 = vmatpush.bf16.msra.mxu0 %v6527
        %6541 = vmatpush.bf16.msra.mxu0 %v6526
        %6542 = vmatpush.bf16.msra.mxu0 %v6525
        %6543 = vmatpush.bf16.msra.mxu0 %v6524
        %6544 = vmatpush.bf16.msra.mxu0 %v6523
        %6545 = vmatpush.bf16.msra.mxu0 %v6522
        %6546 = vmatmul.bf16.gmra.mxu0 %v6468
        %v6547 = vpop.f32.mrf.mxu0
        %v6548 = vadd.f32 %v6351, %v6547
        %v6549 = vpop.f32.mrf.mxu0
        %v6550 = vadd.f32 %v6353, %v6549
        %6551 = vmatmul.bf16.gmra.mxu0 %v6470
        %v6552 = vpop.f32.mrf.mxu0
        %v6553 = vadd.f32 %v6356, %v6552
        %v6554 = vpop.f32.mrf.mxu0
        %v6555 = vadd.f32 %v6358, %v6554
        %6556 = vmatmul.bf16.gmra.mxu0 %v6472
        %v6557 = vpop.f32.mrf.mxu0
        %v6558 = vadd.f32 %v6361, %v6557
        %v6559 = vpop.f32.mrf.mxu0
        %v6560 = vadd.f32 %v6363, %v6559
        %6561 = vmatmul.bf16.gmra.mxu0 %v6474
        %v6562 = vpop.f32.mrf.mxu0
        %v6563 = vadd.f32 %v6366, %v6562
        %v6564 = vpop.f32.mrf.mxu0
        %v6565 = vadd.f32 %v6368, %v6564
        %6566 = vmatmul.bf16.gmra.mxu0 %v6476
        %v6567 = vpop.f32.mrf.mxu0
        %v6568 = vadd.f32 %v6371, %v6567
        %v6569 = vpop.f32.mrf.mxu0
        %v6570 = vadd.f32 %v6373, %v6569
        %6571 = vmatmul.bf16.gmra.mxu0 %v6478
        %v6572 = vpop.f32.mrf.mxu0
        %v6573 = vadd.f32 %v6376, %v6572
        %v6574 = vpop.f32.mrf.mxu0
        %v6575 = vadd.f32 %v6378, %v6574
        %6576 = vmatmul.bf16.gmra.mxu0 %v6479
        %v6577 = vpop.f32.mrf.mxu0
        %v6578 = vadd.f32 %v6381, %v6577
        %v6579 = vpop.f32.mrf.mxu0
        %v6580 = vadd.f32 %v6383, %v6579
        %6581 = vmatmul.bf16.gmra.mxu0 %v6248
        %v6582 = vpop.f32.mrf.mxu0
        %v6583 = vadd.f32 %v6386, %v6582
        %v6584 = vpop.f32.mrf.mxu0
        %v6585 = vadd.f32 %v6388, %v6584
        %6586 = vmatmul.bf16.gmra.mxu0 %v6250
        %v6587 = vpop.f32.mrf.mxu0
        %v6588 = vadd.f32 %v6391, %v6587
        %v6589 = vpop.f32.mrf.mxu0
        %v6590 = vadd.f32 %v6393, %v6589
        %6591 = vmatmul.bf16.gmra.mxu0 %v6252
        %v6592 = vpop.f32.mrf.mxu0
        %v6593 = vadd.f32 %v6396, %v6592
        %v6594 = vpop.f32.mrf.mxu0
        %v6595 = vadd.f32 %v6398, %v6594
        %6596 = vmatmul.bf16.gmra.mxu0 %v6254
        %v6597 = vpop.f32.mrf.mxu0
        %v6598 = vadd.f32 %v6401, %v6597
        %v6599 = vpop.f32.mrf.mxu0
        %v6600 = vadd.f32 %v6403, %v6599
        %6601 = vmatmul.bf16.gmra.mxu0 %v6256
        %v6602 = vpop.f32.mrf.mxu0
        %v6603 = vadd.f32 %v6406, %v6602
        %v6604 = vpop.f32.mrf.mxu0
        %v6605 = vadd.f32 %v6408, %v6604
        %6606 = vmatmul.bf16.gmra.mxu0 %v6258
        %v6607 = vpop.f32.mrf.mxu0
        %v6608 = vadd.f32 %v6411, %v6607
        %v6609 = vpop.f32.mrf.mxu0
        %v6610 = vadd.f32 %v6413, %v6609
        %6611 = vmatmul.bf16.gmra.mxu0 %v6260
        %v6612 = vpop.f32.mrf.mxu0
        %v6613 = vadd.f32 %v6416, %v6612
        %v6614 = vpop.f32.mrf.mxu0
        %v6615 = vadd.f32 %v6418, %v6614
        %6616 = vmatmul.bf16.gmra.mxu0 %v6262
        %v6617 = vpop.f32.mrf.mxu0
        %v6618 = vadd.f32 %v6421, %v6617
        %v6619 = vpop.f32.mrf.mxu0
        %v6620 = vadd.f32 %v6423, %v6619
        %6621 = vmatmul.bf16.gmra.mxu0 %v6481
        %v6622 = vpop.f32.mrf.mxu0
        %v6623 = vadd.f32 %v6426, %v6622
        %v6624 = vpop.f32.mrf.mxu0
        %v6625 = vadd.f32 %v6428, %v6624
        %6626 = vdwg.mxu0
        %v6627 = vld [vmem:[#allocation2 + $0xd0] sm:$0x8]
        %v6628 = vld [vmem:[#allocation2 + $0xd4] sm:$0xf]
        %v6629 = vld [vmem:[#allocation2 + $0xd8] sm:$0xf]
        %v6630 = vld [vmem:[#allocation2 + $0xdc] sm:$0xf]
        %v6631 = vld [vmem:[#allocation2 + $0xe0] sm:$0xf]
        %v6632 = vld [vmem:[#allocation2 + $0xe4] sm:$0xf]
        %v6633 = vld [vmem:[#allocation2 + $0xe8] sm:$0xf]
        %v6634 = vld [vmem:[#allocation2 + $0xec] sm:$0xf]
        %v6635 = vld [vmem:[#allocation2 + $0xf0] sm:$0xf]
        %v6636 = vld [vmem:[#allocation2 + $0xf4] sm:$0xf]
        %v6637 = vld [vmem:[#allocation2 + $0xf8] sm:$0xf]
        %v6638 = vld [vmem:[#allocation2 + $0xfc] sm:$0xf]
        %v6639 = vld [vmem:[#allocation2 + $0x100] sm:$0xf]
        %v6640 = vld [vmem:[#allocation2 + $0x104] sm:$0xf]
        %v6641 = vld [vmem:[#allocation2 + $0x108] sm:$0xf]
        %v6642 = vld [vmem:[#allocation2 + $0x10c] sm:$0xf]
        %v6643 = vld [vmem:[#allocation2 + $0x110] sm:$0xf]
        %v6644 = vld [vmem:[#allocation2 + $0x114] sm:$0xf]
        %v6645 = vld [vmem:[#allocation2 + $0x118] sm:$0xf]
        %v6646 = vld [vmem:[#allocation2 + $0x11c] sm:$0xf]
        %v6647 = vld [vmem:[#allocation2 + $0x120] sm:$0xf]
        %v6648 = vld [vmem:[#allocation2 + $0x124] sm:$0xf]
        %v6649 = vld [vmem:[#allocation2 + $0x128] sm:$0xf]
        %v6650 = vld [vmem:[#allocation2 + $0x12c] sm:$0xf]
        %v6651 = vld [vmem:[#allocation2 + $0x130] sm:$0xf]
        %v6652 = vld [vmem:[#allocation2 + $0x134] sm:$0xf]
        %v6653 = vld [vmem:[#allocation2 + $0x138] sm:$0xf]
        %v6654 = vld [vmem:[#allocation2 + $0x13c] sm:$0xf]
        %v6655 = vld [vmem:[#allocation2 + $0x140] sm:$0xf]
        %v6656 = vld [vmem:[#allocation2 + $0x144] sm:$0xf]
        %v6657 = vld [vmem:[#allocation2 + $0x148] sm:$0xf]
        %v6658 = vld [vmem:[#allocation2 + $0x14c] sm:$0xf]
        %v6659 = vld [vmem:[#allocation2 + $0x150] sm:$0x7]
        %s6660 = sadd.s32 %s701, 576
        %s6661 = smul.addr %s6660, 4
        %s6662 = scalar_lea.vmem [#allocation4], %s6661
        %v6663 = vld [vmem:[%s6662] sm:$0xf]
        %v6664 = vld [vmem:[%s6662 + $0x4] sm:$0xf]
        %v6665 = vld [vmem:[%s6662 + $0x8] sm:$0xf]
        %v6666 = vld [vmem:[%s6662 + $0xc] sm:$0xf]
        %v6667 = vld [vmem:[%s6662 + $0x10] sm:$0xf]
        %v6668 = vld [vmem:[%s6662 + $0x14] sm:$0xf]
        %v6669 = vld [vmem:[%s6662 + $0x18] sm:$0xf]
        %v6670 = vld [vmem:[%s6662 + $0x1c] sm:$0xf]
        %v6671 = vld [vmem:[%s6662 + $0x20] sm:$0xf]
        %v6672 = vld [vmem:[%s6662 + $0x24] sm:$0xf]
        %v6673 = vld [vmem:[%s6662 + $0x28] sm:$0xf]
        %v6674 = vld [vmem:[%s6662 + $0x2c] sm:$0xf]
        %v6675 = vld [vmem:[%s6662 + $0x30] sm:$0xf]
        %v6676 = vld [vmem:[%s6662 + $0x34] sm:$0xf]
        %v6677 = vld [vmem:[%s6662 + $0x38] sm:$0xf]
        %v6678 = vld [vmem:[%s6662 + $0x3c] sm:$0xf]
        %v6712 = vunpack.c.l.b16 %v6627
        %v6713 = vunpack.c.l.b16 %v6628
        %v6714 = vunpack.c.l.b16 %v6629
        %v6715 = vunpack.c.l.b16 %v6630
        %v6716 = vunpack.c.l.b16 %v6631
        %v6717 = vunpack.c.l.b16 %v6632
        %v6718 = vunpack.c.l.b16 %v6633
        %v6719 = vunpack.c.l.b16 %v6634
        %v6720 = vunpack.c.l.b16 %v6635
        %v6721 = vunpack.c.l.b16 %v6636
        %v6722 = vunpack.c.l.b16 %v6637
        %v6723 = vunpack.c.l.b16 %v6638
        %v6724 = vunpack.c.l.b16 %v6639
        %v6725 = vunpack.c.l.b16 %v6640
        %v6726 = vunpack.c.l.b16 %v6641
        %v6727 = vunpack.c.l.b16 %v6642
        %v6728 = vunpack.c.l.b16 %v6643
        %v6729 = vunpack.c.l.b16 %v6644
        %v6730 = vunpack.c.l.b16 %v6645
        %v6731 = vunpack.c.l.b16 %v6646
        %v6732 = vunpack.c.l.b16 %v6647
        %v6733 = vunpack.c.l.b16 %v6648
        %v6734 = vunpack.c.l.b16 %v6649
        %v6735 = vunpack.c.l.b16 %v6650
        %v6736 = vunpack.c.l.b16 %v6651
        %v6737 = vunpack.c.l.b16 %v6652
        %v6738 = vunpack.c.l.b16 %v6653
        %v6739 = vunpack.c.l.b16 %v6654
        %v6740 = vunpack.c.l.b16 %v6655
        %v6741 = vunpack.c.l.b16 %v6656
        %v6742 = vunpack.c.l.b16 %v6657
        %v6743 = vunpack.c.l.b16 %v6658
        %v6744 = vunpack.c.l.b16 %v6659
        %v6745 = vpack.c.b16 %v6713, %v6712
        %v6746 = vpack.c.b16 %v6715, %v6714
        %v6747 = vpack.c.b16 %v6717, %v6716
        %v6748 = vpack.c.b16 %v6719, %v6718
        %v6749 = vpack.c.b16 %v6721, %v6720
        %v6750 = vpack.c.b16 %v6723, %v6722
        %v6751 = vpack.c.b16 %v6725, %v6724
        %v6752 = vpack.c.b16 %v6727, %v6726
        %v6753 = vpack.c.b16 %v6729, %v6728
        %v6754 = vpack.c.b16 %v6731, %v6730
        %v6755 = vpack.c.b16 %v6733, %v6732
        %v6756 = vpack.c.b16 %v6735, %v6734
        %v6757 = vpack.c.b16 %v6737, %v6736
        %v6758 = vpack.c.b16 %v6739, %v6738
        %v6759 = vpack.c.b16 %v6741, %v6740
        %v6760 = vpack.c.b16 %v6743, %v6742
        %v6761 = vpack.c.b16 %v6744, %v6744
        %v6762 = vrot.slane %v6745, 3
        %v6763 = vrot.slane %v6746, 3
        %v6764 = vsel %vm856, %v6762, %v6763
        %v6765 = vrot.slane %v6747, 3
        %v6766 = vsel %vm856, %v6763, %v6765
        %v6767 = vrot.slane %v6748, 3
        %v6768 = vsel %vm856, %v6765, %v6767
        %v6769 = vrot.slane %v6749, 3
        %v6770 = vsel %vm856, %v6767, %v6769
        %v6771 = vrot.slane %v6750, 3
        %v6772 = vsel %vm856, %v6769, %v6771
        %v6773 = vrot.slane %v6751, 3
        %v6774 = vsel %vm856, %v6771, %v6773
        %v6775 = vrot.slane %v6752, 3
        %v6776 = vsel %vm856, %v6773, %v6775
        %v6777 = vrot.slane %v6753, 3
        %v6778 = vsel %vm856, %v6775, %v6777
        %v6779 = vrot.slane %v6754, 3
        %v6780 = vsel %vm856, %v6777, %v6779
        %v6781 = vrot.slane %v6755, 3
        %v6782 = vsel %vm856, %v6779, %v6781
        %v6783 = vrot.slane %v6756, 3
        %v6784 = vsel %vm856, %v6781, %v6783
        %v6785 = vrot.slane %v6757, 3
        %v6786 = vsel %vm856, %v6783, %v6785
        %v6787 = vrot.slane %v6758, 3
        %v6788 = vsel %vm856, %v6785, %v6787
        %v6789 = vrot.slane %v6759, 3
        %v6790 = vsel %vm856, %v6787, %v6789
        %v6791 = vrot.slane %v6760, 3
        %v6792 = vsel %vm856, %v6789, %v6791
        %v6793 = vrot.slane %v6761, 3
        %v6794 = vsel %vm856, %v6791, %v6793
        %v6827 = vunpack.c.l.b16 %v6663
        %v6828 = vunpack.c.l.b16 %v6664
        %v6829 = vunpack.c.l.b16 %v6665
        %v6830 = vunpack.c.l.b16 %v6666
        %v6831 = vunpack.c.l.b16 %v6667
        %v6832 = vunpack.c.l.b16 %v6668
        %v6833 = vunpack.c.l.b16 %v6669
        %v6834 = vunpack.c.l.b16 %v6670
        %v6835 = vunpack.c.l.b16 %v6671
        %v6836 = vunpack.c.l.b16 %v6672
        %v6837 = vunpack.c.l.b16 %v6673
        %v6838 = vunpack.c.l.b16 %v6674
        %v6839 = vunpack.c.l.b16 %v6675
        %v6840 = vunpack.c.l.b16 %v6676
        %v6841 = vunpack.c.l.b16 %v6677
        %v6842 = vunpack.c.l.b16 %v6678
        %v6843 = vpack.c.b16 %v6828, %v6827
        %v6844 = vpack.c.b16 %v6830, %v6829
        %v6845 = vpack.c.b16 %v6832, %v6831
        %v6846 = vpack.c.b16 %v6834, %v6833
        %v6847 = vpack.c.b16 %v6836, %v6835
        %v6848 = vpack.c.b16 %v6838, %v6837
        %v6849 = vpack.c.b16 %v6840, %v6839
        %v6850 = vpack.c.b16 %v6842, %v6841
        %6859 = vmatpush.bf16.msra.mxu0 %v6850
        %6860 = vmatpush.bf16.msra.mxu0 %v6849
        %6861 = vmatpush.bf16.msra.mxu0 %v6848
        %6862 = vmatpush.bf16.msra.mxu0 %v6847
        %6863 = vmatpush.bf16.msra.mxu0 %v6846
        %6864 = vmatpush.bf16.msra.mxu0 %v6845
        %6865 = vmatpush.bf16.msra.mxu0 %v6844
        %6866 = vmatpush.bf16.msra.mxu0 %v6843
        %6867 = vmatmul.bf16.gmra.mxu0 %v6764
        %v6868 = vpop.f32.mrf.mxu0
        %v6869 = vadd.f32 0.0, %v6868
        %v6870 = vpop.f32.mrf.mxu0
        %v6871 = vadd.f32 0.0, %v6870
        %6872 = vmatmul.bf16.gmra.mxu0 %v6766
        %v6873 = vpop.f32.mrf.mxu0
        %v6874 = vadd.f32 0.0, %v6873
        %v6875 = vpop.f32.mrf.mxu0
        %v6876 = vadd.f32 0.0, %v6875
        %6877 = vmatmul.bf16.gmra.mxu0 %v6768
        %v6878 = vpop.f32.mrf.mxu0
        %v6879 = vadd.f32 0.0, %v6878
        %v6880 = vpop.f32.mrf.mxu0
        %v6881 = vadd.f32 0.0, %v6880
        %6882 = vmatmul.bf16.gmra.mxu0 %v6770
        %v6883 = vpop.f32.mrf.mxu0
        %v6884 = vadd.f32 0.0, %v6883
        %v6885 = vpop.f32.mrf.mxu0
        %v6886 = vadd.f32 0.0, %v6885
        %6887 = vmatmul.bf16.gmra.mxu0 %v6772
        %v6888 = vpop.f32.mrf.mxu0
        %v6889 = vadd.f32 0.0, %v6888
        %v6890 = vpop.f32.mrf.mxu0
        %v6891 = vadd.f32 0.0, %v6890
        %6892 = vmatmul.bf16.gmra.mxu0 %v6774
        %v6893 = vpop.f32.mrf.mxu0
        %v6894 = vadd.f32 0.0, %v6893
        %v6895 = vpop.f32.mrf.mxu0
        %v6896 = vadd.f32 0.0, %v6895
        %6897 = vmatmul.bf16.gmra.mxu0 %v6776
        %v6898 = vpop.f32.mrf.mxu0
        %v6899 = vadd.f32 0.0, %v6898
        %v6900 = vpop.f32.mrf.mxu0
        %v6901 = vadd.f32 0.0, %v6900
        %6902 = vmatmul.bf16.gmra.mxu0 %v6778
        %v6903 = vpop.f32.mrf.mxu0
        %v6904 = vadd.f32 0.0, %v6903
        %v6905 = vpop.f32.mrf.mxu0
        %v6906 = vadd.f32 0.0, %v6905
        %6907 = vmatmul.bf16.gmra.mxu0 %v6780
        %v6908 = vpop.f32.mrf.mxu0
        %v6909 = vadd.f32 0.0, %v6908
        %v6910 = vpop.f32.mrf.mxu0
        %v6911 = vadd.f32 0.0, %v6910
        %6912 = vmatmul.bf16.gmra.mxu0 %v6782
        %v6913 = vpop.f32.mrf.mxu0
        %v6914 = vadd.f32 0.0, %v6913
        %v6915 = vpop.f32.mrf.mxu0
        %v6916 = vadd.f32 0.0, %v6915
        %6917 = vmatmul.bf16.gmra.mxu0 %v6784
        %v6918 = vpop.f32.mrf.mxu0
        %v6919 = vadd.f32 0.0, %v6918
        %v6920 = vpop.f32.mrf.mxu0
        %v6921 = vadd.f32 0.0, %v6920
        %6922 = vmatmul.bf16.gmra.mxu0 %v6786
        %v6923 = vpop.f32.mrf.mxu0
        %v6924 = vadd.f32 0.0, %v6923
        %v6925 = vpop.f32.mrf.mxu0
        %v6926 = vadd.f32 0.0, %v6925
        %6927 = vmatmul.bf16.gmra.mxu0 %v6788
        %v6928 = vpop.f32.mrf.mxu0
        %v6929 = vadd.f32 0.0, %v6928
        %v6930 = vpop.f32.mrf.mxu0
        %v6931 = vadd.f32 0.0, %v6930
        %6932 = vmatmul.bf16.gmra.mxu0 %v6790
        %v6933 = vpop.f32.mrf.mxu0
        %v6934 = vadd.f32 0.0, %v6933
        %v6935 = vpop.f32.mrf.mxu0
        %v6936 = vadd.f32 0.0, %v6935
        %6937 = vmatmul.bf16.gmra.mxu0 %v6792
        %v6938 = vpop.f32.mrf.mxu0
        %v6939 = vadd.f32 0.0, %v6938
        %v6940 = vpop.f32.mrf.mxu0
        %v6941 = vadd.f32 0.0, %v6940
        %6942 = vmatmul.bf16.gmra.mxu0 %v6794
        %v6943 = vpop.f32.mrf.mxu0
        %v6944 = vadd.f32 0.0, %v6943
        %v6945 = vpop.f32.mrf.mxu0
        %v6946 = vadd.f32 0.0, %v6945
        %6947 = vdwg.mxu0
        %v6948 = vadd.f32 %v6548, %v6869
        %v6949 = vadd.f32 %v6550, %v6871
        %v6950 = vadd.f32 %v6553, %v6874
        %v6951 = vadd.f32 %v6555, %v6876
        %v6952 = vadd.f32 %v6558, %v6879
        %v6953 = vadd.f32 %v6560, %v6881
        %v6954 = vadd.f32 %v6563, %v6884
        %v6955 = vadd.f32 %v6565, %v6886
        %v6956 = vadd.f32 %v6568, %v6889
        %v6957 = vadd.f32 %v6570, %v6891
        %v6958 = vadd.f32 %v6573, %v6894
        %v6959 = vadd.f32 %v6575, %v6896
        %v6960 = vadd.f32 %v6578, %v6899
        %v6961 = vadd.f32 %v6580, %v6901
        %v6962 = vadd.f32 %v6583, %v6904
        %v6963 = vadd.f32 %v6585, %v6906
        %v6964 = vadd.f32 %v6588, %v6909
        %v6965 = vadd.f32 %v6590, %v6911
        %v6966 = vadd.f32 %v6593, %v6914
        %v6967 = vadd.f32 %v6595, %v6916
        %v6968 = vadd.f32 %v6598, %v6919
        %v6969 = vadd.f32 %v6600, %v6921
        %v6970 = vadd.f32 %v6603, %v6924
        %v6971 = vadd.f32 %v6605, %v6926
        %v6972 = vadd.f32 %v6608, %v6929
        %v6973 = vadd.f32 %v6610, %v6931
        %v6974 = vadd.f32 %v6613, %v6934
        %v6975 = vadd.f32 %v6615, %v6936
        %v6976 = vadd.f32 %v6618, %v6939
        %v6977 = vadd.f32 %v6620, %v6941
        %v6978 = vadd.f32 %v6623, %v6944
        %v6979 = vadd.f32 %v6625, %v6946
        %s6980 = scalar_lea.vmem [#allocation7], 768
        %v6981 = vld [vmem:[%s6980] sm:$0xff]
        %v6982 = vld [vmem:[%s6980 + $0x8] sm:$0xff]
        %v6983 = vld [vmem:[%s6980 + $0x10] sm:$0xff]
        %v6984 = vld [vmem:[%s6980 + $0x18] sm:$0xff]
        %v6985 = vld [vmem:[%s6980 + $0x20] sm:$0xff]
        %v6986 = vld [vmem:[%s6980 + $0x28] sm:$0xff]
        %v6987 = vld [vmem:[%s6980 + $0x30] sm:$0xff]
        %v6988 = vld [vmem:[%s6980 + $0x38] sm:$0xff]
        %v6989 = vld [vmem:[%s6980 + $0x40] sm:$0xff]
        %v6990 = vld [vmem:[%s6980 + $0x48] sm:$0xff]
        %v6991 = vld [vmem:[%s6980 + $0x50] sm:$0xff]
        %v6992 = vld [vmem:[%s6980 + $0x58] sm:$0xff]
        %v6993 = vld [vmem:[%s6980 + $0x60] sm:$0xff]
        %v6994 = vld [vmem:[%s6980 + $0x68] sm:$0xff]
        %v6995 = vld [vmem:[%s6980 + $0x70] sm:$0xff]
        %v6996 = vld [vmem:[%s6980 + $0x78] sm:$0xff]
        %v6997 = vld [vmem:[%s6980 + $0x80] sm:$0xff]
        %v6998 = vld [vmem:[%s6980 + $0x88] sm:$0xff]
        %v6999 = vld [vmem:[%s6980 + $0x90] sm:$0xff]
        %v7000 = vld [vmem:[%s6980 + $0x98] sm:$0xff]
        %v7001 = vld [vmem:[%s6980 + $0xa0] sm:$0xff]
        %v7002 = vld [vmem:[%s6980 + $0xa8] sm:$0xff]
        %v7003 = vld [vmem:[%s6980 + $0xb0] sm:$0xff]
        %v7004 = vld [vmem:[%s6980 + $0xb8] sm:$0xff]
        %v7005 = vld [vmem:[%s6980 + $0xc0] sm:$0xff]
        %v7006 = vld [vmem:[%s6980 + $0xc8] sm:$0xff]
        %v7007 = vld [vmem:[%s6980 + $0xd0] sm:$0xff]
        %v7008 = vld [vmem:[%s6980 + $0xd8] sm:$0xff]
        %v7009 = vld [vmem:[%s6980 + $0xe0] sm:$0xff]
        %v7010 = vld [vmem:[%s6980 + $0xe8] sm:$0xff]
        %v7011 = vld [vmem:[%s6980 + $0xf0] sm:$0xff]
        %v7012 = vld [vmem:[%s6980 + $0xf8] sm:$0xff]
        %7014 = vset.pattern.permute.xlu0 0
        %7015 = vperm.xlu0 %7014, %v6981
        %v7016 = vpop.permute.xlu0 %7015
        %7019 = vset.pattern.permute.xlu0 0
        %7020 = vperm.xlu0 %7019, %v6982
        %v7021 = vpop.permute.xlu0 %7020
        %7024 = vset.pattern.permute.xlu0 0
        %7025 = vperm.xlu0 %7024, %v6983
        %v7026 = vpop.permute.xlu0 %7025
        %7029 = vset.pattern.permute.xlu0 0
        %7030 = vperm.xlu0 %7029, %v6984
        %v7031 = vpop.permute.xlu0 %7030
        %7034 = vset.pattern.permute.xlu0 0
        %7035 = vperm.xlu0 %7034, %v6985
        %v7036 = vpop.permute.xlu0 %7035
        %7039 = vset.pattern.permute.xlu0 0
        %7040 = vperm.xlu0 %7039, %v6986
        %v7041 = vpop.permute.xlu0 %7040
        %7044 = vset.pattern.permute.xlu0 0
        %7045 = vperm.xlu0 %7044, %v6987
        %v7046 = vpop.permute.xlu0 %7045
        %7049 = vset.pattern.permute.xlu0 0
        %7050 = vperm.xlu0 %7049, %v6988
        %v7051 = vpop.permute.xlu0 %7050
        %7054 = vset.pattern.permute.xlu0 0
        %7055 = vperm.xlu0 %7054, %v6989
        %v7056 = vpop.permute.xlu0 %7055
        %7059 = vset.pattern.permute.xlu0 0
        %7060 = vperm.xlu0 %7059, %v6990
        %v7061 = vpop.permute.xlu0 %7060
        %7064 = vset.pattern.permute.xlu0 0
        %7065 = vperm.xlu0 %7064, %v6991
        %v7066 = vpop.permute.xlu0 %7065
        %7069 = vset.pattern.permute.xlu0 0
        %7070 = vperm.xlu0 %7069, %v6992
        %v7071 = vpop.permute.xlu0 %7070
        %7074 = vset.pattern.permute.xlu0 0
        %7075 = vperm.xlu0 %7074, %v6993
        %v7076 = vpop.permute.xlu0 %7075
        %7079 = vset.pattern.permute.xlu0 0
        %7080 = vperm.xlu0 %7079, %v6994
        %v7081 = vpop.permute.xlu0 %7080
        %7084 = vset.pattern.permute.xlu0 0
        %7085 = vperm.xlu0 %7084, %v6995
        %v7086 = vpop.permute.xlu0 %7085
        %7089 = vset.pattern.permute.xlu0 0
        %7090 = vperm.xlu0 %7089, %v6996
        %v7091 = vpop.permute.xlu0 %7090
        %7094 = vset.pattern.permute.xlu0 0
        %7095 = vperm.xlu0 %7094, %v6997
        %v7096 = vpop.permute.xlu0 %7095
        %7099 = vset.pattern.permute.xlu0 0
        %7100 = vperm.xlu0 %7099, %v6998
        %v7101 = vpop.permute.xlu0 %7100
        %7104 = vset.pattern.permute.xlu0 0
        %7105 = vperm.xlu0 %7104, %v6999
        %v7106 = vpop.permute.xlu0 %7105
        %7109 = vset.pattern.permute.xlu0 0
        %7110 = vperm.xlu0 %7109, %v7000
        %v7111 = vpop.permute.xlu0 %7110
        %7114 = vset.pattern.permute.xlu0 0
        %7115 = vperm.xlu0 %7114, %v7001
        %v7116 = vpop.permute.xlu0 %7115
        %7119 = vset.pattern.permute.xlu0 0
        %7120 = vperm.xlu0 %7119, %v7002
        %v7121 = vpop.permute.xlu0 %7120
        %7124 = vset.pattern.permute.xlu0 0
        %7125 = vperm.xlu0 %7124, %v7003
        %v7126 = vpop.permute.xlu0 %7125
        %7129 = vset.pattern.permute.xlu0 0
        %7130 = vperm.xlu0 %7129, %v7004
        %v7131 = vpop.permute.xlu0 %7130
        %7134 = vset.pattern.permute.xlu0 0
        %7135 = vperm.xlu0 %7134, %v7005
        %v7136 = vpop.permute.xlu0 %7135
        %7139 = vset.pattern.permute.xlu0 0
        %7140 = vperm.xlu0 %7139, %v7006
        %v7141 = vpop.permute.xlu0 %7140
        %7144 = vset.pattern.permute.xlu0 0
        %7145 = vperm.xlu0 %7144, %v7007
        %v7146 = vpop.permute.xlu0 %7145
        %7149 = vset.pattern.permute.xlu0 0
        %7150 = vperm.xlu0 %7149, %v7008
        %v7151 = vpop.permute.xlu0 %7150
        %7154 = vset.pattern.permute.xlu0 0
        %7155 = vperm.xlu0 %7154, %v7009
        %v7156 = vpop.permute.xlu0 %7155
        %7159 = vset.pattern.permute.xlu0 0
        %7160 = vperm.xlu0 %7159, %v7010
        %v7161 = vpop.permute.xlu0 %7160
        %7164 = vset.pattern.permute.xlu0 0
        %7165 = vperm.xlu0 %7164, %v7011
        %v7166 = vpop.permute.xlu0 %7165
        %7169 = vset.pattern.permute.xlu0 0
        %7170 = vperm.xlu0 %7169, %v7012
        %v7171 = vpop.permute.xlu0 %7170
        %v7173 = vmul.f32 %v6948, %v7016
        %v7174 = vmul.f32 %v6949, %v7021
        %v7175 = vmul.f32 %v6950, %v7026
        %v7176 = vmul.f32 %v6951, %v7031
        %v7177 = vmul.f32 %v6952, %v7036
        %v7178 = vmul.f32 %v6953, %v7041
        %v7179 = vmul.f32 %v6954, %v7046
        %v7180 = vmul.f32 %v6955, %v7051
        %v7181 = vmul.f32 %v6956, %v7056
        %v7182 = vmul.f32 %v6957, %v7061
        %v7183 = vmul.f32 %v6958, %v7066
        %v7184 = vmul.f32 %v6959, %v7071
        %v7185 = vmul.f32 %v6960, %v7076
        %v7186 = vmul.f32 %v6961, %v7081
        %v7187 = vmul.f32 %v6962, %v7086
        %v7188 = vmul.f32 %v6963, %v7091
        %v7189 = vmul.f32 %v6964, %v7096
        %v7190 = vmul.f32 %v6965, %v7101
        %v7191 = vmul.f32 %v6966, %v7106
        %v7192 = vmul.f32 %v6967, %v7111
        %v7193 = vmul.f32 %v6968, %v7116
        %v7194 = vmul.f32 %v6969, %v7121
        %v7195 = vmul.f32 %v6970, %v7126
        %v7196 = vmul.f32 %v6971, %v7131
        %v7197 = vmul.f32 %v6972, %v7136
        %v7198 = vmul.f32 %v6973, %v7141
        %v7199 = vmul.f32 %v6974, %v7146
        %v7200 = vmul.f32 %v6975, %v7151
        %v7201 = vmul.f32 %v6976, %v7156
        %v7202 = vmul.f32 %v6977, %v7161
        %v7203 = vmul.f32 %v6978, %v7166
        %v7204 = vmul.f32 %v6979, %v7171
        %v7205 = vadd.f32 %v6044, %v7173
        %v7206 = vadd.f32 %v6045, %v7174
        %v7207 = vadd.f32 %v6046, %v7175
        %v7208 = vadd.f32 %v6047, %v7176
        %v7209 = vadd.f32 %v6048, %v7177
        %v7210 = vadd.f32 %v6049, %v7178
        %v7211 = vadd.f32 %v6050, %v7179
        %v7212 = vadd.f32 %v6051, %v7180
        %v7213 = vadd.f32 %v6052, %v7181
        %v7214 = vadd.f32 %v6053, %v7182
        %v7215 = vadd.f32 %v6054, %v7183
        %v7216 = vadd.f32 %v6055, %v7184
        %v7217 = vadd.f32 %v6056, %v7185
        %v7218 = vadd.f32 %v6057, %v7186
        %v7219 = vadd.f32 %v6058, %v7187
        %v7220 = vadd.f32 %v6059, %v7188
        %v7221 = vadd.f32 %v6060, %v7189
        %v7222 = vadd.f32 %v6061, %v7190
        %v7223 = vadd.f32 %v6062, %v7191
        %v7224 = vadd.f32 %v6063, %v7192
        %v7225 = vadd.f32 %v6064, %v7193
        %v7226 = vadd.f32 %v6065, %v7194
        %v7227 = vadd.f32 %v6066, %v7195
        %v7228 = vadd.f32 %v6067, %v7196
        %v7229 = vadd.f32 %v6068, %v7197
        %v7230 = vadd.f32 %v6069, %v7198
        %v7231 = vadd.f32 %v6070, %v7199
        %v7232 = vadd.f32 %v6071, %v7200
        %v7233 = vadd.f32 %v6072, %v7201
        %v7234 = vadd.f32 %v6073, %v7202
        %v7235 = vadd.f32 %v6074, %v7203
        %v7236 = vadd.f32 %v6075, %v7204
        %v7237 = vld [vmem:[#allocation2 + $0x44] sm:$0xc]
        %v7238 = vld [vmem:[#allocation2 + $0x48] sm:$0xf]
        %v7239 = vld [vmem:[#allocation2 + $0x4c] sm:$0xf]
        %v7240 = vld [vmem:[#allocation2 + $0x50] sm:$0xf]
        %v7241 = vld [vmem:[#allocation2 + $0x54] sm:$0xf]
        %v7242 = vld [vmem:[#allocation2 + $0x58] sm:$0xf]
        %v7243 = vld [vmem:[#allocation2 + $0x5c] sm:$0xf]
        %v7244 = vld [vmem:[#allocation2 + $0x60] sm:$0xf]
        %v7245 = vld [vmem:[#allocation2 + $0x64] sm:$0xf]
        %v7246 = vld [vmem:[#allocation2 + $0x68] sm:$0xf]
        %v7247 = vld [vmem:[#allocation2 + $0x6c] sm:$0xf]
        %v7248 = vld [vmem:[#allocation2 + $0x70] sm:$0xf]
        %v7249 = vld [vmem:[#allocation2 + $0x74] sm:$0xf]
        %v7250 = vld [vmem:[#allocation2 + $0x78] sm:$0xf]
        %v7251 = vld [vmem:[#allocation2 + $0x7c] sm:$0xf]
        %v7252 = vld [vmem:[#allocation2 + $0x80] sm:$0xf]
        %v7253 = vld [vmem:[#allocation2 + $0x84] sm:$0xf]
        %v7254 = vld [vmem:[#allocation2 + $0x88] sm:$0xf]
        %v7255 = vld [vmem:[#allocation2 + $0x8c] sm:$0xf]
        %v7256 = vld [vmem:[#allocation2 + $0x90] sm:$0xf]
        %v7257 = vld [vmem:[#allocation2 + $0x94] sm:$0xf]
        %v7258 = vld [vmem:[#allocation2 + $0x98] sm:$0xf]
        %v7259 = vld [vmem:[#allocation2 + $0x9c] sm:$0xf]
        %v7260 = vld [vmem:[#allocation2 + $0xa0] sm:$0xf]
        %v7261 = vld [vmem:[#allocation2 + $0xa4] sm:$0xf]
        %v7262 = vld [vmem:[#allocation2 + $0xa8] sm:$0xf]
        %v7263 = vld [vmem:[#allocation2 + $0xac] sm:$0xf]
        %v7264 = vld [vmem:[#allocation2 + $0xb0] sm:$0xf]
        %v7265 = vld [vmem:[#allocation2 + $0xb4] sm:$0xf]
        %v7266 = vld [vmem:[#allocation2 + $0xb8] sm:$0xf]
        %v7267 = vld [vmem:[#allocation2 + $0xbc] sm:$0xf]
        %v7268 = vld [vmem:[#allocation2 + $0xc0] sm:$0xf]
        %v7269 = vld [vmem:[#allocation2 + $0xc4] sm:$0x3]
        %s7270 = sadd.s32 %s701, 160
        %s7271 = smul.addr %s7270, 4
        %s7272 = scalar_lea.vmem [#allocation4], %s7271
        %v7273 = vld [vmem:[%s7272] sm:$0xf]
        %v7274 = vld [vmem:[%s7272 + $0x4] sm:$0xf]
        %v7275 = vld [vmem:[%s7272 + $0x8] sm:$0xf]
        %v7276 = vld [vmem:[%s7272 + $0xc] sm:$0xf]
        %v7277 = vld [vmem:[%s7272 + $0x10] sm:$0xf]
        %v7278 = vld [vmem:[%s7272 + $0x14] sm:$0xf]
        %v7279 = vld [vmem:[%s7272 + $0x18] sm:$0xf]
        %v7280 = vld [vmem:[%s7272 + $0x1c] sm:$0xf]
        %v7281 = vld [vmem:[%s7272 + $0x20] sm:$0xf]
        %v7282 = vld [vmem:[%s7272 + $0x24] sm:$0xf]
        %v7283 = vld [vmem:[%s7272 + $0x28] sm:$0xf]
        %v7284 = vld [vmem:[%s7272 + $0x2c] sm:$0xf]
        %v7285 = vld [vmem:[%s7272 + $0x30] sm:$0xf]
        %v7286 = vld [vmem:[%s7272 + $0x34] sm:$0xf]
        %v7287 = vld [vmem:[%s7272 + $0x38] sm:$0xf]
        %v7288 = vld [vmem:[%s7272 + $0x3c] sm:$0xf]
        %v7289 = vld [vmem:[#allocation2 + $0xa4] sm:$0xc]
        %v7290 = vld [vmem:[#allocation2 + $0xc4] sm:$0xf]
        %v7291 = vld [vmem:[#allocation2 + $0xc8] sm:$0xf]
        %v7292 = vld [vmem:[#allocation2 + $0xcc] sm:$0xf]
        %v7293 = vld [vmem:[#allocation2 + $0xd0] sm:$0xf]
        %v7294 = vld [vmem:[#allocation2 + $0xd4] sm:$0xf]
        %v7295 = vld [vmem:[#allocation2 + $0xd8] sm:$0xf]
        %v7296 = vld [vmem:[#allocation2 + $0xdc] sm:$0xf]
        %v7297 = vld [vmem:[#allocation2 + $0xe0] sm:$0xf]
        %v7298 = vld [vmem:[#allocation2 + $0xe4] sm:$0xf]
        %v7299 = vld [vmem:[#allocation2 + $0xe8] sm:$0xf]
        %v7300 = vld [vmem:[#allocation2 + $0xec] sm:$0xf]
        %v7301 = vld [vmem:[#allocation2 + $0xf0] sm:$0xf]
        %v7302 = vld [vmem:[#allocation2 + $0xf4] sm:$0xf]
        %v7303 = vld [vmem:[#allocation2 + $0xf8] sm:$0xf]
        %v7304 = vld [vmem:[#allocation2 + $0xfc] sm:$0xf]
        %v7305 = vld [vmem:[#allocation2 + $0x100] sm:$0xf]
        %v7306 = vld [vmem:[#allocation2 + $0x104] sm:$0xf]
        %v7307 = vld [vmem:[#allocation2 + $0x108] sm:$0xf]
        %v7308 = vld [vmem:[#allocation2 + $0x10c] sm:$0xf]
        %v7309 = vld [vmem:[#allocation2 + $0x110] sm:$0xf]
        %v7310 = vld [vmem:[#allocation2 + $0x114] sm:$0xf]
        %v7311 = vld [vmem:[#allocation2 + $0x118] sm:$0xf]
        %v7312 = vld [vmem:[#allocation2 + $0x11c] sm:$0xf]
        %v7313 = vld [vmem:[#allocation2 + $0x120] sm:$0xf]
        %v7314 = vld [vmem:[#allocation2 + $0x124] sm:$0x3]
        %s7315 = sadd.s32 %s701, 448
        %s7316 = smul.addr %s7315, 4
        %s7317 = scalar_lea.vmem [#allocation4], %s7316
        %v7318 = vld [vmem:[%s7317] sm:$0xf]
        %v7319 = vld [vmem:[%s7317 + $0x4] sm:$0xf]
        %v7320 = vld [vmem:[%s7317 + $0x8] sm:$0xf]
        %v7321 = vld [vmem:[%s7317 + $0xc] sm:$0xf]
        %v7322 = vld [vmem:[%s7317 + $0x10] sm:$0xf]
        %v7323 = vld [vmem:[%s7317 + $0x14] sm:$0xf]
        %v7324 = vld [vmem:[%s7317 + $0x18] sm:$0xf]
        %v7325 = vld [vmem:[%s7317 + $0x1c] sm:$0xf]
        %v7326 = vld [vmem:[%s7317 + $0x20] sm:$0xf]
        %v7327 = vld [vmem:[%s7317 + $0x24] sm:$0xf]
        %v7328 = vld [vmem:[%s7317 + $0x28] sm:$0xf]
        %v7329 = vld [vmem:[%s7317 + $0x2c] sm:$0xf]
        %v7330 = vld [vmem:[%s7317 + $0x30] sm:$0xf]
        %v7331 = vld [vmem:[%s7317 + $0x34] sm:$0xf]
        %v7332 = vld [vmem:[%s7317 + $0x38] sm:$0xf]
        %v7333 = vld [vmem:[%s7317 + $0x3c] sm:$0xf]
        %v7367 = vunpack.c.l.b16 %v7289
        %v7368 = vunpack.c.l.b16 %v7262
        %v7369 = vunpack.c.l.b16 %v7263
        %v7370 = vunpack.c.l.b16 %v7264
        %v7371 = vunpack.c.l.b16 %v7265
        %v7372 = vunpack.c.l.b16 %v7266
        %v7373 = vunpack.c.l.b16 %v7267
        %v7374 = vunpack.c.l.b16 %v7268
        %v7375 = vunpack.c.l.b16 %v7290
        %v7376 = vunpack.c.l.b16 %v7291
        %v7377 = vunpack.c.l.b16 %v7292
        %v7378 = vunpack.c.l.b16 %v7293
        %v7379 = vunpack.c.l.b16 %v7294
        %v7380 = vunpack.c.l.b16 %v7295
        %v7381 = vunpack.c.l.b16 %v7296
        %v7382 = vunpack.c.l.b16 %v7297
        %v7383 = vunpack.c.l.b16 %v7298
        %v7384 = vunpack.c.l.b16 %v7299
        %v7385 = vunpack.c.l.b16 %v7300
        %v7386 = vunpack.c.l.b16 %v7301
        %v7387 = vunpack.c.l.b16 %v7302
        %v7388 = vunpack.c.l.b16 %v7303
        %v7389 = vunpack.c.l.b16 %v7304
        %v7390 = vunpack.c.l.b16 %v7305
        %v7391 = vunpack.c.l.b16 %v7306
        %v7392 = vunpack.c.l.b16 %v7307
        %v7393 = vunpack.c.l.b16 %v7308
        %v7394 = vunpack.c.l.b16 %v7309
        %v7395 = vunpack.c.l.b16 %v7310
        %v7396 = vunpack.c.l.b16 %v7311
        %v7397 = vunpack.c.l.b16 %v7312
        %v7398 = vunpack.c.l.b16 %v7313
        %v7399 = vunpack.c.l.b16 %v7314
        %v7400 = vpack.c.b16 %v7368, %v7367
        %v7401 = vpack.c.b16 %v7370, %v7369
        %v7402 = vpack.c.b16 %v7372, %v7371
        %v7403 = vpack.c.b16 %v7374, %v7373
        %v7404 = vpack.c.b16 %v7376, %v7375
        %v7405 = vpack.c.b16 %v7378, %v7377
        %v7406 = vpack.c.b16 %v7380, %v7379
        %v7407 = vpack.c.b16 %v7382, %v7381
        %v7408 = vpack.c.b16 %v7384, %v7383
        %v7409 = vpack.c.b16 %v7386, %v7385
        %v7410 = vpack.c.b16 %v7388, %v7387
        %v7411 = vpack.c.b16 %v7390, %v7389
        %v7412 = vpack.c.b16 %v7392, %v7391
        %v7413 = vpack.c.b16 %v7394, %v7393
        %v7414 = vpack.c.b16 %v7396, %v7395
        %v7415 = vpack.c.b16 %v7398, %v7397
        %v7416 = vpack.c.b16 %v7399, %v7399
        %v7417 = vrot.slane %v7400, 2
        %v7418 = vrot.slane %v7401, 2
        %v7419 = vsel %vm2069, %v7417, %v7418
        %v7420 = vrot.slane %v7402, 2
        %v7421 = vsel %vm2069, %v7418, %v7420
        %v7422 = vrot.slane %v7403, 2
        %v7423 = vsel %vm2069, %v7420, %v7422
        %v7424 = vrot.slane %v7404, 2
        %v7425 = vsel %vm2069, %v7422, %v7424
        %v7426 = vrot.slane %v7405, 2
        %v7427 = vsel %vm2069, %v7424, %v7426
        %v7428 = vrot.slane %v7406, 2
        %v7429 = vsel %vm2069, %v7426, %v7428
        %v7430 = vrot.slane %v7407, 2
        %v7431 = vsel %vm2069, %v7428, %v7430
        %v7432 = vrot.slane %v7408, 2
        %v7433 = vsel %vm2069, %v7430, %v7432
        %v7434 = vrot.slane %v7409, 2
        %v7435 = vsel %vm2069, %v7432, %v7434
        %v7436 = vrot.slane %v7410, 2
        %v7437 = vsel %vm2069, %v7434, %v7436
        %v7438 = vrot.slane %v7411, 2
        %v7439 = vsel %vm2069, %v7436, %v7438
        %v7440 = vrot.slane %v7412, 2
        %v7441 = vsel %vm2069, %v7438, %v7440
        %v7442 = vrot.slane %v7413, 2
        %v7443 = vsel %vm2069, %v7440, %v7442
        %v7444 = vrot.slane %v7414, 2
        %v7445 = vsel %vm2069, %v7442, %v7444
        %v7446 = vrot.slane %v7415, 2
        %v7447 = vsel %vm2069, %v7444, %v7446
        %v7448 = vrot.slane %v7416, 2
        %v7449 = vsel %vm2069, %v7446, %v7448
        %v7482 = vunpack.c.l.b16 %v7318
        %v7483 = vunpack.c.l.b16 %v7319
        %v7484 = vunpack.c.l.b16 %v7320
        %v7485 = vunpack.c.l.b16 %v7321
        %v7486 = vunpack.c.l.b16 %v7322
        %v7487 = vunpack.c.l.b16 %v7323
        %v7488 = vunpack.c.l.b16 %v7324
        %v7489 = vunpack.c.l.b16 %v7325
        %v7490 = vunpack.c.l.b16 %v7326
        %v7491 = vunpack.c.l.b16 %v7327
        %v7492 = vunpack.c.l.b16 %v7328
        %v7493 = vunpack.c.l.b16 %v7329
        %v7494 = vunpack.c.l.b16 %v7330
        %v7495 = vunpack.c.l.b16 %v7331
        %v7496 = vunpack.c.l.b16 %v7332
        %v7497 = vunpack.c.l.b16 %v7333
        %v7498 = vpack.c.b16 %v7483, %v7482
        %v7499 = vpack.c.b16 %v7485, %v7484
        %v7500 = vpack.c.b16 %v7487, %v7486
        %v7501 = vpack.c.b16 %v7489, %v7488
        %v7502 = vpack.c.b16 %v7491, %v7490
        %v7503 = vpack.c.b16 %v7493, %v7492
        %v7504 = vpack.c.b16 %v7495, %v7494
        %v7505 = vpack.c.b16 %v7497, %v7496
        %7514 = vmatpush.bf16.msra.mxu0 %v7505
        %7515 = vmatpush.bf16.msra.mxu0 %v7504
        %7516 = vmatpush.bf16.msra.mxu0 %v7503
        %7517 = vmatpush.bf16.msra.mxu0 %v7502
        %7518 = vmatpush.bf16.msra.mxu0 %v7501
        %7519 = vmatpush.bf16.msra.mxu0 %v7500
        %7520 = vmatpush.bf16.msra.mxu0 %v7499
        %7521 = vmatpush.bf16.msra.mxu0 %v7498
        %7522 = vmatmul.bf16.gmra.mxu0 %v7419
        %v7523 = vpop.f32.mrf.mxu0
        %v7524 = vadd.f32 0.0, %v7523
        %v7525 = vpop.f32.mrf.mxu0
        %v7526 = vadd.f32 0.0, %v7525
        %7527 = vmatmul.bf16.gmra.mxu0 %v7421
        %v7528 = vpop.f32.mrf.mxu0
        %v7529 = vadd.f32 0.0, %v7528
        %v7530 = vpop.f32.mrf.mxu0
        %v7531 = vadd.f32 0.0, %v7530
        %7532 = vmatmul.bf16.gmra.mxu0 %v7423
        %v7533 = vpop.f32.mrf.mxu0
        %v7534 = vadd.f32 0.0, %v7533
        %v7535 = vpop.f32.mrf.mxu0
        %v7536 = vadd.f32 0.0, %v7535
        %7537 = vmatmul.bf16.gmra.mxu0 %v7425
        %v7538 = vpop.f32.mrf.mxu0
        %v7539 = vadd.f32 0.0, %v7538
        %v7540 = vpop.f32.mrf.mxu0
        %v7541 = vadd.f32 0.0, %v7540
        %7542 = vmatmul.bf16.gmra.mxu0 %v7427
        %v7543 = vpop.f32.mrf.mxu0
        %v7544 = vadd.f32 0.0, %v7543
        %v7545 = vpop.f32.mrf.mxu0
        %v7546 = vadd.f32 0.0, %v7545
        %7547 = vmatmul.bf16.gmra.mxu0 %v7429
        %v7548 = vpop.f32.mrf.mxu0
        %v7549 = vadd.f32 0.0, %v7548
        %v7550 = vpop.f32.mrf.mxu0
        %v7551 = vadd.f32 0.0, %v7550
        %7552 = vmatmul.bf16.gmra.mxu0 %v7431
        %v7553 = vpop.f32.mrf.mxu0
        %v7554 = vadd.f32 0.0, %v7553
        %v7555 = vpop.f32.mrf.mxu0
        %v7556 = vadd.f32 0.0, %v7555
        %7557 = vmatmul.bf16.gmra.mxu0 %v7433
        %v7558 = vpop.f32.mrf.mxu0
        %v7559 = vadd.f32 0.0, %v7558
        %v7560 = vpop.f32.mrf.mxu0
        %v7561 = vadd.f32 0.0, %v7560
        %7562 = vmatmul.bf16.gmra.mxu0 %v7435
        %v7563 = vpop.f32.mrf.mxu0
        %v7564 = vadd.f32 0.0, %v7563
        %v7565 = vpop.f32.mrf.mxu0
        %v7566 = vadd.f32 0.0, %v7565
        %7567 = vmatmul.bf16.gmra.mxu0 %v7437
        %v7568 = vpop.f32.mrf.mxu0
        %v7569 = vadd.f32 0.0, %v7568
        %v7570 = vpop.f32.mrf.mxu0
        %v7571 = vadd.f32 0.0, %v7570
        %7572 = vmatmul.bf16.gmra.mxu0 %v7439
        %v7573 = vpop.f32.mrf.mxu0
        %v7574 = vadd.f32 0.0, %v7573
        %v7575 = vpop.f32.mrf.mxu0
        %v7576 = vadd.f32 0.0, %v7575
        %7577 = vmatmul.bf16.gmra.mxu0 %v7441
        %v7578 = vpop.f32.mrf.mxu0
        %v7579 = vadd.f32 0.0, %v7578
        %v7580 = vpop.f32.mrf.mxu0
        %v7581 = vadd.f32 0.0, %v7580
        %7582 = vmatmul.bf16.gmra.mxu0 %v7443
        %v7583 = vpop.f32.mrf.mxu0
        %v7584 = vadd.f32 0.0, %v7583
        %v7585 = vpop.f32.mrf.mxu0
        %v7586 = vadd.f32 0.0, %v7585
        %7587 = vmatmul.bf16.gmra.mxu0 %v7445
        %v7588 = vpop.f32.mrf.mxu0
        %v7589 = vadd.f32 0.0, %v7588
        %v7590 = vpop.f32.mrf.mxu0
        %v7591 = vadd.f32 0.0, %v7590
        %7592 = vmatmul.bf16.gmra.mxu0 %v7447
        %v7593 = vpop.f32.mrf.mxu0
        %v7594 = vadd.f32 0.0, %v7593
        %v7595 = vpop.f32.mrf.mxu0
        %v7596 = vadd.f32 0.0, %v7595
        %7597 = vmatmul.bf16.gmra.mxu0 %v7449
        %v7598 = vpop.f32.mrf.mxu0
        %v7599 = vadd.f32 0.0, %v7598
        %v7600 = vpop.f32.mrf.mxu0
        %v7601 = vadd.f32 0.0, %v7600
        %7602 = vdwg.mxu0
        %v7629 = vunpack.c.l.b16 %v7237
        %v7630 = vunpack.c.l.b16 %v7238
        %v7631 = vunpack.c.l.b16 %v7239
        %v7632 = vunpack.c.l.b16 %v7240
        %v7633 = vunpack.c.l.b16 %v7241
        %v7634 = vunpack.c.l.b16 %v7242
        %v7635 = vunpack.c.l.b16 %v7243
        %v7636 = vunpack.c.l.b16 %v7244
        %v7637 = vunpack.c.l.b16 %v7245
        %v7638 = vunpack.c.l.b16 %v7246
        %v7639 = vunpack.c.l.b16 %v7247
        %v7640 = vunpack.c.l.b16 %v7248
        %v7641 = vunpack.c.l.b16 %v7249
        %v7642 = vunpack.c.l.b16 %v7250
        %v7643 = vunpack.c.l.b16 %v7251
        %v7644 = vunpack.c.l.b16 %v7252
        %v7645 = vunpack.c.l.b16 %v7253
        %v7646 = vunpack.c.l.b16 %v7254
        %v7647 = vunpack.c.l.b16 %v7255
        %v7648 = vunpack.c.l.b16 %v7256
        %v7649 = vunpack.c.l.b16 %v7257
        %v7650 = vunpack.c.l.b16 %v7258
        %v7651 = vunpack.c.l.b16 %v7259
        %v7652 = vunpack.c.l.b16 %v7260
        %v7653 = vunpack.c.l.b16 %v7261
        %v7654 = vunpack.c.l.b16 %v7269
        %v7655 = vpack.c.b16 %v7630, %v7629
        %v7656 = vpack.c.b16 %v7632, %v7631
        %v7657 = vpack.c.b16 %v7634, %v7633
        %v7658 = vpack.c.b16 %v7636, %v7635
        %v7659 = vpack.c.b16 %v7638, %v7637
        %v7660 = vpack.c.b16 %v7640, %v7639
        %v7661 = vpack.c.b16 %v7642, %v7641
        %v7662 = vpack.c.b16 %v7644, %v7643
        %v7663 = vpack.c.b16 %v7646, %v7645
        %v7664 = vpack.c.b16 %v7648, %v7647
        %v7665 = vpack.c.b16 %v7650, %v7649
        %v7666 = vpack.c.b16 %v7652, %v7651
        %v7667 = vpack.c.b16 %v7368, %v7653
        %v7668 = vpack.c.b16 %v7654, %v7654
        %v7669 = vrot.slane %v7655, 2
        %v7670 = vrot.slane %v7656, 2
        %v7671 = vsel %vm2069, %v7669, %v7670
        %v7672 = vrot.slane %v7657, 2
        %v7673 = vsel %vm2069, %v7670, %v7672
        %v7674 = vrot.slane %v7658, 2
        %v7675 = vsel %vm2069, %v7672, %v7674
        %v7676 = vrot.slane %v7659, 2
        %v7677 = vsel %vm2069, %v7674, %v7676
        %v7678 = vrot.slane %v7660, 2
        %v7679 = vsel %vm2069, %v7676, %v7678
        %v7680 = vrot.slane %v7661, 2
        %v7681 = vsel %vm2069, %v7678, %v7680
        %v7682 = vrot.slane %v7662, 2
        %v7683 = vsel %vm2069, %v7680, %v7682
        %v7684 = vrot.slane %v7663, 2
        %v7685 = vsel %vm2069, %v7682, %v7684
        %v7686 = vrot.slane %v7664, 2
        %v7687 = vsel %vm2069, %v7684, %v7686
        %v7688 = vrot.slane %v7665, 2
        %v7689 = vsel %vm2069, %v7686, %v7688
        %v7690 = vrot.slane %v7666, 2
        %v7691 = vsel %vm2069, %v7688, %v7690
        %v7692 = vrot.slane %v7667, 2
        %v7693 = vsel %vm2069, %v7690, %v7692
        %v7694 = vsel %vm2069, %v7692, %v7418
        %v7695 = vrot.slane %v7668, 2
        %v7696 = vsel %vm2069, %v7422, %v7695
        %v7727 = vunpack.c.l.b16 %v7273
        %v7728 = vunpack.c.l.b16 %v7274
        %v7729 = vunpack.c.l.b16 %v7275
        %v7730 = vunpack.c.l.b16 %v7276
        %v7731 = vunpack.c.l.b16 %v7277
        %v7732 = vunpack.c.l.b16 %v7278
        %v7733 = vunpack.c.l.b16 %v7279
        %v7734 = vunpack.c.l.b16 %v7280
        %v7735 = vunpack.c.l.b16 %v7281
        %v7736 = vunpack.c.l.b16 %v7282
        %v7737 = vunpack.c.l.b16 %v7283
        %v7738 = vunpack.c.l.b16 %v7284
        %v7739 = vunpack.c.l.b16 %v7285
        %v7740 = vunpack.c.l.b16 %v7286
        %v7741 = vunpack.c.l.b16 %v7287
        %v7742 = vunpack.c.l.b16 %v7288
        %v7743 = vpack.c.b16 %v7728, %v7727
        %v7744 = vpack.c.b16 %v7730, %v7729
        %v7745 = vpack.c.b16 %v7732, %v7731
        %v7746 = vpack.c.b16 %v7734, %v7733
        %v7747 = vpack.c.b16 %v7736, %v7735
        %v7748 = vpack.c.b16 %v7738, %v7737
        %v7749 = vpack.c.b16 %v7740, %v7739
        %v7750 = vpack.c.b16 %v7742, %v7741
        %7759 = vmatpush.bf16.msra.mxu0 %v7750
        %7760 = vmatpush.bf16.msra.mxu0 %v7749
        %7761 = vmatpush.bf16.msra.mxu0 %v7748
        %7762 = vmatpush.bf16.msra.mxu0 %v7747
        %7763 = vmatpush.bf16.msra.mxu0 %v7746
        %7764 = vmatpush.bf16.msra.mxu0 %v7745
        %7765 = vmatpush.bf16.msra.mxu0 %v7744
        %7766 = vmatpush.bf16.msra.mxu0 %v7743
        %7767 = vmatmul.bf16.gmra.mxu0 %v7671
        %v7768 = vpop.f32.mrf.mxu0
        %v7769 = vadd.f32 %v7524, %v7768
        %v7770 = vpop.f32.mrf.mxu0
        %v7771 = vadd.f32 %v7526, %v7770
        %7772 = vmatmul.bf16.gmra.mxu0 %v7673
        %v7773 = vpop.f32.mrf.mxu0
        %v7774 = vadd.f32 %v7529, %v7773
        %v7775 = vpop.f32.mrf.mxu0
        %v7776 = vadd.f32 %v7531, %v7775
        %7777 = vmatmul.bf16.gmra.mxu0 %v7675
        %v7778 = vpop.f32.mrf.mxu0
        %v7779 = vadd.f32 %v7534, %v7778
        %v7780 = vpop.f32.mrf.mxu0
        %v7781 = vadd.f32 %v7536, %v7780
        %7782 = vmatmul.bf16.gmra.mxu0 %v7677
        %v7783 = vpop.f32.mrf.mxu0
        %v7784 = vadd.f32 %v7539, %v7783
        %v7785 = vpop.f32.mrf.mxu0
        %v7786 = vadd.f32 %v7541, %v7785
        %7787 = vmatmul.bf16.gmra.mxu0 %v7679
        %v7788 = vpop.f32.mrf.mxu0
        %v7789 = vadd.f32 %v7544, %v7788
        %v7790 = vpop.f32.mrf.mxu0
        %v7791 = vadd.f32 %v7546, %v7790
        %7792 = vmatmul.bf16.gmra.mxu0 %v7681
        %v7793 = vpop.f32.mrf.mxu0
        %v7794 = vadd.f32 %v7549, %v7793
        %v7795 = vpop.f32.mrf.mxu0
        %v7796 = vadd.f32 %v7551, %v7795
        %7797 = vmatmul.bf16.gmra.mxu0 %v7683
        %v7798 = vpop.f32.mrf.mxu0
        %v7799 = vadd.f32 %v7554, %v7798
        %v7800 = vpop.f32.mrf.mxu0
        %v7801 = vadd.f32 %v7556, %v7800
        %7802 = vmatmul.bf16.gmra.mxu0 %v7685
        %v7803 = vpop.f32.mrf.mxu0
        %v7804 = vadd.f32 %v7559, %v7803
        %v7805 = vpop.f32.mrf.mxu0
        %v7806 = vadd.f32 %v7561, %v7805
        %7807 = vmatmul.bf16.gmra.mxu0 %v7687
        %v7808 = vpop.f32.mrf.mxu0
        %v7809 = vadd.f32 %v7564, %v7808
        %v7810 = vpop.f32.mrf.mxu0
        %v7811 = vadd.f32 %v7566, %v7810
        %7812 = vmatmul.bf16.gmra.mxu0 %v7689
        %v7813 = vpop.f32.mrf.mxu0
        %v7814 = vadd.f32 %v7569, %v7813
        %v7815 = vpop.f32.mrf.mxu0
        %v7816 = vadd.f32 %v7571, %v7815
        %7817 = vmatmul.bf16.gmra.mxu0 %v7691
        %v7818 = vpop.f32.mrf.mxu0
        %v7819 = vadd.f32 %v7574, %v7818
        %v7820 = vpop.f32.mrf.mxu0
        %v7821 = vadd.f32 %v7576, %v7820
        %7822 = vmatmul.bf16.gmra.mxu0 %v7693
        %v7823 = vpop.f32.mrf.mxu0
        %v7824 = vadd.f32 %v7579, %v7823
        %v7825 = vpop.f32.mrf.mxu0
        %v7826 = vadd.f32 %v7581, %v7825
        %7827 = vmatmul.bf16.gmra.mxu0 %v7694
        %v7828 = vpop.f32.mrf.mxu0
        %v7829 = vadd.f32 %v7584, %v7828
        %v7830 = vpop.f32.mrf.mxu0
        %v7831 = vadd.f32 %v7586, %v7830
        %7832 = vmatmul.bf16.gmra.mxu0 %v7421
        %v7833 = vpop.f32.mrf.mxu0
        %v7834 = vadd.f32 %v7589, %v7833
        %v7835 = vpop.f32.mrf.mxu0
        %v7836 = vadd.f32 %v7591, %v7835
        %7837 = vmatmul.bf16.gmra.mxu0 %v7423
        %v7838 = vpop.f32.mrf.mxu0
        %v7839 = vadd.f32 %v7594, %v7838
        %v7840 = vpop.f32.mrf.mxu0
        %v7841 = vadd.f32 %v7596, %v7840
        %7842 = vmatmul.bf16.gmra.mxu0 %v7696
        %v7843 = vpop.f32.mrf.mxu0
        %v7844 = vadd.f32 %v7599, %v7843
        %v7845 = vpop.f32.mrf.mxu0
        %v7846 = vadd.f32 %v7601, %v7845
        %7847 = vdwg.mxu0
        %v7848 = vld [vmem:[#allocation2 + $0x104] sm:$0xc]
        %v7849 = vld [vmem:[#allocation2 + $0x108] sm:$0xf]
        %v7850 = vld [vmem:[#allocation2 + $0x10c] sm:$0xf]
        %v7851 = vld [vmem:[#allocation2 + $0x110] sm:$0xf]
        %v7852 = vld [vmem:[#allocation2 + $0x114] sm:$0xf]
        %v7853 = vld [vmem:[#allocation2 + $0x118] sm:$0xf]
        %v7854 = vld [vmem:[#allocation2 + $0x11c] sm:$0xf]
        %v7855 = vld [vmem:[#allocation2 + $0x120] sm:$0xf]
        %v7856 = vld [vmem:[#allocation2 + $0x124] sm:$0xf]
        %v7857 = vld [vmem:[#allocation2 + $0x128] sm:$0xf]
        %v7858 = vld [vmem:[#allocation2 + $0x12c] sm:$0xf]
        %v7859 = vld [vmem:[#allocation2 + $0x130] sm:$0xf]
        %v7860 = vld [vmem:[#allocation2 + $0x134] sm:$0xf]
        %v7861 = vld [vmem:[#allocation2 + $0x138] sm:$0xf]
        %v7862 = vld [vmem:[#allocation2 + $0x13c] sm:$0xf]
        %v7863 = vld [vmem:[#allocation2 + $0x140] sm:$0xf]
        %v7864 = vld [vmem:[#allocation2 + $0x144] sm:$0xf]
        %v7865 = vld [vmem:[#allocation2 + $0x148] sm:$0xf]
        %v7866 = vld [vmem:[#allocation2 + $0x14c] sm:$0xf]
        %v7867 = vld [vmem:[#allocation2 + $0x150] sm:$0xf]
        %v7868 = vld [vmem:[#allocation2 + $0x154] sm:$0xf]
        %v7869 = vld [vmem:[#allocation2 + $0x158] sm:$0xf]
        %v7870 = vld [vmem:[#allocation2 + $0x15c] sm:$0xf]
        %v7871 = vld [vmem:[#allocation2 + $0x160] sm:$0xf]
        %v7872 = vld [vmem:[#allocation2 + $0x164] sm:$0xf]
        %v7873 = vld [vmem:[#allocation2 + $0x168] sm:$0xf]
        %v7874 = vld [vmem:[#allocation2 + $0x16c] sm:$0xf]
        %v7875 = vld [vmem:[#allocation2 + $0x170] sm:$0xf]
        %v7876 = vld [vmem:[#allocation2 + $0x174] sm:$0xf]
        %v7877 = vld [vmem:[#allocation2 + $0x178] sm:$0xf]
        %v7878 = vld [vmem:[#allocation2 + $0x17c] sm:$0xf]
        %v7879 = vld [vmem:[#allocation2 + $0x180] sm:$0xf]
        %v7880 = vld [vmem:[#allocation2 + $0x184] sm:$0x3]
        %s7881 = sadd.s32 %s701, 672
        %s7882 = smul.addr %s7881, 4
        %s7883 = scalar_lea.vmem [#allocation4], %s7882
        %v7884 = vld [vmem:[%s7883] sm:$0xf]
        %v7885 = vld [vmem:[%s7883 + $0x4] sm:$0xf]
        %v7886 = vld [vmem:[%s7883 + $0x8] sm:$0xf]
        %v7887 = vld [vmem:[%s7883 + $0xc] sm:$0xf]
        %v7888 = vld [vmem:[%s7883 + $0x10] sm:$0xf]
        %v7889 = vld [vmem:[%s7883 + $0x14] sm:$0xf]
        %v7890 = vld [vmem:[%s7883 + $0x18] sm:$0xf]
        %v7891 = vld [vmem:[%s7883 + $0x1c] sm:$0xf]
        %v7892 = vld [vmem:[%s7883 + $0x20] sm:$0xf]
        %v7893 = vld [vmem:[%s7883 + $0x24] sm:$0xf]
        %v7894 = vld [vmem:[%s7883 + $0x28] sm:$0xf]
        %v7895 = vld [vmem:[%s7883 + $0x2c] sm:$0xf]
        %v7896 = vld [vmem:[%s7883 + $0x30] sm:$0xf]
        %v7897 = vld [vmem:[%s7883 + $0x34] sm:$0xf]
        %v7898 = vld [vmem:[%s7883 + $0x38] sm:$0xf]
        %v7899 = vld [vmem:[%s7883 + $0x3c] sm:$0xf]
        %v7933 = vunpack.c.l.b16 %v7848
        %v7934 = vunpack.c.l.b16 %v7849
        %v7935 = vunpack.c.l.b16 %v7850
        %v7936 = vunpack.c.l.b16 %v7851
        %v7937 = vunpack.c.l.b16 %v7852
        %v7938 = vunpack.c.l.b16 %v7853
        %v7939 = vunpack.c.l.b16 %v7854
        %v7940 = vunpack.c.l.b16 %v7855
        %v7941 = vunpack.c.l.b16 %v7856
        %v7942 = vunpack.c.l.b16 %v7857
        %v7943 = vunpack.c.l.b16 %v7858
        %v7944 = vunpack.c.l.b16 %v7859
        %v7945 = vunpack.c.l.b16 %v7860
        %v7946 = vunpack.c.l.b16 %v7861
        %v7947 = vunpack.c.l.b16 %v7862
        %v7948 = vunpack.c.l.b16 %v7863
        %v7949 = vunpack.c.l.b16 %v7864
        %v7950 = vunpack.c.l.b16 %v7865
        %v7951 = vunpack.c.l.b16 %v7866
        %v7952 = vunpack.c.l.b16 %v7867
        %v7953 = vunpack.c.l.b16 %v7868
        %v7954 = vunpack.c.l.b16 %v7869
        %v7955 = vunpack.c.l.b16 %v7870
        %v7956 = vunpack.c.l.b16 %v7871
        %v7957 = vunpack.c.l.b16 %v7872
        %v7958 = vunpack.c.l.b16 %v7873
        %v7959 = vunpack.c.l.b16 %v7874
        %v7960 = vunpack.c.l.b16 %v7875
        %v7961 = vunpack.c.l.b16 %v7876
        %v7962 = vunpack.c.l.b16 %v7877
        %v7963 = vunpack.c.l.b16 %v7878
        %v7964 = vunpack.c.l.b16 %v7879
        %v7965 = vunpack.c.l.b16 %v7880
        %v7966 = vpack.c.b16 %v7934, %v7933
        %v7967 = vpack.c.b16 %v7936, %v7935
        %v7968 = vpack.c.b16 %v7938, %v7937
        %v7969 = vpack.c.b16 %v7940, %v7939
        %v7970 = vpack.c.b16 %v7942, %v7941
        %v7971 = vpack.c.b16 %v7944, %v7943
        %v7972 = vpack.c.b16 %v7946, %v7945
        %v7973 = vpack.c.b16 %v7948, %v7947
        %v7974 = vpack.c.b16 %v7950, %v7949
        %v7975 = vpack.c.b16 %v7952, %v7951
        %v7976 = vpack.c.b16 %v7954, %v7953
        %v7977 = vpack.c.b16 %v7956, %v7955
        %v7978 = vpack.c.b16 %v7958, %v7957
        %v7979 = vpack.c.b16 %v7960, %v7959
        %v7980 = vpack.c.b16 %v7962, %v7961
        %v7981 = vpack.c.b16 %v7964, %v7963
        %v7982 = vpack.c.b16 %v7965, %v7965
        %v7983 = vrot.slane %v7966, 2
        %v7984 = vrot.slane %v7967, 2
        %v7985 = vsel %vm2069, %v7983, %v7984
        %v7986 = vrot.slane %v7968, 2
        %v7987 = vsel %vm2069, %v7984, %v7986
        %v7988 = vrot.slane %v7969, 2
        %v7989 = vsel %vm2069, %v7986, %v7988
        %v7990 = vrot.slane %v7970, 2
        %v7991 = vsel %vm2069, %v7988, %v7990
        %v7992 = vrot.slane %v7971, 2
        %v7993 = vsel %vm2069, %v7990, %v7992
        %v7994 = vrot.slane %v7972, 2
        %v7995 = vsel %vm2069, %v7992, %v7994
        %v7996 = vrot.slane %v7973, 2
        %v7997 = vsel %vm2069, %v7994, %v7996
        %v7998 = vrot.slane %v7974, 2
        %v7999 = vsel %vm2069, %v7996, %v7998
        %v8000 = vrot.slane %v7975, 2
        %v8001 = vsel %vm2069, %v7998, %v8000
        %v8002 = vrot.slane %v7976, 2
        %v8003 = vsel %vm2069, %v8000, %v8002
        %v8004 = vrot.slane %v7977, 2
        %v8005 = vsel %vm2069, %v8002, %v8004
        %v8006 = vrot.slane %v7978, 2
        %v8007 = vsel %vm2069, %v8004, %v8006
        %v8008 = vrot.slane %v7979, 2
        %v8009 = vsel %vm2069, %v8006, %v8008
        %v8010 = vrot.slane %v7980, 2
        %v8011 = vsel %vm2069, %v8008, %v8010
        %v8012 = vrot.slane %v7981, 2
        %v8013 = vsel %vm2069, %v8010, %v8012
        %v8014 = vrot.slane %v7982, 2
        %v8015 = vsel %vm2069, %v8012, %v8014
        %v8048 = vunpack.c.l.b16 %v7884
        %v8049 = vunpack.c.l.b16 %v7885
        %v8050 = vunpack.c.l.b16 %v7886
        %v8051 = vunpack.c.l.b16 %v7887
        %v8052 = vunpack.c.l.b16 %v7888
        %v8053 = vunpack.c.l.b16 %v7889
        %v8054 = vunpack.c.l.b16 %v7890
        %v8055 = vunpack.c.l.b16 %v7891
        %v8056 = vunpack.c.l.b16 %v7892
        %v8057 = vunpack.c.l.b16 %v7893
        %v8058 = vunpack.c.l.b16 %v7894
        %v8059 = vunpack.c.l.b16 %v7895
        %v8060 = vunpack.c.l.b16 %v7896
        %v8061 = vunpack.c.l.b16 %v7897
        %v8062 = vunpack.c.l.b16 %v7898
        %v8063 = vunpack.c.l.b16 %v7899
        %v8064 = vpack.c.b16 %v8049, %v8048
        %v8065 = vpack.c.b16 %v8051, %v8050
        %v8066 = vpack.c.b16 %v8053, %v8052
        %v8067 = vpack.c.b16 %v8055, %v8054
        %v8068 = vpack.c.b16 %v8057, %v8056
        %v8069 = vpack.c.b16 %v8059, %v8058
        %v8070 = vpack.c.b16 %v8061, %v8060
        %v8071 = vpack.c.b16 %v8063, %v8062
        %8080 = vmatpush.bf16.msra.mxu0 %v8071
        %8081 = vmatpush.bf16.msra.mxu0 %v8070
        %8082 = vmatpush.bf16.msra.mxu0 %v8069
        %8083 = vmatpush.bf16.msra.mxu0 %v8068
        %8084 = vmatpush.bf16.msra.mxu0 %v8067
        %8085 = vmatpush.bf16.msra.mxu0 %v8066
        %8086 = vmatpush.bf16.msra.mxu0 %v8065
        %8087 = vmatpush.bf16.msra.mxu0 %v8064
        %8088 = vmatmul.bf16.gmra.mxu0 %v7985
        %v8089 = vpop.f32.mrf.mxu0
        %v8090 = vadd.f32 0.0, %v8089
        %v8091 = vpop.f32.mrf.mxu0
        %v8092 = vadd.f32 0.0, %v8091
        %8093 = vmatmul.bf16.gmra.mxu0 %v7987
        %v8094 = vpop.f32.mrf.mxu0
        %v8095 = vadd.f32 0.0, %v8094
        %v8096 = vpop.f32.mrf.mxu0
        %v8097 = vadd.f32 0.0, %v8096
        %8098 = vmatmul.bf16.gmra.mxu0 %v7989
        %v8099 = vpop.f32.mrf.mxu0
        %v8100 = vadd.f32 0.0, %v8099
        %v8101 = vpop.f32.mrf.mxu0
        %v8102 = vadd.f32 0.0, %v8101
        %8103 = vmatmul.bf16.gmra.mxu0 %v7991
        %v8104 = vpop.f32.mrf.mxu0
        %v8105 = vadd.f32 0.0, %v8104
        %v8106 = vpop.f32.mrf.mxu0
        %v8107 = vadd.f32 0.0, %v8106
        %8108 = vmatmul.bf16.gmra.mxu0 %v7993
        %v8109 = vpop.f32.mrf.mxu0
        %v8110 = vadd.f32 0.0, %v8109
        %v8111 = vpop.f32.mrf.mxu0
        %v8112 = vadd.f32 0.0, %v8111
        %8113 = vmatmul.bf16.gmra.mxu0 %v7995
        %v8114 = vpop.f32.mrf.mxu0
        %v8115 = vadd.f32 0.0, %v8114
        %v8116 = vpop.f32.mrf.mxu0
        %v8117 = vadd.f32 0.0, %v8116
        %8118 = vmatmul.bf16.gmra.mxu0 %v7997
        %v8119 = vpop.f32.mrf.mxu0
        %v8120 = vadd.f32 0.0, %v8119
        %v8121 = vpop.f32.mrf.mxu0
        %v8122 = vadd.f32 0.0, %v8121
        %8123 = vmatmul.bf16.gmra.mxu0 %v7999
        %v8124 = vpop.f32.mrf.mxu0
        %v8125 = vadd.f32 0.0, %v8124
        %v8126 = vpop.f32.mrf.mxu0
        %v8127 = vadd.f32 0.0, %v8126
        %8128 = vmatmul.bf16.gmra.mxu0 %v8001
        %v8129 = vpop.f32.mrf.mxu0
        %v8130 = vadd.f32 0.0, %v8129
        %v8131 = vpop.f32.mrf.mxu0
        %v8132 = vadd.f32 0.0, %v8131
        %8133 = vmatmul.bf16.gmra.mxu0 %v8003
        %v8134 = vpop.f32.mrf.mxu0
        %v8135 = vadd.f32 0.0, %v8134
        %v8136 = vpop.f32.mrf.mxu0
        %v8137 = vadd.f32 0.0, %v8136
        %8138 = vmatmul.bf16.gmra.mxu0 %v8005
        %v8139 = vpop.f32.mrf.mxu0
        %v8140 = vadd.f32 0.0, %v8139
        %v8141 = vpop.f32.mrf.mxu0
        %v8142 = vadd.f32 0.0, %v8141
        %8143 = vmatmul.bf16.gmra.mxu0 %v8007
        %v8144 = vpop.f32.mrf.mxu0
        %v8145 = vadd.f32 0.0, %v8144
        %v8146 = vpop.f32.mrf.mxu0
        %v8147 = vadd.f32 0.0, %v8146
        %8148 = vmatmul.bf16.gmra.mxu0 %v8009
        %v8149 = vpop.f32.mrf.mxu0
        %v8150 = vadd.f32 0.0, %v8149
        %v8151 = vpop.f32.mrf.mxu0
        %v8152 = vadd.f32 0.0, %v8151
        %8153 = vmatmul.bf16.gmra.mxu0 %v8011
        %v8154 = vpop.f32.mrf.mxu0
        %v8155 = vadd.f32 0.0, %v8154
        %v8156 = vpop.f32.mrf.mxu0
        %v8157 = vadd.f32 0.0, %v8156
        %8158 = vmatmul.bf16.gmra.mxu0 %v8013
        %v8159 = vpop.f32.mrf.mxu0
        %v8160 = vadd.f32 0.0, %v8159
        %v8161 = vpop.f32.mrf.mxu0
        %v8162 = vadd.f32 0.0, %v8161
        %8163 = vmatmul.bf16.gmra.mxu0 %v8015
        %v8164 = vpop.f32.mrf.mxu0
        %v8165 = vadd.f32 0.0, %v8164
        %v8166 = vpop.f32.mrf.mxu0
        %v8167 = vadd.f32 0.0, %v8166
        %8168 = vdwg.mxu0
        %v8169 = vadd.f32 %v7769, %v8090
        %v8170 = vadd.f32 %v7771, %v8092
        %v8171 = vadd.f32 %v7774, %v8095
        %v8172 = vadd.f32 %v7776, %v8097
        %v8173 = vadd.f32 %v7779, %v8100
        %v8174 = vadd.f32 %v7781, %v8102
        %v8175 = vadd.f32 %v7784, %v8105
        %v8176 = vadd.f32 %v7786, %v8107
        %v8177 = vadd.f32 %v7789, %v8110
        %v8178 = vadd.f32 %v7791, %v8112
        %v8179 = vadd.f32 %v7794, %v8115
        %v8180 = vadd.f32 %v7796, %v8117
        %v8181 = vadd.f32 %v7799, %v8120
        %v8182 = vadd.f32 %v7801, %v8122
        %v8183 = vadd.f32 %v7804, %v8125
        %v8184 = vadd.f32 %v7806, %v8127
        %v8185 = vadd.f32 %v7809, %v8130
        %v8186 = vadd.f32 %v7811, %v8132
        %v8187 = vadd.f32 %v7814, %v8135
        %v8188 = vadd.f32 %v7816, %v8137
        %v8189 = vadd.f32 %v7819, %v8140
        %v8190 = vadd.f32 %v7821, %v8142
        %v8191 = vadd.f32 %v7824, %v8145
        %v8192 = vadd.f32 %v7826, %v8147
        %v8193 = vadd.f32 %v7829, %v8150
        %v8194 = vadd.f32 %v7831, %v8152
        %v8195 = vadd.f32 %v7834, %v8155
        %v8196 = vadd.f32 %v7836, %v8157
        %v8197 = vadd.f32 %v7839, %v8160
        %v8198 = vadd.f32 %v7841, %v8162
        %v8199 = vadd.f32 %v7844, %v8165
        %v8200 = vadd.f32 %v7846, %v8167
        %s8201 = scalar_lea.vmem [#allocation7], 1024
        %v8202 = vld [vmem:[%s8201] sm:$0xff]
        %v8203 = vld [vmem:[%s8201 + $0x8] sm:$0xff]
        %v8204 = vld [vmem:[%s8201 + $0x10] sm:$0xff]
        %v8205 = vld [vmem:[%s8201 + $0x18] sm:$0xff]
        %v8206 = vld [vmem:[%s8201 + $0x20] sm:$0xff]
        %v8207 = vld [vmem:[%s8201 + $0x28] sm:$0xff]
        %v8208 = vld [vmem:[%s8201 + $0x30] sm:$0xff]
        %v8209 = vld [vmem:[%s8201 + $0x38] sm:$0xff]
        %v8210 = vld [vmem:[%s8201 + $0x40] sm:$0xff]
        %v8211 = vld [vmem:[%s8201 + $0x48] sm:$0xff]
        %v8212 = vld [vmem:[%s8201 + $0x50] sm:$0xff]
        %v8213 = vld [vmem:[%s8201 + $0x58] sm:$0xff]
        %v8214 = vld [vmem:[%s8201 + $0x60] sm:$0xff]
        %v8215 = vld [vmem:[%s8201 + $0x68] sm:$0xff]
        %v8216 = vld [vmem:[%s8201 + $0x70] sm:$0xff]
        %v8217 = vld [vmem:[%s8201 + $0x78] sm:$0xff]
        %v8218 = vld [vmem:[%s8201 + $0x80] sm:$0xff]
        %v8219 = vld [vmem:[%s8201 + $0x88] sm:$0xff]
        %v8220 = vld [vmem:[%s8201 + $0x90] sm:$0xff]
        %v8221 = vld [vmem:[%s8201 + $0x98] sm:$0xff]
        %v8222 = vld [vmem:[%s8201 + $0xa0] sm:$0xff]
        %v8223 = vld [vmem:[%s8201 + $0xa8] sm:$0xff]
        %v8224 = vld [vmem:[%s8201 + $0xb0] sm:$0xff]
        %v8225 = vld [vmem:[%s8201 + $0xb8] sm:$0xff]
        %v8226 = vld [vmem:[%s8201 + $0xc0] sm:$0xff]
        %v8227 = vld [vmem:[%s8201 + $0xc8] sm:$0xff]
        %v8228 = vld [vmem:[%s8201 + $0xd0] sm:$0xff]
        %v8229 = vld [vmem:[%s8201 + $0xd8] sm:$0xff]
        %v8230 = vld [vmem:[%s8201 + $0xe0] sm:$0xff]
        %v8231 = vld [vmem:[%s8201 + $0xe8] sm:$0xff]
        %v8232 = vld [vmem:[%s8201 + $0xf0] sm:$0xff]
        %v8233 = vld [vmem:[%s8201 + $0xf8] sm:$0xff]
        %8235 = vset.pattern.permute.xlu0 0
        %8236 = vperm.xlu0 %8235, %v8202
        %v8237 = vpop.permute.xlu0 %8236
        %8240 = vset.pattern.permute.xlu0 0
        %8241 = vperm.xlu0 %8240, %v8203
        %v8242 = vpop.permute.xlu0 %8241
        %8245 = vset.pattern.permute.xlu0 0
        %8246 = vperm.xlu0 %8245, %v8204
        %v8247 = vpop.permute.xlu0 %8246
        %8250 = vset.pattern.permute.xlu0 0
        %8251 = vperm.xlu0 %8250, %v8205
        %v8252 = vpop.permute.xlu0 %8251
        %8255 = vset.pattern.permute.xlu0 0
        %8256 = vperm.xlu0 %8255, %v8206
        %v8257 = vpop.permute.xlu0 %8256
        %8260 = vset.pattern.permute.xlu0 0
        %8261 = vperm.xlu0 %8260, %v8207
        %v8262 = vpop.permute.xlu0 %8261
        %8265 = vset.pattern.permute.xlu0 0
        %8266 = vperm.xlu0 %8265, %v8208
        %v8267 = vpop.permute.xlu0 %8266
        %8270 = vset.pattern.permute.xlu0 0
        %8271 = vperm.xlu0 %8270, %v8209
        %v8272 = vpop.permute.xlu0 %8271
        %8275 = vset.pattern.permute.xlu0 0
        %8276 = vperm.xlu0 %8275, %v8210
        %v8277 = vpop.permute.xlu0 %8276
        %8280 = vset.pattern.permute.xlu0 0
        %8281 = vperm.xlu0 %8280, %v8211
        %v8282 = vpop.permute.xlu0 %8281
        %8285 = vset.pattern.permute.xlu0 0
        %8286 = vperm.xlu0 %8285, %v8212
        %v8287 = vpop.permute.xlu0 %8286
        %8290 = vset.pattern.permute.xlu0 0
        %8291 = vperm.xlu0 %8290, %v8213
        %v8292 = vpop.permute.xlu0 %8291
        %8295 = vset.pattern.permute.xlu0 0
        %8296 = vperm.xlu0 %8295, %v8214
        %v8297 = vpop.permute.xlu0 %8296
        %8300 = vset.pattern.permute.xlu0 0
        %8301 = vperm.xlu0 %8300, %v8215
        %v8302 = vpop.permute.xlu0 %8301
        %8305 = vset.pattern.permute.xlu0 0
        %8306 = vperm.xlu0 %8305, %v8216
        %v8307 = vpop.permute.xlu0 %8306
        %8310 = vset.pattern.permute.xlu0 0
        %8311 = vperm.xlu0 %8310, %v8217
        %v8312 = vpop.permute.xlu0 %8311
        %8315 = vset.pattern.permute.xlu0 0
        %8316 = vperm.xlu0 %8315, %v8218
        %v8317 = vpop.permute.xlu0 %8316
        %8320 = vset.pattern.permute.xlu0 0
        %8321 = vperm.xlu0 %8320, %v8219
        %v8322 = vpop.permute.xlu0 %8321
        %8325 = vset.pattern.permute.xlu0 0
        %8326 = vperm.xlu0 %8325, %v8220
        %v8327 = vpop.permute.xlu0 %8326
        %8330 = vset.pattern.permute.xlu0 0
        %8331 = vperm.xlu0 %8330, %v8221
        %v8332 = vpop.permute.xlu0 %8331
        %8335 = vset.pattern.permute.xlu0 0
        %8336 = vperm.xlu0 %8335, %v8222
        %v8337 = vpop.permute.xlu0 %8336
        %8340 = vset.pattern.permute.xlu0 0
        %8341 = vperm.xlu0 %8340, %v8223
        %v8342 = vpop.permute.xlu0 %8341
        %8345 = vset.pattern.permute.xlu0 0
        %8346 = vperm.xlu0 %8345, %v8224
        %v8347 = vpop.permute.xlu0 %8346
        %8350 = vset.pattern.permute.xlu0 0
        %8351 = vperm.xlu0 %8350, %v8225
        %v8352 = vpop.permute.xlu0 %8351
        %8355 = vset.pattern.permute.xlu0 0
        %8356 = vperm.xlu0 %8355, %v8226
        %v8357 = vpop.permute.xlu0 %8356
        %8360 = vset.pattern.permute.xlu0 0
        %8361 = vperm.xlu0 %8360, %v8227
        %v8362 = vpop.permute.xlu0 %8361
        %8365 = vset.pattern.permute.xlu0 0
        %8366 = vperm.xlu0 %8365, %v8228
        %v8367 = vpop.permute.xlu0 %8366
        %8370 = vset.pattern.permute.xlu0 0
        %8371 = vperm.xlu0 %8370, %v8229
        %v8372 = vpop.permute.xlu0 %8371
        %8375 = vset.pattern.permute.xlu0 0
        %8376 = vperm.xlu0 %8375, %v8230
        %v8377 = vpop.permute.xlu0 %8376
        %8380 = vset.pattern.permute.xlu0 0
        %8381 = vperm.xlu0 %8380, %v8231
        %v8382 = vpop.permute.xlu0 %8381
        %8385 = vset.pattern.permute.xlu0 0
        %8386 = vperm.xlu0 %8385, %v8232
        %v8387 = vpop.permute.xlu0 %8386
        %8390 = vset.pattern.permute.xlu0 0
        %8391 = vperm.xlu0 %8390, %v8233
        %v8392 = vpop.permute.xlu0 %8391
        %v8394 = vmul.f32 %v8169, %v8237
        %v8395 = vmul.f32 %v8170, %v8242
        %v8396 = vmul.f32 %v8171, %v8247
        %v8397 = vmul.f32 %v8172, %v8252
        %v8398 = vmul.f32 %v8173, %v8257
        %v8399 = vmul.f32 %v8174, %v8262
        %v8400 = vmul.f32 %v8175, %v8267
        %v8401 = vmul.f32 %v8176, %v8272
        %v8402 = vmul.f32 %v8177, %v8277
        %v8403 = vmul.f32 %v8178, %v8282
        %v8404 = vmul.f32 %v8179, %v8287
        %v8405 = vmul.f32 %v8180, %v8292
        %v8406 = vmul.f32 %v8181, %v8297
        %v8407 = vmul.f32 %v8182, %v8302
        %v8408 = vmul.f32 %v8183, %v8307
        %v8409 = vmul.f32 %v8184, %v8312
        %v8410 = vmul.f32 %v8185, %v8317
        %v8411 = vmul.f32 %v8186, %v8322
        %v8412 = vmul.f32 %v8187, %v8327
        %v8413 = vmul.f32 %v8188, %v8332
        %v8414 = vmul.f32 %v8189, %v8337
        %v8415 = vmul.f32 %v8190, %v8342
        %v8416 = vmul.f32 %v8191, %v8347
        %v8417 = vmul.f32 %v8192, %v8352
        %v8418 = vmul.f32 %v8193, %v8357
        %v8419 = vmul.f32 %v8194, %v8362
        %v8420 = vmul.f32 %v8195, %v8367
        %v8421 = vmul.f32 %v8196, %v8372
        %v8422 = vmul.f32 %v8197, %v8377
        %v8423 = vmul.f32 %v8198, %v8382
        %v8424 = vmul.f32 %v8199, %v8387
        %v8425 = vmul.f32 %v8200, %v8392
        %v8426 = vadd.f32 %v7205, %v8394
        %v8427 = vadd.f32 %v7206, %v8395
        %v8428 = vadd.f32 %v7207, %v8396
        %v8429 = vadd.f32 %v7208, %v8397
        %v8430 = vadd.f32 %v7209, %v8398
        %v8431 = vadd.f32 %v7210, %v8399
        %v8432 = vadd.f32 %v7211, %v8400
        %v8433 = vadd.f32 %v7212, %v8401
        %v8434 = vadd.f32 %v7213, %v8402
        %v8435 = vadd.f32 %v7214, %v8403
        %v8436 = vadd.f32 %v7215, %v8404
        %v8437 = vadd.f32 %v7216, %v8405
        %v8438 = vadd.f32 %v7217, %v8406
        %v8439 = vadd.f32 %v7218, %v8407
        %v8440 = vadd.f32 %v7219, %v8408
        %v8441 = vadd.f32 %v7220, %v8409
        %v8442 = vadd.f32 %v7221, %v8410
        %v8443 = vadd.f32 %v7222, %v8411
        %v8444 = vadd.f32 %v7223, %v8412
        %v8445 = vadd.f32 %v7224, %v8413
        %v8446 = vadd.f32 %v7225, %v8414
        %v8447 = vadd.f32 %v7226, %v8415
        %v8448 = vadd.f32 %v7227, %v8416
        %v8449 = vadd.f32 %v7228, %v8417
        %v8450 = vadd.f32 %v7229, %v8418
        %v8451 = vadd.f32 %v7230, %v8419
        %v8452 = vadd.f32 %v7231, %v8420
        %v8453 = vadd.f32 %v7232, %v8421
        %v8454 = vadd.f32 %v7233, %v8422
        %v8455 = vadd.f32 %v7234, %v8423
        %v8456 = vadd.f32 %v7235, %v8424
        %v8457 = vadd.f32 %v7236, %v8425
        %v8458 = vld [vmem:[#allocation2 + $0x18] sm:$0xe]
        %v8459 = vld [vmem:[#allocation2 + $0x1c] sm:$0xf]
        %v8460 = vld [vmem:[#allocation2 + $0x20] sm:$0xf]
        %v8461 = vld [vmem:[#allocation2 + $0x24] sm:$0xf]
        %v8462 = vld [vmem:[#allocation2 + $0x28] sm:$0xf]
        %v8463 = vld [vmem:[#allocation2 + $0x2c] sm:$0xf]
        %v8464 = vld [vmem:[#allocation2 + $0x30] sm:$0xf]
        %v8465 = vld [vmem:[#allocation2 + $0x34] sm:$0xf]
        %v8466 = vld [vmem:[#allocation2 + $0x38] sm:$0xf]
        %v8467 = vld [vmem:[#allocation2 + $0x3c] sm:$0xf]
        %v8468 = vld [vmem:[#allocation2 + $0x40] sm:$0xf]
        %v8469 = vld [vmem:[#allocation2 + $0x44] sm:$0xf]
        %v8470 = vld [vmem:[#allocation2 + $0x48] sm:$0xf]
        %v8471 = vld [vmem:[#allocation2 + $0x4c] sm:$0xf]
        %v8472 = vld [vmem:[#allocation2 + $0x50] sm:$0xf]
        %v8473 = vld [vmem:[#allocation2 + $0x54] sm:$0xf]
        %v8474 = vld [vmem:[#allocation2 + $0x58] sm:$0xf]
        %v8475 = vld [vmem:[#allocation2 + $0x5c] sm:$0xf]
        %v8476 = vld [vmem:[#allocation2 + $0x60] sm:$0xf]
        %v8477 = vld [vmem:[#allocation2 + $0x64] sm:$0xf]
        %v8478 = vld [vmem:[#allocation2 + $0x68] sm:$0xf]
        %v8479 = vld [vmem:[#allocation2 + $0x6c] sm:$0xf]
        %v8480 = vld [vmem:[#allocation2 + $0x70] sm:$0xf]
        %v8481 = vld [vmem:[#allocation2 + $0x74] sm:$0xf]
        %v8482 = vld [vmem:[#allocation2 + $0x78] sm:$0xf]
        %v8483 = vld [vmem:[#allocation2 + $0x7c] sm:$0xf]
        %v8484 = vld [vmem:[#allocation2 + $0x80] sm:$0xf]
        %v8485 = vld [vmem:[#allocation2 + $0x84] sm:$0xf]
        %v8486 = vld [vmem:[#allocation2 + $0x88] sm:$0xf]
        %v8487 = vld [vmem:[#allocation2 + $0x8c] sm:$0xf]
        %v8488 = vld [vmem:[#allocation2 + $0x90] sm:$0xf]
        %v8489 = vld [vmem:[#allocation2 + $0x94] sm:$0xf]
        %v8490 = vld [vmem:[#allocation2 + $0x98] sm:$0x1]
        %s8491 = sadd.s32 %s701, 64
        %s8492 = smul.addr %s8491, 4
        %s8493 = scalar_lea.vmem [#allocation4], %s8492
        %v8494 = vld [vmem:[%s8493] sm:$0xf]
        %v8495 = vld [vmem:[%s8493 + $0x4] sm:$0xf]
        %v8496 = vld [vmem:[%s8493 + $0x8] sm:$0xf]
        %v8497 = vld [vmem:[%s8493 + $0xc] sm:$0xf]
        %v8498 = vld [vmem:[%s8493 + $0x10] sm:$0xf]
        %v8499 = vld [vmem:[%s8493 + $0x14] sm:$0xf]
        %v8500 = vld [vmem:[%s8493 + $0x18] sm:$0xf]
        %v8501 = vld [vmem:[%s8493 + $0x1c] sm:$0xf]
        %v8502 = vld [vmem:[%s8493 + $0x20] sm:$0xf]
        %v8503 = vld [vmem:[%s8493 + $0x24] sm:$0xf]
        %v8504 = vld [vmem:[%s8493 + $0x28] sm:$0xf]
        %v8505 = vld [vmem:[%s8493 + $0x2c] sm:$0xf]
        %v8506 = vld [vmem:[%s8493 + $0x30] sm:$0xf]
        %v8507 = vld [vmem:[%s8493 + $0x34] sm:$0xf]
        %v8508 = vld [vmem:[%s8493 + $0x38] sm:$0xf]
        %v8509 = vld [vmem:[%s8493 + $0x3c] sm:$0xf]
        %v8510 = vld [vmem:[#allocation2 + $0xa8] sm:$0xe]
        %v8511 = vld [vmem:[#allocation2 + $0xac] sm:$0xf]
        %v8512 = vld [vmem:[#allocation2 + $0xb0] sm:$0xf]
        %v8513 = vld [vmem:[#allocation2 + $0xb4] sm:$0xf]
        %v8514 = vld [vmem:[#allocation2 + $0xb8] sm:$0xf]
        %v8515 = vld [vmem:[#allocation2 + $0xbc] sm:$0xf]
        %v8516 = vld [vmem:[#allocation2 + $0xc0] sm:$0xf]
        %v8517 = vld [vmem:[#allocation2 + $0xc4] sm:$0xf]
        %v8518 = vld [vmem:[#allocation2 + $0xc8] sm:$0xf]
        %v8519 = vld [vmem:[#allocation2 + $0xcc] sm:$0xf]
        %v8520 = vld [vmem:[#allocation2 + $0xd0] sm:$0xf]
        %v8521 = vld [vmem:[#allocation2 + $0xd4] sm:$0xf]
        %v8522 = vld [vmem:[#allocation2 + $0xd8] sm:$0xf]
        %v8523 = vld [vmem:[#allocation2 + $0xdc] sm:$0xf]
        %v8524 = vld [vmem:[#allocation2 + $0xe0] sm:$0xf]
        %v8525 = vld [vmem:[#allocation2 + $0xe4] sm:$0xf]
        %v8526 = vld [vmem:[#allocation2 + $0xe8] sm:$0xf]
        %v8527 = vld [vmem:[#allocation2 + $0xec] sm:$0xf]
        %v8528 = vld [vmem:[#allocation2 + $0xf0] sm:$0xf]
        %v8529 = vld [vmem:[#allocation2 + $0xf4] sm:$0xf]
        %v8530 = vld [vmem:[#allocation2 + $0xf8] sm:$0xf]
        %v8531 = vld [vmem:[#allocation2 + $0xfc] sm:$0xf]
        %v8532 = vld [vmem:[#allocation2 + $0x100] sm:$0xf]
        %v8533 = vld [vmem:[#allocation2 + $0x104] sm:$0xf]
        %v8534 = vld [vmem:[#allocation2 + $0x108] sm:$0xf]
        %v8535 = vld [vmem:[#allocation2 + $0x10c] sm:$0xf]
        %v8536 = vld [vmem:[#allocation2 + $0x110] sm:$0xf]
        %v8537 = vld [vmem:[#allocation2 + $0x114] sm:$0xf]
        %v8538 = vld [vmem:[#allocation2 + $0x118] sm:$0xf]
        %v8539 = vld [vmem:[#allocation2 + $0x11c] sm:$0xf]
        %v8540 = vld [vmem:[#allocation2 + $0x120] sm:$0xf]
        %v8541 = vld [vmem:[#allocation2 + $0x124] sm:$0xf]
        %v8542 = vld [vmem:[#allocation2 + $0x128] sm:$0x1]
        %s8543 = sadd.s32 %s701, 480
        %s8544 = smul.addr %s8543, 4
        %s8545 = scalar_lea.vmem [#allocation4], %s8544
        %v8546 = vld [vmem:[%s8545] sm:$0xf]
        %v8547 = vld [vmem:[%s8545 + $0x4] sm:$0xf]
        %v8548 = vld [vmem:[%s8545 + $0x8] sm:$0xf]
        %v8549 = vld [vmem:[%s8545 + $0xc] sm:$0xf]
        %v8550 = vld [vmem:[%s8545 + $0x10] sm:$0xf]
        %v8551 = vld [vmem:[%s8545 + $0x14] sm:$0xf]
        %v8552 = vld [vmem:[%s8545 + $0x18] sm:$0xf]
        %v8553 = vld [vmem:[%s8545 + $0x1c] sm:$0xf]
        %v8554 = vld [vmem:[%s8545 + $0x20] sm:$0xf]
        %v8555 = vld [vmem:[%s8545 + $0x24] sm:$0xf]
        %v8556 = vld [vmem:[%s8545 + $0x28] sm:$0xf]
        %v8557 = vld [vmem:[%s8545 + $0x2c] sm:$0xf]
        %v8558 = vld [vmem:[%s8545 + $0x30] sm:$0xf]
        %v8559 = vld [vmem:[%s8545 + $0x34] sm:$0xf]
        %v8560 = vld [vmem:[%s8545 + $0x38] sm:$0xf]
        %v8561 = vld [vmem:[%s8545 + $0x3c] sm:$0xf]
        %v8595 = vunpack.c.l.b16 %v8510
        %v8596 = vunpack.c.l.b16 %v8511
        %v8597 = vunpack.c.l.b16 %v8512
        %v8598 = vunpack.c.l.b16 %v8513
        %v8599 = vunpack.c.l.b16 %v8514
        %v8600 = vunpack.c.l.b16 %v8515
        %v8601 = vunpack.c.l.b16 %v8516
        %v8602 = vunpack.c.l.b16 %v8517
        %v8603 = vunpack.c.l.b16 %v8518
        %v8604 = vunpack.c.l.b16 %v8519
        %v8605 = vunpack.c.l.b16 %v8520
        %v8606 = vunpack.c.l.b16 %v8521
        %v8607 = vunpack.c.l.b16 %v8522
        %v8608 = vunpack.c.l.b16 %v8523
        %v8609 = vunpack.c.l.b16 %v8524
        %v8610 = vunpack.c.l.b16 %v8525
        %v8611 = vunpack.c.l.b16 %v8526
        %v8612 = vunpack.c.l.b16 %v8527
        %v8613 = vunpack.c.l.b16 %v8528
        %v8614 = vunpack.c.l.b16 %v8529
        %v8615 = vunpack.c.l.b16 %v8530
        %v8616 = vunpack.c.l.b16 %v8531
        %v8617 = vunpack.c.l.b16 %v8532
        %v8618 = vunpack.c.l.b16 %v8533
        %v8619 = vunpack.c.l.b16 %v8534
        %v8620 = vunpack.c.l.b16 %v8535
        %v8621 = vunpack.c.l.b16 %v8536
        %v8622 = vunpack.c.l.b16 %v8537
        %v8623 = vunpack.c.l.b16 %v8538
        %v8624 = vunpack.c.l.b16 %v8539
        %v8625 = vunpack.c.l.b16 %v8540
        %v8626 = vunpack.c.l.b16 %v8541
        %v8627 = vunpack.c.l.b16 %v8542
        %v8628 = vpack.c.b16 %v8596, %v8595
        %v8629 = vpack.c.b16 %v8598, %v8597
        %v8630 = vpack.c.b16 %v8600, %v8599
        %v8631 = vpack.c.b16 %v8602, %v8601
        %v8632 = vpack.c.b16 %v8604, %v8603
        %v8633 = vpack.c.b16 %v8606, %v8605
        %v8634 = vpack.c.b16 %v8608, %v8607
        %v8635 = vpack.c.b16 %v8610, %v8609
        %v8636 = vpack.c.b16 %v8612, %v8611
        %v8637 = vpack.c.b16 %v8614, %v8613
        %v8638 = vpack.c.b16 %v8616, %v8615
        %v8639 = vpack.c.b16 %v8618, %v8617
        %v8640 = vpack.c.b16 %v8620, %v8619
        %v8641 = vpack.c.b16 %v8622, %v8621
        %v8642 = vpack.c.b16 %v8624, %v8623
        %v8643 = vpack.c.b16 %v8626, %v8625
        %v8644 = vpack.c.b16 %v8627, %v8627
        %v8645 = vrot.slane %v8628, 1
        %v8646 = vrot.slane %v8629, 1
        %v8647 = vsel %vm3279, %v8645, %v8646
        %v8648 = vrot.slane %v8630, 1
        %v8649 = vsel %vm3279, %v8646, %v8648
        %v8650 = vrot.slane %v8631, 1
        %v8651 = vsel %vm3279, %v8648, %v8650
        %v8652 = vrot.slane %v8632, 1
        %v8653 = vsel %vm3279, %v8650, %v8652
        %v8654 = vrot.slane %v8633, 1
        %v8655 = vsel %vm3279, %v8652, %v8654
        %v8656 = vrot.slane %v8634, 1
        %v8657 = vsel %vm3279, %v8654, %v8656
        %v8658 = vrot.slane %v8635, 1
        %v8659 = vsel %vm3279, %v8656, %v8658
        %v8660 = vrot.slane %v8636, 1
        %v8661 = vsel %vm3279, %v8658, %v8660
        %v8662 = vrot.slane %v8637, 1
        %v8663 = vsel %vm3279, %v8660, %v8662
        %v8664 = vrot.slane %v8638, 1
        %v8665 = vsel %vm3279, %v8662, %v8664
        %v8666 = vrot.slane %v8639, 1
        %v8667 = vsel %vm3279, %v8664, %v8666
        %v8668 = vrot.slane %v8640, 1
        %v8669 = vsel %vm3279, %v8666, %v8668
        %v8670 = vrot.slane %v8641, 1
        %v8671 = vsel %vm3279, %v8668, %v8670
        %v8672 = vrot.slane %v8642, 1
        %v8673 = vsel %vm3279, %v8670, %v8672
        %v8674 = vrot.slane %v8643, 1
        %v8675 = vsel %vm3279, %v8672, %v8674
        %v8676 = vrot.slane %v8644, 1
        %v8677 = vsel %vm3279, %v8674, %v8676
        %v8710 = vunpack.c.l.b16 %v8546
        %v8711 = vunpack.c.l.b16 %v8547
        %v8712 = vunpack.c.l.b16 %v8548
        %v8713 = vunpack.c.l.b16 %v8549
        %v8714 = vunpack.c.l.b16 %v8550
        %v8715 = vunpack.c.l.b16 %v8551
        %v8716 = vunpack.c.l.b16 %v8552
        %v8717 = vunpack.c.l.b16 %v8553
        %v8718 = vunpack.c.l.b16 %v8554
        %v8719 = vunpack.c.l.b16 %v8555
        %v8720 = vunpack.c.l.b16 %v8556
        %v8721 = vunpack.c.l.b16 %v8557
        %v8722 = vunpack.c.l.b16 %v8558
        %v8723 = vunpack.c.l.b16 %v8559
        %v8724 = vunpack.c.l.b16 %v8560
        %v8725 = vunpack.c.l.b16 %v8561
        %v8726 = vpack.c.b16 %v8711, %v8710
        %v8727 = vpack.c.b16 %v8713, %v8712
        %v8728 = vpack.c.b16 %v8715, %v8714
        %v8729 = vpack.c.b16 %v8717, %v8716
        %v8730 = vpack.c.b16 %v8719, %v8718
        %v8731 = vpack.c.b16 %v8721, %v8720
        %v8732 = vpack.c.b16 %v8723, %v8722
        %v8733 = vpack.c.b16 %v8725, %v8724
        %8742 = vmatpush.bf16.msra.mxu0 %v8733
        %8743 = vmatpush.bf16.msra.mxu0 %v8732
        %8744 = vmatpush.bf16.msra.mxu0 %v8731
        %8745 = vmatpush.bf16.msra.mxu0 %v8730
        %8746 = vmatpush.bf16.msra.mxu0 %v8729
        %8747 = vmatpush.bf16.msra.mxu0 %v8728
        %8748 = vmatpush.bf16.msra.mxu0 %v8727
        %8749 = vmatpush.bf16.msra.mxu0 %v8726
        %8750 = vmatmul.bf16.gmra.mxu0 %v8647
        %v8751 = vpop.f32.mrf.mxu0
        %v8752 = vadd.f32 0.0, %v8751
        %v8753 = vpop.f32.mrf.mxu0
        %v8754 = vadd.f32 0.0, %v8753
        %8755 = vmatmul.bf16.gmra.mxu0 %v8649
        %v8756 = vpop.f32.mrf.mxu0
        %v8757 = vadd.f32 0.0, %v8756
        %v8758 = vpop.f32.mrf.mxu0
        %v8759 = vadd.f32 0.0, %v8758
        %8760 = vmatmul.bf16.gmra.mxu0 %v8651
        %v8761 = vpop.f32.mrf.mxu0
        %v8762 = vadd.f32 0.0, %v8761
        %v8763 = vpop.f32.mrf.mxu0
        %v8764 = vadd.f32 0.0, %v8763
        %8765 = vmatmul.bf16.gmra.mxu0 %v8653
        %v8766 = vpop.f32.mrf.mxu0
        %v8767 = vadd.f32 0.0, %v8766
        %v8768 = vpop.f32.mrf.mxu0
        %v8769 = vadd.f32 0.0, %v8768
        %8770 = vmatmul.bf16.gmra.mxu0 %v8655
        %v8771 = vpop.f32.mrf.mxu0
        %v8772 = vadd.f32 0.0, %v8771
        %v8773 = vpop.f32.mrf.mxu0
        %v8774 = vadd.f32 0.0, %v8773
        %8775 = vmatmul.bf16.gmra.mxu0 %v8657
        %v8776 = vpop.f32.mrf.mxu0
        %v8777 = vadd.f32 0.0, %v8776
        %v8778 = vpop.f32.mrf.mxu0
        %v8779 = vadd.f32 0.0, %v8778
        %8780 = vmatmul.bf16.gmra.mxu0 %v8659
        %v8781 = vpop.f32.mrf.mxu0
        %v8782 = vadd.f32 0.0, %v8781
        %v8783 = vpop.f32.mrf.mxu0
        %v8784 = vadd.f32 0.0, %v8783
        %8785 = vmatmul.bf16.gmra.mxu0 %v8661
        %v8786 = vpop.f32.mrf.mxu0
        %v8787 = vadd.f32 0.0, %v8786
        %v8788 = vpop.f32.mrf.mxu0
        %v8789 = vadd.f32 0.0, %v8788
        %8790 = vmatmul.bf16.gmra.mxu0 %v8663
        %v8791 = vpop.f32.mrf.mxu0
        %v8792 = vadd.f32 0.0, %v8791
        %v8793 = vpop.f32.mrf.mxu0
        %v8794 = vadd.f32 0.0, %v8793
        %8795 = vmatmul.bf16.gmra.mxu0 %v8665
        %v8796 = vpop.f32.mrf.mxu0
        %v8797 = vadd.f32 0.0, %v8796
        %v8798 = vpop.f32.mrf.mxu0
        %v8799 = vadd.f32 0.0, %v8798
        %8800 = vmatmul.bf16.gmra.mxu0 %v8667
        %v8801 = vpop.f32.mrf.mxu0
        %v8802 = vadd.f32 0.0, %v8801
        %v8803 = vpop.f32.mrf.mxu0
        %v8804 = vadd.f32 0.0, %v8803
        %8805 = vmatmul.bf16.gmra.mxu0 %v8669
        %v8806 = vpop.f32.mrf.mxu0
        %v8807 = vadd.f32 0.0, %v8806
        %v8808 = vpop.f32.mrf.mxu0
        %v8809 = vadd.f32 0.0, %v8808
        %8810 = vmatmul.bf16.gmra.mxu0 %v8671
        %v8811 = vpop.f32.mrf.mxu0
        %v8812 = vadd.f32 0.0, %v8811
        %v8813 = vpop.f32.mrf.mxu0
        %v8814 = vadd.f32 0.0, %v8813
        %8815 = vmatmul.bf16.gmra.mxu0 %v8673
        %v8816 = vpop.f32.mrf.mxu0
        %v8817 = vadd.f32 0.0, %v8816
        %v8818 = vpop.f32.mrf.mxu0
        %v8819 = vadd.f32 0.0, %v8818
        %8820 = vmatmul.bf16.gmra.mxu0 %v8675
        %v8821 = vpop.f32.mrf.mxu0
        %v8822 = vadd.f32 0.0, %v8821
        %v8823 = vpop.f32.mrf.mxu0
        %v8824 = vadd.f32 0.0, %v8823
        %8825 = vmatmul.bf16.gmra.mxu0 %v8677
        %v8826 = vpop.f32.mrf.mxu0
        %v8827 = vadd.f32 0.0, %v8826
        %v8828 = vpop.f32.mrf.mxu0
        %v8829 = vadd.f32 0.0, %v8828
        %8830 = vdwg.mxu0
        %v8864 = vunpack.c.l.b16 %v8458
        %v8865 = vunpack.c.l.b16 %v8459
        %v8866 = vunpack.c.l.b16 %v8460
        %v8867 = vunpack.c.l.b16 %v8461
        %v8868 = vunpack.c.l.b16 %v8462
        %v8869 = vunpack.c.l.b16 %v8463
        %v8870 = vunpack.c.l.b16 %v8464
        %v8871 = vunpack.c.l.b16 %v8465
        %v8872 = vunpack.c.l.b16 %v8466
        %v8873 = vunpack.c.l.b16 %v8467
        %v8874 = vunpack.c.l.b16 %v8468
        %v8875 = vunpack.c.l.b16 %v8469
        %v8876 = vunpack.c.l.b16 %v8470
        %v8877 = vunpack.c.l.b16 %v8471
        %v8878 = vunpack.c.l.b16 %v8472
        %v8879 = vunpack.c.l.b16 %v8473
        %v8880 = vunpack.c.l.b16 %v8474
        %v8881 = vunpack.c.l.b16 %v8475
        %v8882 = vunpack.c.l.b16 %v8476
        %v8883 = vunpack.c.l.b16 %v8477
        %v8884 = vunpack.c.l.b16 %v8478
        %v8885 = vunpack.c.l.b16 %v8479
        %v8886 = vunpack.c.l.b16 %v8480
        %v8887 = vunpack.c.l.b16 %v8481
        %v8888 = vunpack.c.l.b16 %v8482
        %v8889 = vunpack.c.l.b16 %v8483
        %v8890 = vunpack.c.l.b16 %v8484
        %v8891 = vunpack.c.l.b16 %v8485
        %v8892 = vunpack.c.l.b16 %v8486
        %v8893 = vunpack.c.l.b16 %v8487
        %v8894 = vunpack.c.l.b16 %v8488
        %v8895 = vunpack.c.l.b16 %v8489
        %v8896 = vunpack.c.l.b16 %v8490
        %v8897 = vpack.c.b16 %v8865, %v8864
        %v8898 = vpack.c.b16 %v8867, %v8866
        %v8899 = vpack.c.b16 %v8869, %v8868
        %v8900 = vpack.c.b16 %v8871, %v8870
        %v8901 = vpack.c.b16 %v8873, %v8872
        %v8902 = vpack.c.b16 %v8875, %v8874
        %v8903 = vpack.c.b16 %v8877, %v8876
        %v8904 = vpack.c.b16 %v8879, %v8878
        %v8905 = vpack.c.b16 %v8881, %v8880
        %v8906 = vpack.c.b16 %v8883, %v8882
        %v8907 = vpack.c.b16 %v8885, %v8884
        %v8908 = vpack.c.b16 %v8887, %v8886
        %v8909 = vpack.c.b16 %v8889, %v8888
        %v8910 = vpack.c.b16 %v8891, %v8890
        %v8911 = vpack.c.b16 %v8893, %v8892
        %v8912 = vpack.c.b16 %v8895, %v8894
        %v8913 = vpack.c.b16 %v8896, %v8896
        %v8914 = vrot.slane %v8897, 1
        %v8915 = vrot.slane %v8898, 1
        %v8916 = vsel %vm3279, %v8914, %v8915
        %v8917 = vrot.slane %v8899, 1
        %v8918 = vsel %vm3279, %v8915, %v8917
        %v8919 = vrot.slane %v8900, 1
        %v8920 = vsel %vm3279, %v8917, %v8919
        %v8921 = vrot.slane %v8901, 1
        %v8922 = vsel %vm3279, %v8919, %v8921
        %v8923 = vrot.slane %v8902, 1
        %v8924 = vsel %vm3279, %v8921, %v8923
        %v8925 = vrot.slane %v8903, 1
        %v8926 = vsel %vm3279, %v8923, %v8925
        %v8927 = vrot.slane %v8904, 1
        %v8928 = vsel %vm3279, %v8925, %v8927
        %v8929 = vrot.slane %v8905, 1
        %v8930 = vsel %vm3279, %v8927, %v8929
        %v8931 = vrot.slane %v8906, 1
        %v8932 = vsel %vm3279, %v8929, %v8931
        %v8933 = vrot.slane %v8907, 1
        %v8934 = vsel %vm3279, %v8931, %v8933
        %v8935 = vrot.slane %v8908, 1
        %v8936 = vsel %vm3279, %v8933, %v8935
        %v8937 = vrot.slane %v8909, 1
        %v8938 = vsel %vm3279, %v8935, %v8937
        %v8939 = vrot.slane %v8910, 1
        %v8940 = vsel %vm3279, %v8937, %v8939
        %v8941 = vrot.slane %v8911, 1
        %v8942 = vsel %vm3279, %v8939, %v8941
        %v8943 = vrot.slane %v8912, 1
        %v8944 = vsel %vm3279, %v8941, %v8943
        %v8945 = vrot.slane %v8913, 1
        %v8946 = vsel %vm3279, %v8943, %v8945
        %v8979 = vunpack.c.l.b16 %v8494
        %v8980 = vunpack.c.l.b16 %v8495
        %v8981 = vunpack.c.l.b16 %v8496
        %v8982 = vunpack.c.l.b16 %v8497
        %v8983 = vunpack.c.l.b16 %v8498
        %v8984 = vunpack.c.l.b16 %v8499
        %v8985 = vunpack.c.l.b16 %v8500
        %v8986 = vunpack.c.l.b16 %v8501
        %v8987 = vunpack.c.l.b16 %v8502
        %v8988 = vunpack.c.l.b16 %v8503
        %v8989 = vunpack.c.l.b16 %v8504
        %v8990 = vunpack.c.l.b16 %v8505
        %v8991 = vunpack.c.l.b16 %v8506
        %v8992 = vunpack.c.l.b16 %v8507
        %v8993 = vunpack.c.l.b16 %v8508
        %v8994 = vunpack.c.l.b16 %v8509
        %v8995 = vpack.c.b16 %v8980, %v8979
        %v8996 = vpack.c.b16 %v8982, %v8981
        %v8997 = vpack.c.b16 %v8984, %v8983
        %v8998 = vpack.c.b16 %v8986, %v8985
        %v8999 = vpack.c.b16 %v8988, %v8987
        %v9000 = vpack.c.b16 %v8990, %v8989
        %v9001 = vpack.c.b16 %v8992, %v8991
        %v9002 = vpack.c.b16 %v8994, %v8993
        %9011 = vmatpush.bf16.msra.mxu0 %v9002
        %9012 = vmatpush.bf16.msra.mxu0 %v9001
        %9013 = vmatpush.bf16.msra.mxu0 %v9000
        %9014 = vmatpush.bf16.msra.mxu0 %v8999
        %9015 = vmatpush.bf16.msra.mxu0 %v8998
        %9016 = vmatpush.bf16.msra.mxu0 %v8997
        %9017 = vmatpush.bf16.msra.mxu0 %v8996
        %9018 = vmatpush.bf16.msra.mxu0 %v8995
        %9019 = vmatmul.bf16.gmra.mxu0 %v8916
        %v9020 = vpop.f32.mrf.mxu0
        %v9021 = vadd.f32 %v8752, %v9020
        %v9022 = vpop.f32.mrf.mxu0
        %v9023 = vadd.f32 %v8754, %v9022
        %9024 = vmatmul.bf16.gmra.mxu0 %v8918
        %v9025 = vpop.f32.mrf.mxu0
        %v9026 = vadd.f32 %v8757, %v9025
        %v9027 = vpop.f32.mrf.mxu0
        %v9028 = vadd.f32 %v8759, %v9027
        %9029 = vmatmul.bf16.gmra.mxu0 %v8920
        %v9030 = vpop.f32.mrf.mxu0
        %v9031 = vadd.f32 %v8762, %v9030
        %v9032 = vpop.f32.mrf.mxu0
        %v9033 = vadd.f32 %v8764, %v9032
        %9034 = vmatmul.bf16.gmra.mxu0 %v8922
        %v9035 = vpop.f32.mrf.mxu0
        %v9036 = vadd.f32 %v8767, %v9035
        %v9037 = vpop.f32.mrf.mxu0
        %v9038 = vadd.f32 %v8769, %v9037
        %9039 = vmatmul.bf16.gmra.mxu0 %v8924
        %v9040 = vpop.f32.mrf.mxu0
        %v9041 = vadd.f32 %v8772, %v9040
        %v9042 = vpop.f32.mrf.mxu0
        %v9043 = vadd.f32 %v8774, %v9042
        %9044 = vmatmul.bf16.gmra.mxu0 %v8926
        %v9045 = vpop.f32.mrf.mxu0
        %v9046 = vadd.f32 %v8777, %v9045
        %v9047 = vpop.f32.mrf.mxu0
        %v9048 = vadd.f32 %v8779, %v9047
        %9049 = vmatmul.bf16.gmra.mxu0 %v8928
        %v9050 = vpop.f32.mrf.mxu0
        %v9051 = vadd.f32 %v8782, %v9050
        %v9052 = vpop.f32.mrf.mxu0
        %v9053 = vadd.f32 %v8784, %v9052
        %9054 = vmatmul.bf16.gmra.mxu0 %v8930
        %v9055 = vpop.f32.mrf.mxu0
        %v9056 = vadd.f32 %v8787, %v9055
        %v9057 = vpop.f32.mrf.mxu0
        %v9058 = vadd.f32 %v8789, %v9057
        %9059 = vmatmul.bf16.gmra.mxu0 %v8932
        %v9060 = vpop.f32.mrf.mxu0
        %v9061 = vadd.f32 %v8792, %v9060
        %v9062 = vpop.f32.mrf.mxu0
        %v9063 = vadd.f32 %v8794, %v9062
        %9064 = vmatmul.bf16.gmra.mxu0 %v8934
        %v9065 = vpop.f32.mrf.mxu0
        %v9066 = vadd.f32 %v8797, %v9065
        %v9067 = vpop.f32.mrf.mxu0
        %v9068 = vadd.f32 %v8799, %v9067
        %9069 = vmatmul.bf16.gmra.mxu0 %v8936
        %v9070 = vpop.f32.mrf.mxu0
        %v9071 = vadd.f32 %v8802, %v9070
        %v9072 = vpop.f32.mrf.mxu0
        %v9073 = vadd.f32 %v8804, %v9072
        %9074 = vmatmul.bf16.gmra.mxu0 %v8938
        %v9075 = vpop.f32.mrf.mxu0
        %v9076 = vadd.f32 %v8807, %v9075
        %v9077 = vpop.f32.mrf.mxu0
        %v9078 = vadd.f32 %v8809, %v9077
        %9079 = vmatmul.bf16.gmra.mxu0 %v8940
        %v9080 = vpop.f32.mrf.mxu0
        %v9081 = vadd.f32 %v8812, %v9080
        %v9082 = vpop.f32.mrf.mxu0
        %v9083 = vadd.f32 %v8814, %v9082
        %9084 = vmatmul.bf16.gmra.mxu0 %v8942
        %v9085 = vpop.f32.mrf.mxu0
        %v9086 = vadd.f32 %v8817, %v9085
        %v9087 = vpop.f32.mrf.mxu0
        %v9088 = vadd.f32 %v8819, %v9087
        %9089 = vmatmul.bf16.gmra.mxu0 %v8944
        %v9090 = vpop.f32.mrf.mxu0
        %v9091 = vadd.f32 %v8822, %v9090
        %v9092 = vpop.f32.mrf.mxu0
        %v9093 = vadd.f32 %v8824, %v9092
        %9094 = vmatmul.bf16.gmra.mxu0 %v8946
        %v9095 = vpop.f32.mrf.mxu0
        %v9096 = vadd.f32 %v8827, %v9095
        %v9097 = vpop.f32.mrf.mxu0
        %v9098 = vadd.f32 %v8829, %v9097
        %9099 = vdwg.mxu0
        %v9100 = vld [vmem:[#allocation2 + $0x138] sm:$0xe]
        %v9101 = vld [vmem:[#allocation2 + $0x13c] sm:$0xf]
        %v9102 = vld [vmem:[#allocation2 + $0x140] sm:$0xf]
        %v9103 = vld [vmem:[#allocation2 + $0x144] sm:$0xf]
        %v9104 = vld [vmem:[#allocation2 + $0x148] sm:$0xf]
        %v9105 = vld [vmem:[#allocation2 + $0x14c] sm:$0xf]
        %v9106 = vld [vmem:[#allocation2 + $0x150] sm:$0xf]
        %v9107 = vld [vmem:[#allocation2 + $0x154] sm:$0xf]
        %v9108 = vld [vmem:[#allocation2 + $0x158] sm:$0xf]
        %v9109 = vld [vmem:[#allocation2 + $0x15c] sm:$0xf]
        %v9110 = vld [vmem:[#allocation2 + $0x160] sm:$0xf]
        %v9111 = vld [vmem:[#allocation2 + $0x164] sm:$0xf]
        %v9112 = vld [vmem:[#allocation2 + $0x168] sm:$0xf]
        %v9113 = vld [vmem:[#allocation2 + $0x16c] sm:$0xf]
        %v9114 = vld [vmem:[#allocation2 + $0x170] sm:$0xf]
        %v9115 = vld [vmem:[#allocation2 + $0x174] sm:$0xf]
        %v9116 = vld [vmem:[#allocation2 + $0x178] sm:$0xf]
        %v9117 = vld [vmem:[#allocation2 + $0x17c] sm:$0xf]
        %v9118 = vld [vmem:[#allocation2 + $0x180] sm:$0xf]
        %v9119 = vld [vmem:[#allocation2 + $0x184] sm:$0xf]
        %v9120 = vld [vmem:[#allocation2 + $0x188] sm:$0xf]
        %v9121 = vld [vmem:[#allocation2 + $0x18c] sm:$0xf]
        %v9122 = vld [vmem:[#allocation2 + $0x190] sm:$0xf]
        %v9123 = vld [vmem:[#allocation2 + $0x194] sm:$0xf]
        %v9124 = vld [vmem:[#allocation2 + $0x198] sm:$0xf]
        %v9125 = vld [vmem:[#allocation2 + $0x19c] sm:$0xf]
        %v9126 = vld [vmem:[#allocation2 + $0x1a0] sm:$0xf]
        %v9127 = vld [vmem:[#allocation2 + $0x1a4] sm:$0xf]
        %v9128 = vld [vmem:[#allocation2 + $0x1a8] sm:$0xf]
        %v9129 = vld [vmem:[#allocation2 + $0x1ac] sm:$0xf]
        %v9130 = vld [vmem:[#allocation2 + $0x1b0] sm:$0xf]
        %v9131 = vld [vmem:[#allocation2 + $0x1b4] sm:$0xf]
        %v9132 = vld [vmem:[#allocation2 + $0x1b8] sm:$0x1]
        %s9133 = sadd.s32 %s701, 768
        %s9134 = smul.addr %s9133, 4
        %s9135 = scalar_lea.vmem [#allocation4], %s9134
        %v9136 = vld [vmem:[%s9135] sm:$0xf]
        %v9137 = vld [vmem:[%s9135 + $0x4] sm:$0xf]
        %v9138 = vld [vmem:[%s9135 + $0x8] sm:$0xf]
        %v9139 = vld [vmem:[%s9135 + $0xc] sm:$0xf]
        %v9140 = vld [vmem:[%s9135 + $0x10] sm:$0xf]
        %v9141 = vld [vmem:[%s9135 + $0x14] sm:$0xf]
        %v9142 = vld [vmem:[%s9135 + $0x18] sm:$0xf]
        %v9143 = vld [vmem:[%s9135 + $0x1c] sm:$0xf]
        %v9144 = vld [vmem:[%s9135 + $0x20] sm:$0xf]
        %v9145 = vld [vmem:[%s9135 + $0x24] sm:$0xf]
        %v9146 = vld [vmem:[%s9135 + $0x28] sm:$0xf]
        %v9147 = vld [vmem:[%s9135 + $0x2c] sm:$0xf]
        %v9148 = vld [vmem:[%s9135 + $0x30] sm:$0xf]
        %v9149 = vld [vmem:[%s9135 + $0x34] sm:$0xf]
        %v9150 = vld [vmem:[%s9135 + $0x38] sm:$0xf]
        %v9151 = vld [vmem:[%s9135 + $0x3c] sm:$0xf]
        %v9185 = vunpack.c.l.b16 %v9100
        %v9186 = vunpack.c.l.b16 %v9101
        %v9187 = vunpack.c.l.b16 %v9102
        %v9188 = vunpack.c.l.b16 %v9103
        %v9189 = vunpack.c.l.b16 %v9104
        %v9190 = vunpack.c.l.b16 %v9105
        %v9191 = vunpack.c.l.b16 %v9106
        %v9192 = vunpack.c.l.b16 %v9107
        %v9193 = vunpack.c.l.b16 %v9108
        %v9194 = vunpack.c.l.b16 %v9109
        %v9195 = vunpack.c.l.b16 %v9110
        %v9196 = vunpack.c.l.b16 %v9111
        %v9197 = vunpack.c.l.b16 %v9112
        %v9198 = vunpack.c.l.b16 %v9113
        %v9199 = vunpack.c.l.b16 %v9114
        %v9200 = vunpack.c.l.b16 %v9115
        %v9201 = vunpack.c.l.b16 %v9116
        %v9202 = vunpack.c.l.b16 %v9117
        %v9203 = vunpack.c.l.b16 %v9118
        %v9204 = vunpack.c.l.b16 %v9119
        %v9205 = vunpack.c.l.b16 %v9120
        %v9206 = vunpack.c.l.b16 %v9121
        %v9207 = vunpack.c.l.b16 %v9122
        %v9208 = vunpack.c.l.b16 %v9123
        %v9209 = vunpack.c.l.b16 %v9124
        %v9210 = vunpack.c.l.b16 %v9125
        %v9211 = vunpack.c.l.b16 %v9126
        %v9212 = vunpack.c.l.b16 %v9127
        %v9213 = vunpack.c.l.b16 %v9128
        %v9214 = vunpack.c.l.b16 %v9129
        %v9215 = vunpack.c.l.b16 %v9130
        %v9216 = vunpack.c.l.b16 %v9131
        %v9217 = vunpack.c.l.b16 %v9132
        %v9218 = vpack.c.b16 %v9186, %v9185
        %v9219 = vpack.c.b16 %v9188, %v9187
        %v9220 = vpack.c.b16 %v9190, %v9189
        %v9221 = vpack.c.b16 %v9192, %v9191
        %v9222 = vpack.c.b16 %v9194, %v9193
        %v9223 = vpack.c.b16 %v9196, %v9195
        %v9224 = vpack.c.b16 %v9198, %v9197
        %v9225 = vpack.c.b16 %v9200, %v9199
        %v9226 = vpack.c.b16 %v9202, %v9201
        %v9227 = vpack.c.b16 %v9204, %v9203
        %v9228 = vpack.c.b16 %v9206, %v9205
        %v9229 = vpack.c.b16 %v9208, %v9207
        %v9230 = vpack.c.b16 %v9210, %v9209
        %v9231 = vpack.c.b16 %v9212, %v9211
        %v9232 = vpack.c.b16 %v9214, %v9213
        %v9233 = vpack.c.b16 %v9216, %v9215
        %v9234 = vpack.c.b16 %v9217, %v9217
        %v9235 = vrot.slane %v9218, 1
        %v9236 = vrot.slane %v9219, 1
        %v9237 = vsel %vm3279, %v9235, %v9236
        %v9238 = vrot.slane %v9220, 1
        %v9239 = vsel %vm3279, %v9236, %v9238
        %v9240 = vrot.slane %v9221, 1
        %v9241 = vsel %vm3279, %v9238, %v9240
        %v9242 = vrot.slane %v9222, 1
        %v9243 = vsel %vm3279, %v9240, %v9242
        %v9244 = vrot.slane %v9223, 1
        %v9245 = vsel %vm3279, %v9242, %v9244
        %v9246 = vrot.slane %v9224, 1
        %v9247 = vsel %vm3279, %v9244, %v9246
        %v9248 = vrot.slane %v9225, 1
        %v9249 = vsel %vm3279, %v9246, %v9248
        %v9250 = vrot.slane %v9226, 1
        %v9251 = vsel %vm3279, %v9248, %v9250
        %v9252 = vrot.slane %v9227, 1
        %v9253 = vsel %vm3279, %v9250, %v9252
        %v9254 = vrot.slane %v9228, 1
        %v9255 = vsel %vm3279, %v9252, %v9254
        %v9256 = vrot.slane %v9229, 1
        %v9257 = vsel %vm3279, %v9254, %v9256
        %v9258 = vrot.slane %v9230, 1
        %v9259 = vsel %vm3279, %v9256, %v9258
        %v9260 = vrot.slane %v9231, 1
        %v9261 = vsel %vm3279, %v9258, %v9260
        %v9262 = vrot.slane %v9232, 1
        %v9263 = vsel %vm3279, %v9260, %v9262
        %v9264 = vrot.slane %v9233, 1
        %v9265 = vsel %vm3279, %v9262, %v9264
        %v9266 = vrot.slane %v9234, 1
        %v9267 = vsel %vm3279, %v9264, %v9266
        %v9300 = vunpack.c.l.b16 %v9136
        %v9301 = vunpack.c.l.b16 %v9137
        %v9302 = vunpack.c.l.b16 %v9138
        %v9303 = vunpack.c.l.b16 %v9139
        %v9304 = vunpack.c.l.b16 %v9140
        %v9305 = vunpack.c.l.b16 %v9141
        %v9306 = vunpack.c.l.b16 %v9142
        %v9307 = vunpack.c.l.b16 %v9143
        %v9308 = vunpack.c.l.b16 %v9144
        %v9309 = vunpack.c.l.b16 %v9145
        %v9310 = vunpack.c.l.b16 %v9146
        %v9311 = vunpack.c.l.b16 %v9147
        %v9312 = vunpack.c.l.b16 %v9148
        %v9313 = vunpack.c.l.b16 %v9149
        %v9314 = vunpack.c.l.b16 %v9150
        %v9315 = vunpack.c.l.b16 %v9151
        %v9316 = vpack.c.b16 %v9301, %v9300
        %v9317 = vpack.c.b16 %v9303, %v9302
        %v9318 = vpack.c.b16 %v9305, %v9304
        %v9319 = vpack.c.b16 %v9307, %v9306
        %v9320 = vpack.c.b16 %v9309, %v9308
        %v9321 = vpack.c.b16 %v9311, %v9310
        %v9322 = vpack.c.b16 %v9313, %v9312
        %v9323 = vpack.c.b16 %v9315, %v9314
        %9332 = vmatpush.bf16.msra.mxu0 %v9323
        %9333 = vmatpush.bf16.msra.mxu0 %v9322
        %9334 = vmatpush.bf16.msra.mxu0 %v9321
        %9335 = vmatpush.bf16.msra.mxu0 %v9320
        %9336 = vmatpush.bf16.msra.mxu0 %v9319
        %9337 = vmatpush.bf16.msra.mxu0 %v9318
        %9338 = vmatpush.bf16.msra.mxu0 %v9317
        %9339 = vmatpush.bf16.msra.mxu0 %v9316
        %9340 = vmatmul.bf16.gmra.mxu0 %v9237
        %v9341 = vpop.f32.mrf.mxu0
        %v9342 = vadd.f32 0.0, %v9341
        %v9343 = vpop.f32.mrf.mxu0
        %v9344 = vadd.f32 0.0, %v9343
        %9345 = vmatmul.bf16.gmra.mxu0 %v9239
        %v9346 = vpop.f32.mrf.mxu0
        %v9347 = vadd.f32 0.0, %v9346
        %v9348 = vpop.f32.mrf.mxu0
        %v9349 = vadd.f32 0.0, %v9348
        %9350 = vmatmul.bf16.gmra.mxu0 %v9241
        %v9351 = vpop.f32.mrf.mxu0
        %v9352 = vadd.f32 0.0, %v9351
        %v9353 = vpop.f32.mrf.mxu0
        %v9354 = vadd.f32 0.0, %v9353
        %9355 = vmatmul.bf16.gmra.mxu0 %v9243
        %v9356 = vpop.f32.mrf.mxu0
        %v9357 = vadd.f32 0.0, %v9356
        %v9358 = vpop.f32.mrf.mxu0
        %v9359 = vadd.f32 0.0, %v9358
        %9360 = vmatmul.bf16.gmra.mxu0 %v9245
        %v9361 = vpop.f32.mrf.mxu0
        %v9362 = vadd.f32 0.0, %v9361
        %v9363 = vpop.f32.mrf.mxu0
        %v9364 = vadd.f32 0.0, %v9363
        %9365 = vmatmul.bf16.gmra.mxu0 %v9247
        %v9366 = vpop.f32.mrf.mxu0
        %v9367 = vadd.f32 0.0, %v9366
        %v9368 = vpop.f32.mrf.mxu0
        %v9369 = vadd.f32 0.0, %v9368
        %9370 = vmatmul.bf16.gmra.mxu0 %v9249
        %v9371 = vpop.f32.mrf.mxu0
        %v9372 = vadd.f32 0.0, %v9371
        %v9373 = vpop.f32.mrf.mxu0
        %v9374 = vadd.f32 0.0, %v9373
        %9375 = vmatmul.bf16.gmra.mxu0 %v9251
        %v9376 = vpop.f32.mrf.mxu0
        %v9377 = vadd.f32 0.0, %v9376
        %v9378 = vpop.f32.mrf.mxu0
        %v9379 = vadd.f32 0.0, %v9378
        %9380 = vmatmul.bf16.gmra.mxu0 %v9253
        %v9381 = vpop.f32.mrf.mxu0
        %v9382 = vadd.f32 0.0, %v9381
        %v9383 = vpop.f32.mrf.mxu0
        %v9384 = vadd.f32 0.0, %v9383
        %9385 = vmatmul.bf16.gmra.mxu0 %v9255
        %v9386 = vpop.f32.mrf.mxu0
        %v9387 = vadd.f32 0.0, %v9386
        %v9388 = vpop.f32.mrf.mxu0
        %v9389 = vadd.f32 0.0, %v9388
        %9390 = vmatmul.bf16.gmra.mxu0 %v9257
        %v9391 = vpop.f32.mrf.mxu0
        %v9392 = vadd.f32 0.0, %v9391
        %v9393 = vpop.f32.mrf.mxu0
        %v9394 = vadd.f32 0.0, %v9393
        %9395 = vmatmul.bf16.gmra.mxu0 %v9259
        %v9396 = vpop.f32.mrf.mxu0
        %v9397 = vadd.f32 0.0, %v9396
        %v9398 = vpop.f32.mrf.mxu0
        %v9399 = vadd.f32 0.0, %v9398
        %9400 = vmatmul.bf16.gmra.mxu0 %v9261
        %v9401 = vpop.f32.mrf.mxu0
        %v9402 = vadd.f32 0.0, %v9401
        %v9403 = vpop.f32.mrf.mxu0
        %v9404 = vadd.f32 0.0, %v9403
        %9405 = vmatmul.bf16.gmra.mxu0 %v9263
        %v9406 = vpop.f32.mrf.mxu0
        %v9407 = vadd.f32 0.0, %v9406
        %v9408 = vpop.f32.mrf.mxu0
        %v9409 = vadd.f32 0.0, %v9408
        %9410 = vmatmul.bf16.gmra.mxu0 %v9265
        %v9411 = vpop.f32.mrf.mxu0
        %v9412 = vadd.f32 0.0, %v9411
        %v9413 = vpop.f32.mrf.mxu0
        %v9414 = vadd.f32 0.0, %v9413
        %9415 = vmatmul.bf16.gmra.mxu0 %v9267
        %v9416 = vpop.f32.mrf.mxu0
        %v9417 = vadd.f32 0.0, %v9416
        %v9418 = vpop.f32.mrf.mxu0
        %v9419 = vadd.f32 0.0, %v9418
        %9420 = vdwg.mxu0
        %v9421 = vadd.f32 %v9021, %v9342
        %v9422 = vadd.f32 %v9023, %v9344
        %v9423 = vadd.f32 %v9026, %v9347
        %v9424 = vadd.f32 %v9028, %v9349
        %v9425 = vadd.f32 %v9031, %v9352
        %v9426 = vadd.f32 %v9033, %v9354
        %v9427 = vadd.f32 %v9036, %v9357
        %v9428 = vadd.f32 %v9038, %v9359
        %v9429 = vadd.f32 %v9041, %v9362
        %v9430 = vadd.f32 %v9043, %v9364
        %v9431 = vadd.f32 %v9046, %v9367
        %v9432 = vadd.f32 %v9048, %v9369
        %v9433 = vadd.f32 %v9051, %v9372
        %v9434 = vadd.f32 %v9053, %v9374
        %v9435 = vadd.f32 %v9056, %v9377
        %v9436 = vadd.f32 %v9058, %v9379
        %v9437 = vadd.f32 %v9061, %v9382
        %v9438 = vadd.f32 %v9063, %v9384
        %v9439 = vadd.f32 %v9066, %v9387
        %v9440 = vadd.f32 %v9068, %v9389
        %v9441 = vadd.f32 %v9071, %v9392
        %v9442 = vadd.f32 %v9073, %v9394
        %v9443 = vadd.f32 %v9076, %v9397
        %v9444 = vadd.f32 %v9078, %v9399
        %v9445 = vadd.f32 %v9081, %v9402
        %v9446 = vadd.f32 %v9083, %v9404
        %v9447 = vadd.f32 %v9086, %v9407
        %v9448 = vadd.f32 %v9088, %v9409
        %v9449 = vadd.f32 %v9091, %v9412
        %v9450 = vadd.f32 %v9093, %v9414
        %v9451 = vadd.f32 %v9096, %v9417
        %v9452 = vadd.f32 %v9098, %v9419
        %s9453 = scalar_lea.vmem [#allocation7], 1280
        %v9454 = vld [vmem:[%s9453] sm:$0xff]
        %v9455 = vld [vmem:[%s9453 + $0x8] sm:$0xff]
        %v9456 = vld [vmem:[%s9453 + $0x10] sm:$0xff]
        %v9457 = vld [vmem:[%s9453 + $0x18] sm:$0xff]
        %v9458 = vld [vmem:[%s9453 + $0x20] sm:$0xff]
        %v9459 = vld [vmem:[%s9453 + $0x28] sm:$0xff]
        %v9460 = vld [vmem:[%s9453 + $0x30] sm:$0xff]
        %v9461 = vld [vmem:[%s9453 + $0x38] sm:$0xff]
        %v9462 = vld [vmem:[%s9453 + $0x40] sm:$0xff]
        %v9463 = vld [vmem:[%s9453 + $0x48] sm:$0xff]
        %v9464 = vld [vmem:[%s9453 + $0x50] sm:$0xff]
        %v9465 = vld [vmem:[%s9453 + $0x58] sm:$0xff]
        %v9466 = vld [vmem:[%s9453 + $0x60] sm:$0xff]
        %v9467 = vld [vmem:[%s9453 + $0x68] sm:$0xff]
        %v9468 = vld [vmem:[%s9453 + $0x70] sm:$0xff]
        %v9469 = vld [vmem:[%s9453 + $0x78] sm:$0xff]
        %v9470 = vld [vmem:[%s9453 + $0x80] sm:$0xff]
        %v9471 = vld [vmem:[%s9453 + $0x88] sm:$0xff]
        %v9472 = vld [vmem:[%s9453 + $0x90] sm:$0xff]
        %v9473 = vld [vmem:[%s9453 + $0x98] sm:$0xff]
        %v9474 = vld [vmem:[%s9453 + $0xa0] sm:$0xff]
        %v9475 = vld [vmem:[%s9453 + $0xa8] sm:$0xff]
        %v9476 = vld [vmem:[%s9453 + $0xb0] sm:$0xff]
        %v9477 = vld [vmem:[%s9453 + $0xb8] sm:$0xff]
        %v9478 = vld [vmem:[%s9453 + $0xc0] sm:$0xff]
        %v9479 = vld [vmem:[%s9453 + $0xc8] sm:$0xff]
        %v9480 = vld [vmem:[%s9453 + $0xd0] sm:$0xff]
        %v9481 = vld [vmem:[%s9453 + $0xd8] sm:$0xff]
        %v9482 = vld [vmem:[%s9453 + $0xe0] sm:$0xff]
        %v9483 = vld [vmem:[%s9453 + $0xe8] sm:$0xff]
        %v9484 = vld [vmem:[%s9453 + $0xf0] sm:$0xff]
        %v9485 = vld [vmem:[%s9453 + $0xf8] sm:$0xff]
        %9487 = vset.pattern.permute.xlu0 0
        %9488 = vperm.xlu0 %9487, %v9454
        %v9489 = vpop.permute.xlu0 %9488
        %9492 = vset.pattern.permute.xlu0 0
        %9493 = vperm.xlu0 %9492, %v9455
        %v9494 = vpop.permute.xlu0 %9493
        %9497 = vset.pattern.permute.xlu0 0
        %9498 = vperm.xlu0 %9497, %v9456
        %v9499 = vpop.permute.xlu0 %9498
        %9502 = vset.pattern.permute.xlu0 0
        %9503 = vperm.xlu0 %9502, %v9457
        %v9504 = vpop.permute.xlu0 %9503
        %9507 = vset.pattern.permute.xlu0 0
        %9508 = vperm.xlu0 %9507, %v9458
        %v9509 = vpop.permute.xlu0 %9508
        %9512 = vset.pattern.permute.xlu0 0
        %9513 = vperm.xlu0 %9512, %v9459
        %v9514 = vpop.permute.xlu0 %9513
        %9517 = vset.pattern.permute.xlu0 0
        %9518 = vperm.xlu0 %9517, %v9460
        %v9519 = vpop.permute.xlu0 %9518
        %9522 = vset.pattern.permute.xlu0 0
        %9523 = vperm.xlu0 %9522, %v9461
        %v9524 = vpop.permute.xlu0 %9523
        %9527 = vset.pattern.permute.xlu0 0
        %9528 = vperm.xlu0 %9527, %v9462
        %v9529 = vpop.permute.xlu0 %9528
        %9532 = vset.pattern.permute.xlu0 0
        %9533 = vperm.xlu0 %9532, %v9463
        %v9534 = vpop.permute.xlu0 %9533
        %9537 = vset.pattern.permute.xlu0 0
        %9538 = vperm.xlu0 %9537, %v9464
        %v9539 = vpop.permute.xlu0 %9538
        %9542 = vset.pattern.permute.xlu0 0
        %9543 = vperm.xlu0 %9542, %v9465
        %v9544 = vpop.permute.xlu0 %9543
        %9547 = vset.pattern.permute.xlu0 0
        %9548 = vperm.xlu0 %9547, %v9466
        %v9549 = vpop.permute.xlu0 %9548
        %9552 = vset.pattern.permute.xlu0 0
        %9553 = vperm.xlu0 %9552, %v9467
        %v9554 = vpop.permute.xlu0 %9553
        %9557 = vset.pattern.permute.xlu0 0
        %9558 = vperm.xlu0 %9557, %v9468
        %v9559 = vpop.permute.xlu0 %9558
        %9562 = vset.pattern.permute.xlu0 0
        %9563 = vperm.xlu0 %9562, %v9469
        %v9564 = vpop.permute.xlu0 %9563
        %9567 = vset.pattern.permute.xlu0 0
        %9568 = vperm.xlu0 %9567, %v9470
        %v9569 = vpop.permute.xlu0 %9568
        %9572 = vset.pattern.permute.xlu0 0
        %9573 = vperm.xlu0 %9572, %v9471
        %v9574 = vpop.permute.xlu0 %9573
        %9577 = vset.pattern.permute.xlu0 0
        %9578 = vperm.xlu0 %9577, %v9472
        %v9579 = vpop.permute.xlu0 %9578
        %9582 = vset.pattern.permute.xlu0 0
        %9583 = vperm.xlu0 %9582, %v9473
        %v9584 = vpop.permute.xlu0 %9583
        %9587 = vset.pattern.permute.xlu0 0
        %9588 = vperm.xlu0 %9587, %v9474
        %v9589 = vpop.permute.xlu0 %9588
        %9592 = vset.pattern.permute.xlu0 0
        %9593 = vperm.xlu0 %9592, %v9475
        %v9594 = vpop.permute.xlu0 %9593
        %9597 = vset.pattern.permute.xlu0 0
        %9598 = vperm.xlu0 %9597, %v9476
        %v9599 = vpop.permute.xlu0 %9598
        %9602 = vset.pattern.permute.xlu0 0
        %9603 = vperm.xlu0 %9602, %v9477
        %v9604 = vpop.permute.xlu0 %9603
        %9607 = vset.pattern.permute.xlu0 0
        %9608 = vperm.xlu0 %9607, %v9478
        %v9609 = vpop.permute.xlu0 %9608
        %9612 = vset.pattern.permute.xlu0 0
        %9613 = vperm.xlu0 %9612, %v9479
        %v9614 = vpop.permute.xlu0 %9613
        %9617 = vset.pattern.permute.xlu0 0
        %9618 = vperm.xlu0 %9617, %v9480
        %v9619 = vpop.permute.xlu0 %9618
        %9622 = vset.pattern.permute.xlu0 0
        %9623 = vperm.xlu0 %9622, %v9481
        %v9624 = vpop.permute.xlu0 %9623
        %9627 = vset.pattern.permute.xlu0 0
        %9628 = vperm.xlu0 %9627, %v9482
        %v9629 = vpop.permute.xlu0 %9628
        %9632 = vset.pattern.permute.xlu0 0
        %9633 = vperm.xlu0 %9632, %v9483
        %v9634 = vpop.permute.xlu0 %9633
        %9637 = vset.pattern.permute.xlu0 0
        %9638 = vperm.xlu0 %9637, %v9484
        %v9639 = vpop.permute.xlu0 %9638
        %9642 = vset.pattern.permute.xlu0 0
        %9643 = vperm.xlu0 %9642, %v9485
        %v9644 = vpop.permute.xlu0 %9643
        %v9646 = vmul.f32 %v9421, %v9489
        %v9647 = vmul.f32 %v9422, %v9494
        %v9648 = vmul.f32 %v9423, %v9499
        %v9649 = vmul.f32 %v9424, %v9504
        %v9650 = vmul.f32 %v9425, %v9509
        %v9651 = vmul.f32 %v9426, %v9514
        %v9652 = vmul.f32 %v9427, %v9519
        %v9653 = vmul.f32 %v9428, %v9524
        %v9654 = vmul.f32 %v9429, %v9529
        %v9655 = vmul.f32 %v9430, %v9534
        %v9656 = vmul.f32 %v9431, %v9539
        %v9657 = vmul.f32 %v9432, %v9544
        %v9658 = vmul.f32 %v9433, %v9549
        %v9659 = vmul.f32 %v9434, %v9554
        %v9660 = vmul.f32 %v9435, %v9559
        %v9661 = vmul.f32 %v9436, %v9564
        %v9662 = vmul.f32 %v9437, %v9569
        %v9663 = vmul.f32 %v9438, %v9574
        %v9664 = vmul.f32 %v9439, %v9579
        %v9665 = vmul.f32 %v9440, %v9584
        %v9666 = vmul.f32 %v9441, %v9589
        %v9667 = vmul.f32 %v9442, %v9594
        %v9668 = vmul.f32 %v9443, %v9599
        %v9669 = vmul.f32 %v9444, %v9604
        %v9670 = vmul.f32 %v9445, %v9609
        %v9671 = vmul.f32 %v9446, %v9614
        %v9672 = vmul.f32 %v9447, %v9619
        %v9673 = vmul.f32 %v9448, %v9624
        %v9674 = vmul.f32 %v9449, %v9629
        %v9675 = vmul.f32 %v9450, %v9634
        %v9676 = vmul.f32 %v9451, %v9639
        %v9677 = vmul.f32 %v9452, %v9644
        %v9678 = vadd.f32 %v8426, %v9646
        %v9679 = vadd.f32 %v8427, %v9647
        %v9680 = vadd.f32 %v8428, %v9648
        %v9681 = vadd.f32 %v8429, %v9649
        %v9682 = vadd.f32 %v8430, %v9650
        %v9683 = vadd.f32 %v8431, %v9651
        %v9684 = vadd.f32 %v8432, %v9652
        %v9685 = vadd.f32 %v8433, %v9653
        %v9686 = vadd.f32 %v8434, %v9654
        %v9687 = vadd.f32 %v8435, %v9655
        %v9688 = vadd.f32 %v8436, %v9656
        %v9689 = vadd.f32 %v8437, %v9657
        %v9690 = vadd.f32 %v8438, %v9658
        %v9691 = vadd.f32 %v8439, %v9659
        %v9692 = vadd.f32 %v8440, %v9660
        %v9693 = vadd.f32 %v8441, %v9661
        %v9694 = vadd.f32 %v8442, %v9662
        %v9695 = vadd.f32 %v8443, %v9663
        %v9696 = vadd.f32 %v8444, %v9664
        %v9697 = vadd.f32 %v8445, %v9665
        %v9698 = vadd.f32 %v8446, %v9666
        %v9699 = vadd.f32 %v8447, %v9667
        %v9700 = vadd.f32 %v8448, %v9668
        %v9701 = vadd.f32 %v8449, %v9669
        %v9702 = vadd.f32 %v8450, %v9670
        %v9703 = vadd.f32 %v8451, %v9671
        %v9704 = vadd.f32 %v8452, %v9672
        %v9705 = vadd.f32 %v8453, %v9673
        %v9706 = vadd.f32 %v8454, %v9674
        %v9707 = vadd.f32 %v8455, %v9675
        %v9708 = vadd.f32 %v8456, %v9676
        %v9709 = vadd.f32 %v8457, %v9677
        %v9710 = vld [vmem:[%s447] sm:$0xff]
        %v9711 = vld [vmem:[%s447 + $0x8] sm:$0xff]
        %v9712 = vld [vmem:[%s447 + $0x10] sm:$0xff]
        %v9713 = vld [vmem:[%s447 + $0x18] sm:$0xff]
        %v9714 = vld [vmem:[%s447 + $0x20] sm:$0xff]
        %v9715 = vld [vmem:[%s447 + $0x28] sm:$0xff]
        %v9716 = vld [vmem:[%s447 + $0x30] sm:$0xff]
        %v9717 = vld [vmem:[%s447 + $0x38] sm:$0xff]
        %v9718 = vld [vmem:[%s447 + $0x40] sm:$0xff]
        %v9719 = vld [vmem:[%s447 + $0x48] sm:$0xff]
        %v9720 = vld [vmem:[%s447 + $0x50] sm:$0xff]
        %v9721 = vld [vmem:[%s447 + $0x58] sm:$0xff]
        %v9722 = vld [vmem:[%s447 + $0x60] sm:$0xff]
        %v9723 = vld [vmem:[%s447 + $0x68] sm:$0xff]
        %v9724 = vld [vmem:[%s447 + $0x70] sm:$0xff]
        %v9725 = vld [vmem:[%s447 + $0x78] sm:$0xff]
        %v9726 = vld [vmem:[%s447 + $0x80] sm:$0xff]
        %v9727 = vld [vmem:[%s447 + $0x88] sm:$0xff]
        %v9728 = vld [vmem:[%s447 + $0x90] sm:$0xff]
        %v9729 = vld [vmem:[%s447 + $0x98] sm:$0xff]
        %v9730 = vld [vmem:[%s447 + $0xa0] sm:$0xff]
        %v9731 = vld [vmem:[%s447 + $0xa8] sm:$0xff]
        %v9732 = vld [vmem:[%s447 + $0xb0] sm:$0xff]
        %v9733 = vld [vmem:[%s447 + $0xb8] sm:$0xff]
        %v9734 = vld [vmem:[%s447 + $0xc0] sm:$0xff]
        %v9735 = vld [vmem:[%s447 + $0xc8] sm:$0xff]
        %v9736 = vld [vmem:[%s447 + $0xd0] sm:$0xff]
        %v9737 = vld [vmem:[%s447 + $0xd8] sm:$0xff]
        %v9738 = vld [vmem:[%s447 + $0xe0] sm:$0xff]
        %v9739 = vld [vmem:[%s447 + $0xe8] sm:$0xff]
        %v9740 = vld [vmem:[%s447 + $0xf0] sm:$0xff]
        %v9741 = vld [vmem:[%s447 + $0xf8] sm:$0xff]
        %v9742 = vadd.f32 %v9710, %v9678
        %v9743 = vadd.f32 %v9711, %v9679
        %v9744 = vadd.f32 %v9712, %v9680
        %v9745 = vadd.f32 %v9713, %v9681
        %v9746 = vadd.f32 %v9714, %v9682
        %v9747 = vadd.f32 %v9715, %v9683
        %v9748 = vadd.f32 %v9716, %v9684
        %v9749 = vadd.f32 %v9717, %v9685
        %v9750 = vadd.f32 %v9718, %v9686
        %v9751 = vadd.f32 %v9719, %v9687
        %v9752 = vadd.f32 %v9720, %v9688
        %v9753 = vadd.f32 %v9721, %v9689
        %v9754 = vadd.f32 %v9722, %v9690
        %v9755 = vadd.f32 %v9723, %v9691
        %v9756 = vadd.f32 %v9724, %v9692
        %v9757 = vadd.f32 %v9725, %v9693
        %v9758 = vadd.f32 %v9726, %v9694
        %v9759 = vadd.f32 %v9727, %v9695
        %v9760 = vadd.f32 %v9728, %v9696
        %v9761 = vadd.f32 %v9729, %v9697
        %v9762 = vadd.f32 %v9730, %v9698
        %v9763 = vadd.f32 %v9731, %v9699
        %v9764 = vadd.f32 %v9732, %v9700
        %v9765 = vadd.f32 %v9733, %v9701
        %v9766 = vadd.f32 %v9734, %v9702
        %v9767 = vadd.f32 %v9735, %v9703
        %v9768 = vadd.f32 %v9736, %v9704
        %v9769 = vadd.f32 %v9737, %v9705
        %v9770 = vadd.f32 %v9738, %v9706
        %v9771 = vadd.f32 %v9739, %v9707
        %v9772 = vadd.f32 %v9740, %v9708
        %v9773 = vadd.f32 %v9741, %v9709
        %9774 = vst [vmem:[%s447] sm:$0xff] %v9742
        %9775 = vst [vmem:[%s447 + $0x8] sm:$0xff] %v9743
        %9776 = vst [vmem:[%s447 + $0x10] sm:$0xff] %v9744
        %9777 = vst [vmem:[%s447 + $0x18] sm:$0xff] %v9745
        %9778 = vst [vmem:[%s447 + $0x20] sm:$0xff] %v9746
        %9779 = vst [vmem:[%s447 + $0x28] sm:$0xff] %v9747
        %9780 = vst [vmem:[%s447 + $0x30] sm:$0xff] %v9748
        %9781 = vst [vmem:[%s447 + $0x38] sm:$0xff] %v9749
        %9782 = vst [vmem:[%s447 + $0x40] sm:$0xff] %v9750
        %9783 = vst [vmem:[%s447 + $0x48] sm:$0xff] %v9751
        %9784 = vst [vmem:[%s447 + $0x50] sm:$0xff] %v9752
        %9785 = vst [vmem:[%s447 + $0x58] sm:$0xff] %v9753
        %9786 = vst [vmem:[%s447 + $0x60] sm:$0xff] %v9754
        %9787 = vst [vmem:[%s447 + $0x68] sm:$0xff] %v9755
        %9788 = vst [vmem:[%s447 + $0x70] sm:$0xff] %v9756
        %9789 = vst [vmem:[%s447 + $0x78] sm:$0xff] %v9757
        %9790 = vst [vmem:[%s447 + $0x80] sm:$0xff] %v9758
        %9791 = vst [vmem:[%s447 + $0x88] sm:$0xff] %v9759
        %9792 = vst [vmem:[%s447 + $0x90] sm:$0xff] %v9760
        %9793 = vst [vmem:[%s447 + $0x98] sm:$0xff] %v9761
        %9794 = vst [vmem:[%s447 + $0xa0] sm:$0xff] %v9762
        %9795 = vst [vmem:[%s447 + $0xa8] sm:$0xff] %v9763
        %9796 = vst [vmem:[%s447 + $0xb0] sm:$0xff] %v9764
        %9797 = vst [vmem:[%s447 + $0xb8] sm:$0xff] %v9765
        %9798 = vst [vmem:[%s447 + $0xc0] sm:$0xff] %v9766
        %9799 = vst [vmem:[%s447 + $0xc8] sm:$0xff] %v9767
        %9800 = vst [vmem:[%s447 + $0xd0] sm:$0xff] %v9768
        %9801 = vst [vmem:[%s447 + $0xd8] sm:$0xff] %v9769
        %9802 = vst [vmem:[%s447 + $0xe0] sm:$0xff] %v9770
        %9803 = vst [vmem:[%s447 + $0xe8] sm:$0xff] %v9771
        %9804 = vst [vmem:[%s447 + $0xf0] sm:$0xff] %v9772
        %9805 = vst [vmem:[%s447 + $0xf8] sm:$0xff] %v9773
        %p9806 = scmp.eq.s32.totalorder %s27, 1
        // Predicated region
        $region90: #{_lambda_.1} parent=72 // pred_check
          %p9807 = pneg %p9806
        $region91: #{_lambda_.1} parent=72 // pred_check_branch
          %9809 = sbr.rel (%p9807) target = $region93
        $region92: #{_lambda_.1} parent=72 // pred_region
          %v9810 = vld [vmem:[%s447] sm:$0xff]
          %v9811 = vld [vmem:[%s447 + $0x8] sm:$0xff]
          %v9812 = vld [vmem:[%s447 + $0x10] sm:$0xff]
          %v9813 = vld [vmem:[%s447 + $0x18] sm:$0xff]
          %v9814 = vld [vmem:[%s447 + $0x20] sm:$0xff]
          %v9815 = vld [vmem:[%s447 + $0x28] sm:$0xff]
          %v9816 = vld [vmem:[%s447 + $0x30] sm:$0xff]
          %v9817 = vld [vmem:[%s447 + $0x38] sm:$0xff]
          %v9818 = vld [vmem:[%s447 + $0x40] sm:$0xff]
          %v9819 = vld [vmem:[%s447 + $0x48] sm:$0xff]
          %v9820 = vld [vmem:[%s447 + $0x50] sm:$0xff]
          %v9821 = vld [vmem:[%s447 + $0x58] sm:$0xff]
          %v9822 = vld [vmem:[%s447 + $0x60] sm:$0xff]
          %v9823 = vld [vmem:[%s447 + $0x68] sm:$0xff]
          %v9824 = vld [vmem:[%s447 + $0x70] sm:$0xff]
          %v9825 = vld [vmem:[%s447 + $0x78] sm:$0xff]
          %v9826 = vld [vmem:[%s447 + $0x80] sm:$0xff]
          %v9827 = vld [vmem:[%s447 + $0x88] sm:$0xff]
          %v9828 = vld [vmem:[%s447 + $0x90] sm:$0xff]
          %v9829 = vld [vmem:[%s447 + $0x98] sm:$0xff]
          %v9830 = vld [vmem:[%s447 + $0xa0] sm:$0xff]
          %v9831 = vld [vmem:[%s447 + $0xa8] sm:$0xff]
          %v9832 = vld [vmem:[%s447 + $0xb0] sm:$0xff]
          %v9833 = vld [vmem:[%s447 + $0xb8] sm:$0xff]
          %v9834 = vld [vmem:[%s447 + $0xc0] sm:$0xff]
          %v9835 = vld [vmem:[%s447 + $0xc8] sm:$0xff]
          %v9836 = vld [vmem:[%s447 + $0xd0] sm:$0xff]
          %v9837 = vld [vmem:[%s447 + $0xd8] sm:$0xff]
          %v9838 = vld [vmem:[%s447 + $0xe0] sm:$0xff]
          %v9839 = vld [vmem:[%s447 + $0xe8] sm:$0xff]
          %v9840 = vld [vmem:[%s447 + $0xf0] sm:$0xff]
          %v9841 = vld [vmem:[%s447 + $0xf8] sm:$0xff]
          %v9842 = vld [vmem:[%s453] sm:$0x1]
          %v9844 = vperm.slane %v9842, 0
          %v9846 = vadd.f32 %v9810, %v9844
          %v9847 = vadd.f32 %v9811, %v9844
          %v9848 = vadd.f32 %v9812, %v9844
          %v9849 = vadd.f32 %v9813, %v9844
          %v9850 = vadd.f32 %v9814, %v9844
          %v9851 = vadd.f32 %v9815, %v9844
          %v9852 = vadd.f32 %v9816, %v9844
          %v9853 = vadd.f32 %v9817, %v9844
          %v9854 = vadd.f32 %v9818, %v9844
          %v9855 = vadd.f32 %v9819, %v9844
          %v9856 = vadd.f32 %v9820, %v9844
          %v9857 = vadd.f32 %v9821, %v9844
          %v9858 = vadd.f32 %v9822, %v9844
          %v9859 = vadd.f32 %v9823, %v9844
          %v9860 = vadd.f32 %v9824, %v9844
          %v9861 = vadd.f32 %v9825, %v9844
          %v9862 = vadd.f32 %v9826, %v9844
          %v9863 = vadd.f32 %v9827, %v9844
          %v9864 = vadd.f32 %v9828, %v9844
          %v9865 = vadd.f32 %v9829, %v9844
          %v9866 = vadd.f32 %v9830, %v9844
          %v9867 = vadd.f32 %v9831, %v9844
          %v9868 = vadd.f32 %v9832, %v9844
          %v9869 = vadd.f32 %v9833, %v9844
          %v9870 = vadd.f32 %v9834, %v9844
          %v9871 = vadd.f32 %v9835, %v9844
          %v9872 = vadd.f32 %v9836, %v9844
          %v9873 = vadd.f32 %v9837, %v9844
          %v9874 = vadd.f32 %v9838, %v9844
          %v9875 = vadd.f32 %v9839, %v9844
          %v9876 = vadd.f32 %v9840, %v9844
          %v9877 = vadd.f32 %v9841, %v9844
          %v9878 = vmax.f32 %v9846, 0.0
          %v9879 = vmax.f32 %v9847, 0.0
          %v9880 = vmax.f32 %v9848, 0.0
          %v9881 = vmax.f32 %v9849, 0.0
          %v9882 = vmax.f32 %v9850, 0.0
          %v9883 = vmax.f32 %v9851, 0.0
          %v9884 = vmax.f32 %v9852, 0.0
          %v9885 = vmax.f32 %v9853, 0.0
          %v9886 = vmax.f32 %v9854, 0.0
          %v9887 = vmax.f32 %v9855, 0.0
          %v9888 = vmax.f32 %v9856, 0.0
          %v9889 = vmax.f32 %v9857, 0.0
          %v9890 = vmax.f32 %v9858, 0.0
          %v9891 = vmax.f32 %v9859, 0.0
          %v9892 = vmax.f32 %v9860, 0.0
          %v9893 = vmax.f32 %v9861, 0.0
          %v9894 = vmax.f32 %v9862, 0.0
          %v9895 = vmax.f32 %v9863, 0.0
          %v9896 = vmax.f32 %v9864, 0.0
          %v9897 = vmax.f32 %v9865, 0.0
          %v9898 = vmax.f32 %v9866, 0.0
          %v9899 = vmax.f32 %v9867, 0.0
          %v9900 = vmax.f32 %v9868, 0.0
          %v9901 = vmax.f32 %v9869, 0.0
          %v9902 = vmax.f32 %v9870, 0.0
          %v9903 = vmax.f32 %v9871, 0.0
          %v9904 = vmax.f32 %v9872, 0.0
          %v9905 = vmax.f32 %v9873, 0.0
          %v9906 = vmax.f32 %v9874, 0.0
          %v9907 = vmax.f32 %v9875, 0.0
          %v9908 = vmax.f32 %v9876, 0.0
          %v9909 = vmax.f32 %v9877, 0.0
          %9910 = vst [vmem:[%s447] sm:$0xff] %v9878
          %9911 = vst [vmem:[%s447 + $0x8] sm:$0xff] %v9879
          %9912 = vst [vmem:[%s447 + $0x10] sm:$0xff] %v9880
          %9913 = vst [vmem:[%s447 + $0x18] sm:$0xff] %v9881
          %9914 = vst [vmem:[%s447 + $0x20] sm:$0xff] %v9882
          %9915 = vst [vmem:[%s447 + $0x28] sm:$0xff] %v9883
          %9916 = vst [vmem:[%s447 + $0x30] sm:$0xff] %v9884
          %9917 = vst [vmem:[%s447 + $0x38] sm:$0xff] %v9885
          %9918 = vst [vmem:[%s447 + $0x40] sm:$0xff] %v9886
          %9919 = vst [vmem:[%s447 + $0x48] sm:$0xff] %v9887
          %9920 = vst [vmem:[%s447 + $0x50] sm:$0xff] %v9888
          %9921 = vst [vmem:[%s447 + $0x58] sm:$0xff] %v9889
          %9922 = vst [vmem:[%s447 + $0x60] sm:$0xff] %v9890
          %9923 = vst [vmem:[%s447 + $0x68] sm:$0xff] %v9891
          %9924 = vst [vmem:[%s447 + $0x70] sm:$0xff] %v9892
          %9925 = vst [vmem:[%s447 + $0x78] sm:$0xff] %v9893
          %9926 = vst [vmem:[%s447 + $0x80] sm:$0xff] %v9894
          %9927 = vst [vmem:[%s447 + $0x88] sm:$0xff] %v9895
          %9928 = vst [vmem:[%s447 + $0x90] sm:$0xff] %v9896
          %9929 = vst [vmem:[%s447 + $0x98] sm:$0xff] %v9897
          %9930 = vst [vmem:[%s447 + $0xa0] sm:$0xff] %v9898
          %9931 = vst [vmem:[%s447 + $0xa8] sm:$0xff] %v9899
          %9932 = vst [vmem:[%s447 + $0xb0] sm:$0xff] %v9900
          %9933 = vst [vmem:[%s447 + $0xb8] sm:$0xff] %v9901
          %9934 = vst [vmem:[%s447 + $0xc0] sm:$0xff] %v9902
          %9935 = vst [vmem:[%s447 + $0xc8] sm:$0xff] %v9903
          %9936 = vst [vmem:[%s447 + $0xd0] sm:$0xff] %v9904
          %9937 = vst [vmem:[%s447 + $0xd8] sm:$0xff] %v9905
          %9938 = vst [vmem:[%s447 + $0xe0] sm:$0xff] %v9906
          %9939 = vst [vmem:[%s447 + $0xe8] sm:$0xff] %v9907
          %9940 = vst [vmem:[%s447 + $0xf0] sm:$0xff] %v9908
          %9941 = vst [vmem:[%s447 + $0xf8] sm:$0xff] %v9909
        $region93: #{_lambda_.1} parent=72 // pred_fallthru
          _
        %s9942 = sand.u32 %s152, 1
        %s9943 = scalar_lea.sflag [#allocation6], %s9942
        %s9944 = sand.u32 %s152, 1
        %s9945 = smul.addr %s9944, 256
        %s9946 = scalar_lea.vmem [#allocation9], %s9945
        // Predicated region
        $region94: #{_lambda_.1} parent=72 // pred_check
          %p9947 = pneg %p162
        $region95: #{_lambda_.1} parent=72 // pred_check_branch
          %9949 = sbr.rel (%p9947) target = $region97
        $region96: #{_lambda_.1} parent=72 // pred_region
          %9951 = vsyncadd %s9943, 0
          %s9952 = smul.addr %s26, 32
          %s9953 = sadd.s32 %s25, %s9952
          %s9954 = smul.addr %s9953, 8
          %s9955 = scalar_lea.hbm %s4, %s9954
          %s9956 = sshll.u32 %s9946, 4
          %s9957 = int_to_ptr.vmem [resolvable:$true] %s9956
          %s9958 = sshll.u32 %s9955, 4
          %s9959 = int_to_ptr.hbm [resolvable:$true] %s9958
          %9964 = dma.vmem_to_hbm [thread:$0]  %s9957, 4096, %s9959, %s9943, 128, 128, 8
        $region97: #{_lambda_.1} parent=72 // pred_fallthru
          _
      $region73: #{_lambda_.1} parent=5 // pred_fallthru
        _
      %p9965 = scmp.le.s32.totalorder 2, %s15
      // Predicated region
      $region98: #{_lambda_.1} parent=5 // pred_check
        %p9966 = pneg %p9965
      $region99: #{_lambda_.1} parent=5 // pred_check_branch
        %9968 = sbr.rel (%p9966) target = $region101
      $region100: #{_lambda_.1} parent=5 // pred_region
        %s9969 = ssub.s32 %s15, 2
        // Predicated region
        $region102: #{_lambda_.1} parent=100 // pred_check
          %p9970 = pneg %p168
        $region103: #{_lambda_.1} parent=100 // pred_check_branch
          %9972 = sbr.rel (%p9970) target = $region105
        $region104: #{_lambda_.1} parent=100 // pred_region
          %s9973 = sand.u32 %s153, 1
          %s9974 = scalar_lea.sflag [#allocation6], %s9973
          %s9975 = sand.u32 %s153, 1
          %s9976 = smul.addr %s9975, 256
          %s9977 = scalar_lea.vmem [#allocation9], %s9976
          %9979 = dma.done %s9974, 4096
        $region105: #{_lambda_.1} parent=100 // pred_fallthru
          _
      $region101: #{_lambda_.1} parent=5 // pred_fallthru
        _
    $region6: #{_lambda_.1} parent=1 // loop_footer
      %s19 = sadd.s32 1, %s15
    $region7: #{_lambda_.1} parent=1 // loop_footer_branch
      %14 = sbr.rel target = $region3
    $region8: #{_lambda_.1} parent=1 // loop_exit
      _
    %9980 = vsyncpa [#allocation5], 1
    %s9981 = scalar_lea.sflag [#allocation5], 1
    %9982 = vsyncpa %s9981, 1
    %9983 = vsyncpa [#allocation8], 1
    %9984 = vsyncpa [#allocation6], 1
    %s9985 = scalar_lea.sflag [#allocation6], 1
    %9986 = vsyncpa %s9985, 1

</llo_original>
